<compile_context>
chip_gen: v5e
topology: v5e:2x2
jax: 0.10.0
libtpu: 0.0.40
codegen_flags: <defaults>
</compile_context>

<pallas_src>
import functools

import jax
import jax.numpy as jnp
from jax.experimental import pallas as pl
from jax.experimental.pallas import tpu as pltpu

DROPOUT_P = 0.2
N_EMBD = 384


def _round_up(a, b):
    return -(-a // b) * b


def _choose_tm(n_rows):
    """Row-tile size: big enough to amortize per-step overhead, small enough to
    keep >=4 grid steps (>=2 per v7x TensorCore) when N permits."""
    if n_rows < 512:
        # Tiny input: one (or few) tiles; just round to the sublane multiple.
        return _round_up(max(n_rows, 8), 8)
    tm = min(512, (n_rows // (4 * 128)) * 128)   # >=4 steps, 128-aligned
    return max(tm, 128)


def _ffn_kernel(x_ref, w1_ref, b1_ref, w2_ref, b2_ref, *rest, p, training):
    # x_ref: (tm, C) f32 token tile; W1/W2 are fully resident bf16 blocks.
    if training:
        bits_ref, o_ref = rest
    else:
        (o_ref,) = rest

    x = x_ref[...].astype(jnp.bfloat16)          # in-kernel cast (hidden under MXU)
    h = jnp.dot(x, w1_ref[...], preferred_element_type=jnp.float32)
    h = jnp.maximum(h + b1_ref[...], 0.0)        # bias + ReLU in f32
    y = jnp.dot(h.astype(jnp.bfloat16), w2_ref[...],
                preferred_element_type=jnp.float32)
    y = y + b2_ref[...]

    if training:
        # Inverted dropout (nn.Dropout training semantics).  Integer-threshold
        # compare on precomputed uint32 bits: drop iff bits < p * 2^32.
        bits = bits_ref[...]
        threshold = jnp.uint32(int(p * 4294967296.0))
        keep = bits >= threshold
        y = jnp.where(keep, y * (1.0 / (1.0 - p)), 0.0)

    o_ref[...] = y.astype(o_ref.dtype)


def feed_forward(x, w1, b1, w2, b2, *, key=None, training=False,
                 p=DROPOUT_P, out_dtype=jnp.float32):
    """x: [B, T, C] float32. Returns [B, T, C] in `out_dtype` (default f32)."""
    B, T, C = x.shape
    H = w1.shape[1]                       # 4*C
    N = B * T

    tm = _choose_tm(N)
    num_tiles = pl.cdiv(N, tm)            # partial last block masked by Pallas

    x2 = x.reshape(N, C)                   # free reshape; cast happens in-kernel
    w1b = w1.astype(jnp.bfloat16)
    w2b = w2.astype(jnp.bfloat16)
    b1_2d = b1.reshape(1, H).astype(jnp.float32)
    b2_2d = b2.reshape(1, C).astype(jnp.float32)

    apply_dropout = bool(training) and p > 0.0

    # Grid-invariant blocks -> single-buffered (no revisit DMA needed).
    resident = dict(pipeline_mode=pl.Buffered(1))
    in_specs = [
        pl.BlockSpec((tm, C), lambda i: (i, 0)),               # x tile (streamed)
        pl.BlockSpec((C, H), lambda i: (0, 0), **resident),    # W1 (resident)
        pl.BlockSpec((1, H), lambda i: (0, 0), **resident),    # b1
        pl.BlockSpec((H, C), lambda i: (0, 0), **resident),    # W2 (resident)
        pl.BlockSpec((1, C), lambda i: (0, 0), **resident),    # b2
    ]
    operands = [x2, w1b, b1_2d, w2b, b2_2d]

    if apply_dropout:
        if key is None:
            key = jax.random.PRNGKey(0)
        bits = jax.random.bits(key, (N, C), dtype=jnp.uint32)
        in_specs.append(pl.BlockSpec((tm, C), lambda i: (i, 0)))  # dropout bits
        operands.append(bits)

    out_bytes = jnp.dtype(out_dtype).itemsize

    # Generation-aware VMEM budget (cap at ~62% of physical so Mosaic scratch
    # and the f32 hidden intermediate still fit on v7x's 64 MiB).
    try:
        physical_vmem = pltpu.get_tpu_info().vmem_capacity_bytes
    except Exception:
        physical_vmem = 64 * 1024 * 1024
    est = (2 * tm * C * 4                       # x tiles (f32, double-buffered)
           + 2 * tm * C * out_bytes             # out tiles (double-buffered)
           + 2 * C * H * 2                      # W1 + W2 (bf16, single buffer)
           + (H + C) * 4                        # biases
           + tm * H * 4                         # f32 hidden intermediate
           + (2 * tm * C * 4 if apply_dropout else 0))   # dropout bits tiles
    vmem_limit = int(min(max(2 * est, 32 * 1024 * 1024),
                         int(0.62 * physical_vmem)))

    cost = pl.CostEstimate(
        flops=4 * N * C * H,                    # two (N, C, H) matmuls
        transcendentals=0,
        bytes_accessed=(N * C * 4               # x (f32)
                        + 2 * C * H * 2         # W1 + W2 (bf16)
                        + (H + C) * 4           # biases
                        + N * C * out_bytes     # out
                        + (N * C * 4 if apply_dropout else 0)))

    kernel = functools.partial(_ffn_kernel, p=p, training=apply_dropout)

    out2 = pl.pallas_call(
        kernel,
        out_shape=jax.ShapeDtypeStruct((N, C), out_dtype),
        grid=(num_tiles,),
        in_specs=in_specs,
        out_specs=pl.BlockSpec((tm, C), lambda i: (i, 0)),
        compiler_params=pltpu.CompilerParams(
            dimension_semantics=("parallel",),   # tiles independent -> both TCs
            vmem_limit_bytes=vmem_limit),
        cost_estimate=cost,
    )(*operands)

    return out2.reshape(B, T, C)


def init_params(key, n_embd):
    """PyTorch nn.Linear-style init: U(-1/sqrt(fan_in), 1/sqrt(fan_in))."""
    k1, k2, k3, k4 = jax.random.split(key, 4)
    hidden = 4 * n_embd
    bound1 = 1.0 / (n_embd ** 0.5)
    bound2 = 1.0 / (hidden ** 0.5)
    w1 = jax.random.uniform(k1, (n_embd, hidden), jnp.float32, -bound1, bound1)
    b1 = jax.random.uniform(k2, (hidden,), jnp.float32, -bound1, bound1)
    w2 = jax.random.uniform(k3, (hidden, n_embd), jnp.float32, -bound2, bound2)
    b2 = jax.random.uniform(k4, (n_embd,), jnp.float32, -bound2, bound2)
    return w1, b1, w2, b2


if __name__ == "__main__":
    # n_embd = 384 per the module; N = 512 tokens -> tm = 128, 4 grid tiles
    # (exercises the pipelined path on every generation, >=2 tiles per v7x TC).
    B, T, C = 2, 256, N_EMBD
    key = jax.random.PRNGKey(0)
    kx, kp, kd = jax.random.split(key, 3)
    x = jax.random.normal(kx, (B, T, C), dtype=jnp.float32)
    w1, b1, w2, b2 = init_params(kp, C)

    # Eval-mode forward (dropout is identity in eval).
    out = jax.block_until_ready(feed_forward(x, w1, b1, w2, b2, training=False))

    # Pure-JAX reference with identical numerics (bf16 matmuls, f32 accumulate).
    xb = x.reshape(-1, C).astype(jnp.bfloat16)
    h = jnp.dot(xb, w1.astype(jnp.bfloat16),
                preferred_element_type=jnp.float32) + b1
    h = jnp.maximum(h, 0.0)
    ref = jnp.dot(h.astype(jnp.bfloat16), w2.astype(jnp.bfloat16),
                  preferred_element_type=jnp.float32) + b2
    ref = ref.reshape(B, T, C)
    assert jnp.allclose(out, ref, atol=2e-3, rtol=2e-3), "mismatch vs reference"

    # Ragged token count (N=600 -> partial last block, masked by Pallas) plus
    # training-mode dropout.
    x_r = jax.random.normal(kx, (2, 300, C), dtype=jnp.float32)
    out_r = jax.block_until_ready(
        feed_forward(x_r, w1, b1, w2, b2, training=True, key=kd))
    assert out_r.shape == (2, 300, C)
    assert bool(jnp.isfinite(out_r).all())
    # Dropout sanity: roughly p of the entries should be exactly zero.
    zero_frac = float(jnp.mean((out_r == 0.0).astype(jnp.float32)))
    assert 0.1 < zero_frac < 0.3, f"unexpected dropout zero fraction {zero_frac}"

    print("KERNEL_OK")
</pallas_src>

<mosaic_0001>
module attributes {stable_mosaic.version = 11 : i64} {
  func.func @_ffn_kernel(%arg0: i32, %arg1: memref<128x384xf32, #tpu.memory_space<vmem>>, %arg2: memref<384x1536xbf16, #tpu.memory_space<vmem>>, %arg3: memref<1x1536xf32, #tpu.memory_space<vmem>>, %arg4: memref<1536x384xbf16, #tpu.memory_space<vmem>>, %arg5: memref<1x384xf32, #tpu.memory_space<vmem>>, %arg6: memref<128x384xf32, #tpu.memory_space<vmem>>) attributes {dimension_semantics = [#tpu.dimension_semantics<parallel>], iteration_bounds = array<i64: 4>, scalar_prefetch = 0 : i64, scratch_operands = 0 : i64, tpu.core_type = #tpu.core_type<tc>, window_params = [{transform_indices = @transform_0, window_bounds = array<i64: 128, 384>}, {pipeline_mode = #tpu.pipeline_mode<synchronous>, transform_indices = @transform_1, window_bounds = array<i64: 384, 1536>}, {pipeline_mode = #tpu.pipeline_mode<synchronous>, transform_indices = @transform_2, window_bounds = array<i64: 1, 1536>}, {pipeline_mode = #tpu.pipeline_mode<synchronous>, transform_indices = @transform_3, window_bounds = array<i64: 1536, 384>}, {pipeline_mode = #tpu.pipeline_mode<synchronous>, transform_indices = @transform_4, window_bounds = array<i64: 1, 384>}, {transform_indices = @transform_5, window_bounds = array<i64: 128, 384>}]} {
    %c0 = arith.constant 0 : index
    %c0_0 = arith.constant 0 : index
    %0 = vector.load %arg1[%c0, %c0_0] : memref<128x384xf32, #tpu.memory_space<vmem>>, vector<128x384xf32>
    %1 = arith.truncf %0 : vector<128x384xf32> to vector<128x384xbf16>
    %c0_1 = arith.constant 0 : index
    %c0_2 = arith.constant 0 : index
    %2 = vector.load %arg2[%c0_1, %c0_2] : memref<384x1536xbf16, #tpu.memory_space<vmem>>, vector<384x1536xbf16>
    %cst = arith.constant dense<0.000000e+00> : vector<128x1536xf32>
    %3 = tpu.matmul %1, %2, %cst {dimension_numbers = #tpu.dot_dimension_numbers<[1], [0], [0], [1], [0, 0, 1, 1], [], []>} : vector<128x384xbf16>, vector<384x1536xbf16>, vector<128x1536xf32> -> vector<128x1536xf32>
    %c0_3 = arith.constant 0 : index
    %c0_4 = arith.constant 0 : index
    %4 = vector.load %arg3[%c0_3, %c0_4] : memref<1x1536xf32, #tpu.memory_space<vmem>>, vector<1x1536xf32>
    %5 = vector.broadcast %4 : vector<1x1536xf32> to vector<128x1536xf32>
    %6 = arith.addf %3, %5 : vector<128x1536xf32>
    %cst_5 = arith.constant 0.000000e+00 : f32
    %7 = vector.broadcast %cst_5 : f32 to vector<128x1536xf32>
    %8 = arith.maximumf %6, %7 : vector<128x1536xf32>
    %9 = arith.truncf %8 : vector<128x1536xf32> to vector<128x1536xbf16>
    %c0_6 = arith.constant 0 : index
    %c0_7 = arith.constant 0 : index
    %10 = vector.load %arg4[%c0_6, %c0_7] : memref<1536x384xbf16, #tpu.memory_space<vmem>>, vector<1536x384xbf16>
    %cst_8 = arith.constant dense<0.000000e+00> : vector<128x384xf32>
    %11 = tpu.matmul %9, %10, %cst_8 {dimension_numbers = #tpu.dot_dimension_numbers<[1], [0], [0], [1], [0, 0, 1, 1], [], []>} : vector<128x1536xbf16>, vector<1536x384xbf16>, vector<128x384xf32> -> vector<128x384xf32>
    %c0_9 = arith.constant 0 : index
    %c0_10 = arith.constant 0 : index
    %12 = vector.load %arg5[%c0_9, %c0_10] : memref<1x384xf32, #tpu.memory_space<vmem>>, vector<1x384xf32>
    %13 = vector.broadcast %12 : vector<1x384xf32> to vector<128x384xf32>
    %14 = arith.addf %11, %13 : vector<128x384xf32>
    %c0_11 = arith.constant 0 : index
    %c0_12 = arith.constant 0 : index
    %15 = vector.load %arg6[%c0_11, %c0_12] : memref<128x384xf32, #tpu.memory_space<vmem>>, vector<128x384xf32>
    tpu.vector_store %arg6[%c0_11, %c0_12], %14 {strides = array<i32>} : memref<128x384xf32, #tpu.memory_space<vmem>>, vector<128x384xf32>,
    return
  }
  func.func @transform_0(%arg0: i32) -> (i32, i32) {
    %c0_i32 = arith.constant 0 : i32
    %c0_i32_0 = arith.constant 0 : i32
    return %arg0, %c0_i32 : i32, i32
  }
  func.func @transform_1(%arg0: i32) -> (i32, i32) {
    %c0_i32 = arith.constant 0 : i32
    %c0_i32_0 = arith.constant 0 : i32
    %c0_i32_1 = arith.constant 0 : i32
    return %c0_i32, %c0_i32_0 : i32, i32
  }
  func.func @transform_2(%arg0: i32) -> (i32, i32) {
    %c0_i32 = arith.constant 0 : i32
    %c0_i32_0 = arith.constant 0 : i32
    %c0_i32_1 = arith.constant 0 : i32
    return %c0_i32, %c0_i32_0 : i32, i32
  }
  func.func @transform_3(%arg0: i32) -> (i32, i32) {
    %c0_i32 = arith.constant 0 : i32
    %c0_i32_0 = arith.constant 0 : i32
    %c0_i32_1 = arith.constant 0 : i32
    return %c0_i32, %c0_i32_0 : i32, i32
  }
  func.func @transform_4(%arg0: i32) -> (i32, i32) {
    %c0_i32 = arith.constant 0 : i32
    %c0_i32_0 = arith.constant 0 : i32
    %c0_i32_1 = arith.constant 0 : i32
    return %c0_i32, %c0_i32_0 : i32, i32
  }
  func.func @transform_5(%arg0: i32) -> (i32, i32) {
    %c0_i32 = arith.constant 0 : i32
    %c0_i32_0 = arith.constant 0 : i32
    return %arg0, %c0_i32 : i32, i32
  }
}

</mosaic_0001>

<llo_original>
// kernel: tpu_custom_call.1
$region0: #{tpu_custom_call.1}
  #allocation0 [shape = 'u32[]', space=smem, size = 0x4, offset = 0x4, fixed_abs, tag = 'smem constant byte address 0x4 - core index']
  #allocation1 [shape = 'u32[72,128]{1,0:T(1,128)}', space=vmem, size = 0x9000, scoped, tag = 'internal scratch']
  %s0 = inlined_call_operand.hbm [shape: f32[512,384], index: 0, kind: input, shape index: {}]
  %s1 = inlined_call_operand.hbm [shape: bf16[384,1536], index: 1, kind: input, shape index: {}]
  %s2 = inlined_call_operand.hbm [shape: f32[1,1536], index: 2, kind: input, shape index: {}]
  %s3 = inlined_call_operand.hbm [shape: bf16[1536,384], index: 3, kind: input, shape index: {}]
  %s4 = inlined_call_operand.hbm [shape: f32[1,384], index: 4, kind: input, shape index: {}]
  %s5 = inlined_call_operand.hbm [shape: f32[512,384], index: 5, kind: output, shape index: {}]
  %s6 = sld [smem:[#allocation0]]
  $region73: #{tpu_custom_call.1} parent=0
    _
  %s8 = ssub.s32 1, %s6
  %s9 = scalar_select 0, %s8, %s6
  $region1: #{tpu_custom_call.1} parent=0
    #allocation2 [shape = 'u8[393216]{0}', space=vmem, size = 0x60000, scoped, tag = 'input window, operand 0']
    #allocation3 [shape = 's32[2]{0}', space=sflag, size = 0x8, scoped, tag = 'scoped memory for tpu_custom_call.1']
    #allocation4 [shape = 's32[2]{0}', space=sflag, size = 0x8, scoped, tag = 'scoped memory for tpu_custom_call.1']
    #allocation5 [shape = 'u8[1179648]{0}', space=vmem, size = 0x120000, scoped, tag = 'input window, operand 1, single buffered']
    #allocation6 [shape = 's32[1]{0}', space=sflag, size = 0x4, scoped, tag = 'scoped memory for tpu_custom_call.1']
    #allocation7 [shape = 'u8[6144]{0}', space=vmem, size = 0x1800, scoped, tag = 'input window, operand 2, single buffered']
    #allocation8 [shape = 'u8[1179648]{0}', space=vmem, size = 0x120000, scoped, tag = 'input window, operand 3, single buffered']
    #allocation9 [shape = 's32[1]{0}', space=sflag, size = 0x4, scoped, tag = 'scoped memory for tpu_custom_call.1']
    #allocation10 [shape = 'u8[1536]{0}', space=vmem, size = 0x800, scoped, tag = 'input window, operand 4, single buffered']
    #allocation11 [shape = 'u8[393216]{0}', space=vmem, size = 0x60000, scoped, tag = 'output window, operand 0']
    %10 = vsyncpa [#allocation3], 0
    %s11 = scalar_lea.sflag [#allocation3], 1
    %12 = vsyncpa %s11, 0
    %13 = vsyncpa [#allocation6], 0
    %14 = vsyncpa [#allocation9], 0
    %15 = vsyncpa [#allocation4], 0
    %s16 = scalar_lea.sflag [#allocation4], 1
    %17 = vsyncpa %s16, 0
    loop: start=0, step=1, limit=6
    $region2: #{tpu_custom_call.1} parent=1 // loop_pre_header
      _
    $region3: #{tpu_custom_call.1} parent=1 // loop_header
      %s19 = sphi 0, %s23
      %p20 = scmp.ge.s32.totalorder %s19, 6
      %s29 = sphi 0, %s31
      %s32 = sphi 0, %s29
      %s33 = sphi 0, %s32
      %s49 = sphi 0, %s33
      %s53 = sphi 0, %s53
      %s55 = sphi 0, %s53
      %s56 = sphi 0, %s55
      %s70 = sphi 0, %s56
      %s74 = sphi 0, %s74
      %s76 = sphi 0, %s74
      %s77 = sphi 0, %s76
      %s91 = sphi 0, %s77
      %s95 = sphi 0, %s95
      %s97 = sphi 0, %s95
      %s98 = sphi 0, %s97
      %s112 = sphi 0, %s98
      %s116 = sphi 0, %s116
      %s118 = sphi 0, %s116
      %s119 = sphi 0, %s118
      %s133 = sphi 0, %s119
      %s139 = sphi 0, %s141
      %s142 = sphi 0, %s139
      %s143 = sphi 0, %s142
      %s159 = sphi 0, %s143
    $region4: #{tpu_custom_call.1} parent=1 // loop_header_branch
      %22 = sbr.rel (%p20) target = $region8
    $region5: #{tpu_custom_call.1} parent=1 // loop_body
      %s24 = ssub.s32 %s19, 1
      %s25 = ssub.s32 %s19, 2
      %s26 = sadd.s32 %s19, 1
      %s27 = ssub.s32 %s19, %s26
      %p28 = scmp.eq.s32.totalorder %s27, 0
      %s30 = sadd.s32 %s29, 1
      %s31 = scalar_select %p28, %s29, %s30
      %p34 = pneg %p28
      %p35 = scmp.eq.s32.totalorder %s19, 3
      %p36 = por %p34, %p35
      %p37 = scmp.ne.s32.totalorder %s29, %s32
      %p38 = scmp.eq.s32.totalorder %s19, 0
      %p39 = por %p37, %p38
      %p40 = scmp.ne.s32.totalorder %s29, %s32
      %p41 = scmp.eq.s32.totalorder %s24, 3
      %p42 = por %p40, %p41
      %p43 = scmp.ne.s32.totalorder %s32, %s33
      %p44 = scmp.eq.s32.totalorder %s24, 0
      %p45 = por %p43, %p44
      %p46 = scmp.ne.s32.totalorder %s32, %s33
      %p47 = scmp.eq.s32.totalorder %s25, 3
      %p48 = por %p46, %p47
      %p50 = scmp.ne.s32.totalorder %s33, %s49
      %p51 = scmp.eq.s32.totalorder %s25, 0
      %p52 = por %p50, %p51
      %s54 = sadd.s32 %s53, 1
      %p57 = scmp.eq.s32.totalorder %s19, 3
      %p58 = scmp.ne.s32.totalorder %s53, %s55
      %p59 = scmp.eq.s32.totalorder %s19, 0
      %p60 = por %p58, %p59
      %p61 = scmp.ne.s32.totalorder %s53, %s55
      %p62 = scmp.eq.s32.totalorder %s24, 3
      %p63 = por %p61, %p62
      %p64 = scmp.ne.s32.totalorder %s55, %s56
      %p65 = scmp.eq.s32.totalorder %s24, 0
      %p66 = por %p64, %p65
      %p67 = scmp.ne.s32.totalorder %s55, %s56
      %p68 = scmp.eq.s32.totalorder %s25, 3
      %p69 = por %p67, %p68
      %p71 = scmp.ne.s32.totalorder %s56, %s70
      %p72 = scmp.eq.s32.totalorder %s25, 0
      %p73 = por %p71, %p72
      %s75 = sadd.s32 %s74, 1
      %p78 = scmp.eq.s32.totalorder %s19, 3
      %p79 = scmp.ne.s32.totalorder %s74, %s76
      %p80 = scmp.eq.s32.totalorder %s19, 0
      %p81 = por %p79, %p80
      %p82 = scmp.ne.s32.totalorder %s74, %s76
      %p83 = scmp.eq.s32.totalorder %s24, 3
      %p84 = por %p82, %p83
      %p85 = scmp.ne.s32.totalorder %s76, %s77
      %p86 = scmp.eq.s32.totalorder %s24, 0
      %p87 = por %p85, %p86
      %p88 = scmp.ne.s32.totalorder %s76, %s77
      %p89 = scmp.eq.s32.totalorder %s25, 3
      %p90 = por %p88, %p89
      %p92 = scmp.ne.s32.totalorder %s77, %s91
      %p93 = scmp.eq.s32.totalorder %s25, 0
      %p94 = por %p92, %p93
      %s96 = sadd.s32 %s95, 1
      %p99 = scmp.eq.s32.totalorder %s19, 3
      %p100 = scmp.ne.s32.totalorder %s95, %s97
      %p101 = scmp.eq.s32.totalorder %s19, 0
      %p102 = por %p100, %p101
      %p103 = scmp.ne.s32.totalorder %s95, %s97
      %p104 = scmp.eq.s32.totalorder %s24, 3
      %p105 = por %p103, %p104
      %p106 = scmp.ne.s32.totalorder %s97, %s98
      %p107 = scmp.eq.s32.totalorder %s24, 0
      %p108 = por %p106, %p107
      %p109 = scmp.ne.s32.totalorder %s97, %s98
      %p110 = scmp.eq.s32.totalorder %s25, 3
      %p111 = por %p109, %p110
      %p113 = scmp.ne.s32.totalorder %s98, %s112
      %p114 = scmp.eq.s32.totalorder %s25, 0
      %p115 = por %p113, %p114
      %s117 = sadd.s32 %s116, 1
      %p120 = scmp.eq.s32.totalorder %s19, 3
      %p121 = scmp.ne.s32.totalorder %s116, %s118
      %p122 = scmp.eq.s32.totalorder %s19, 0
      %p123 = por %p121, %p122
      %p124 = scmp.ne.s32.totalorder %s116, %s118
      %p125 = scmp.eq.s32.totalorder %s24, 3
      %p126 = por %p124, %p125
      %p127 = scmp.ne.s32.totalorder %s118, %s119
      %p128 = scmp.eq.s32.totalorder %s24, 0
      %p129 = por %p127, %p128
      %p130 = scmp.ne.s32.totalorder %s118, %s119
      %p131 = scmp.eq.s32.totalorder %s25, 3
      %p132 = por %p130, %p131
      %p134 = scmp.ne.s32.totalorder %s119, %s133
      %p135 = scmp.eq.s32.totalorder %s25, 0
      %p136 = por %p134, %p135
      %s137 = ssub.s32 %s19, %s26
      %p138 = scmp.eq.s32.totalorder %s137, 0
      %s140 = sadd.s32 %s139, 1
      %s141 = scalar_select %p138, %s139, %s140
      %p144 = pneg %p138
      %p145 = scmp.eq.s32.totalorder %s19, 3
      %p146 = por %p144, %p145
      %p147 = scmp.ne.s32.totalorder %s139, %s142
      %p148 = scmp.eq.s32.totalorder %s19, 0
      %p149 = por %p147, %p148
      %p150 = scmp.ne.s32.totalorder %s139, %s142
      %p151 = scmp.eq.s32.totalorder %s24, 3
      %p152 = por %p150, %p151
      %p153 = scmp.ne.s32.totalorder %s142, %s143
      %p154 = scmp.eq.s32.totalorder %s24, 0
      %p155 = por %p153, %p154
      %p156 = scmp.ne.s32.totalorder %s142, %s143
      %p157 = scmp.eq.s32.totalorder %s25, 3
      %p158 = por %p156, %p157
      %p160 = scmp.ne.s32.totalorder %s143, %s159
      %p161 = scmp.eq.s32.totalorder %s25, 0
      %p162 = por %p160, %p161
      %p163 = scmp.le.s32.totalorder 1, %s19
      %p164 = scmp.lt.s32.totalorder %s19, 5
      %p165 = pnand %p163, %p164
      %p166 = pneg %p165
      // Predicated region
      $region9: #{tpu_custom_call.1} parent=5 // pred_check
        _
      $region10: #{tpu_custom_call.1} parent=5 // pred_check_branch
        %168 = sbr.rel (%p165) target = $region12
      $region11: #{tpu_custom_call.1} parent=5 // pred_region
        %s169 = ssub.s32 %s19, 1
        // Predicated region
        $region13: #{tpu_custom_call.1} parent=11 // pred_check
          %p170 = pneg %p66
        $region14: #{tpu_custom_call.1} parent=11 // pred_check_branch
          %172 = sbr.rel (%p170) target = $region16
        $region15: #{tpu_custom_call.1} parent=11 // pred_region
          %174 = vsyncadd [#allocation6], 0
          %s175 = sshll.u32 %s1, 4
          %s176 = int_to_ptr.hbm [resolvable:$true] %s175
          %s177 = sshll.u32 [#allocation5], 4
          %s178 = int_to_ptr.vmem [resolvable:$true] %s177
          %183 = dma.hbm_to_vmem [thread:$0]  %s176, 36864, %s178, [#allocation6], 768, 768, 48
        $region16: #{tpu_custom_call.1} parent=11 // pred_fallthru
          _
        // Predicated region
        $region17: #{tpu_custom_call.1} parent=11 // pred_check
          %p184 = pneg %p87
        $region18: #{tpu_custom_call.1} parent=11 // pred_check_branch
          %186 = sbr.rel (%p184) target = $region20
        $region19: #{tpu_custom_call.1} parent=11 // pred_region
          %188 = vsyncadd [#allocation6], 0
          %s190 = sshll.u32 %s2, 4
          %s191 = int_to_ptr.hbm [resolvable:$true] %s190
          %s192 = sshll.u32 [#allocation7], 4
          %s193 = int_to_ptr.vmem [resolvable:$true] %s192
          %195 = dma.hbm_to_vmem [thread:$0]  %s191, 192, %s193, [#allocation6]
        $region20: #{tpu_custom_call.1} parent=11 // pred_fallthru
          _
        // Predicated region
        $region21: #{tpu_custom_call.1} parent=11 // pred_check
          %p196 = pneg %p108
        $region22: #{tpu_custom_call.1} parent=11 // pred_check_branch
          %198 = sbr.rel (%p196) target = $region24
        $region23: #{tpu_custom_call.1} parent=11 // pred_region
          %200 = vsyncadd [#allocation9], 0
          %s201 = sshll.u32 %s3, 4
          %s202 = int_to_ptr.hbm [resolvable:$true] %s201
          %s203 = sshll.u32 [#allocation8], 4
          %s204 = int_to_ptr.vmem [resolvable:$true] %s203
          %209 = dma.hbm_to_vmem [thread:$0]  %s202, 36864, %s204, [#allocation9], 192, 192, 12
        $region24: #{tpu_custom_call.1} parent=11 // pred_fallthru
          _
        // Predicated region
        $region25: #{tpu_custom_call.1} parent=11 // pred_check
          %p210 = pneg %p129
        $region26: #{tpu_custom_call.1} parent=11 // pred_check_branch
          %212 = sbr.rel (%p210) target = $region28
        $region27: #{tpu_custom_call.1} parent=11 // pred_region
          %214 = vsyncadd [#allocation9], 0
          %s216 = sshll.u32 %s4, 4
          %s217 = int_to_ptr.hbm [resolvable:$true] %s216
          %s218 = sshll.u32 [#allocation10], 4
          %s219 = int_to_ptr.vmem [resolvable:$true] %s218
          %221 = dma.hbm_to_vmem [thread:$0]  %s217, 48, %s219, [#allocation9]
        $region28: #{tpu_custom_call.1} parent=11 // pred_fallthru
          _
      $region12: #{tpu_custom_call.1} parent=5 // pred_fallthru
        _
      %p222 = scmp.lt.s32.totalorder %s19, 4
      // Predicated region
      $region29: #{tpu_custom_call.1} parent=5 // pred_check
        %p223 = pneg %p222
      $region30: #{tpu_custom_call.1} parent=5 // pred_check_branch
        %225 = sbr.rel (%p223) target = $region32
      $region31: #{tpu_custom_call.1} parent=5 // pred_region
        // Predicated region
        $region33: #{tpu_custom_call.1} parent=31 // pred_check
          %p226 = pneg %p39
        $region34: #{tpu_custom_call.1} parent=31 // pred_check_branch
          %228 = sbr.rel (%p226) target = $region36
        $region35: #{tpu_custom_call.1} parent=31 // pred_region
          %s229 = sand.u32 %s29, 1
          %s230 = scalar_lea.sflag [#allocation3], %s229
          %s231 = sand.u32 %s29, 1
          %s232 = smul.addr %s231, 384
          %s233 = scalar_lea.vmem [#allocation2], %s232
          %s234 = smul.u32 16, %s19
          %236 = vsyncadd %s230, 0
          %s237 = smul.addr %s234, 3
          %s238 = smul.addr %s237, 8
          %s239 = scalar_lea.hbm %s0, %s238
          %s240 = sshll.u32 %s239, 4
          %s241 = int_to_ptr.hbm [resolvable:$true] %s240
          %s242 = sshll.u32 %s233, 4
          %s243 = int_to_ptr.vmem [resolvable:$true] %s242
          %248 = dma.hbm_to_vmem [thread:$0]  %s241, 6144, %s243, %s230, 384, 384, 24
        $region36: #{tpu_custom_call.1} parent=31 // pred_fallthru
          _
      $region32: #{tpu_custom_call.1} parent=5 // pred_fallthru
        _
      %p249 = scmp.le.s32.totalorder 1, %s19
      %p250 = scmp.lt.s32.totalorder %s19, 5
      %p251 = pnand %p249, %p250
      %p252 = pneg %p251
      // Predicated region
      $region37: #{tpu_custom_call.1} parent=5 // pred_check
        _
      $region38: #{tpu_custom_call.1} parent=5 // pred_check_branch
        %254 = sbr.rel (%p251) target = $region40
      $region39: #{tpu_custom_call.1} parent=5 // pred_region
        %s255 = ssub.s32 %s19, 1
        %s256 = sand.u32 %s32, 1
        %s257 = scalar_lea.sflag [#allocation3], %s256
        %s258 = sand.u32 %s32, 1
        %s259 = smul.addr %s258, 384
        %s260 = scalar_lea.vmem [#allocation2], %s259
        // Predicated region
        $region41: #{tpu_custom_call.1} parent=39 // pred_check
          %p261 = pneg %p45
        $region42: #{tpu_custom_call.1} parent=39 // pred_check_branch
          %263 = sbr.rel (%p261) target = $region44
        $region43: #{tpu_custom_call.1} parent=39 // pred_region
          %265 = dma.done %s257, 6144
        $region44: #{tpu_custom_call.1} parent=39 // pred_fallthru
          _
        // Predicated region
        $region45: #{tpu_custom_call.1} parent=39 // pred_check
          %p266 = pneg %p66
        $region46: #{tpu_custom_call.1} parent=39 // pred_check_branch
          %268 = sbr.rel (%p266) target = $region48
        $region47: #{tpu_custom_call.1} parent=39 // pred_region
          %270 = dma.done [#allocation6], 36864
        $region48: #{tpu_custom_call.1} parent=39 // pred_fallthru
          _
        // Predicated region
        $region49: #{tpu_custom_call.1} parent=39 // pred_check
          %p271 = pneg %p87
        $region50: #{tpu_custom_call.1} parent=39 // pred_check_branch
          %273 = sbr.rel (%p271) target = $region52
        $region51: #{tpu_custom_call.1} parent=39 // pred_region
          %275 = dma.done [#allocation6], 192
        $region52: #{tpu_custom_call.1} parent=39 // pred_fallthru
          _
        // Predicated region
        $region53: #{tpu_custom_call.1} parent=39 // pred_check
          %p276 = pneg %p108
        $region54: #{tpu_custom_call.1} parent=39 // pred_check_branch
          %278 = sbr.rel (%p276) target = $region56
        $region55: #{tpu_custom_call.1} parent=39 // pred_region
          %280 = dma.done [#allocation9], 36864
        $region56: #{tpu_custom_call.1} parent=39 // pred_fallthru
          _
        // Predicated region
        $region57: #{tpu_custom_call.1} parent=39 // pred_check
          %p281 = pneg %p129
        $region58: #{tpu_custom_call.1} parent=39 // pred_check_branch
          %283 = sbr.rel (%p281) target = $region60
        $region59: #{tpu_custom_call.1} parent=39 // pred_region
          %285 = dma.done [#allocation9], 48
        $region60: #{tpu_custom_call.1} parent=39 // pred_fallthru
          _
        %s286 = sand.u32 %s32, 1
        %s287 = scalar_lea.sflag [#allocation3], %s286
        %s288 = sand.u32 %s32, 1
        %s289 = smul.addr %s288, 384
        %s290 = scalar_lea.vmem [#allocation2], %s289
        %p291 = pneg %p45
        %p292 = pneg %p42
        %p293 = pneg %p66
        %p294 = pneg %p63
        %p295 = pneg %p87
        %p296 = pneg %p84
        %p297 = pneg %p108
        %p298 = pneg %p105
        %p299 = pneg %p129
        %p300 = pneg %p126
        %p301 = pneg %p155
        %p302 = pneg %p152
        %s303 = sand.u32 %s142, 1
        %s304 = scalar_lea.sflag [#allocation4], %s303
        %s305 = sand.u32 %s142, 1
        %s306 = smul.addr %s305, 384
        %s307 = scalar_lea.vmem [#allocation11], %s306
        %s308 = smul.u32 16, %s24
        %s309 = smul.u32 16, %s24
        %v310 = vld [vmem:[%s260] sm:$0xff]
        %v311 = vld [vmem:[%s260 + $0x8] sm:$0xff]
        %v312 = vld [vmem:[%s260 + $0x10] sm:$0xff]
        %v313 = vld [vmem:[%s260 + $0x18] sm:$0xff]
        %v314 = vld [vmem:[%s260 + $0x20] sm:$0xff]
        %v315 = vld [vmem:[%s260 + $0x28] sm:$0xff]
        %v316 = vld [vmem:[%s260 + $0x30] sm:$0xff]
        %v317 = vld [vmem:[%s260 + $0x38] sm:$0xff]
        %v318 = vld [vmem:[%s260 + $0x40] sm:$0xff]
        %v319 = vld [vmem:[%s260 + $0x48] sm:$0xff]
        %v320 = vld [vmem:[%s260 + $0x50] sm:$0xff]
        %v321 = vld [vmem:[%s260 + $0x58] sm:$0xff]
        %v322 = vld [vmem:[%s260 + $0x60] sm:$0xff]
        %v323 = vld [vmem:[%s260 + $0x68] sm:$0xff]
        %v324 = vld [vmem:[%s260 + $0x70] sm:$0xff]
        %v325 = vld [vmem:[%s260 + $0x78] sm:$0xff]
        %v326 = vld [vmem:[%s260 + $0x80] sm:$0xff]
        %v327 = vld [vmem:[%s260 + $0x88] sm:$0xff]
        %v328 = vld [vmem:[%s260 + $0x90] sm:$0xff]
        %v329 = vld [vmem:[%s260 + $0x98] sm:$0xff]
        %v330 = vld [vmem:[%s260 + $0xa0] sm:$0xff]
        %v331 = vld [vmem:[%s260 + $0xa8] sm:$0xff]
        %v332 = vld [vmem:[%s260 + $0xb0] sm:$0xff]
        %v333 = vld [vmem:[%s260 + $0xb8] sm:$0xff]
        %v334 = vld [vmem:[%s260 + $0xc0] sm:$0xff]
        %v335 = vld [vmem:[%s260 + $0xc8] sm:$0xff]
        %v336 = vld [vmem:[%s260 + $0xd0] sm:$0xff]
        %v337 = vld [vmem:[%s260 + $0xd8] sm:$0xff]
        %v338 = vld [vmem:[%s260 + $0xe0] sm:$0xff]
        %v339 = vld [vmem:[%s260 + $0xe8] sm:$0xff]
        %v340 = vld [vmem:[%s260 + $0xf0] sm:$0xff]
        %v341 = vld [vmem:[%s260 + $0xf8] sm:$0xff]
        %v342 = vld [vmem:[%s260 + $0x100] sm:$0xff]
        %v343 = vld [vmem:[%s260 + $0x108] sm:$0xff]
        %v344 = vld [vmem:[%s260 + $0x110] sm:$0xff]
        %v345 = vld [vmem:[%s260 + $0x118] sm:$0xff]
        %v346 = vld [vmem:[%s260 + $0x120] sm:$0xff]
        %v347 = vld [vmem:[%s260 + $0x128] sm:$0xff]
        %v348 = vld [vmem:[%s260 + $0x130] sm:$0xff]
        %v349 = vld [vmem:[%s260 + $0x138] sm:$0xff]
        %v350 = vld [vmem:[%s260 + $0x140] sm:$0xff]
        %v351 = vld [vmem:[%s260 + $0x148] sm:$0xff]
        %v352 = vld [vmem:[%s260 + $0x150] sm:$0xff]
        %v353 = vld [vmem:[%s260 + $0x158] sm:$0xff]
        %v354 = vld [vmem:[%s260 + $0x160] sm:$0xff]
        %v355 = vld [vmem:[%s260 + $0x168] sm:$0xff]
        %v356 = vld [vmem:[%s260 + $0x170] sm:$0xff]
        %v357 = vld [vmem:[%s260 + $0x178] sm:$0xff]
        %v358 = vpack.c.bf16 %v313, %v310
        %v359 = vpack.c.bf16 %v314, %v311
        %v360 = vpack.c.bf16 %v315, %v312
        %v361 = vpack.c.bf16 %v319, %v316
        %v362 = vpack.c.bf16 %v320, %v317
        %v363 = vpack.c.bf16 %v321, %v318
        %v364 = vpack.c.bf16 %v325, %v322
        %v365 = vpack.c.bf16 %v326, %v323
        %v366 = vpack.c.bf16 %v327, %v324
        %v367 = vpack.c.bf16 %v331, %v328
        %v368 = vpack.c.bf16 %v332, %v329
        %v369 = vpack.c.bf16 %v333, %v330
        %v370 = vpack.c.bf16 %v337, %v334
        %v371 = vpack.c.bf16 %v338, %v335
        %v372 = vpack.c.bf16 %v339, %v336
        %v373 = vpack.c.bf16 %v343, %v340
        %v374 = vpack.c.bf16 %v344, %v341
        %v375 = vpack.c.bf16 %v345, %v342
        %v376 = vpack.c.bf16 %v349, %v346
        %v377 = vpack.c.bf16 %v350, %v347
        %v378 = vpack.c.bf16 %v351, %v348
        %v379 = vpack.c.bf16 %v355, %v352
        %v380 = vpack.c.bf16 %v356, %v353
        %v381 = vpack.c.bf16 %v357, %v354
        %v382 = vld [vmem:[#allocation5] sm:$0xff]
        %v383 = vld [vmem:[#allocation5 + $0x8] sm:$0xff]
        %v384 = vld [vmem:[#allocation5 + $0x10] sm:$0xff]
        %v385 = vld [vmem:[#allocation5 + $0x18] sm:$0xff]
        %v386 = vld [vmem:[#allocation5 + $0x20] sm:$0xff]
        %v387 = vld [vmem:[#allocation5 + $0x28] sm:$0xff]
        %v388 = vld [vmem:[#allocation5 + $0x30] sm:$0xff]
        %v389 = vld [vmem:[#allocation5 + $0x38] sm:$0xff]
        %v390 = vld [vmem:[#allocation5 + $0x40] sm:$0xff]
        %v391 = vld [vmem:[#allocation5 + $0x48] sm:$0xff]
        %v392 = vld [vmem:[#allocation5 + $0x50] sm:$0xff]
        %v393 = vld [vmem:[#allocation5 + $0x58] sm:$0xff]
        %v394 = vld [vmem:[#allocation5 + $0x60] sm:$0xff]
        %v395 = vld [vmem:[#allocation5 + $0x68] sm:$0xff]
        %v396 = vld [vmem:[#allocation5 + $0x70] sm:$0xff]
        %v397 = vld [vmem:[#allocation5 + $0x78] sm:$0xff]
        %v398 = vld [vmem:[#allocation5 + $0x80] sm:$0xff]
        %v399 = vld [vmem:[#allocation5 + $0x88] sm:$0xff]
        %v400 = vld [vmem:[#allocation5 + $0x90] sm:$0xff]
        %v401 = vld [vmem:[#allocation5 + $0x98] sm:$0xff]
        %v402 = vld [vmem:[#allocation5 + $0xa0] sm:$0xff]
        %v403 = vld [vmem:[#allocation5 + $0xa8] sm:$0xff]
        %v404 = vld [vmem:[#allocation5 + $0xb0] sm:$0xff]
        %v405 = vld [vmem:[#allocation5 + $0xb8] sm:$0xff]
        %v406 = vld [vmem:[#allocation5 + $0xc0] sm:$0xff]
        %v407 = vld [vmem:[#allocation5 + $0xc8] sm:$0xff]
        %v408 = vld [vmem:[#allocation5 + $0xd0] sm:$0xff]
        %v409 = vld [vmem:[#allocation5 + $0xd8] sm:$0xff]
        %v410 = vld [vmem:[#allocation5 + $0xe0] sm:$0xff]
        %v411 = vld [vmem:[#allocation5 + $0xe8] sm:$0xff]
        %v412 = vld [vmem:[#allocation5 + $0xf0] sm:$0xff]
        %v413 = vld [vmem:[#allocation5 + $0xf8] sm:$0xff]
        %v414 = vld [vmem:[#allocation5 + $0x100] sm:$0xff]
        %v415 = vld [vmem:[#allocation5 + $0x108] sm:$0xff]
        %v416 = vld [vmem:[#allocation5 + $0x110] sm:$0xff]
        %v417 = vld [vmem:[#allocation5 + $0x118] sm:$0xff]
        %v418 = vld [vmem:[#allocation5 + $0x120] sm:$0xff]
        %v419 = vld [vmem:[#allocation5 + $0x128] sm:$0xff]
        %v420 = vld [vmem:[#allocation5 + $0x130] sm:$0xff]
        %v421 = vld [vmem:[#allocation5 + $0x138] sm:$0xff]
        %v422 = vld [vmem:[#allocation5 + $0x140] sm:$0xff]
        %v423 = vld [vmem:[#allocation5 + $0x148] sm:$0xff]
        %v424 = vld [vmem:[#allocation5 + $0x150] sm:$0xff]
        %v425 = vld [vmem:[#allocation5 + $0x158] sm:$0xff]
        %v426 = vld [vmem:[#allocation5 + $0x160] sm:$0xff]
        %v427 = vld [vmem:[#allocation5 + $0x168] sm:$0xff]
        %v428 = vld [vmem:[#allocation5 + $0x170] sm:$0xff]
        %v429 = vld [vmem:[#allocation5 + $0x178] sm:$0xff]
        %v430 = vld [vmem:[#allocation5 + $0x180] sm:$0xff]
        %v431 = vld [vmem:[#allocation5 + $0x188] sm:$0xff]
        %v432 = vld [vmem:[#allocation5 + $0x190] sm:$0xff]
        %v433 = vld [vmem:[#allocation5 + $0x198] sm:$0xff]
        %v434 = vld [vmem:[#allocation5 + $0x1a0] sm:$0xff]
        %v435 = vld [vmem:[#allocation5 + $0x1a8] sm:$0xff]
        %v436 = vld [vmem:[#allocation5 + $0x1b0] sm:$0xff]
        %v437 = vld [vmem:[#allocation5 + $0x1b8] sm:$0xff]
        %v438 = vld [vmem:[#allocation5 + $0x1c0] sm:$0xff]
        %v439 = vld [vmem:[#allocation5 + $0x1c8] sm:$0xff]
        %v440 = vld [vmem:[#allocation5 + $0x1d0] sm:$0xff]
        %v441 = vld [vmem:[#allocation5 + $0x1d8] sm:$0xff]
        %v442 = vld [vmem:[#allocation5 + $0x1e0] sm:$0xff]
        %v443 = vld [vmem:[#allocation5 + $0x1e8] sm:$0xff]
        %v444 = vld [vmem:[#allocation5 + $0x1f0] sm:$0xff]
        %v445 = vld [vmem:[#allocation5 + $0x1f8] sm:$0xff]
        %v446 = vld [vmem:[#allocation5 + $0x200] sm:$0xff]
        %v447 = vld [vmem:[#allocation5 + $0x208] sm:$0xff]
        %v448 = vld [vmem:[#allocation5 + $0x210] sm:$0xff]
        %v449 = vld [vmem:[#allocation5 + $0x218] sm:$0xff]
        %v450 = vld [vmem:[#allocation5 + $0x220] sm:$0xff]
        %v451 = vld [vmem:[#allocation5 + $0x228] sm:$0xff]
        %v452 = vld [vmem:[#allocation5 + $0x230] sm:$0xff]
        %v453 = vld [vmem:[#allocation5 + $0x238] sm:$0xff]
        %v454 = vld [vmem:[#allocation5 + $0x240] sm:$0xff]
        %v455 = vld [vmem:[#allocation5 + $0x248] sm:$0xff]
        %v456 = vld [vmem:[#allocation5 + $0x250] sm:$0xff]
        %v457 = vld [vmem:[#allocation5 + $0x258] sm:$0xff]
        %v458 = vld [vmem:[#allocation5 + $0x260] sm:$0xff]
        %v459 = vld [vmem:[#allocation5 + $0x268] sm:$0xff]
        %v460 = vld [vmem:[#allocation5 + $0x270] sm:$0xff]
        %v461 = vld [vmem:[#allocation5 + $0x278] sm:$0xff]
        %v462 = vld [vmem:[#allocation5 + $0x280] sm:$0xff]
        %v463 = vld [vmem:[#allocation5 + $0x288] sm:$0xff]
        %v464 = vld [vmem:[#allocation5 + $0x290] sm:$0xff]
        %v465 = vld [vmem:[#allocation5 + $0x298] sm:$0xff]
        %v466 = vld [vmem:[#allocation5 + $0x2a0] sm:$0xff]
        %v467 = vld [vmem:[#allocation5 + $0x2a8] sm:$0xff]
        %v468 = vld [vmem:[#allocation5 + $0x2b0] sm:$0xff]
        %v469 = vld [vmem:[#allocation5 + $0x2b8] sm:$0xff]
        %v470 = vld [vmem:[#allocation5 + $0x2c0] sm:$0xff]
        %v471 = vld [vmem:[#allocation5 + $0x2c8] sm:$0xff]
        %v472 = vld [vmem:[#allocation5 + $0x2d0] sm:$0xff]
        %v473 = vld [vmem:[#allocation5 + $0x2d8] sm:$0xff]
        %v474 = vld [vmem:[#allocation5 + $0x2e0] sm:$0xff]
        %v475 = vld [vmem:[#allocation5 + $0x2e8] sm:$0xff]
        %v476 = vld [vmem:[#allocation5 + $0x2f0] sm:$0xff]
        %v477 = vld [vmem:[#allocation5 + $0x2f8] sm:$0xff]
        %v478 = vld [vmem:[#allocation5 + $0x300] sm:$0xff]
        %v479 = vld [vmem:[#allocation5 + $0x308] sm:$0xff]
        %v480 = vld [vmem:[#allocation5 + $0x310] sm:$0xff]
        %v481 = vld [vmem:[#allocation5 + $0x318] sm:$0xff]
        %v482 = vld [vmem:[#allocation5 + $0x320] sm:$0xff]
        %v483 = vld [vmem:[#allocation5 + $0x328] sm:$0xff]
        %v484 = vld [vmem:[#allocation5 + $0x330] sm:$0xff]
        %v485 = vld [vmem:[#allocation5 + $0x338] sm:$0xff]
        %v486 = vld [vmem:[#allocation5 + $0x340] sm:$0xff]
        %v487 = vld [vmem:[#allocation5 + $0x348] sm:$0xff]
        %v488 = vld [vmem:[#allocation5 + $0x350] sm:$0xff]
        %v489 = vld [vmem:[#allocation5 + $0x358] sm:$0xff]
        %v490 = vld [vmem:[#allocation5 + $0x360] sm:$0xff]
        %v491 = vld [vmem:[#allocation5 + $0x368] sm:$0xff]
        %v492 = vld [vmem:[#allocation5 + $0x370] sm:$0xff]
        %v493 = vld [vmem:[#allocation5 + $0x378] sm:$0xff]
        %v494 = vld [vmem:[#allocation5 + $0x380] sm:$0xff]
        %v495 = vld [vmem:[#allocation5 + $0x388] sm:$0xff]
        %v496 = vld [vmem:[#allocation5 + $0x390] sm:$0xff]
        %v497 = vld [vmem:[#allocation5 + $0x398] sm:$0xff]
        %v498 = vld [vmem:[#allocation5 + $0x3a0] sm:$0xff]
        %v499 = vld [vmem:[#allocation5 + $0x3a8] sm:$0xff]
        %v500 = vld [vmem:[#allocation5 + $0x3b0] sm:$0xff]
        %v501 = vld [vmem:[#allocation5 + $0x3b8] sm:$0xff]
        %v502 = vld [vmem:[#allocation5 + $0x3c0] sm:$0xff]
        %v503 = vld [vmem:[#allocation5 + $0x3c8] sm:$0xff]
        %v504 = vld [vmem:[#allocation5 + $0x3d0] sm:$0xff]
        %v505 = vld [vmem:[#allocation5 + $0x3d8] sm:$0xff]
        %v506 = vld [vmem:[#allocation5 + $0x3e0] sm:$0xff]
        %v507 = vld [vmem:[#allocation5 + $0x3e8] sm:$0xff]
        %v508 = vld [vmem:[#allocation5 + $0x3f0] sm:$0xff]
        %v509 = vld [vmem:[#allocation5 + $0x3f8] sm:$0xff]
        %v510 = vld [vmem:[#allocation5 + $0x400] sm:$0xff]
        %v511 = vld [vmem:[#allocation5 + $0x408] sm:$0xff]
        %v512 = vld [vmem:[#allocation5 + $0x410] sm:$0xff]
        %v513 = vld [vmem:[#allocation5 + $0x418] sm:$0xff]
        %v514 = vld [vmem:[#allocation5 + $0x420] sm:$0xff]
        %v515 = vld [vmem:[#allocation5 + $0x428] sm:$0xff]
        %v516 = vld [vmem:[#allocation5 + $0x430] sm:$0xff]
        %v517 = vld [vmem:[#allocation5 + $0x438] sm:$0xff]
        %v518 = vld [vmem:[#allocation5 + $0x440] sm:$0xff]
        %v519 = vld [vmem:[#allocation5 + $0x448] sm:$0xff]
        %v520 = vld [vmem:[#allocation5 + $0x450] sm:$0xff]
        %v521 = vld [vmem:[#allocation5 + $0x458] sm:$0xff]
        %v522 = vld [vmem:[#allocation5 + $0x460] sm:$0xff]
        %v523 = vld [vmem:[#allocation5 + $0x468] sm:$0xff]
        %v524 = vld [vmem:[#allocation5 + $0x470] sm:$0xff]
        %v525 = vld [vmem:[#allocation5 + $0x478] sm:$0xff]
        %v526 = vld [vmem:[#allocation5 + $0x480] sm:$0xff]
        %v527 = vld [vmem:[#allocation5 + $0x488] sm:$0xff]
        %v528 = vld [vmem:[#allocation5 + $0x490] sm:$0xff]
        %v529 = vld [vmem:[#allocation5 + $0x498] sm:$0xff]
        %v530 = vld [vmem:[#allocation5 + $0x4a0] sm:$0xff]
        %v531 = vld [vmem:[#allocation5 + $0x4a8] sm:$0xff]
        %v532 = vld [vmem:[#allocation5 + $0x4b0] sm:$0xff]
        %v533 = vld [vmem:[#allocation5 + $0x4b8] sm:$0xff]
        %v534 = vld [vmem:[#allocation5 + $0x4c0] sm:$0xff]
        %v535 = vld [vmem:[#allocation5 + $0x4c8] sm:$0xff]
        %v536 = vld [vmem:[#allocation5 + $0x4d0] sm:$0xff]
        %v537 = vld [vmem:[#allocation5 + $0x4d8] sm:$0xff]
        %v538 = vld [vmem:[#allocation5 + $0x4e0] sm:$0xff]
        %v539 = vld [vmem:[#allocation5 + $0x4e8] sm:$0xff]
        %v540 = vld [vmem:[#allocation5 + $0x4f0] sm:$0xff]
        %v541 = vld [vmem:[#allocation5 + $0x4f8] sm:$0xff]
        %v542 = vld [vmem:[#allocation5 + $0x500] sm:$0xff]
        %v543 = vld [vmem:[#allocation5 + $0x508] sm:$0xff]
        %v544 = vld [vmem:[#allocation5 + $0x510] sm:$0xff]
        %v545 = vld [vmem:[#allocation5 + $0x518] sm:$0xff]
        %v546 = vld [vmem:[#allocation5 + $0x520] sm:$0xff]
        %v547 = vld [vmem:[#allocation5 + $0x528] sm:$0xff]
        %v548 = vld [vmem:[#allocation5 + $0x530] sm:$0xff]
        %v549 = vld [vmem:[#allocation5 + $0x538] sm:$0xff]
        %v550 = vld [vmem:[#allocation5 + $0x540] sm:$0xff]
        %v551 = vld [vmem:[#allocation5 + $0x548] sm:$0xff]
        %v552 = vld [vmem:[#allocation5 + $0x550] sm:$0xff]
        %v553 = vld [vmem:[#allocation5 + $0x558] sm:$0xff]
        %v554 = vld [vmem:[#allocation5 + $0x560] sm:$0xff]
        %v555 = vld [vmem:[#allocation5 + $0x568] sm:$0xff]
        %v556 = vld [vmem:[#allocation5 + $0x570] sm:$0xff]
        %v557 = vld [vmem:[#allocation5 + $0x578] sm:$0xff]
        %v558 = vld [vmem:[#allocation5 + $0x580] sm:$0xff]
        %v559 = vld [vmem:[#allocation5 + $0x588] sm:$0xff]
        %v560 = vld [vmem:[#allocation5 + $0x590] sm:$0xff]
        %v561 = vld [vmem:[#allocation5 + $0x598] sm:$0xff]
        %v562 = vld [vmem:[#allocation5 + $0x5a0] sm:$0xff]
        %v563 = vld [vmem:[#allocation5 + $0x5a8] sm:$0xff]
        %v564 = vld [vmem:[#allocation5 + $0x5b0] sm:$0xff]
        %v565 = vld [vmem:[#allocation5 + $0x5b8] sm:$0xff]
        %v566 = vld [vmem:[#allocation5 + $0x5c0] sm:$0xff]
        %v567 = vld [vmem:[#allocation5 + $0x5c8] sm:$0xff]
        %v568 = vld [vmem:[#allocation5 + $0x5d0] sm:$0xff]
        %v569 = vld [vmem:[#allocation5 + $0x5d8] sm:$0xff]
        %v570 = vld [vmem:[#allocation5 + $0x5e0] sm:$0xff]
        %v571 = vld [vmem:[#allocation5 + $0x5e8] sm:$0xff]
        %v572 = vld [vmem:[#allocation5 + $0x5f0] sm:$0xff]
        %v573 = vld [vmem:[#allocation5 + $0x5f8] sm:$0xff]
        %v574 = vld [vmem:[#allocation5 + $0x600] sm:$0xff]
        %v575 = vld [vmem:[#allocation5 + $0x608] sm:$0xff]
        %v576 = vld [vmem:[#allocation5 + $0x610] sm:$0xff]
        %v577 = vld [vmem:[#allocation5 + $0x618] sm:$0xff]
        %v578 = vld [vmem:[#allocation5 + $0x620] sm:$0xff]
        %v579 = vld [vmem:[#allocation5 + $0x628] sm:$0xff]
        %v580 = vld [vmem:[#allocation5 + $0x630] sm:$0xff]
        %v581 = vld [vmem:[#allocation5 + $0x638] sm:$0xff]
        %v582 = vld [vmem:[#allocation5 + $0x640] sm:$0xff]
        %v583 = vld [vmem:[#allocation5 + $0x648] sm:$0xff]
        %v584 = vld [vmem:[#allocation5 + $0x650] sm:$0xff]
        %v585 = vld [vmem:[#allocation5 + $0x658] sm:$0xff]
        %v586 = vld [vmem:[#allocation5 + $0x660] sm:$0xff]
        %v587 = vld [vmem:[#allocation5 + $0x668] sm:$0xff]
        %v588 = vld [vmem:[#allocation5 + $0x670] sm:$0xff]
        %v589 = vld [vmem:[#allocation5 + $0x678] sm:$0xff]
        %v590 = vld [vmem:[#allocation5 + $0x680] sm:$0xff]
        %v591 = vld [vmem:[#allocation5 + $0x688] sm:$0xff]
        %v592 = vld [vmem:[#allocation5 + $0x690] sm:$0xff]
        %v593 = vld [vmem:[#allocation5 + $0x698] sm:$0xff]
        %v594 = vld [vmem:[#allocation5 + $0x6a0] sm:$0xff]
        %v595 = vld [vmem:[#allocation5 + $0x6a8] sm:$0xff]
        %v596 = vld [vmem:[#allocation5 + $0x6b0] sm:$0xff]
        %v597 = vld [vmem:[#allocation5 + $0x6b8] sm:$0xff]
        %v598 = vld [vmem:[#allocation5 + $0x6c0] sm:$0xff]
        %v599 = vld [vmem:[#allocation5 + $0x6c8] sm:$0xff]
        %v600 = vld [vmem:[#allocation5 + $0x6d0] sm:$0xff]
        %v601 = vld [vmem:[#allocation5 + $0x6d8] sm:$0xff]
        %v602 = vld [vmem:[#allocation5 + $0x6e0] sm:$0xff]
        %v603 = vld [vmem:[#allocation5 + $0x6e8] sm:$0xff]
        %v604 = vld [vmem:[#allocation5 + $0x6f0] sm:$0xff]
        %v605 = vld [vmem:[#allocation5 + $0x6f8] sm:$0xff]
        %v606 = vld [vmem:[#allocation5 + $0x700] sm:$0xff]
        %v607 = vld [vmem:[#allocation5 + $0x708] sm:$0xff]
        %v608 = vld [vmem:[#allocation5 + $0x710] sm:$0xff]
        %v609 = vld [vmem:[#allocation5 + $0x718] sm:$0xff]
        %v610 = vld [vmem:[#allocation5 + $0x720] sm:$0xff]
        %v611 = vld [vmem:[#allocation5 + $0x728] sm:$0xff]
        %v612 = vld [vmem:[#allocation5 + $0x730] sm:$0xff]
        %v613 = vld [vmem:[#allocation5 + $0x738] sm:$0xff]
        %v614 = vld [vmem:[#allocation5 + $0x740] sm:$0xff]
        %v615 = vld [vmem:[#allocation5 + $0x748] sm:$0xff]
        %v616 = vld [vmem:[#allocation5 + $0x750] sm:$0xff]
        %v617 = vld [vmem:[#allocation5 + $0x758] sm:$0xff]
        %v618 = vld [vmem:[#allocation5 + $0x760] sm:$0xff]
        %v619 = vld [vmem:[#allocation5 + $0x768] sm:$0xff]
        %v620 = vld [vmem:[#allocation5 + $0x770] sm:$0xff]
        %v621 = vld [vmem:[#allocation5 + $0x778] sm:$0xff]
        %v622 = vld [vmem:[#allocation5 + $0x780] sm:$0xff]
        %v623 = vld [vmem:[#allocation5 + $0x788] sm:$0xff]
        %v624 = vld [vmem:[#allocation5 + $0x790] sm:$0xff]
        %v625 = vld [vmem:[#allocation5 + $0x798] sm:$0xff]
        %v626 = vld [vmem:[#allocation5 + $0x7a0] sm:$0xff]
        %v627 = vld [vmem:[#allocation5 + $0x7a8] sm:$0xff]
        %v628 = vld [vmem:[#allocation5 + $0x7b0] sm:$0xff]
        %v629 = vld [vmem:[#allocation5 + $0x7b8] sm:$0xff]
        %v630 = vld [vmem:[#allocation5 + $0x7c0] sm:$0xff]
        %v631 = vld [vmem:[#allocation5 + $0x7c8] sm:$0xff]
        %v632 = vld [vmem:[#allocation5 + $0x7d0] sm:$0xff]
        %v633 = vld [vmem:[#allocation5 + $0x7d8] sm:$0xff]
        %v634 = vld [vmem:[#allocation5 + $0x7e0] sm:$0xff]
        %v635 = vld [vmem:[#allocation5 + $0x7e8] sm:$0xff]
        %v636 = vld [vmem:[#allocation5 + $0x7f0] sm:$0xff]
        %v637 = vld [vmem:[#allocation5 + $0x7f8] sm:$0xff]
        %v638 = vld [vmem:[#allocation5 + $0x800] sm:$0xff]
        %v639 = vld [vmem:[#allocation5 + $0x808] sm:$0xff]
        %v640 = vld [vmem:[#allocation5 + $0x810] sm:$0xff]
        %v641 = vld [vmem:[#allocation5 + $0x818] sm:$0xff]
        %v642 = vld [vmem:[#allocation5 + $0x820] sm:$0xff]
        %v643 = vld [vmem:[#allocation5 + $0x828] sm:$0xff]
        %v644 = vld [vmem:[#allocation5 + $0x830] sm:$0xff]
        %v645 = vld [vmem:[#allocation5 + $0x838] sm:$0xff]
        %v646 = vld [vmem:[#allocation5 + $0x840] sm:$0xff]
        %v647 = vld [vmem:[#allocation5 + $0x848] sm:$0xff]
        %v648 = vld [vmem:[#allocation5 + $0x850] sm:$0xff]
        %v649 = vld [vmem:[#allocation5 + $0x858] sm:$0xff]
        %v650 = vld [vmem:[#allocation5 + $0x860] sm:$0xff]
        %v651 = vld [vmem:[#allocation5 + $0x868] sm:$0xff]
        %v652 = vld [vmem:[#allocation5 + $0x870] sm:$0xff]
        %v653 = vld [vmem:[#allocation5 + $0x878] sm:$0xff]
        %v654 = vld [vmem:[#allocation5 + $0x880] sm:$0xff]
        %v655 = vld [vmem:[#allocation5 + $0x888] sm:$0xff]
        %v656 = vld [vmem:[#allocation5 + $0x890] sm:$0xff]
        %v657 = vld [vmem:[#allocation5 + $0x898] sm:$0xff]
        %v658 = vld [vmem:[#allocation5 + $0x8a0] sm:$0xff]
        %v659 = vld [vmem:[#allocation5 + $0x8a8] sm:$0xff]
        %v660 = vld [vmem:[#allocation5 + $0x8b0] sm:$0xff]
        %v661 = vld [vmem:[#allocation5 + $0x8b8] sm:$0xff]
        %v662 = vld [vmem:[#allocation5 + $0x8c0] sm:$0xff]
        %v663 = vld [vmem:[#allocation5 + $0x8c8] sm:$0xff]
        %v664 = vld [vmem:[#allocation5 + $0x8d0] sm:$0xff]
        %v665 = vld [vmem:[#allocation5 + $0x8d8] sm:$0xff]
        %v666 = vld [vmem:[#allocation5 + $0x8e0] sm:$0xff]
        %v667 = vld [vmem:[#allocation5 + $0x8e8] sm:$0xff]
        %v668 = vld [vmem:[#allocation5 + $0x8f0] sm:$0xff]
        %v669 = vld [vmem:[#allocation5 + $0x8f8] sm:$0xff]
        %v670 = vld [vmem:[#allocation7] sm:$0xff]
        %v671 = vld [vmem:[#allocation7 + $0x8] sm:$0xf]
        %v674 = vperm.slane %v670, 0
        %v675 = vperm.slane %v670, 1
        %v676 = vperm.slane %v670, 2
        %v677 = vperm.slane %v670, 3
        %v678 = vperm.slane %v670, 4
        %v679 = vperm.slane %v670, 5
        %v680 = vperm.slane %v670, 6
        %v681 = vperm.slane %v670, 7
        %v682 = vperm.slane %v671, 0
        %v683 = vperm.slane %v671, 1
        %v684 = vperm.slane %v671, 2
        %v685 = vperm.slane %v671, 3
        %v986 = vunpack.c.l.b16 %v382
        %v987 = vunpack.c.h.b16 %v382
        %v988 = vunpack.c.l.b16 %v383
        %v989 = vunpack.c.h.b16 %v383
        %v990 = vunpack.c.l.b16 %v384
        %v991 = vunpack.c.h.b16 %v384
        %v992 = vunpack.c.l.b16 %v385
        %v993 = vunpack.c.h.b16 %v385
        %v994 = vunpack.c.l.b16 %v386
        %v995 = vunpack.c.h.b16 %v386
        %v996 = vunpack.c.l.b16 %v387
        %v997 = vunpack.c.h.b16 %v387
        %v998 = vunpack.c.l.b16 %v388
        %v999 = vunpack.c.h.b16 %v388
        %v1000 = vunpack.c.l.b16 %v389
        %v1001 = vunpack.c.h.b16 %v389
        %v1002 = vunpack.c.l.b16 %v390
        %v1003 = vunpack.c.h.b16 %v390
        %v1004 = vunpack.c.l.b16 %v391
        %v1005 = vunpack.c.h.b16 %v391
        %v1006 = vunpack.c.l.b16 %v392
        %v1007 = vunpack.c.h.b16 %v392
        %v1008 = vunpack.c.l.b16 %v393
        %v1009 = vunpack.c.h.b16 %v393
        %v1010 = vunpack.c.l.b16 %v394
        %v1011 = vunpack.c.h.b16 %v394
        %v1012 = vunpack.c.l.b16 %v395
        %v1013 = vunpack.c.h.b16 %v395
        %v1014 = vunpack.c.l.b16 %v396
        %v1015 = vunpack.c.h.b16 %v396
        %v1016 = vunpack.c.l.b16 %v397
        %v1017 = vunpack.c.h.b16 %v397
        %v1018 = vunpack.c.l.b16 %v398
        %v1019 = vunpack.c.h.b16 %v398
        %v1020 = vunpack.c.l.b16 %v399
        %v1021 = vunpack.c.h.b16 %v399
        %v1022 = vunpack.c.l.b16 %v400
        %v1023 = vunpack.c.h.b16 %v400
        %v1024 = vunpack.c.l.b16 %v401
        %v1025 = vunpack.c.h.b16 %v401
        %v1026 = vunpack.c.l.b16 %v402
        %v1027 = vunpack.c.h.b16 %v402
        %v1028 = vunpack.c.l.b16 %v403
        %v1029 = vunpack.c.h.b16 %v403
        %v1030 = vunpack.c.l.b16 %v404
        %v1031 = vunpack.c.h.b16 %v404
        %v1032 = vunpack.c.l.b16 %v405
        %v1033 = vunpack.c.h.b16 %v405
        %v1034 = vunpack.c.l.b16 %v406
        %v1035 = vunpack.c.h.b16 %v406
        %v1036 = vunpack.c.l.b16 %v407
        %v1037 = vunpack.c.h.b16 %v407
        %v1038 = vunpack.c.l.b16 %v408
        %v1039 = vunpack.c.h.b16 %v408
        %v1040 = vunpack.c.l.b16 %v409
        %v1041 = vunpack.c.h.b16 %v409
        %v1042 = vunpack.c.l.b16 %v410
        %v1043 = vunpack.c.h.b16 %v410
        %v1044 = vunpack.c.l.b16 %v411
        %v1045 = vunpack.c.h.b16 %v411
        %v1046 = vunpack.c.l.b16 %v412
        %v1047 = vunpack.c.h.b16 %v412
        %v1048 = vunpack.c.l.b16 %v413
        %v1049 = vunpack.c.h.b16 %v413
        %v1050 = vunpack.c.l.b16 %v414
        %v1051 = vunpack.c.h.b16 %v414
        %v1052 = vunpack.c.l.b16 %v415
        %v1053 = vunpack.c.h.b16 %v415
        %v1054 = vunpack.c.l.b16 %v416
        %v1055 = vunpack.c.h.b16 %v416
        %v1056 = vunpack.c.l.b16 %v417
        %v1057 = vunpack.c.h.b16 %v417
        %v1058 = vunpack.c.l.b16 %v418
        %v1059 = vunpack.c.h.b16 %v418
        %v1060 = vunpack.c.l.b16 %v419
        %v1061 = vunpack.c.h.b16 %v419
        %v1062 = vunpack.c.l.b16 %v420
        %v1063 = vunpack.c.h.b16 %v420
        %v1064 = vunpack.c.l.b16 %v421
        %v1065 = vunpack.c.h.b16 %v421
        %v1066 = vunpack.c.l.b16 %v422
        %v1067 = vunpack.c.h.b16 %v422
        %v1068 = vunpack.c.l.b16 %v423
        %v1069 = vunpack.c.h.b16 %v423
        %v1070 = vunpack.c.l.b16 %v424
        %v1071 = vunpack.c.h.b16 %v424
        %v1072 = vunpack.c.l.b16 %v425
        %v1073 = vunpack.c.h.b16 %v425
        %v1074 = vunpack.c.l.b16 %v426
        %v1075 = vunpack.c.h.b16 %v426
        %v1076 = vunpack.c.l.b16 %v427
        %v1077 = vunpack.c.h.b16 %v427
        %v1078 = vunpack.c.l.b16 %v428
        %v1079 = vunpack.c.h.b16 %v428
        %v1080 = vunpack.c.l.b16 %v429
        %v1081 = vunpack.c.h.b16 %v429
        %v1082 = vunpack.c.l.b16 %v430
        %v1083 = vunpack.c.h.b16 %v430
        %v1084 = vunpack.c.l.b16 %v431
        %v1085 = vunpack.c.h.b16 %v431
        %v1086 = vunpack.c.l.b16 %v432
        %v1087 = vunpack.c.h.b16 %v432
        %v1088 = vunpack.c.l.b16 %v433
        %v1089 = vunpack.c.h.b16 %v433
        %v1090 = vunpack.c.l.b16 %v434
        %v1091 = vunpack.c.h.b16 %v434
        %v1092 = vunpack.c.l.b16 %v435
        %v1093 = vunpack.c.h.b16 %v435
        %v1094 = vunpack.c.l.b16 %v436
        %v1095 = vunpack.c.h.b16 %v436
        %v1096 = vunpack.c.l.b16 %v437
        %v1097 = vunpack.c.h.b16 %v437
        %v1098 = vunpack.c.l.b16 %v438
        %v1099 = vunpack.c.h.b16 %v438
        %v1100 = vunpack.c.l.b16 %v439
        %v1101 = vunpack.c.h.b16 %v439
        %v1102 = vunpack.c.l.b16 %v440
        %v1103 = vunpack.c.h.b16 %v440
        %v1104 = vunpack.c.l.b16 %v441
        %v1105 = vunpack.c.h.b16 %v441
        %v1106 = vunpack.c.l.b16 %v442
        %v1107 = vunpack.c.h.b16 %v442
        %v1108 = vunpack.c.l.b16 %v443
        %v1109 = vunpack.c.h.b16 %v443
        %v1110 = vunpack.c.l.b16 %v444
        %v1111 = vunpack.c.h.b16 %v444
        %v1112 = vunpack.c.l.b16 %v445
        %v1113 = vunpack.c.h.b16 %v445
        %v1114 = vunpack.c.l.b16 %v446
        %v1115 = vunpack.c.h.b16 %v446
        %v1116 = vunpack.c.l.b16 %v447
        %v1117 = vunpack.c.h.b16 %v447
        %v1118 = vunpack.c.l.b16 %v448
        %v1119 = vunpack.c.h.b16 %v448
        %v1120 = vunpack.c.l.b16 %v449
        %v1121 = vunpack.c.h.b16 %v449
        %v1122 = vunpack.c.l.b16 %v450
        %v1123 = vunpack.c.h.b16 %v450
        %v1124 = vunpack.c.l.b16 %v451
        %v1125 = vunpack.c.h.b16 %v451
        %v1126 = vunpack.c.l.b16 %v452
        %v1127 = vunpack.c.h.b16 %v452
        %v1128 = vunpack.c.l.b16 %v453
        %v1129 = vunpack.c.h.b16 %v453
        %v1130 = vunpack.c.l.b16 %v454
        %v1131 = vunpack.c.h.b16 %v454
        %v1132 = vunpack.c.l.b16 %v455
        %v1133 = vunpack.c.h.b16 %v455
        %v1134 = vunpack.c.l.b16 %v456
        %v1135 = vunpack.c.h.b16 %v456
        %v1136 = vunpack.c.l.b16 %v457
        %v1137 = vunpack.c.h.b16 %v457
        %v1138 = vunpack.c.l.b16 %v458
        %v1139 = vunpack.c.h.b16 %v458
        %v1140 = vunpack.c.l.b16 %v459
        %v1141 = vunpack.c.h.b16 %v459
        %v1142 = vunpack.c.l.b16 %v460
        %v1143 = vunpack.c.h.b16 %v460
        %v1144 = vunpack.c.l.b16 %v461
        %v1145 = vunpack.c.h.b16 %v461
        %v1146 = vunpack.c.l.b16 %v462
        %v1147 = vunpack.c.h.b16 %v462
        %v1148 = vunpack.c.l.b16 %v463
        %v1149 = vunpack.c.h.b16 %v463
        %v1150 = vunpack.c.l.b16 %v464
        %v1151 = vunpack.c.h.b16 %v464
        %v1152 = vunpack.c.l.b16 %v465
        %v1153 = vunpack.c.h.b16 %v465
        %v1154 = vunpack.c.l.b16 %v466
        %v1155 = vunpack.c.h.b16 %v466
        %v1156 = vunpack.c.l.b16 %v467
        %v1157 = vunpack.c.h.b16 %v467
        %v1158 = vunpack.c.l.b16 %v468
        %v1159 = vunpack.c.h.b16 %v468
        %v1160 = vunpack.c.l.b16 %v469
        %v1161 = vunpack.c.h.b16 %v469
        %v1162 = vunpack.c.l.b16 %v470
        %v1163 = vunpack.c.h.b16 %v470
        %v1164 = vunpack.c.l.b16 %v471
        %v1165 = vunpack.c.h.b16 %v471
        %v1166 = vunpack.c.l.b16 %v472
        %v1167 = vunpack.c.h.b16 %v472
        %v1168 = vunpack.c.l.b16 %v473
        %v1169 = vunpack.c.h.b16 %v473
        %v1170 = vunpack.c.l.b16 %v474
        %v1171 = vunpack.c.h.b16 %v474
        %v1172 = vunpack.c.l.b16 %v475
        %v1173 = vunpack.c.h.b16 %v475
        %v1174 = vunpack.c.l.b16 %v476
        %v1175 = vunpack.c.h.b16 %v476
        %v1176 = vunpack.c.l.b16 %v477
        %v1177 = vunpack.c.h.b16 %v477
        %v1178 = vunpack.c.l.b16 %v478
        %v1179 = vunpack.c.h.b16 %v478
        %v1180 = vunpack.c.l.b16 %v479
        %v1181 = vunpack.c.h.b16 %v479
        %v1182 = vunpack.c.l.b16 %v480
        %v1183 = vunpack.c.h.b16 %v480
        %v1184 = vunpack.c.l.b16 %v481
        %v1185 = vunpack.c.h.b16 %v481
        %v1186 = vunpack.c.l.b16 %v482
        %v1187 = vunpack.c.h.b16 %v482
        %v1188 = vunpack.c.l.b16 %v483
        %v1189 = vunpack.c.h.b16 %v483
        %v1190 = vunpack.c.l.b16 %v484
        %v1191 = vunpack.c.h.b16 %v484
        %v1192 = vunpack.c.l.b16 %v485
        %v1193 = vunpack.c.h.b16 %v485
        %v1194 = vunpack.c.l.b16 %v486
        %v1195 = vunpack.c.h.b16 %v486
        %v1196 = vunpack.c.l.b16 %v487
        %v1197 = vunpack.c.h.b16 %v487
        %v1198 = vunpack.c.l.b16 %v488
        %v1199 = vunpack.c.h.b16 %v488
        %v1200 = vunpack.c.l.b16 %v489
        %v1201 = vunpack.c.h.b16 %v489
        %v1202 = vunpack.c.l.b16 %v490
        %v1203 = vunpack.c.h.b16 %v490
        %v1204 = vunpack.c.l.b16 %v491
        %v1205 = vunpack.c.h.b16 %v491
        %v1206 = vunpack.c.l.b16 %v492
        %v1207 = vunpack.c.h.b16 %v492
        %v1208 = vunpack.c.l.b16 %v493
        %v1209 = vunpack.c.h.b16 %v493
        %v1210 = vunpack.c.l.b16 %v494
        %v1211 = vunpack.c.h.b16 %v494
        %v1212 = vunpack.c.l.b16 %v495
        %v1213 = vunpack.c.h.b16 %v495
        %v1214 = vunpack.c.l.b16 %v496
        %v1215 = vunpack.c.h.b16 %v496
        %v1216 = vunpack.c.l.b16 %v497
        %v1217 = vunpack.c.h.b16 %v497
        %v1218 = vunpack.c.l.b16 %v498
        %v1219 = vunpack.c.h.b16 %v498
        %v1220 = vunpack.c.l.b16 %v499
        %v1221 = vunpack.c.h.b16 %v499
        %v1222 = vunpack.c.l.b16 %v500
        %v1223 = vunpack.c.h.b16 %v500
        %v1224 = vunpack.c.l.b16 %v501
        %v1225 = vunpack.c.h.b16 %v501
        %v1226 = vunpack.c.l.b16 %v502
        %v1227 = vunpack.c.h.b16 %v502
        %v1228 = vunpack.c.l.b16 %v503
        %v1229 = vunpack.c.h.b16 %v503
        %v1230 = vunpack.c.l.b16 %v504
        %v1231 = vunpack.c.h.b16 %v504
        %v1232 = vunpack.c.l.b16 %v505
        %v1233 = vunpack.c.h.b16 %v505
        %v1234 = vunpack.c.l.b16 %v506
        %v1235 = vunpack.c.h.b16 %v506
        %v1236 = vunpack.c.l.b16 %v507
        %v1237 = vunpack.c.h.b16 %v507
        %v1238 = vunpack.c.l.b16 %v508
        %v1239 = vunpack.c.h.b16 %v508
        %v1240 = vunpack.c.l.b16 %v509
        %v1241 = vunpack.c.h.b16 %v509
        %v1242 = vunpack.c.l.b16 %v510
        %v1243 = vunpack.c.h.b16 %v510
        %v1244 = vunpack.c.l.b16 %v511
        %v1245 = vunpack.c.h.b16 %v511
        %v1246 = vunpack.c.l.b16 %v512
        %v1247 = vunpack.c.h.b16 %v512
        %v1248 = vunpack.c.l.b16 %v513
        %v1249 = vunpack.c.h.b16 %v513
        %v1250 = vunpack.c.l.b16 %v514
        %v1251 = vunpack.c.h.b16 %v514
        %v1252 = vunpack.c.l.b16 %v515
        %v1253 = vunpack.c.h.b16 %v515
        %v1254 = vunpack.c.l.b16 %v516
        %v1255 = vunpack.c.h.b16 %v516
        %v1256 = vunpack.c.l.b16 %v517
        %v1257 = vunpack.c.h.b16 %v517
        %v1258 = vunpack.c.l.b16 %v518
        %v1259 = vunpack.c.h.b16 %v518
        %v1260 = vunpack.c.l.b16 %v519
        %v1261 = vunpack.c.h.b16 %v519
        %v1262 = vunpack.c.l.b16 %v520
        %v1263 = vunpack.c.h.b16 %v520
        %v1264 = vunpack.c.l.b16 %v521
        %v1265 = vunpack.c.h.b16 %v521
        %v1266 = vunpack.c.l.b16 %v522
        %v1267 = vunpack.c.h.b16 %v522
        %v1268 = vunpack.c.l.b16 %v523
        %v1269 = vunpack.c.h.b16 %v523
        %v1270 = vunpack.c.l.b16 %v524
        %v1271 = vunpack.c.h.b16 %v524
        %v1272 = vunpack.c.l.b16 %v525
        %v1273 = vunpack.c.h.b16 %v525
        %v1274 = vunpack.c.l.b16 %v526
        %v1275 = vunpack.c.h.b16 %v526
        %v1276 = vunpack.c.l.b16 %v527
        %v1277 = vunpack.c.h.b16 %v527
        %v1278 = vunpack.c.l.b16 %v528
        %v1279 = vunpack.c.h.b16 %v528
        %v1280 = vunpack.c.l.b16 %v529
        %v1281 = vunpack.c.h.b16 %v529
        %v1282 = vunpack.c.l.b16 %v530
        %v1283 = vunpack.c.h.b16 %v530
        %v1284 = vunpack.c.l.b16 %v531
        %v1285 = vunpack.c.h.b16 %v531
        %v1286 = vunpack.c.l.b16 %v532
        %v1287 = vunpack.c.h.b16 %v532
        %v1288 = vunpack.c.l.b16 %v533
        %v1289 = vunpack.c.h.b16 %v533
        %v1290 = vunpack.c.l.b16 %v534
        %v1291 = vunpack.c.h.b16 %v534
        %v1292 = vunpack.c.l.b16 %v535
        %v1293 = vunpack.c.h.b16 %v535
        %v1294 = vunpack.c.l.b16 %v536
        %v1295 = vunpack.c.h.b16 %v536
        %v1296 = vunpack.c.l.b16 %v537
        %v1297 = vunpack.c.h.b16 %v537
        %v1298 = vunpack.c.l.b16 %v538
        %v1299 = vunpack.c.h.b16 %v538
        %v1300 = vunpack.c.l.b16 %v539
        %v1301 = vunpack.c.h.b16 %v539
        %v1302 = vunpack.c.l.b16 %v540
        %v1303 = vunpack.c.h.b16 %v540
        %v1304 = vunpack.c.l.b16 %v541
        %v1305 = vunpack.c.h.b16 %v541
        %v1306 = vunpack.c.l.b16 %v542
        %v1307 = vunpack.c.h.b16 %v542
        %v1308 = vunpack.c.l.b16 %v543
        %v1309 = vunpack.c.h.b16 %v543
        %v1310 = vunpack.c.l.b16 %v544
        %v1311 = vunpack.c.h.b16 %v544
        %v1312 = vunpack.c.l.b16 %v545
        %v1313 = vunpack.c.h.b16 %v545
        %v1314 = vunpack.c.l.b16 %v546
        %v1315 = vunpack.c.h.b16 %v546
        %v1316 = vunpack.c.l.b16 %v547
        %v1317 = vunpack.c.h.b16 %v547
        %v1318 = vunpack.c.l.b16 %v548
        %v1319 = vunpack.c.h.b16 %v548
        %v1320 = vunpack.c.l.b16 %v549
        %v1321 = vunpack.c.h.b16 %v549
        %v1322 = vunpack.c.l.b16 %v550
        %v1323 = vunpack.c.h.b16 %v550
        %v1324 = vunpack.c.l.b16 %v551
        %v1325 = vunpack.c.h.b16 %v551
        %v1326 = vunpack.c.l.b16 %v552
        %v1327 = vunpack.c.h.b16 %v552
        %v1328 = vunpack.c.l.b16 %v553
        %v1329 = vunpack.c.h.b16 %v553
        %v1330 = vunpack.c.l.b16 %v554
        %v1331 = vunpack.c.h.b16 %v554
        %v1332 = vunpack.c.l.b16 %v555
        %v1333 = vunpack.c.h.b16 %v555
        %v1334 = vunpack.c.l.b16 %v556
        %v1335 = vunpack.c.h.b16 %v556
        %v1336 = vunpack.c.l.b16 %v557
        %v1337 = vunpack.c.h.b16 %v557
        %v1338 = vunpack.c.l.b16 %v558
        %v1339 = vunpack.c.h.b16 %v558
        %v1340 = vunpack.c.l.b16 %v559
        %v1341 = vunpack.c.h.b16 %v559
        %v1342 = vunpack.c.l.b16 %v560
        %v1343 = vunpack.c.h.b16 %v560
        %v1344 = vunpack.c.l.b16 %v561
        %v1345 = vunpack.c.h.b16 %v561
        %v1346 = vunpack.c.l.b16 %v562
        %v1347 = vunpack.c.h.b16 %v562
        %v1348 = vunpack.c.l.b16 %v563
        %v1349 = vunpack.c.h.b16 %v563
        %v1350 = vunpack.c.l.b16 %v564
        %v1351 = vunpack.c.h.b16 %v564
        %v1352 = vunpack.c.l.b16 %v565
        %v1353 = vunpack.c.h.b16 %v565
        %v1354 = vunpack.c.l.b16 %v566
        %v1355 = vunpack.c.h.b16 %v566
        %v1356 = vunpack.c.l.b16 %v567
        %v1357 = vunpack.c.h.b16 %v567
        %v1358 = vunpack.c.l.b16 %v568
        %v1359 = vunpack.c.h.b16 %v568
        %v1360 = vunpack.c.l.b16 %v569
        %v1361 = vunpack.c.h.b16 %v569
        %v1362 = vunpack.c.l.b16 %v570
        %v1363 = vunpack.c.h.b16 %v570
        %v1364 = vunpack.c.l.b16 %v571
        %v1365 = vunpack.c.h.b16 %v571
        %v1366 = vunpack.c.l.b16 %v572
        %v1367 = vunpack.c.h.b16 %v572
        %v1368 = vunpack.c.l.b16 %v573
        %v1369 = vunpack.c.h.b16 %v573
        %v1370 = vunpack.c.l.b16 %v574
        %v1371 = vunpack.c.h.b16 %v574
        %v1372 = vunpack.c.l.b16 %v575
        %v1373 = vunpack.c.h.b16 %v575
        %v1374 = vunpack.c.l.b16 %v576
        %v1375 = vunpack.c.h.b16 %v576
        %v1376 = vunpack.c.l.b16 %v577
        %v1377 = vunpack.c.h.b16 %v577
        %v1378 = vunpack.c.l.b16 %v578
        %v1379 = vunpack.c.h.b16 %v578
        %v1380 = vunpack.c.l.b16 %v579
        %v1381 = vunpack.c.h.b16 %v579
        %v1382 = vunpack.c.l.b16 %v580
        %v1383 = vunpack.c.h.b16 %v580
        %v1384 = vunpack.c.l.b16 %v581
        %v1385 = vunpack.c.h.b16 %v581
        %v1386 = vunpack.c.l.b16 %v582
        %v1387 = vunpack.c.h.b16 %v582
        %v1388 = vunpack.c.l.b16 %v583
        %v1389 = vunpack.c.h.b16 %v583
        %v1390 = vunpack.c.l.b16 %v584
        %v1391 = vunpack.c.h.b16 %v584
        %v1392 = vunpack.c.l.b16 %v585
        %v1393 = vunpack.c.h.b16 %v585
        %v1394 = vunpack.c.l.b16 %v586
        %v1395 = vunpack.c.h.b16 %v586
        %v1396 = vunpack.c.l.b16 %v587
        %v1397 = vunpack.c.h.b16 %v587
        %v1398 = vunpack.c.l.b16 %v588
        %v1399 = vunpack.c.h.b16 %v588
        %v1400 = vunpack.c.l.b16 %v589
        %v1401 = vunpack.c.h.b16 %v589
        %v1402 = vunpack.c.l.b16 %v590
        %v1403 = vunpack.c.h.b16 %v590
        %v1404 = vunpack.c.l.b16 %v591
        %v1405 = vunpack.c.h.b16 %v591
        %v1406 = vunpack.c.l.b16 %v592
        %v1407 = vunpack.c.h.b16 %v592
        %v1408 = vunpack.c.l.b16 %v593
        %v1409 = vunpack.c.h.b16 %v593
        %v1410 = vunpack.c.l.b16 %v594
        %v1411 = vunpack.c.h.b16 %v594
        %v1412 = vunpack.c.l.b16 %v595
        %v1413 = vunpack.c.h.b16 %v595
        %v1414 = vunpack.c.l.b16 %v596
        %v1415 = vunpack.c.h.b16 %v596
        %v1416 = vunpack.c.l.b16 %v597
        %v1417 = vunpack.c.h.b16 %v597
        %v1418 = vunpack.c.l.b16 %v598
        %v1419 = vunpack.c.h.b16 %v598
        %v1420 = vunpack.c.l.b16 %v599
        %v1421 = vunpack.c.h.b16 %v599
        %v1422 = vunpack.c.l.b16 %v600
        %v1423 = vunpack.c.h.b16 %v600
        %v1424 = vunpack.c.l.b16 %v601
        %v1425 = vunpack.c.h.b16 %v601
        %v1426 = vunpack.c.l.b16 %v602
        %v1427 = vunpack.c.h.b16 %v602
        %v1428 = vunpack.c.l.b16 %v603
        %v1429 = vunpack.c.h.b16 %v603
        %v1430 = vunpack.c.l.b16 %v604
        %v1431 = vunpack.c.h.b16 %v604
        %v1432 = vunpack.c.l.b16 %v605
        %v1433 = vunpack.c.h.b16 %v605
        %v1434 = vunpack.c.l.b16 %v606
        %v1435 = vunpack.c.h.b16 %v606
        %v1436 = vunpack.c.l.b16 %v607
        %v1437 = vunpack.c.h.b16 %v607
        %v1438 = vunpack.c.l.b16 %v608
        %v1439 = vunpack.c.h.b16 %v608
        %v1440 = vunpack.c.l.b16 %v609
        %v1441 = vunpack.c.h.b16 %v609
        %v1442 = vunpack.c.l.b16 %v610
        %v1443 = vunpack.c.h.b16 %v610
        %v1444 = vunpack.c.l.b16 %v611
        %v1445 = vunpack.c.h.b16 %v611
        %v1446 = vunpack.c.l.b16 %v612
        %v1447 = vunpack.c.h.b16 %v612
        %v1448 = vunpack.c.l.b16 %v613
        %v1449 = vunpack.c.h.b16 %v613
        %v1450 = vunpack.c.l.b16 %v614
        %v1451 = vunpack.c.h.b16 %v614
        %v1452 = vunpack.c.l.b16 %v615
        %v1453 = vunpack.c.h.b16 %v615
        %v1454 = vunpack.c.l.b16 %v616
        %v1455 = vunpack.c.h.b16 %v616
        %v1456 = vunpack.c.l.b16 %v617
        %v1457 = vunpack.c.h.b16 %v617
        %v1458 = vunpack.c.l.b16 %v618
        %v1459 = vunpack.c.h.b16 %v618
        %v1460 = vunpack.c.l.b16 %v619
        %v1461 = vunpack.c.h.b16 %v619
        %v1462 = vunpack.c.l.b16 %v620
        %v1463 = vunpack.c.h.b16 %v620
        %v1464 = vunpack.c.l.b16 %v621
        %v1465 = vunpack.c.h.b16 %v621
        %v1466 = vunpack.c.l.b16 %v622
        %v1467 = vunpack.c.h.b16 %v622
        %v1468 = vunpack.c.l.b16 %v623
        %v1469 = vunpack.c.h.b16 %v623
        %v1470 = vunpack.c.l.b16 %v624
        %v1471 = vunpack.c.h.b16 %v624
        %v1472 = vunpack.c.l.b16 %v625
        %v1473 = vunpack.c.h.b16 %v625
        %v1474 = vunpack.c.l.b16 %v626
        %v1475 = vunpack.c.h.b16 %v626
        %v1476 = vunpack.c.l.b16 %v627
        %v1477 = vunpack.c.h.b16 %v627
        %v1478 = vunpack.c.l.b16 %v628
        %v1479 = vunpack.c.h.b16 %v628
        %v1480 = vunpack.c.l.b16 %v629
        %v1481 = vunpack.c.h.b16 %v629
        %v1482 = vunpack.c.l.b16 %v630
        %v1483 = vunpack.c.h.b16 %v630
        %v1484 = vunpack.c.l.b16 %v631
        %v1485 = vunpack.c.h.b16 %v631
        %v1486 = vunpack.c.l.b16 %v632
        %v1487 = vunpack.c.h.b16 %v632
        %v1488 = vunpack.c.l.b16 %v633
        %v1489 = vunpack.c.h.b16 %v633
        %v1490 = vunpack.c.l.b16 %v634
        %v1491 = vunpack.c.h.b16 %v634
        %v1492 = vunpack.c.l.b16 %v635
        %v1493 = vunpack.c.h.b16 %v635
        %v1494 = vunpack.c.l.b16 %v636
        %v1495 = vunpack.c.h.b16 %v636
        %v1496 = vunpack.c.l.b16 %v637
        %v1497 = vunpack.c.h.b16 %v637
        %v1498 = vunpack.c.l.b16 %v638
        %v1499 = vunpack.c.h.b16 %v638
        %v1500 = vunpack.c.l.b16 %v639
        %v1501 = vunpack.c.h.b16 %v639
        %v1502 = vunpack.c.l.b16 %v640
        %v1503 = vunpack.c.h.b16 %v640
        %v1504 = vunpack.c.l.b16 %v641
        %v1505 = vunpack.c.h.b16 %v641
        %v1506 = vunpack.c.l.b16 %v642
        %v1507 = vunpack.c.h.b16 %v642
        %v1508 = vunpack.c.l.b16 %v643
        %v1509 = vunpack.c.h.b16 %v643
        %v1510 = vunpack.c.l.b16 %v644
        %v1511 = vunpack.c.h.b16 %v644
        %v1512 = vunpack.c.l.b16 %v645
        %v1513 = vunpack.c.h.b16 %v645
        %v1514 = vunpack.c.l.b16 %v646
        %v1515 = vunpack.c.h.b16 %v646
        %v1516 = vunpack.c.l.b16 %v647
        %v1517 = vunpack.c.h.b16 %v647
        %v1518 = vunpack.c.l.b16 %v648
        %v1519 = vunpack.c.h.b16 %v648
        %v1520 = vunpack.c.l.b16 %v649
        %v1521 = vunpack.c.h.b16 %v649
        %v1522 = vunpack.c.l.b16 %v650
        %v1523 = vunpack.c.h.b16 %v650
        %v1524 = vunpack.c.l.b16 %v651
        %v1525 = vunpack.c.h.b16 %v651
        %v1526 = vunpack.c.l.b16 %v652
        %v1527 = vunpack.c.h.b16 %v652
        %v1528 = vunpack.c.l.b16 %v653
        %v1529 = vunpack.c.h.b16 %v653
        %v1530 = vunpack.c.l.b16 %v654
        %v1531 = vunpack.c.h.b16 %v654
        %v1532 = vunpack.c.l.b16 %v655
        %v1533 = vunpack.c.h.b16 %v655
        %v1534 = vunpack.c.l.b16 %v656
        %v1535 = vunpack.c.h.b16 %v656
        %v1536 = vunpack.c.l.b16 %v657
        %v1537 = vunpack.c.h.b16 %v657
        %v1538 = vunpack.c.l.b16 %v658
        %v1539 = vunpack.c.h.b16 %v658
        %v1540 = vunpack.c.l.b16 %v659
        %v1541 = vunpack.c.h.b16 %v659
        %v1542 = vunpack.c.l.b16 %v660
        %v1543 = vunpack.c.h.b16 %v660
        %v1544 = vunpack.c.l.b16 %v661
        %v1545 = vunpack.c.h.b16 %v661
        %v1546 = vunpack.c.l.b16 %v662
        %v1547 = vunpack.c.h.b16 %v662
        %v1548 = vunpack.c.l.b16 %v663
        %v1549 = vunpack.c.h.b16 %v663
        %v1550 = vunpack.c.l.b16 %v664
        %v1551 = vunpack.c.h.b16 %v664
        %v1552 = vunpack.c.l.b16 %v665
        %v1553 = vunpack.c.h.b16 %v665
        %v1554 = vunpack.c.l.b16 %v666
        %v1555 = vunpack.c.h.b16 %v666
        %v1556 = vunpack.c.l.b16 %v667
        %v1557 = vunpack.c.h.b16 %v667
        %v1558 = vunpack.c.l.b16 %v668
        %v1559 = vunpack.c.h.b16 %v668
        %v1560 = vunpack.c.l.b16 %v669
        %v1561 = vunpack.c.h.b16 %v669
        %v1562 = vpack.c.b16 %v998, %v986
        %v1563 = vpack.c.b16 %v999, %v987
        %v1564 = vpack.c.b16 %v1000, %v988
        %v1565 = vpack.c.b16 %v1001, %v989
        %v1566 = vpack.c.b16 %v1002, %v990
        %v1567 = vpack.c.b16 %v1003, %v991
        %v1568 = vpack.c.b16 %v1004, %v992
        %v1569 = vpack.c.b16 %v1005, %v993
        %v1570 = vpack.c.b16 %v1006, %v994
        %v1571 = vpack.c.b16 %v1007, %v995
        %v1572 = vpack.c.b16 %v1008, %v996
        %v1573 = vpack.c.b16 %v1009, %v997
        %v1574 = vpack.c.b16 %v1022, %v1010
        %v1575 = vpack.c.b16 %v1023, %v1011
        %v1576 = vpack.c.b16 %v1024, %v1012
        %v1577 = vpack.c.b16 %v1025, %v1013
        %v1578 = vpack.c.b16 %v1026, %v1014
        %v1579 = vpack.c.b16 %v1027, %v1015
        %v1580 = vpack.c.b16 %v1028, %v1016
        %v1581 = vpack.c.b16 %v1029, %v1017
        %v1582 = vpack.c.b16 %v1030, %v1018
        %v1583 = vpack.c.b16 %v1031, %v1019
        %v1584 = vpack.c.b16 %v1032, %v1020
        %v1585 = vpack.c.b16 %v1033, %v1021
        %v1586 = vpack.c.b16 %v1046, %v1034
        %v1587 = vpack.c.b16 %v1047, %v1035
        %v1588 = vpack.c.b16 %v1048, %v1036
        %v1589 = vpack.c.b16 %v1049, %v1037
        %v1590 = vpack.c.b16 %v1050, %v1038
        %v1591 = vpack.c.b16 %v1051, %v1039
        %v1592 = vpack.c.b16 %v1052, %v1040
        %v1593 = vpack.c.b16 %v1053, %v1041
        %v1594 = vpack.c.b16 %v1054, %v1042
        %v1595 = vpack.c.b16 %v1055, %v1043
        %v1596 = vpack.c.b16 %v1056, %v1044
        %v1597 = vpack.c.b16 %v1057, %v1045
        %v1598 = vpack.c.b16 %v1070, %v1058
        %v1599 = vpack.c.b16 %v1071, %v1059
        %v1600 = vpack.c.b16 %v1072, %v1060
        %v1601 = vpack.c.b16 %v1073, %v1061
        %v1602 = vpack.c.b16 %v1074, %v1062
        %v1603 = vpack.c.b16 %v1075, %v1063
        %v1604 = vpack.c.b16 %v1076, %v1064
        %v1605 = vpack.c.b16 %v1077, %v1065
        %v1606 = vpack.c.b16 %v1078, %v1066
        %v1607 = vpack.c.b16 %v1079, %v1067
        %v1608 = vpack.c.b16 %v1080, %v1068
        %v1609 = vpack.c.b16 %v1081, %v1069
        %v1610 = vpack.c.b16 %v1094, %v1082
        %v1611 = vpack.c.b16 %v1095, %v1083
        %v1612 = vpack.c.b16 %v1096, %v1084
        %v1613 = vpack.c.b16 %v1097, %v1085
        %v1614 = vpack.c.b16 %v1098, %v1086
        %v1615 = vpack.c.b16 %v1099, %v1087
        %v1616 = vpack.c.b16 %v1100, %v1088
        %v1617 = vpack.c.b16 %v1101, %v1089
        %v1618 = vpack.c.b16 %v1102, %v1090
        %v1619 = vpack.c.b16 %v1103, %v1091
        %v1620 = vpack.c.b16 %v1104, %v1092
        %v1621 = vpack.c.b16 %v1105, %v1093
        %v1622 = vpack.c.b16 %v1118, %v1106
        %v1623 = vpack.c.b16 %v1119, %v1107
        %v1624 = vpack.c.b16 %v1120, %v1108
        %v1625 = vpack.c.b16 %v1121, %v1109
        %v1626 = vpack.c.b16 %v1122, %v1110
        %v1627 = vpack.c.b16 %v1123, %v1111
        %v1628 = vpack.c.b16 %v1124, %v1112
        %v1629 = vpack.c.b16 %v1125, %v1113
        %v1630 = vpack.c.b16 %v1126, %v1114
        %v1631 = vpack.c.b16 %v1127, %v1115
        %v1632 = vpack.c.b16 %v1128, %v1116
        %v1633 = vpack.c.b16 %v1129, %v1117
        %v1634 = vpack.c.b16 %v1142, %v1130
        %v1635 = vpack.c.b16 %v1143, %v1131
        %v1636 = vpack.c.b16 %v1144, %v1132
        %v1637 = vpack.c.b16 %v1145, %v1133
        %v1638 = vpack.c.b16 %v1146, %v1134
        %v1639 = vpack.c.b16 %v1147, %v1135
        %v1640 = vpack.c.b16 %v1148, %v1136
        %v1641 = vpack.c.b16 %v1149, %v1137
        %v1642 = vpack.c.b16 %v1150, %v1138
        %v1643 = vpack.c.b16 %v1151, %v1139
        %v1644 = vpack.c.b16 %v1152, %v1140
        %v1645 = vpack.c.b16 %v1153, %v1141
        %v1646 = vpack.c.b16 %v1166, %v1154
        %v1647 = vpack.c.b16 %v1167, %v1155
        %v1648 = vpack.c.b16 %v1168, %v1156
        %v1649 = vpack.c.b16 %v1169, %v1157
        %v1650 = vpack.c.b16 %v1170, %v1158
        %v1651 = vpack.c.b16 %v1171, %v1159
        %v1652 = vpack.c.b16 %v1172, %v1160
        %v1653 = vpack.c.b16 %v1173, %v1161
        %v1654 = vpack.c.b16 %v1174, %v1162
        %v1655 = vpack.c.b16 %v1175, %v1163
        %v1656 = vpack.c.b16 %v1176, %v1164
        %v1657 = vpack.c.b16 %v1177, %v1165
        %v1658 = vpack.c.b16 %v1190, %v1178
        %v1659 = vpack.c.b16 %v1191, %v1179
        %v1660 = vpack.c.b16 %v1192, %v1180
        %v1661 = vpack.c.b16 %v1193, %v1181
        %v1662 = vpack.c.b16 %v1194, %v1182
        %v1663 = vpack.c.b16 %v1195, %v1183
        %v1664 = vpack.c.b16 %v1196, %v1184
        %v1665 = vpack.c.b16 %v1197, %v1185
        %v1666 = vpack.c.b16 %v1198, %v1186
        %v1667 = vpack.c.b16 %v1199, %v1187
        %v1668 = vpack.c.b16 %v1200, %v1188
        %v1669 = vpack.c.b16 %v1201, %v1189
        %v1670 = vpack.c.b16 %v1214, %v1202
        %v1671 = vpack.c.b16 %v1215, %v1203
        %v1672 = vpack.c.b16 %v1216, %v1204
        %v1673 = vpack.c.b16 %v1217, %v1205
        %v1674 = vpack.c.b16 %v1218, %v1206
        %v1675 = vpack.c.b16 %v1219, %v1207
        %v1676 = vpack.c.b16 %v1220, %v1208
        %v1677 = vpack.c.b16 %v1221, %v1209
        %v1678 = vpack.c.b16 %v1222, %v1210
        %v1679 = vpack.c.b16 %v1223, %v1211
        %v1680 = vpack.c.b16 %v1224, %v1212
        %v1681 = vpack.c.b16 %v1225, %v1213
        %v1682 = vpack.c.b16 %v1238, %v1226
        %v1683 = vpack.c.b16 %v1239, %v1227
        %v1684 = vpack.c.b16 %v1240, %v1228
        %v1685 = vpack.c.b16 %v1241, %v1229
        %v1686 = vpack.c.b16 %v1242, %v1230
        %v1687 = vpack.c.b16 %v1243, %v1231
        %v1688 = vpack.c.b16 %v1244, %v1232
        %v1689 = vpack.c.b16 %v1245, %v1233
        %v1690 = vpack.c.b16 %v1246, %v1234
        %v1691 = vpack.c.b16 %v1247, %v1235
        %v1692 = vpack.c.b16 %v1248, %v1236
        %v1693 = vpack.c.b16 %v1249, %v1237
        %v1694 = vpack.c.b16 %v1262, %v1250
        %v1695 = vpack.c.b16 %v1263, %v1251
        %v1696 = vpack.c.b16 %v1264, %v1252
        %v1697 = vpack.c.b16 %v1265, %v1253
        %v1698 = vpack.c.b16 %v1266, %v1254
        %v1699 = vpack.c.b16 %v1267, %v1255
        %v1700 = vpack.c.b16 %v1268, %v1256
        %v1701 = vpack.c.b16 %v1269, %v1257
        %v1702 = vpack.c.b16 %v1270, %v1258
        %v1703 = vpack.c.b16 %v1271, %v1259
        %v1704 = vpack.c.b16 %v1272, %v1260
        %v1705 = vpack.c.b16 %v1273, %v1261
        %v1706 = vpack.c.b16 %v1286, %v1274
        %v1707 = vpack.c.b16 %v1287, %v1275
        %v1708 = vpack.c.b16 %v1288, %v1276
        %v1709 = vpack.c.b16 %v1289, %v1277
        %v1710 = vpack.c.b16 %v1290, %v1278
        %v1711 = vpack.c.b16 %v1291, %v1279
        %v1712 = vpack.c.b16 %v1292, %v1280
        %v1713 = vpack.c.b16 %v1293, %v1281
        %v1714 = vpack.c.b16 %v1294, %v1282
        %v1715 = vpack.c.b16 %v1295, %v1283
        %v1716 = vpack.c.b16 %v1296, %v1284
        %v1717 = vpack.c.b16 %v1297, %v1285
        %v1718 = vpack.c.b16 %v1310, %v1298
        %v1719 = vpack.c.b16 %v1311, %v1299
        %v1720 = vpack.c.b16 %v1312, %v1300
        %v1721 = vpack.c.b16 %v1313, %v1301
        %v1722 = vpack.c.b16 %v1314, %v1302
        %v1723 = vpack.c.b16 %v1315, %v1303
        %v1724 = vpack.c.b16 %v1316, %v1304
        %v1725 = vpack.c.b16 %v1317, %v1305
        %v1726 = vpack.c.b16 %v1318, %v1306
        %v1727 = vpack.c.b16 %v1319, %v1307
        %v1728 = vpack.c.b16 %v1320, %v1308
        %v1729 = vpack.c.b16 %v1321, %v1309
        %v1730 = vpack.c.b16 %v1334, %v1322
        %v1731 = vpack.c.b16 %v1335, %v1323
        %v1732 = vpack.c.b16 %v1336, %v1324
        %v1733 = vpack.c.b16 %v1337, %v1325
        %v1734 = vpack.c.b16 %v1338, %v1326
        %v1735 = vpack.c.b16 %v1339, %v1327
        %v1736 = vpack.c.b16 %v1340, %v1328
        %v1737 = vpack.c.b16 %v1341, %v1329
        %v1738 = vpack.c.b16 %v1342, %v1330
        %v1739 = vpack.c.b16 %v1343, %v1331
        %v1740 = vpack.c.b16 %v1344, %v1332
        %v1741 = vpack.c.b16 %v1345, %v1333
        %v1742 = vpack.c.b16 %v1358, %v1346
        %v1743 = vpack.c.b16 %v1359, %v1347
        %v1744 = vpack.c.b16 %v1360, %v1348
        %v1745 = vpack.c.b16 %v1361, %v1349
        %v1746 = vpack.c.b16 %v1362, %v1350
        %v1747 = vpack.c.b16 %v1363, %v1351
        %v1748 = vpack.c.b16 %v1364, %v1352
        %v1749 = vpack.c.b16 %v1365, %v1353
        %v1750 = vpack.c.b16 %v1366, %v1354
        %v1751 = vpack.c.b16 %v1367, %v1355
        %v1752 = vpack.c.b16 %v1368, %v1356
        %v1753 = vpack.c.b16 %v1369, %v1357
        %v1754 = vpack.c.b16 %v1382, %v1370
        %v1755 = vpack.c.b16 %v1383, %v1371
        %v1756 = vpack.c.b16 %v1384, %v1372
        %v1757 = vpack.c.b16 %v1385, %v1373
        %v1758 = vpack.c.b16 %v1386, %v1374
        %v1759 = vpack.c.b16 %v1387, %v1375
        %v1760 = vpack.c.b16 %v1388, %v1376
        %v1761 = vpack.c.b16 %v1389, %v1377
        %v1762 = vpack.c.b16 %v1390, %v1378
        %v1763 = vpack.c.b16 %v1391, %v1379
        %v1764 = vpack.c.b16 %v1392, %v1380
        %v1765 = vpack.c.b16 %v1393, %v1381
        %v1766 = vpack.c.b16 %v1406, %v1394
        %v1767 = vpack.c.b16 %v1407, %v1395
        %v1768 = vpack.c.b16 %v1408, %v1396
        %v1769 = vpack.c.b16 %v1409, %v1397
        %v1770 = vpack.c.b16 %v1410, %v1398
        %v1771 = vpack.c.b16 %v1411, %v1399
        %v1772 = vpack.c.b16 %v1412, %v1400
        %v1773 = vpack.c.b16 %v1413, %v1401
        %v1774 = vpack.c.b16 %v1414, %v1402
        %v1775 = vpack.c.b16 %v1415, %v1403
        %v1776 = vpack.c.b16 %v1416, %v1404
        %v1777 = vpack.c.b16 %v1417, %v1405
        %v1778 = vpack.c.b16 %v1430, %v1418
        %v1779 = vpack.c.b16 %v1431, %v1419
        %v1780 = vpack.c.b16 %v1432, %v1420
        %v1781 = vpack.c.b16 %v1433, %v1421
        %v1782 = vpack.c.b16 %v1434, %v1422
        %v1783 = vpack.c.b16 %v1435, %v1423
        %v1784 = vpack.c.b16 %v1436, %v1424
        %v1785 = vpack.c.b16 %v1437, %v1425
        %v1786 = vpack.c.b16 %v1438, %v1426
        %v1787 = vpack.c.b16 %v1439, %v1427
        %v1788 = vpack.c.b16 %v1440, %v1428
        %v1789 = vpack.c.b16 %v1441, %v1429
        %v1790 = vpack.c.b16 %v1454, %v1442
        %v1791 = vpack.c.b16 %v1455, %v1443
        %v1792 = vpack.c.b16 %v1456, %v1444
        %v1793 = vpack.c.b16 %v1457, %v1445
        %v1794 = vpack.c.b16 %v1458, %v1446
        %v1795 = vpack.c.b16 %v1459, %v1447
        %v1796 = vpack.c.b16 %v1460, %v1448
        %v1797 = vpack.c.b16 %v1461, %v1449
        %v1798 = vpack.c.b16 %v1462, %v1450
        %v1799 = vpack.c.b16 %v1463, %v1451
        %v1800 = vpack.c.b16 %v1464, %v1452
        %v1801 = vpack.c.b16 %v1465, %v1453
        %v1802 = vpack.c.b16 %v1478, %v1466
        %v1803 = vpack.c.b16 %v1479, %v1467
        %v1804 = vpack.c.b16 %v1480, %v1468
        %v1805 = vpack.c.b16 %v1481, %v1469
        %v1806 = vpack.c.b16 %v1482, %v1470
        %v1807 = vpack.c.b16 %v1483, %v1471
        %v1808 = vpack.c.b16 %v1484, %v1472
        %v1809 = vpack.c.b16 %v1485, %v1473
        %v1810 = vpack.c.b16 %v1486, %v1474
        %v1811 = vpack.c.b16 %v1487, %v1475
        %v1812 = vpack.c.b16 %v1488, %v1476
        %v1813 = vpack.c.b16 %v1489, %v1477
        %v1814 = vpack.c.b16 %v1502, %v1490
        %v1815 = vpack.c.b16 %v1503, %v1491
        %v1816 = vpack.c.b16 %v1504, %v1492
        %v1817 = vpack.c.b16 %v1505, %v1493
        %v1818 = vpack.c.b16 %v1506, %v1494
        %v1819 = vpack.c.b16 %v1507, %v1495
        %v1820 = vpack.c.b16 %v1508, %v1496
        %v1821 = vpack.c.b16 %v1509, %v1497
        %v1822 = vpack.c.b16 %v1510, %v1498
        %v1823 = vpack.c.b16 %v1511, %v1499
        %v1824 = vpack.c.b16 %v1512, %v1500
        %v1825 = vpack.c.b16 %v1513, %v1501
        %v1826 = vpack.c.b16 %v1526, %v1514
        %v1827 = vpack.c.b16 %v1527, %v1515
        %v1828 = vpack.c.b16 %v1528, %v1516
        %v1829 = vpack.c.b16 %v1529, %v1517
        %v1830 = vpack.c.b16 %v1530, %v1518
        %v1831 = vpack.c.b16 %v1531, %v1519
        %v1832 = vpack.c.b16 %v1532, %v1520
        %v1833 = vpack.c.b16 %v1533, %v1521
        %v1834 = vpack.c.b16 %v1534, %v1522
        %v1835 = vpack.c.b16 %v1535, %v1523
        %v1836 = vpack.c.b16 %v1536, %v1524
        %v1837 = vpack.c.b16 %v1537, %v1525
        %v1838 = vpack.c.b16 %v1550, %v1538
        %v1839 = vpack.c.b16 %v1551, %v1539
        %v1840 = vpack.c.b16 %v1552, %v1540
        %v1841 = vpack.c.b16 %v1553, %v1541
        %v1842 = vpack.c.b16 %v1554, %v1542
        %v1843 = vpack.c.b16 %v1555, %v1543
        %v1844 = vpack.c.b16 %v1556, %v1544
        %v1845 = vpack.c.b16 %v1557, %v1545
        %v1846 = vpack.c.b16 %v1558, %v1546
        %v1847 = vpack.c.b16 %v1559, %v1547
        %v1848 = vpack.c.b16 %v1560, %v1548
        %v1849 = vpack.c.b16 %v1561, %v1549
        %2138 = vmatpush.bf16.msra.mxu0 %v1646
        %2139 = vmatpush.bf16.msra.mxu0 %v1634
        %2140 = vmatpush.bf16.msra.mxu0 %v1622
        %2141 = vmatpush.bf16.msra.mxu0 %v1610
        %2142 = vmatpush.bf16.msra.mxu0 %v1598
        %2143 = vmatpush.bf16.msra.mxu0 %v1586
        %2144 = vmatpush.bf16.msra.mxu0 %v1574
        %2145 = vmatpush.bf16.msra.mxu0 %v1562
        %2146 = vmatmul.bf16.gmra.mxu0 %v358
        %v2147 = vpop.f32.mrf.mxu0
        %v2148 = vadd.f32 %v674, %v2147
        %v2149 = vpop.f32.mrf.mxu0
        %v2150 = vadd.f32 %v674, %v2149
        %2151 = vmatmul.bf16.gmra.mxu0 %v361
        %v2152 = vpop.f32.mrf.mxu0
        %v2153 = vadd.f32 %v674, %v2152
        %v2154 = vpop.f32.mrf.mxu0
        %v2155 = vadd.f32 %v674, %v2154
        %2156 = vmatmul.bf16.gmra.mxu0 %v364
        %v2157 = vpop.f32.mrf.mxu0
        %v2158 = vadd.f32 %v674, %v2157
        %v2159 = vpop.f32.mrf.mxu0
        %v2160 = vadd.f32 %v674, %v2159
        %2161 = vmatmul.bf16.gmra.mxu0 %v367
        %v2162 = vpop.f32.mrf.mxu0
        %v2163 = vadd.f32 %v674, %v2162
        %v2164 = vpop.f32.mrf.mxu0
        %v2165 = vadd.f32 %v674, %v2164
        %2166 = vmatmul.bf16.gmra.mxu0 %v370
        %v2167 = vpop.f32.mrf.mxu0
        %v2168 = vadd.f32 %v674, %v2167
        %v2169 = vpop.f32.mrf.mxu0
        %v2170 = vadd.f32 %v674, %v2169
        %2171 = vmatmul.bf16.gmra.mxu0 %v373
        %v2172 = vpop.f32.mrf.mxu0
        %v2173 = vadd.f32 %v674, %v2172
        %v2174 = vpop.f32.mrf.mxu0
        %v2175 = vadd.f32 %v674, %v2174
        %2176 = vmatmul.bf16.gmra.mxu0 %v376
        %v2177 = vpop.f32.mrf.mxu0
        %v2178 = vadd.f32 %v674, %v2177
        %v2179 = vpop.f32.mrf.mxu0
        %v2180 = vadd.f32 %v674, %v2179
        %2181 = vmatmul.bf16.gmra.mxu0 %v379
        %v2182 = vpop.f32.mrf.mxu0
        %v2183 = vadd.f32 %v674, %v2182
        %v2184 = vpop.f32.mrf.mxu0
        %v2185 = vadd.f32 %v674, %v2184
        %2186 = vdwg.mxu0
        %2187 = vmatpush.bf16.msra.mxu0 %v1742
        %2188 = vmatpush.bf16.msra.mxu0 %v1730
        %2189 = vmatpush.bf16.msra.mxu0 %v1718
        %2190 = vmatpush.bf16.msra.mxu0 %v1706
        %2191 = vmatpush.bf16.msra.mxu0 %v1694
        %2192 = vmatpush.bf16.msra.mxu0 %v1682
        %2193 = vmatpush.bf16.msra.mxu0 %v1670
        %2194 = vmatpush.bf16.msra.mxu0 %v1658
        %2195 = vmatmul.bf16.gmra.mxu0 %v359
        %v2196 = vpop.f32.mrf.mxu0
        %v2197 = vadd.f32 %v2148, %v2196
        %v2198 = vpop.f32.mrf.mxu0
        %v2199 = vadd.f32 %v2150, %v2198
        %2200 = vmatmul.bf16.gmra.mxu0 %v362
        %v2201 = vpop.f32.mrf.mxu0
        %v2202 = vadd.f32 %v2153, %v2201
        %v2203 = vpop.f32.mrf.mxu0
        %v2204 = vadd.f32 %v2155, %v2203
        %2205 = vmatmul.bf16.gmra.mxu0 %v365
        %v2206 = vpop.f32.mrf.mxu0
        %v2207 = vadd.f32 %v2158, %v2206
        %v2208 = vpop.f32.mrf.mxu0
        %v2209 = vadd.f32 %v2160, %v2208
        %2210 = vmatmul.bf16.gmra.mxu0 %v368
        %v2211 = vpop.f32.mrf.mxu0
        %v2212 = vadd.f32 %v2163, %v2211
        %v2213 = vpop.f32.mrf.mxu0
        %v2214 = vadd.f32 %v2165, %v2213
        %2215 = vmatmul.bf16.gmra.mxu0 %v371
        %v2216 = vpop.f32.mrf.mxu0
        %v2217 = vadd.f32 %v2168, %v2216
        %v2218 = vpop.f32.mrf.mxu0
        %v2219 = vadd.f32 %v2170, %v2218
        %2220 = vmatmul.bf16.gmra.mxu0 %v374
        %v2221 = vpop.f32.mrf.mxu0
        %v2222 = vadd.f32 %v2173, %v2221
        %v2223 = vpop.f32.mrf.mxu0
        %v2224 = vadd.f32 %v2175, %v2223
        %2225 = vmatmul.bf16.gmra.mxu0 %v377
        %v2226 = vpop.f32.mrf.mxu0
        %v2227 = vadd.f32 %v2178, %v2226
        %v2228 = vpop.f32.mrf.mxu0
        %v2229 = vadd.f32 %v2180, %v2228
        %2230 = vmatmul.bf16.gmra.mxu0 %v380
        %v2231 = vpop.f32.mrf.mxu0
        %v2232 = vadd.f32 %v2183, %v2231
        %v2233 = vpop.f32.mrf.mxu0
        %v2234 = vadd.f32 %v2185, %v2233
        %2235 = vdwg.mxu0
        %2236 = vmatpush.bf16.msra.mxu0 %v1838
        %2237 = vmatpush.bf16.msra.mxu0 %v1826
        %2238 = vmatpush.bf16.msra.mxu0 %v1814
        %2239 = vmatpush.bf16.msra.mxu0 %v1802
        %2240 = vmatpush.bf16.msra.mxu0 %v1790
        %2241 = vmatpush.bf16.msra.mxu0 %v1778
        %2242 = vmatpush.bf16.msra.mxu0 %v1766
        %2243 = vmatpush.bf16.msra.mxu0 %v1754
        %2244 = vmatmul.bf16.gmra.mxu0 %v360
        %v2245 = vpop.f32.mrf.mxu0
        %v2246 = vadd.f32 %v2197, %v2245
        %v2247 = vpop.f32.mrf.mxu0
        %v2248 = vadd.f32 %v2199, %v2247
        %2249 = vmatmul.bf16.gmra.mxu0 %v363
        %v2250 = vpop.f32.mrf.mxu0
        %v2251 = vadd.f32 %v2202, %v2250
        %v2252 = vpop.f32.mrf.mxu0
        %v2253 = vadd.f32 %v2204, %v2252
        %2254 = vmatmul.bf16.gmra.mxu0 %v366
        %v2255 = vpop.f32.mrf.mxu0
        %v2256 = vadd.f32 %v2207, %v2255
        %v2257 = vpop.f32.mrf.mxu0
        %v2258 = vadd.f32 %v2209, %v2257
        %2259 = vmatmul.bf16.gmra.mxu0 %v369
        %v2260 = vpop.f32.mrf.mxu0
        %v2261 = vadd.f32 %v2212, %v2260
        %v2262 = vpop.f32.mrf.mxu0
        %v2263 = vadd.f32 %v2214, %v2262
        %2264 = vmatmul.bf16.gmra.mxu0 %v372
        %v2265 = vpop.f32.mrf.mxu0
        %v2266 = vadd.f32 %v2217, %v2265
        %v2267 = vpop.f32.mrf.mxu0
        %v2268 = vadd.f32 %v2219, %v2267
        %2269 = vmatmul.bf16.gmra.mxu0 %v375
        %v2270 = vpop.f32.mrf.mxu0
        %v2271 = vadd.f32 %v2222, %v2270
        %v2272 = vpop.f32.mrf.mxu0
        %v2273 = vadd.f32 %v2224, %v2272
        %2274 = vmatmul.bf16.gmra.mxu0 %v378
        %v2275 = vpop.f32.mrf.mxu0
        %v2276 = vadd.f32 %v2227, %v2275
        %v2277 = vpop.f32.mrf.mxu0
        %v2278 = vadd.f32 %v2229, %v2277
        %2279 = vmatmul.bf16.gmra.mxu0 %v381
        %v2280 = vpop.f32.mrf.mxu0
        %v2281 = vadd.f32 %v2232, %v2280
        %v2282 = vpop.f32.mrf.mxu0
        %v2283 = vadd.f32 %v2234, %v2282
        %2284 = vdwg.mxu0
        %2285 = vmatpush.bf16.msra.mxu0 %v1647
        %2286 = vmatpush.bf16.msra.mxu0 %v1635
        %2287 = vmatpush.bf16.msra.mxu0 %v1623
        %2288 = vmatpush.bf16.msra.mxu0 %v1611
        %2289 = vmatpush.bf16.msra.mxu0 %v1599
        %2290 = vmatpush.bf16.msra.mxu0 %v1587
        %2291 = vmatpush.bf16.msra.mxu0 %v1575
        %2292 = vmatpush.bf16.msra.mxu0 %v1563
        %2293 = vmatmul.bf16.gmra.mxu0 %v358
        %v2294 = vpop.f32.mrf.mxu0
        %v2295 = vadd.f32 %v675, %v2294
        %v2296 = vpop.f32.mrf.mxu0
        %v2297 = vadd.f32 %v675, %v2296
        %2298 = vmatmul.bf16.gmra.mxu0 %v361
        %v2299 = vpop.f32.mrf.mxu0
        %v2300 = vadd.f32 %v675, %v2299
        %v2301 = vpop.f32.mrf.mxu0
        %v2302 = vadd.f32 %v675, %v2301
        %2303 = vmatmul.bf16.gmra.mxu0 %v364
        %v2304 = vpop.f32.mrf.mxu0
        %v2305 = vadd.f32 %v675, %v2304
        %v2306 = vpop.f32.mrf.mxu0
        %v2307 = vadd.f32 %v675, %v2306
        %2308 = vmatmul.bf16.gmra.mxu0 %v367
        %v2309 = vpop.f32.mrf.mxu0
        %v2310 = vadd.f32 %v675, %v2309
        %v2311 = vpop.f32.mrf.mxu0
        %v2312 = vadd.f32 %v675, %v2311
        %2313 = vmatmul.bf16.gmra.mxu0 %v370
        %v2314 = vpop.f32.mrf.mxu0
        %v2315 = vadd.f32 %v675, %v2314
        %v2316 = vpop.f32.mrf.mxu0
        %v2317 = vadd.f32 %v675, %v2316
        %2318 = vmatmul.bf16.gmra.mxu0 %v373
        %v2319 = vpop.f32.mrf.mxu0
        %v2320 = vadd.f32 %v675, %v2319
        %v2321 = vpop.f32.mrf.mxu0
        %v2322 = vadd.f32 %v675, %v2321
        %2323 = vmatmul.bf16.gmra.mxu0 %v376
        %v2324 = vpop.f32.mrf.mxu0
        %v2325 = vadd.f32 %v675, %v2324
        %v2326 = vpop.f32.mrf.mxu0
        %v2327 = vadd.f32 %v675, %v2326
        %2328 = vmatmul.bf16.gmra.mxu0 %v379
        %v2329 = vpop.f32.mrf.mxu0
        %v2330 = vadd.f32 %v675, %v2329
        %v2331 = vpop.f32.mrf.mxu0
        %v2332 = vadd.f32 %v675, %v2331
        %2333 = vdwg.mxu0
        %2334 = vmatpush.bf16.msra.mxu0 %v1743
        %2335 = vmatpush.bf16.msra.mxu0 %v1731
        %2336 = vmatpush.bf16.msra.mxu0 %v1719
        %2337 = vmatpush.bf16.msra.mxu0 %v1707
        %2338 = vmatpush.bf16.msra.mxu0 %v1695
        %2339 = vmatpush.bf16.msra.mxu0 %v1683
        %2340 = vmatpush.bf16.msra.mxu0 %v1671
        %2341 = vmatpush.bf16.msra.mxu0 %v1659
        %2342 = vmatmul.bf16.gmra.mxu0 %v359
        %v2343 = vpop.f32.mrf.mxu0
        %v2344 = vadd.f32 %v2295, %v2343
        %v2345 = vpop.f32.mrf.mxu0
        %v2346 = vadd.f32 %v2297, %v2345
        %2347 = vmatmul.bf16.gmra.mxu0 %v362
        %v2348 = vpop.f32.mrf.mxu0
        %v2349 = vadd.f32 %v2300, %v2348
        %v2350 = vpop.f32.mrf.mxu0
        %v2351 = vadd.f32 %v2302, %v2350
        %2352 = vmatmul.bf16.gmra.mxu0 %v365
        %v2353 = vpop.f32.mrf.mxu0
        %v2354 = vadd.f32 %v2305, %v2353
        %v2355 = vpop.f32.mrf.mxu0
        %v2356 = vadd.f32 %v2307, %v2355
        %2357 = vmatmul.bf16.gmra.mxu0 %v368
        %v2358 = vpop.f32.mrf.mxu0
        %v2359 = vadd.f32 %v2310, %v2358
        %v2360 = vpop.f32.mrf.mxu0
        %v2361 = vadd.f32 %v2312, %v2360
        %2362 = vmatmul.bf16.gmra.mxu0 %v371
        %v2363 = vpop.f32.mrf.mxu0
        %v2364 = vadd.f32 %v2315, %v2363
        %v2365 = vpop.f32.mrf.mxu0
        %v2366 = vadd.f32 %v2317, %v2365
        %2367 = vmatmul.bf16.gmra.mxu0 %v374
        %v2368 = vpop.f32.mrf.mxu0
        %v2369 = vadd.f32 %v2320, %v2368
        %v2370 = vpop.f32.mrf.mxu0
        %v2371 = vadd.f32 %v2322, %v2370
        %2372 = vmatmul.bf16.gmra.mxu0 %v377
        %v2373 = vpop.f32.mrf.mxu0
        %v2374 = vadd.f32 %v2325, %v2373
        %v2375 = vpop.f32.mrf.mxu0
        %v2376 = vadd.f32 %v2327, %v2375
        %2377 = vmatmul.bf16.gmra.mxu0 %v380
        %v2378 = vpop.f32.mrf.mxu0
        %v2379 = vadd.f32 %v2330, %v2378
        %v2380 = vpop.f32.mrf.mxu0
        %v2381 = vadd.f32 %v2332, %v2380
        %2382 = vdwg.mxu0
        %2383 = vmatpush.bf16.msra.mxu0 %v1839
        %2384 = vmatpush.bf16.msra.mxu0 %v1827
        %2385 = vmatpush.bf16.msra.mxu0 %v1815
        %2386 = vmatpush.bf16.msra.mxu0 %v1803
        %2387 = vmatpush.bf16.msra.mxu0 %v1791
        %2388 = vmatpush.bf16.msra.mxu0 %v1779
        %2389 = vmatpush.bf16.msra.mxu0 %v1767
        %2390 = vmatpush.bf16.msra.mxu0 %v1755
        %2391 = vmatmul.bf16.gmra.mxu0 %v360
        %v2392 = vpop.f32.mrf.mxu0
        %v2393 = vadd.f32 %v2344, %v2392
        %v2394 = vpop.f32.mrf.mxu0
        %v2395 = vadd.f32 %v2346, %v2394
        %2396 = vmatmul.bf16.gmra.mxu0 %v363
        %v2397 = vpop.f32.mrf.mxu0
        %v2398 = vadd.f32 %v2349, %v2397
        %v2399 = vpop.f32.mrf.mxu0
        %v2400 = vadd.f32 %v2351, %v2399
        %2401 = vmatmul.bf16.gmra.mxu0 %v366
        %v2402 = vpop.f32.mrf.mxu0
        %v2403 = vadd.f32 %v2354, %v2402
        %v2404 = vpop.f32.mrf.mxu0
        %v2405 = vadd.f32 %v2356, %v2404
        %2406 = vmatmul.bf16.gmra.mxu0 %v369
        %v2407 = vpop.f32.mrf.mxu0
        %v2408 = vadd.f32 %v2359, %v2407
        %v2409 = vpop.f32.mrf.mxu0
        %v2410 = vadd.f32 %v2361, %v2409
        %2411 = vmatmul.bf16.gmra.mxu0 %v372
        %v2412 = vpop.f32.mrf.mxu0
        %v2413 = vadd.f32 %v2364, %v2412
        %v2414 = vpop.f32.mrf.mxu0
        %v2415 = vadd.f32 %v2366, %v2414
        %2416 = vmatmul.bf16.gmra.mxu0 %v375
        %v2417 = vpop.f32.mrf.mxu0
        %v2418 = vadd.f32 %v2369, %v2417
        %v2419 = vpop.f32.mrf.mxu0
        %v2420 = vadd.f32 %v2371, %v2419
        %2421 = vmatmul.bf16.gmra.mxu0 %v378
        %v2422 = vpop.f32.mrf.mxu0
        %v2423 = vadd.f32 %v2374, %v2422
        %v2424 = vpop.f32.mrf.mxu0
        %v2425 = vadd.f32 %v2376, %v2424
        %2426 = vmatmul.bf16.gmra.mxu0 %v381
        %v2427 = vpop.f32.mrf.mxu0
        %v2428 = vadd.f32 %v2379, %v2427
        %v2429 = vpop.f32.mrf.mxu0
        %v2430 = vadd.f32 %v2381, %v2429
        %2431 = vdwg.mxu0
        %2432 = vmatpush.bf16.msra.mxu0 %v1648
        %2433 = vmatpush.bf16.msra.mxu0 %v1636
        %2434 = vmatpush.bf16.msra.mxu0 %v1624
        %2435 = vmatpush.bf16.msra.mxu0 %v1612
        %2436 = vmatpush.bf16.msra.mxu0 %v1600
        %2437 = vmatpush.bf16.msra.mxu0 %v1588
        %2438 = vmatpush.bf16.msra.mxu0 %v1576
        %2439 = vmatpush.bf16.msra.mxu0 %v1564
        %2440 = vmatmul.bf16.gmra.mxu0 %v358
        %v2441 = vpop.f32.mrf.mxu0
        %v2442 = vadd.f32 %v676, %v2441
        %v2443 = vpop.f32.mrf.mxu0
        %v2444 = vadd.f32 %v676, %v2443
        %2445 = vmatmul.bf16.gmra.mxu0 %v361
        %v2446 = vpop.f32.mrf.mxu0
        %v2447 = vadd.f32 %v676, %v2446
        %v2448 = vpop.f32.mrf.mxu0
        %v2449 = vadd.f32 %v676, %v2448
        %2450 = vmatmul.bf16.gmra.mxu0 %v364
        %v2451 = vpop.f32.mrf.mxu0
        %v2452 = vadd.f32 %v676, %v2451
        %v2453 = vpop.f32.mrf.mxu0
        %v2454 = vadd.f32 %v676, %v2453
        %2455 = vmatmul.bf16.gmra.mxu0 %v367
        %v2456 = vpop.f32.mrf.mxu0
        %v2457 = vadd.f32 %v676, %v2456
        %v2458 = vpop.f32.mrf.mxu0
        %v2459 = vadd.f32 %v676, %v2458
        %2460 = vmatmul.bf16.gmra.mxu0 %v370
        %v2461 = vpop.f32.mrf.mxu0
        %v2462 = vadd.f32 %v676, %v2461
        %v2463 = vpop.f32.mrf.mxu0
        %v2464 = vadd.f32 %v676, %v2463
        %2465 = vmatmul.bf16.gmra.mxu0 %v373
        %v2466 = vpop.f32.mrf.mxu0
        %v2467 = vadd.f32 %v676, %v2466
        %v2468 = vpop.f32.mrf.mxu0
        %v2469 = vadd.f32 %v676, %v2468
        %2470 = vmatmul.bf16.gmra.mxu0 %v376
        %v2471 = vpop.f32.mrf.mxu0
        %v2472 = vadd.f32 %v676, %v2471
        %v2473 = vpop.f32.mrf.mxu0
        %v2474 = vadd.f32 %v676, %v2473
        %2475 = vmatmul.bf16.gmra.mxu0 %v379
        %v2476 = vpop.f32.mrf.mxu0
        %v2477 = vadd.f32 %v676, %v2476
        %v2478 = vpop.f32.mrf.mxu0
        %v2479 = vadd.f32 %v676, %v2478
        %2480 = vdwg.mxu0
        %2481 = vmatpush.bf16.msra.mxu0 %v1744
        %2482 = vmatpush.bf16.msra.mxu0 %v1732
        %2483 = vmatpush.bf16.msra.mxu0 %v1720
        %2484 = vmatpush.bf16.msra.mxu0 %v1708
        %2485 = vmatpush.bf16.msra.mxu0 %v1696
        %2486 = vmatpush.bf16.msra.mxu0 %v1684
        %2487 = vmatpush.bf16.msra.mxu0 %v1672
        %2488 = vmatpush.bf16.msra.mxu0 %v1660
        %2489 = vmatmul.bf16.gmra.mxu0 %v359
        %v2490 = vpop.f32.mrf.mxu0
        %v2491 = vadd.f32 %v2442, %v2490
        %v2492 = vpop.f32.mrf.mxu0
        %v2493 = vadd.f32 %v2444, %v2492
        %2494 = vmatmul.bf16.gmra.mxu0 %v362
        %v2495 = vpop.f32.mrf.mxu0
        %v2496 = vadd.f32 %v2447, %v2495
        %v2497 = vpop.f32.mrf.mxu0
        %v2498 = vadd.f32 %v2449, %v2497
        %2499 = vmatmul.bf16.gmra.mxu0 %v365
        %v2500 = vpop.f32.mrf.mxu0
        %v2501 = vadd.f32 %v2452, %v2500
        %v2502 = vpop.f32.mrf.mxu0
        %v2503 = vadd.f32 %v2454, %v2502
        %2504 = vmatmul.bf16.gmra.mxu0 %v368
        %v2505 = vpop.f32.mrf.mxu0
        %v2506 = vadd.f32 %v2457, %v2505
        %v2507 = vpop.f32.mrf.mxu0
        %v2508 = vadd.f32 %v2459, %v2507
        %2509 = vmatmul.bf16.gmra.mxu0 %v371
        %v2510 = vpop.f32.mrf.mxu0
        %v2511 = vadd.f32 %v2462, %v2510
        %v2512 = vpop.f32.mrf.mxu0
        %v2513 = vadd.f32 %v2464, %v2512
        %2514 = vmatmul.bf16.gmra.mxu0 %v374
        %v2515 = vpop.f32.mrf.mxu0
        %v2516 = vadd.f32 %v2467, %v2515
        %v2517 = vpop.f32.mrf.mxu0
        %v2518 = vadd.f32 %v2469, %v2517
        %2519 = vmatmul.bf16.gmra.mxu0 %v377
        %v2520 = vpop.f32.mrf.mxu0
        %v2521 = vadd.f32 %v2472, %v2520
        %v2522 = vpop.f32.mrf.mxu0
        %v2523 = vadd.f32 %v2474, %v2522
        %2524 = vmatmul.bf16.gmra.mxu0 %v380
        %v2525 = vpop.f32.mrf.mxu0
        %v2526 = vadd.f32 %v2477, %v2525
        %v2527 = vpop.f32.mrf.mxu0
        %v2528 = vadd.f32 %v2479, %v2527
        %2529 = vdwg.mxu0
        %2530 = vmatpush.bf16.msra.mxu0 %v1840
        %2531 = vmatpush.bf16.msra.mxu0 %v1828
        %2532 = vmatpush.bf16.msra.mxu0 %v1816
        %2533 = vmatpush.bf16.msra.mxu0 %v1804
        %2534 = vmatpush.bf16.msra.mxu0 %v1792
        %2535 = vmatpush.bf16.msra.mxu0 %v1780
        %2536 = vmatpush.bf16.msra.mxu0 %v1768
        %2537 = vmatpush.bf16.msra.mxu0 %v1756
        %2538 = vmatmul.bf16.gmra.mxu0 %v360
        %v2539 = vpop.f32.mrf.mxu0
        %v2540 = vadd.f32 %v2491, %v2539
        %v2541 = vpop.f32.mrf.mxu0
        %v2542 = vadd.f32 %v2493, %v2541
        %2543 = vmatmul.bf16.gmra.mxu0 %v363
        %v2544 = vpop.f32.mrf.mxu0
        %v2545 = vadd.f32 %v2496, %v2544
        %v2546 = vpop.f32.mrf.mxu0
        %v2547 = vadd.f32 %v2498, %v2546
        %2548 = vmatmul.bf16.gmra.mxu0 %v366
        %v2549 = vpop.f32.mrf.mxu0
        %v2550 = vadd.f32 %v2501, %v2549
        %v2551 = vpop.f32.mrf.mxu0
        %v2552 = vadd.f32 %v2503, %v2551
        %2553 = vmatmul.bf16.gmra.mxu0 %v369
        %v2554 = vpop.f32.mrf.mxu0
        %v2555 = vadd.f32 %v2506, %v2554
        %v2556 = vpop.f32.mrf.mxu0
        %v2557 = vadd.f32 %v2508, %v2556
        %2558 = vmatmul.bf16.gmra.mxu0 %v372
        %v2559 = vpop.f32.mrf.mxu0
        %v2560 = vadd.f32 %v2511, %v2559
        %v2561 = vpop.f32.mrf.mxu0
        %v2562 = vadd.f32 %v2513, %v2561
        %2563 = vmatmul.bf16.gmra.mxu0 %v375
        %v2564 = vpop.f32.mrf.mxu0
        %v2565 = vadd.f32 %v2516, %v2564
        %v2566 = vpop.f32.mrf.mxu0
        %v2567 = vadd.f32 %v2518, %v2566
        %2568 = vmatmul.bf16.gmra.mxu0 %v378
        %v2569 = vpop.f32.mrf.mxu0
        %v2570 = vadd.f32 %v2521, %v2569
        %v2571 = vpop.f32.mrf.mxu0
        %v2572 = vadd.f32 %v2523, %v2571
        %2573 = vmatmul.bf16.gmra.mxu0 %v381
        %v2574 = vpop.f32.mrf.mxu0
        %v2575 = vadd.f32 %v2526, %v2574
        %v2576 = vpop.f32.mrf.mxu0
        %v2577 = vadd.f32 %v2528, %v2576
        %2578 = vdwg.mxu0
        %2579 = vmatpush.bf16.msra.mxu0 %v1649
        %2580 = vmatpush.bf16.msra.mxu0 %v1637
        %2581 = vmatpush.bf16.msra.mxu0 %v1625
        %2582 = vmatpush.bf16.msra.mxu0 %v1613
        %2583 = vmatpush.bf16.msra.mxu0 %v1601
        %2584 = vmatpush.bf16.msra.mxu0 %v1589
        %2585 = vmatpush.bf16.msra.mxu0 %v1577
        %2586 = vmatpush.bf16.msra.mxu0 %v1565
        %2587 = vmatmul.bf16.gmra.mxu0 %v358
        %v2588 = vpop.f32.mrf.mxu0
        %v2589 = vadd.f32 %v677, %v2588
        %v2590 = vpop.f32.mrf.mxu0
        %v2591 = vadd.f32 %v677, %v2590
        %2592 = vmatmul.bf16.gmra.mxu0 %v361
        %v2593 = vpop.f32.mrf.mxu0
        %v2594 = vadd.f32 %v677, %v2593
        %v2595 = vpop.f32.mrf.mxu0
        %v2596 = vadd.f32 %v677, %v2595
        %2597 = vmatmul.bf16.gmra.mxu0 %v364
        %v2598 = vpop.f32.mrf.mxu0
        %v2599 = vadd.f32 %v677, %v2598
        %v2600 = vpop.f32.mrf.mxu0
        %v2601 = vadd.f32 %v677, %v2600
        %2602 = vmatmul.bf16.gmra.mxu0 %v367
        %v2603 = vpop.f32.mrf.mxu0
        %v2604 = vadd.f32 %v677, %v2603
        %v2605 = vpop.f32.mrf.mxu0
        %v2606 = vadd.f32 %v677, %v2605
        %2607 = vmatmul.bf16.gmra.mxu0 %v370
        %v2608 = vpop.f32.mrf.mxu0
        %v2609 = vadd.f32 %v677, %v2608
        %v2610 = vpop.f32.mrf.mxu0
        %v2611 = vadd.f32 %v677, %v2610
        %2612 = vmatmul.bf16.gmra.mxu0 %v373
        %v2613 = vpop.f32.mrf.mxu0
        %v2614 = vadd.f32 %v677, %v2613
        %v2615 = vpop.f32.mrf.mxu0
        %v2616 = vadd.f32 %v677, %v2615
        %2617 = vmatmul.bf16.gmra.mxu0 %v376
        %v2618 = vpop.f32.mrf.mxu0
        %v2619 = vadd.f32 %v677, %v2618
        %v2620 = vpop.f32.mrf.mxu0
        %v2621 = vadd.f32 %v677, %v2620
        %2622 = vmatmul.bf16.gmra.mxu0 %v379
        %v2623 = vpop.f32.mrf.mxu0
        %v2624 = vadd.f32 %v677, %v2623
        %v2625 = vpop.f32.mrf.mxu0
        %v2626 = vadd.f32 %v677, %v2625
        %2627 = vdwg.mxu0
        %2628 = vmatpush.bf16.msra.mxu0 %v1745
        %2629 = vmatpush.bf16.msra.mxu0 %v1733
        %2630 = vmatpush.bf16.msra.mxu0 %v1721
        %2631 = vmatpush.bf16.msra.mxu0 %v1709
        %2632 = vmatpush.bf16.msra.mxu0 %v1697
        %2633 = vmatpush.bf16.msra.mxu0 %v1685
        %2634 = vmatpush.bf16.msra.mxu0 %v1673
        %2635 = vmatpush.bf16.msra.mxu0 %v1661
        %2636 = vmatmul.bf16.gmra.mxu0 %v359
        %v2637 = vpop.f32.mrf.mxu0
        %v2638 = vadd.f32 %v2589, %v2637
        %v2639 = vpop.f32.mrf.mxu0
        %v2640 = vadd.f32 %v2591, %v2639
        %2641 = vmatmul.bf16.gmra.mxu0 %v362
        %v2642 = vpop.f32.mrf.mxu0
        %v2643 = vadd.f32 %v2594, %v2642
        %v2644 = vpop.f32.mrf.mxu0
        %v2645 = vadd.f32 %v2596, %v2644
        %2646 = vmatmul.bf16.gmra.mxu0 %v365
        %v2647 = vpop.f32.mrf.mxu0
        %v2648 = vadd.f32 %v2599, %v2647
        %v2649 = vpop.f32.mrf.mxu0
        %v2650 = vadd.f32 %v2601, %v2649
        %2651 = vmatmul.bf16.gmra.mxu0 %v368
        %v2652 = vpop.f32.mrf.mxu0
        %v2653 = vadd.f32 %v2604, %v2652
        %v2654 = vpop.f32.mrf.mxu0
        %v2655 = vadd.f32 %v2606, %v2654
        %2656 = vmatmul.bf16.gmra.mxu0 %v371
        %v2657 = vpop.f32.mrf.mxu0
        %v2658 = vadd.f32 %v2609, %v2657
        %v2659 = vpop.f32.mrf.mxu0
        %v2660 = vadd.f32 %v2611, %v2659
        %2661 = vmatmul.bf16.gmra.mxu0 %v374
        %v2662 = vpop.f32.mrf.mxu0
        %v2663 = vadd.f32 %v2614, %v2662
        %v2664 = vpop.f32.mrf.mxu0
        %v2665 = vadd.f32 %v2616, %v2664
        %2666 = vmatmul.bf16.gmra.mxu0 %v377
        %v2667 = vpop.f32.mrf.mxu0
        %v2668 = vadd.f32 %v2619, %v2667
        %v2669 = vpop.f32.mrf.mxu0
        %v2670 = vadd.f32 %v2621, %v2669
        %2671 = vmatmul.bf16.gmra.mxu0 %v380
        %v2672 = vpop.f32.mrf.mxu0
        %v2673 = vadd.f32 %v2624, %v2672
        %v2674 = vpop.f32.mrf.mxu0
        %v2675 = vadd.f32 %v2626, %v2674
        %2676 = vdwg.mxu0
        %2677 = vmatpush.bf16.msra.mxu0 %v1841
        %2678 = vmatpush.bf16.msra.mxu0 %v1829
        %2679 = vmatpush.bf16.msra.mxu0 %v1817
        %2680 = vmatpush.bf16.msra.mxu0 %v1805
        %2681 = vmatpush.bf16.msra.mxu0 %v1793
        %2682 = vmatpush.bf16.msra.mxu0 %v1781
        %2683 = vmatpush.bf16.msra.mxu0 %v1769
        %2684 = vmatpush.bf16.msra.mxu0 %v1757
        %2685 = vmatmul.bf16.gmra.mxu0 %v360
        %v2686 = vpop.f32.mrf.mxu0
        %v2687 = vadd.f32 %v2638, %v2686
        %v2688 = vpop.f32.mrf.mxu0
        %v2689 = vadd.f32 %v2640, %v2688
        %2690 = vmatmul.bf16.gmra.mxu0 %v363
        %v2691 = vpop.f32.mrf.mxu0
        %v2692 = vadd.f32 %v2643, %v2691
        %v2693 = vpop.f32.mrf.mxu0
        %v2694 = vadd.f32 %v2645, %v2693
        %2695 = vmatmul.bf16.gmra.mxu0 %v366
        %v2696 = vpop.f32.mrf.mxu0
        %v2697 = vadd.f32 %v2648, %v2696
        %v2698 = vpop.f32.mrf.mxu0
        %v2699 = vadd.f32 %v2650, %v2698
        %2700 = vmatmul.bf16.gmra.mxu0 %v369
        %v2701 = vpop.f32.mrf.mxu0
        %v2702 = vadd.f32 %v2653, %v2701
        %v2703 = vpop.f32.mrf.mxu0
        %v2704 = vadd.f32 %v2655, %v2703
        %2705 = vmatmul.bf16.gmra.mxu0 %v372
        %v2706 = vpop.f32.mrf.mxu0
        %v2707 = vadd.f32 %v2658, %v2706
        %v2708 = vpop.f32.mrf.mxu0
        %v2709 = vadd.f32 %v2660, %v2708
        %2710 = vmatmul.bf16.gmra.mxu0 %v375
        %v2711 = vpop.f32.mrf.mxu0
        %v2712 = vadd.f32 %v2663, %v2711
        %v2713 = vpop.f32.mrf.mxu0
        %v2714 = vadd.f32 %v2665, %v2713
        %2715 = vmatmul.bf16.gmra.mxu0 %v378
        %v2716 = vpop.f32.mrf.mxu0
        %v2717 = vadd.f32 %v2668, %v2716
        %v2718 = vpop.f32.mrf.mxu0
        %v2719 = vadd.f32 %v2670, %v2718
        %2720 = vmatmul.bf16.gmra.mxu0 %v381
        %v2721 = vpop.f32.mrf.mxu0
        %v2722 = vadd.f32 %v2673, %v2721
        %v2723 = vpop.f32.mrf.mxu0
        %v2724 = vadd.f32 %v2675, %v2723
        %2725 = vdwg.mxu0
        %2726 = vmatpush.bf16.msra.mxu0 %v1650
        %2727 = vmatpush.bf16.msra.mxu0 %v1638
        %2728 = vmatpush.bf16.msra.mxu0 %v1626
        %2729 = vmatpush.bf16.msra.mxu0 %v1614
        %2730 = vmatpush.bf16.msra.mxu0 %v1602
        %2731 = vmatpush.bf16.msra.mxu0 %v1590
        %2732 = vmatpush.bf16.msra.mxu0 %v1578
        %2733 = vmatpush.bf16.msra.mxu0 %v1566
        %2734 = vmatmul.bf16.gmra.mxu0 %v358
        %v2735 = vpop.f32.mrf.mxu0
        %v2736 = vadd.f32 %v678, %v2735
        %v2737 = vpop.f32.mrf.mxu0
        %v2738 = vadd.f32 %v678, %v2737
        %2739 = vmatmul.bf16.gmra.mxu0 %v361
        %v2740 = vpop.f32.mrf.mxu0
        %v2741 = vadd.f32 %v678, %v2740
        %v2742 = vpop.f32.mrf.mxu0
        %v2743 = vadd.f32 %v678, %v2742
        %2744 = vmatmul.bf16.gmra.mxu0 %v364
        %v2745 = vpop.f32.mrf.mxu0
        %v2746 = vadd.f32 %v678, %v2745
        %v2747 = vpop.f32.mrf.mxu0
        %v2748 = vadd.f32 %v678, %v2747
        %2749 = vmatmul.bf16.gmra.mxu0 %v367
        %v2750 = vpop.f32.mrf.mxu0
        %v2751 = vadd.f32 %v678, %v2750
        %v2752 = vpop.f32.mrf.mxu0
        %v2753 = vadd.f32 %v678, %v2752
        %2754 = vmatmul.bf16.gmra.mxu0 %v370
        %v2755 = vpop.f32.mrf.mxu0
        %v2756 = vadd.f32 %v678, %v2755
        %v2757 = vpop.f32.mrf.mxu0
        %v2758 = vadd.f32 %v678, %v2757
        %2759 = vmatmul.bf16.gmra.mxu0 %v373
        %v2760 = vpop.f32.mrf.mxu0
        %v2761 = vadd.f32 %v678, %v2760
        %v2762 = vpop.f32.mrf.mxu0
        %v2763 = vadd.f32 %v678, %v2762
        %2764 = vmatmul.bf16.gmra.mxu0 %v376
        %v2765 = vpop.f32.mrf.mxu0
        %v2766 = vadd.f32 %v678, %v2765
        %v2767 = vpop.f32.mrf.mxu0
        %v2768 = vadd.f32 %v678, %v2767
        %2769 = vmatmul.bf16.gmra.mxu0 %v379
        %v2770 = vpop.f32.mrf.mxu0
        %v2771 = vadd.f32 %v678, %v2770
        %v2772 = vpop.f32.mrf.mxu0
        %v2773 = vadd.f32 %v678, %v2772
        %2774 = vdwg.mxu0
        %2775 = vmatpush.bf16.msra.mxu0 %v1746
        %2776 = vmatpush.bf16.msra.mxu0 %v1734
        %2777 = vmatpush.bf16.msra.mxu0 %v1722
        %2778 = vmatpush.bf16.msra.mxu0 %v1710
        %2779 = vmatpush.bf16.msra.mxu0 %v1698
        %2780 = vmatpush.bf16.msra.mxu0 %v1686
        %2781 = vmatpush.bf16.msra.mxu0 %v1674
        %2782 = vmatpush.bf16.msra.mxu0 %v1662
        %2783 = vmatmul.bf16.gmra.mxu0 %v359
        %v2784 = vpop.f32.mrf.mxu0
        %v2785 = vadd.f32 %v2736, %v2784
        %v2786 = vpop.f32.mrf.mxu0
        %v2787 = vadd.f32 %v2738, %v2786
        %2788 = vmatmul.bf16.gmra.mxu0 %v362
        %v2789 = vpop.f32.mrf.mxu0
        %v2790 = vadd.f32 %v2741, %v2789
        %v2791 = vpop.f32.mrf.mxu0
        %v2792 = vadd.f32 %v2743, %v2791
        %2793 = vmatmul.bf16.gmra.mxu0 %v365
        %v2794 = vpop.f32.mrf.mxu0
        %v2795 = vadd.f32 %v2746, %v2794
        %v2796 = vpop.f32.mrf.mxu0
        %v2797 = vadd.f32 %v2748, %v2796
        %2798 = vmatmul.bf16.gmra.mxu0 %v368
        %v2799 = vpop.f32.mrf.mxu0
        %v2800 = vadd.f32 %v2751, %v2799
        %v2801 = vpop.f32.mrf.mxu0
        %v2802 = vadd.f32 %v2753, %v2801
        %2803 = vmatmul.bf16.gmra.mxu0 %v371
        %v2804 = vpop.f32.mrf.mxu0
        %v2805 = vadd.f32 %v2756, %v2804
        %v2806 = vpop.f32.mrf.mxu0
        %v2807 = vadd.f32 %v2758, %v2806
        %2808 = vmatmul.bf16.gmra.mxu0 %v374
        %v2809 = vpop.f32.mrf.mxu0
        %v2810 = vadd.f32 %v2761, %v2809
        %v2811 = vpop.f32.mrf.mxu0
        %v2812 = vadd.f32 %v2763, %v2811
        %2813 = vmatmul.bf16.gmra.mxu0 %v377
        %v2814 = vpop.f32.mrf.mxu0
        %v2815 = vadd.f32 %v2766, %v2814
        %v2816 = vpop.f32.mrf.mxu0
        %v2817 = vadd.f32 %v2768, %v2816
        %2818 = vmatmul.bf16.gmra.mxu0 %v380
        %v2819 = vpop.f32.mrf.mxu0
        %v2820 = vadd.f32 %v2771, %v2819
        %v2821 = vpop.f32.mrf.mxu0
        %v2822 = vadd.f32 %v2773, %v2821
        %2823 = vdwg.mxu0
        %2824 = vmatpush.bf16.msra.mxu0 %v1842
        %2825 = vmatpush.bf16.msra.mxu0 %v1830
        %2826 = vmatpush.bf16.msra.mxu0 %v1818
        %2827 = vmatpush.bf16.msra.mxu0 %v1806
        %2828 = vmatpush.bf16.msra.mxu0 %v1794
        %2829 = vmatpush.bf16.msra.mxu0 %v1782
        %2830 = vmatpush.bf16.msra.mxu0 %v1770
        %2831 = vmatpush.bf16.msra.mxu0 %v1758
        %2832 = vmatmul.bf16.gmra.mxu0 %v360
        %v2833 = vpop.f32.mrf.mxu0
        %v2834 = vadd.f32 %v2785, %v2833
        %v2835 = vpop.f32.mrf.mxu0
        %v2836 = vadd.f32 %v2787, %v2835
        %2837 = vmatmul.bf16.gmra.mxu0 %v363
        %v2838 = vpop.f32.mrf.mxu0
        %v2839 = vadd.f32 %v2790, %v2838
        %v2840 = vpop.f32.mrf.mxu0
        %v2841 = vadd.f32 %v2792, %v2840
        %2842 = vmatmul.bf16.gmra.mxu0 %v366
        %v2843 = vpop.f32.mrf.mxu0
        %v2844 = vadd.f32 %v2795, %v2843
        %v2845 = vpop.f32.mrf.mxu0
        %v2846 = vadd.f32 %v2797, %v2845
        %2847 = vmatmul.bf16.gmra.mxu0 %v369
        %v2848 = vpop.f32.mrf.mxu0
        %v2849 = vadd.f32 %v2800, %v2848
        %v2850 = vpop.f32.mrf.mxu0
        %v2851 = vadd.f32 %v2802, %v2850
        %2852 = vmatmul.bf16.gmra.mxu0 %v372
        %v2853 = vpop.f32.mrf.mxu0
        %v2854 = vadd.f32 %v2805, %v2853
        %v2855 = vpop.f32.mrf.mxu0
        %v2856 = vadd.f32 %v2807, %v2855
        %2857 = vmatmul.bf16.gmra.mxu0 %v375
        %v2858 = vpop.f32.mrf.mxu0
        %v2859 = vadd.f32 %v2810, %v2858
        %v2860 = vpop.f32.mrf.mxu0
        %v2861 = vadd.f32 %v2812, %v2860
        %2862 = vmatmul.bf16.gmra.mxu0 %v378
        %v2863 = vpop.f32.mrf.mxu0
        %v2864 = vadd.f32 %v2815, %v2863
        %v2865 = vpop.f32.mrf.mxu0
        %v2866 = vadd.f32 %v2817, %v2865
        %2867 = vmatmul.bf16.gmra.mxu0 %v381
        %v2868 = vpop.f32.mrf.mxu0
        %v2869 = vadd.f32 %v2820, %v2868
        %v2870 = vpop.f32.mrf.mxu0
        %v2871 = vadd.f32 %v2822, %v2870
        %2872 = vdwg.mxu0
        %2873 = vmatpush.bf16.msra.mxu0 %v1651
        %2874 = vmatpush.bf16.msra.mxu0 %v1639
        %2875 = vmatpush.bf16.msra.mxu0 %v1627
        %2876 = vmatpush.bf16.msra.mxu0 %v1615
        %2877 = vmatpush.bf16.msra.mxu0 %v1603
        %2878 = vmatpush.bf16.msra.mxu0 %v1591
        %2879 = vmatpush.bf16.msra.mxu0 %v1579
        %2880 = vmatpush.bf16.msra.mxu0 %v1567
        %2881 = vmatmul.bf16.gmra.mxu0 %v358
        %v2882 = vpop.f32.mrf.mxu0
        %v2883 = vadd.f32 %v679, %v2882
        %v2884 = vpop.f32.mrf.mxu0
        %v2885 = vadd.f32 %v679, %v2884
        %2886 = vmatmul.bf16.gmra.mxu0 %v361
        %v2887 = vpop.f32.mrf.mxu0
        %v2888 = vadd.f32 %v679, %v2887
        %v2889 = vpop.f32.mrf.mxu0
        %v2890 = vadd.f32 %v679, %v2889
        %2891 = vmatmul.bf16.gmra.mxu0 %v364
        %v2892 = vpop.f32.mrf.mxu0
        %v2893 = vadd.f32 %v679, %v2892
        %v2894 = vpop.f32.mrf.mxu0
        %v2895 = vadd.f32 %v679, %v2894
        %2896 = vmatmul.bf16.gmra.mxu0 %v367
        %v2897 = vpop.f32.mrf.mxu0
        %v2898 = vadd.f32 %v679, %v2897
        %v2899 = vpop.f32.mrf.mxu0
        %v2900 = vadd.f32 %v679, %v2899
        %2901 = vmatmul.bf16.gmra.mxu0 %v370
        %v2902 = vpop.f32.mrf.mxu0
        %v2903 = vadd.f32 %v679, %v2902
        %v2904 = vpop.f32.mrf.mxu0
        %v2905 = vadd.f32 %v679, %v2904
        %2906 = vmatmul.bf16.gmra.mxu0 %v373
        %v2907 = vpop.f32.mrf.mxu0
        %v2908 = vadd.f32 %v679, %v2907
        %v2909 = vpop.f32.mrf.mxu0
        %v2910 = vadd.f32 %v679, %v2909
        %2911 = vmatmul.bf16.gmra.mxu0 %v376
        %v2912 = vpop.f32.mrf.mxu0
        %v2913 = vadd.f32 %v679, %v2912
        %v2914 = vpop.f32.mrf.mxu0
        %v2915 = vadd.f32 %v679, %v2914
        %2916 = vmatmul.bf16.gmra.mxu0 %v379
        %v2917 = vpop.f32.mrf.mxu0
        %v2918 = vadd.f32 %v679, %v2917
        %v2919 = vpop.f32.mrf.mxu0
        %v2920 = vadd.f32 %v679, %v2919
        %2921 = vdwg.mxu0
        %2922 = vmatpush.bf16.msra.mxu0 %v1747
        %2923 = vmatpush.bf16.msra.mxu0 %v1735
        %2924 = vmatpush.bf16.msra.mxu0 %v1723
        %2925 = vmatpush.bf16.msra.mxu0 %v1711
        %2926 = vmatpush.bf16.msra.mxu0 %v1699
        %2927 = vmatpush.bf16.msra.mxu0 %v1687
        %2928 = vmatpush.bf16.msra.mxu0 %v1675
        %2929 = vmatpush.bf16.msra.mxu0 %v1663
        %2930 = vmatmul.bf16.gmra.mxu0 %v359
        %v2931 = vpop.f32.mrf.mxu0
        %v2932 = vadd.f32 %v2883, %v2931
        %v2933 = vpop.f32.mrf.mxu0
        %v2934 = vadd.f32 %v2885, %v2933
        %2935 = vmatmul.bf16.gmra.mxu0 %v362
        %v2936 = vpop.f32.mrf.mxu0
        %v2937 = vadd.f32 %v2888, %v2936
        %v2938 = vpop.f32.mrf.mxu0
        %v2939 = vadd.f32 %v2890, %v2938
        %2940 = vmatmul.bf16.gmra.mxu0 %v365
        %v2941 = vpop.f32.mrf.mxu0
        %v2942 = vadd.f32 %v2893, %v2941
        %v2943 = vpop.f32.mrf.mxu0
        %v2944 = vadd.f32 %v2895, %v2943
        %2945 = vmatmul.bf16.gmra.mxu0 %v368
        %v2946 = vpop.f32.mrf.mxu0
        %v2947 = vadd.f32 %v2898, %v2946
        %v2948 = vpop.f32.mrf.mxu0
        %v2949 = vadd.f32 %v2900, %v2948
        %2950 = vmatmul.bf16.gmra.mxu0 %v371
        %v2951 = vpop.f32.mrf.mxu0
        %v2952 = vadd.f32 %v2903, %v2951
        %v2953 = vpop.f32.mrf.mxu0
        %v2954 = vadd.f32 %v2905, %v2953
        %2955 = vmatmul.bf16.gmra.mxu0 %v374
        %v2956 = vpop.f32.mrf.mxu0
        %v2957 = vadd.f32 %v2908, %v2956
        %v2958 = vpop.f32.mrf.mxu0
        %v2959 = vadd.f32 %v2910, %v2958
        %2960 = vmatmul.bf16.gmra.mxu0 %v377
        %v2961 = vpop.f32.mrf.mxu0
        %v2962 = vadd.f32 %v2913, %v2961
        %v2963 = vpop.f32.mrf.mxu0
        %v2964 = vadd.f32 %v2915, %v2963
        %2965 = vmatmul.bf16.gmra.mxu0 %v380
        %v2966 = vpop.f32.mrf.mxu0
        %v2967 = vadd.f32 %v2918, %v2966
        %v2968 = vpop.f32.mrf.mxu0
        %v2969 = vadd.f32 %v2920, %v2968
        %2970 = vdwg.mxu0
        %2971 = vmatpush.bf16.msra.mxu0 %v1843
        %2972 = vmatpush.bf16.msra.mxu0 %v1831
        %2973 = vmatpush.bf16.msra.mxu0 %v1819
        %2974 = vmatpush.bf16.msra.mxu0 %v1807
        %2975 = vmatpush.bf16.msra.mxu0 %v1795
        %2976 = vmatpush.bf16.msra.mxu0 %v1783
        %2977 = vmatpush.bf16.msra.mxu0 %v1771
        %2978 = vmatpush.bf16.msra.mxu0 %v1759
        %2979 = vmatmul.bf16.gmra.mxu0 %v360
        %v2980 = vpop.f32.mrf.mxu0
        %v2981 = vadd.f32 %v2932, %v2980
        %v2982 = vpop.f32.mrf.mxu0
        %v2983 = vadd.f32 %v2934, %v2982
        %2984 = vmatmul.bf16.gmra.mxu0 %v363
        %v2985 = vpop.f32.mrf.mxu0
        %v2986 = vadd.f32 %v2937, %v2985
        %v2987 = vpop.f32.mrf.mxu0
        %v2988 = vadd.f32 %v2939, %v2987
        %2989 = vmatmul.bf16.gmra.mxu0 %v366
        %v2990 = vpop.f32.mrf.mxu0
        %v2991 = vadd.f32 %v2942, %v2990
        %v2992 = vpop.f32.mrf.mxu0
        %v2993 = vadd.f32 %v2944, %v2992
        %2994 = vmatmul.bf16.gmra.mxu0 %v369
        %v2995 = vpop.f32.mrf.mxu0
        %v2996 = vadd.f32 %v2947, %v2995
        %v2997 = vpop.f32.mrf.mxu0
        %v2998 = vadd.f32 %v2949, %v2997
        %2999 = vmatmul.bf16.gmra.mxu0 %v372
        %v3000 = vpop.f32.mrf.mxu0
        %v3001 = vadd.f32 %v2952, %v3000
        %v3002 = vpop.f32.mrf.mxu0
        %v3003 = vadd.f32 %v2954, %v3002
        %3004 = vmatmul.bf16.gmra.mxu0 %v375
        %v3005 = vpop.f32.mrf.mxu0
        %v3006 = vadd.f32 %v2957, %v3005
        %v3007 = vpop.f32.mrf.mxu0
        %v3008 = vadd.f32 %v2959, %v3007
        %3009 = vmatmul.bf16.gmra.mxu0 %v378
        %v3010 = vpop.f32.mrf.mxu0
        %v3011 = vadd.f32 %v2962, %v3010
        %v3012 = vpop.f32.mrf.mxu0
        %v3013 = vadd.f32 %v2964, %v3012
        %3014 = vmatmul.bf16.gmra.mxu0 %v381
        %v3015 = vpop.f32.mrf.mxu0
        %v3016 = vadd.f32 %v2967, %v3015
        %v3017 = vpop.f32.mrf.mxu0
        %v3018 = vadd.f32 %v2969, %v3017
        %3019 = vdwg.mxu0
        %3020 = vmatpush.bf16.msra.mxu0 %v1652
        %3021 = vmatpush.bf16.msra.mxu0 %v1640
        %3022 = vmatpush.bf16.msra.mxu0 %v1628
        %3023 = vmatpush.bf16.msra.mxu0 %v1616
        %3024 = vmatpush.bf16.msra.mxu0 %v1604
        %3025 = vmatpush.bf16.msra.mxu0 %v1592
        %3026 = vmatpush.bf16.msra.mxu0 %v1580
        %3027 = vmatpush.bf16.msra.mxu0 %v1568
        %3028 = vmatmul.bf16.gmra.mxu0 %v358
        %v3029 = vpop.f32.mrf.mxu0
        %v3030 = vadd.f32 %v680, %v3029
        %v3031 = vpop.f32.mrf.mxu0
        %v3032 = vadd.f32 %v680, %v3031
        %3033 = vmatmul.bf16.gmra.mxu0 %v361
        %v3034 = vpop.f32.mrf.mxu0
        %v3035 = vadd.f32 %v680, %v3034
        %v3036 = vpop.f32.mrf.mxu0
        %v3037 = vadd.f32 %v680, %v3036
        %3038 = vmatmul.bf16.gmra.mxu0 %v364
        %v3039 = vpop.f32.mrf.mxu0
        %v3040 = vadd.f32 %v680, %v3039
        %v3041 = vpop.f32.mrf.mxu0
        %v3042 = vadd.f32 %v680, %v3041
        %3043 = vmatmul.bf16.gmra.mxu0 %v367
        %v3044 = vpop.f32.mrf.mxu0
        %v3045 = vadd.f32 %v680, %v3044
        %v3046 = vpop.f32.mrf.mxu0
        %v3047 = vadd.f32 %v680, %v3046
        %3048 = vmatmul.bf16.gmra.mxu0 %v370
        %v3049 = vpop.f32.mrf.mxu0
        %v3050 = vadd.f32 %v680, %v3049
        %v3051 = vpop.f32.mrf.mxu0
        %v3052 = vadd.f32 %v680, %v3051
        %3053 = vmatmul.bf16.gmra.mxu0 %v373
        %v3054 = vpop.f32.mrf.mxu0
        %v3055 = vadd.f32 %v680, %v3054
        %v3056 = vpop.f32.mrf.mxu0
        %v3057 = vadd.f32 %v680, %v3056
        %3058 = vmatmul.bf16.gmra.mxu0 %v376
        %v3059 = vpop.f32.mrf.mxu0
        %v3060 = vadd.f32 %v680, %v3059
        %v3061 = vpop.f32.mrf.mxu0
        %v3062 = vadd.f32 %v680, %v3061
        %3063 = vmatmul.bf16.gmra.mxu0 %v379
        %v3064 = vpop.f32.mrf.mxu0
        %v3065 = vadd.f32 %v680, %v3064
        %v3066 = vpop.f32.mrf.mxu0
        %v3067 = vadd.f32 %v680, %v3066
        %3068 = vdwg.mxu0
        %3069 = vmatpush.bf16.msra.mxu0 %v1748
        %3070 = vmatpush.bf16.msra.mxu0 %v1736
        %3071 = vmatpush.bf16.msra.mxu0 %v1724
        %3072 = vmatpush.bf16.msra.mxu0 %v1712
        %3073 = vmatpush.bf16.msra.mxu0 %v1700
        %3074 = vmatpush.bf16.msra.mxu0 %v1688
        %3075 = vmatpush.bf16.msra.mxu0 %v1676
        %3076 = vmatpush.bf16.msra.mxu0 %v1664
        %3077 = vmatmul.bf16.gmra.mxu0 %v359
        %v3078 = vpop.f32.mrf.mxu0
        %v3079 = vadd.f32 %v3030, %v3078
        %v3080 = vpop.f32.mrf.mxu0
        %v3081 = vadd.f32 %v3032, %v3080
        %3082 = vmatmul.bf16.gmra.mxu0 %v362
        %v3083 = vpop.f32.mrf.mxu0
        %v3084 = vadd.f32 %v3035, %v3083
        %v3085 = vpop.f32.mrf.mxu0
        %v3086 = vadd.f32 %v3037, %v3085
        %3087 = vmatmul.bf16.gmra.mxu0 %v365
        %v3088 = vpop.f32.mrf.mxu0
        %v3089 = vadd.f32 %v3040, %v3088
        %v3090 = vpop.f32.mrf.mxu0
        %v3091 = vadd.f32 %v3042, %v3090
        %3092 = vmatmul.bf16.gmra.mxu0 %v368
        %v3093 = vpop.f32.mrf.mxu0
        %v3094 = vadd.f32 %v3045, %v3093
        %v3095 = vpop.f32.mrf.mxu0
        %v3096 = vadd.f32 %v3047, %v3095
        %3097 = vmatmul.bf16.gmra.mxu0 %v371
        %v3098 = vpop.f32.mrf.mxu0
        %v3099 = vadd.f32 %v3050, %v3098
        %v3100 = vpop.f32.mrf.mxu0
        %v3101 = vadd.f32 %v3052, %v3100
        %3102 = vmatmul.bf16.gmra.mxu0 %v374
        %v3103 = vpop.f32.mrf.mxu0
        %v3104 = vadd.f32 %v3055, %v3103
        %v3105 = vpop.f32.mrf.mxu0
        %v3106 = vadd.f32 %v3057, %v3105
        %3107 = vmatmul.bf16.gmra.mxu0 %v377
        %v3108 = vpop.f32.mrf.mxu0
        %v3109 = vadd.f32 %v3060, %v3108
        %v3110 = vpop.f32.mrf.mxu0
        %v3111 = vadd.f32 %v3062, %v3110
        %3112 = vmatmul.bf16.gmra.mxu0 %v380
        %v3113 = vpop.f32.mrf.mxu0
        %v3114 = vadd.f32 %v3065, %v3113
        %v3115 = vpop.f32.mrf.mxu0
        %v3116 = vadd.f32 %v3067, %v3115
        %3117 = vdwg.mxu0
        %3118 = vmatpush.bf16.msra.mxu0 %v1844
        %3119 = vmatpush.bf16.msra.mxu0 %v1832
        %3120 = vmatpush.bf16.msra.mxu0 %v1820
        %3121 = vmatpush.bf16.msra.mxu0 %v1808
        %3122 = vmatpush.bf16.msra.mxu0 %v1796
        %3123 = vmatpush.bf16.msra.mxu0 %v1784
        %3124 = vmatpush.bf16.msra.mxu0 %v1772
        %3125 = vmatpush.bf16.msra.mxu0 %v1760
        %3126 = vmatmul.bf16.gmra.mxu0 %v360
        %v3127 = vpop.f32.mrf.mxu0
        %v3128 = vadd.f32 %v3079, %v3127
        %v3129 = vpop.f32.mrf.mxu0
        %v3130 = vadd.f32 %v3081, %v3129
        %3131 = vmatmul.bf16.gmra.mxu0 %v363
        %v3132 = vpop.f32.mrf.mxu0
        %v3133 = vadd.f32 %v3084, %v3132
        %v3134 = vpop.f32.mrf.mxu0
        %v3135 = vadd.f32 %v3086, %v3134
        %3136 = vmatmul.bf16.gmra.mxu0 %v366
        %v3137 = vpop.f32.mrf.mxu0
        %v3138 = vadd.f32 %v3089, %v3137
        %v3139 = vpop.f32.mrf.mxu0
        %v3140 = vadd.f32 %v3091, %v3139
        %3141 = vmatmul.bf16.gmra.mxu0 %v369
        %v3142 = vpop.f32.mrf.mxu0
        %v3143 = vadd.f32 %v3094, %v3142
        %v3144 = vpop.f32.mrf.mxu0
        %v3145 = vadd.f32 %v3096, %v3144
        %3146 = vmatmul.bf16.gmra.mxu0 %v372
        %v3147 = vpop.f32.mrf.mxu0
        %v3148 = vadd.f32 %v3099, %v3147
        %v3149 = vpop.f32.mrf.mxu0
        %v3150 = vadd.f32 %v3101, %v3149
        %3151 = vmatmul.bf16.gmra.mxu0 %v375
        %v3152 = vpop.f32.mrf.mxu0
        %v3153 = vadd.f32 %v3104, %v3152
        %v3154 = vpop.f32.mrf.mxu0
        %v3155 = vadd.f32 %v3106, %v3154
        %3156 = vmatmul.bf16.gmra.mxu0 %v378
        %v3157 = vpop.f32.mrf.mxu0
        %v3158 = vadd.f32 %v3109, %v3157
        %v3159 = vpop.f32.mrf.mxu0
        %v3160 = vadd.f32 %v3111, %v3159
        %3161 = vmatmul.bf16.gmra.mxu0 %v381
        %v3162 = vpop.f32.mrf.mxu0
        %v3163 = vadd.f32 %v3114, %v3162
        %v3164 = vpop.f32.mrf.mxu0
        %v3165 = vadd.f32 %v3116, %v3164
        %3166 = vdwg.mxu0
        %3167 = vmatpush.bf16.msra.mxu0 %v1653
        %3168 = vmatpush.bf16.msra.mxu0 %v1641
        %3169 = vmatpush.bf16.msra.mxu0 %v1629
        %3170 = vmatpush.bf16.msra.mxu0 %v1617
        %3171 = vmatpush.bf16.msra.mxu0 %v1605
        %3172 = vmatpush.bf16.msra.mxu0 %v1593
        %3173 = vmatpush.bf16.msra.mxu0 %v1581
        %3174 = vmatpush.bf16.msra.mxu0 %v1569
        %3175 = vmatmul.bf16.gmra.mxu0 %v358
        %v3176 = vpop.f32.mrf.mxu0
        %v3177 = vadd.f32 %v681, %v3176
        %v3178 = vpop.f32.mrf.mxu0
        %v3179 = vadd.f32 %v681, %v3178
        %3180 = vmatmul.bf16.gmra.mxu0 %v361
        %v3181 = vpop.f32.mrf.mxu0
        %v3182 = vadd.f32 %v681, %v3181
        %v3183 = vpop.f32.mrf.mxu0
        %v3184 = vadd.f32 %v681, %v3183
        %3185 = vmatmul.bf16.gmra.mxu0 %v364
        %v3186 = vpop.f32.mrf.mxu0
        %v3187 = vadd.f32 %v681, %v3186
        %v3188 = vpop.f32.mrf.mxu0
        %v3189 = vadd.f32 %v681, %v3188
        %3190 = vmatmul.bf16.gmra.mxu0 %v367
        %v3191 = vpop.f32.mrf.mxu0
        %v3192 = vadd.f32 %v681, %v3191
        %v3193 = vpop.f32.mrf.mxu0
        %v3194 = vadd.f32 %v681, %v3193
        %3195 = vmatmul.bf16.gmra.mxu0 %v370
        %v3196 = vpop.f32.mrf.mxu0
        %v3197 = vadd.f32 %v681, %v3196
        %v3198 = vpop.f32.mrf.mxu0
        %v3199 = vadd.f32 %v681, %v3198
        %3200 = vmatmul.bf16.gmra.mxu0 %v373
        %v3201 = vpop.f32.mrf.mxu0
        %v3202 = vadd.f32 %v681, %v3201
        %v3203 = vpop.f32.mrf.mxu0
        %v3204 = vadd.f32 %v681, %v3203
        %3205 = vmatmul.bf16.gmra.mxu0 %v376
        %v3206 = vpop.f32.mrf.mxu0
        %v3207 = vadd.f32 %v681, %v3206
        %v3208 = vpop.f32.mrf.mxu0
        %v3209 = vadd.f32 %v681, %v3208
        %3210 = vmatmul.bf16.gmra.mxu0 %v379
        %v3211 = vpop.f32.mrf.mxu0
        %v3212 = vadd.f32 %v681, %v3211
        %v3213 = vpop.f32.mrf.mxu0
        %v3214 = vadd.f32 %v681, %v3213
        %3215 = vdwg.mxu0
        %3216 = vmatpush.bf16.msra.mxu0 %v1749
        %3217 = vmatpush.bf16.msra.mxu0 %v1737
        %3218 = vmatpush.bf16.msra.mxu0 %v1725
        %3219 = vmatpush.bf16.msra.mxu0 %v1713
        %3220 = vmatpush.bf16.msra.mxu0 %v1701
        %3221 = vmatpush.bf16.msra.mxu0 %v1689
        %3222 = vmatpush.bf16.msra.mxu0 %v1677
        %3223 = vmatpush.bf16.msra.mxu0 %v1665
        %3224 = vmatmul.bf16.gmra.mxu0 %v359
        %v3225 = vpop.f32.mrf.mxu0
        %v3226 = vadd.f32 %v3177, %v3225
        %v3227 = vpop.f32.mrf.mxu0
        %v3228 = vadd.f32 %v3179, %v3227
        %3229 = vmatmul.bf16.gmra.mxu0 %v362
        %v3230 = vpop.f32.mrf.mxu0
        %v3231 = vadd.f32 %v3182, %v3230
        %v3232 = vpop.f32.mrf.mxu0
        %v3233 = vadd.f32 %v3184, %v3232
        %3234 = vmatmul.bf16.gmra.mxu0 %v365
        %v3235 = vpop.f32.mrf.mxu0
        %v3236 = vadd.f32 %v3187, %v3235
        %v3237 = vpop.f32.mrf.mxu0
        %v3238 = vadd.f32 %v3189, %v3237
        %3239 = vmatmul.bf16.gmra.mxu0 %v368
        %v3240 = vpop.f32.mrf.mxu0
        %v3241 = vadd.f32 %v3192, %v3240
        %v3242 = vpop.f32.mrf.mxu0
        %v3243 = vadd.f32 %v3194, %v3242
        %3244 = vmatmul.bf16.gmra.mxu0 %v371
        %v3245 = vpop.f32.mrf.mxu0
        %v3246 = vadd.f32 %v3197, %v3245
        %v3247 = vpop.f32.mrf.mxu0
        %v3248 = vadd.f32 %v3199, %v3247
        %3249 = vmatmul.bf16.gmra.mxu0 %v374
        %v3250 = vpop.f32.mrf.mxu0
        %v3251 = vadd.f32 %v3202, %v3250
        %v3252 = vpop.f32.mrf.mxu0
        %v3253 = vadd.f32 %v3204, %v3252
        %3254 = vmatmul.bf16.gmra.mxu0 %v377
        %v3255 = vpop.f32.mrf.mxu0
        %v3256 = vadd.f32 %v3207, %v3255
        %v3257 = vpop.f32.mrf.mxu0
        %v3258 = vadd.f32 %v3209, %v3257
        %3259 = vmatmul.bf16.gmra.mxu0 %v380
        %v3260 = vpop.f32.mrf.mxu0
        %v3261 = vadd.f32 %v3212, %v3260
        %v3262 = vpop.f32.mrf.mxu0
        %v3263 = vadd.f32 %v3214, %v3262
        %3264 = vdwg.mxu0
        %3265 = vmatpush.bf16.msra.mxu0 %v1845
        %3266 = vmatpush.bf16.msra.mxu0 %v1833
        %3267 = vmatpush.bf16.msra.mxu0 %v1821
        %3268 = vmatpush.bf16.msra.mxu0 %v1809
        %3269 = vmatpush.bf16.msra.mxu0 %v1797
        %3270 = vmatpush.bf16.msra.mxu0 %v1785
        %3271 = vmatpush.bf16.msra.mxu0 %v1773
        %3272 = vmatpush.bf16.msra.mxu0 %v1761
        %3273 = vmatmul.bf16.gmra.mxu0 %v360
        %v3274 = vpop.f32.mrf.mxu0
        %v3275 = vadd.f32 %v3226, %v3274
        %v3276 = vpop.f32.mrf.mxu0
        %v3277 = vadd.f32 %v3228, %v3276
        %3278 = vmatmul.bf16.gmra.mxu0 %v363
        %v3279 = vpop.f32.mrf.mxu0
        %v3280 = vadd.f32 %v3231, %v3279
        %v3281 = vpop.f32.mrf.mxu0
        %v3282 = vadd.f32 %v3233, %v3281
        %3283 = vmatmul.bf16.gmra.mxu0 %v366
        %v3284 = vpop.f32.mrf.mxu0
        %v3285 = vadd.f32 %v3236, %v3284
        %v3286 = vpop.f32.mrf.mxu0
        %v3287 = vadd.f32 %v3238, %v3286
        %3288 = vmatmul.bf16.gmra.mxu0 %v369
        %v3289 = vpop.f32.mrf.mxu0
        %v3290 = vadd.f32 %v3241, %v3289
        %v3291 = vpop.f32.mrf.mxu0
        %v3292 = vadd.f32 %v3243, %v3291
        %3293 = vmatmul.bf16.gmra.mxu0 %v372
        %v3294 = vpop.f32.mrf.mxu0
        %v3295 = vadd.f32 %v3246, %v3294
        %v3296 = vpop.f32.mrf.mxu0
        %v3297 = vadd.f32 %v3248, %v3296
        %3298 = vmatmul.bf16.gmra.mxu0 %v375
        %v3299 = vpop.f32.mrf.mxu0
        %v3300 = vadd.f32 %v3251, %v3299
        %v3301 = vpop.f32.mrf.mxu0
        %v3302 = vadd.f32 %v3253, %v3301
        %3303 = vmatmul.bf16.gmra.mxu0 %v378
        %v3304 = vpop.f32.mrf.mxu0
        %v3305 = vadd.f32 %v3256, %v3304
        %v3306 = vpop.f32.mrf.mxu0
        %v3307 = vadd.f32 %v3258, %v3306
        %3308 = vmatmul.bf16.gmra.mxu0 %v381
        %v3309 = vpop.f32.mrf.mxu0
        %v3310 = vadd.f32 %v3261, %v3309
        %v3311 = vpop.f32.mrf.mxu0
        %v3312 = vadd.f32 %v3263, %v3311
        %3313 = vdwg.mxu0
        %3314 = vmatpush.bf16.msra.mxu0 %v1654
        %3315 = vmatpush.bf16.msra.mxu0 %v1642
        %3316 = vmatpush.bf16.msra.mxu0 %v1630
        %3317 = vmatpush.bf16.msra.mxu0 %v1618
        %3318 = vmatpush.bf16.msra.mxu0 %v1606
        %3319 = vmatpush.bf16.msra.mxu0 %v1594
        %3320 = vmatpush.bf16.msra.mxu0 %v1582
        %3321 = vmatpush.bf16.msra.mxu0 %v1570
        %3322 = vmatmul.bf16.gmra.mxu0 %v358
        %v3323 = vpop.f32.mrf.mxu0
        %v3324 = vadd.f32 %v682, %v3323
        %v3325 = vpop.f32.mrf.mxu0
        %v3326 = vadd.f32 %v682, %v3325
        %3327 = vmatmul.bf16.gmra.mxu0 %v361
        %v3328 = vpop.f32.mrf.mxu0
        %v3329 = vadd.f32 %v682, %v3328
        %v3330 = vpop.f32.mrf.mxu0
        %v3331 = vadd.f32 %v682, %v3330
        %3332 = vmatmul.bf16.gmra.mxu0 %v364
        %v3333 = vpop.f32.mrf.mxu0
        %v3334 = vadd.f32 %v682, %v3333
        %v3335 = vpop.f32.mrf.mxu0
        %v3336 = vadd.f32 %v682, %v3335
        %3337 = vmatmul.bf16.gmra.mxu0 %v367
        %v3338 = vpop.f32.mrf.mxu0
        %v3339 = vadd.f32 %v682, %v3338
        %v3340 = vpop.f32.mrf.mxu0
        %v3341 = vadd.f32 %v682, %v3340
        %3342 = vmatmul.bf16.gmra.mxu0 %v370
        %v3343 = vpop.f32.mrf.mxu0
        %v3344 = vadd.f32 %v682, %v3343
        %v3345 = vpop.f32.mrf.mxu0
        %v3346 = vadd.f32 %v682, %v3345
        %3347 = vmatmul.bf16.gmra.mxu0 %v373
        %v3348 = vpop.f32.mrf.mxu0
        %v3349 = vadd.f32 %v682, %v3348
        %v3350 = vpop.f32.mrf.mxu0
        %v3351 = vadd.f32 %v682, %v3350
        %3352 = vmatmul.bf16.gmra.mxu0 %v376
        %v3353 = vpop.f32.mrf.mxu0
        %v3354 = vadd.f32 %v682, %v3353
        %v3355 = vpop.f32.mrf.mxu0
        %v3356 = vadd.f32 %v682, %v3355
        %3357 = vmatmul.bf16.gmra.mxu0 %v379
        %v3358 = vpop.f32.mrf.mxu0
        %v3359 = vadd.f32 %v682, %v3358
        %v3360 = vpop.f32.mrf.mxu0
        %v3361 = vadd.f32 %v682, %v3360
        %3362 = vdwg.mxu0
        %3363 = vmatpush.bf16.msra.mxu0 %v1750
        %3364 = vmatpush.bf16.msra.mxu0 %v1738
        %3365 = vmatpush.bf16.msra.mxu0 %v1726
        %3366 = vmatpush.bf16.msra.mxu0 %v1714
        %3367 = vmatpush.bf16.msra.mxu0 %v1702
        %3368 = vmatpush.bf16.msra.mxu0 %v1690
        %3369 = vmatpush.bf16.msra.mxu0 %v1678
        %3370 = vmatpush.bf16.msra.mxu0 %v1666
        %3371 = vmatmul.bf16.gmra.mxu0 %v359
        %v3372 = vpop.f32.mrf.mxu0
        %v3373 = vadd.f32 %v3324, %v3372
        %v3374 = vpop.f32.mrf.mxu0
        %v3375 = vadd.f32 %v3326, %v3374
        %3376 = vmatmul.bf16.gmra.mxu0 %v362
        %v3377 = vpop.f32.mrf.mxu0
        %v3378 = vadd.f32 %v3329, %v3377
        %v3379 = vpop.f32.mrf.mxu0
        %v3380 = vadd.f32 %v3331, %v3379
        %3381 = vmatmul.bf16.gmra.mxu0 %v365
        %v3382 = vpop.f32.mrf.mxu0
        %v3383 = vadd.f32 %v3334, %v3382
        %v3384 = vpop.f32.mrf.mxu0
        %v3385 = vadd.f32 %v3336, %v3384
        %3386 = vmatmul.bf16.gmra.mxu0 %v368
        %v3387 = vpop.f32.mrf.mxu0
        %v3388 = vadd.f32 %v3339, %v3387
        %v3389 = vpop.f32.mrf.mxu0
        %v3390 = vadd.f32 %v3341, %v3389
        %3391 = vmatmul.bf16.gmra.mxu0 %v371
        %v3392 = vpop.f32.mrf.mxu0
        %v3393 = vadd.f32 %v3344, %v3392
        %v3394 = vpop.f32.mrf.mxu0
        %v3395 = vadd.f32 %v3346, %v3394
        %3396 = vmatmul.bf16.gmra.mxu0 %v374
        %v3397 = vpop.f32.mrf.mxu0
        %v3398 = vadd.f32 %v3349, %v3397
        %v3399 = vpop.f32.mrf.mxu0
        %v3400 = vadd.f32 %v3351, %v3399
        %3401 = vmatmul.bf16.gmra.mxu0 %v377
        %v3402 = vpop.f32.mrf.mxu0
        %v3403 = vadd.f32 %v3354, %v3402
        %v3404 = vpop.f32.mrf.mxu0
        %v3405 = vadd.f32 %v3356, %v3404
        %3406 = vmatmul.bf16.gmra.mxu0 %v380
        %v3407 = vpop.f32.mrf.mxu0
        %v3408 = vadd.f32 %v3359, %v3407
        %v3409 = vpop.f32.mrf.mxu0
        %v3410 = vadd.f32 %v3361, %v3409
        %3411 = vdwg.mxu0
        %3412 = vmatpush.bf16.msra.mxu0 %v1846
        %3413 = vmatpush.bf16.msra.mxu0 %v1834
        %3414 = vmatpush.bf16.msra.mxu0 %v1822
        %3415 = vmatpush.bf16.msra.mxu0 %v1810
        %3416 = vmatpush.bf16.msra.mxu0 %v1798
        %3417 = vmatpush.bf16.msra.mxu0 %v1786
        %3418 = vmatpush.bf16.msra.mxu0 %v1774
        %3419 = vmatpush.bf16.msra.mxu0 %v1762
        %3420 = vmatmul.bf16.gmra.mxu0 %v360
        %v3421 = vpop.f32.mrf.mxu0
        %v3422 = vadd.f32 %v3373, %v3421
        %v3423 = vpop.f32.mrf.mxu0
        %v3424 = vadd.f32 %v3375, %v3423
        %3425 = vmatmul.bf16.gmra.mxu0 %v363
        %v3426 = vpop.f32.mrf.mxu0
        %v3427 = vadd.f32 %v3378, %v3426
        %v3428 = vpop.f32.mrf.mxu0
        %v3429 = vadd.f32 %v3380, %v3428
        %3430 = vmatmul.bf16.gmra.mxu0 %v366
        %v3431 = vpop.f32.mrf.mxu0
        %v3432 = vadd.f32 %v3383, %v3431
        %v3433 = vpop.f32.mrf.mxu0
        %v3434 = vadd.f32 %v3385, %v3433
        %3435 = vmatmul.bf16.gmra.mxu0 %v369
        %v3436 = vpop.f32.mrf.mxu0
        %v3437 = vadd.f32 %v3388, %v3436
        %v3438 = vpop.f32.mrf.mxu0
        %v3439 = vadd.f32 %v3390, %v3438
        %3440 = vmatmul.bf16.gmra.mxu0 %v372
        %v3441 = vpop.f32.mrf.mxu0
        %v3442 = vadd.f32 %v3393, %v3441
        %v3443 = vpop.f32.mrf.mxu0
        %v3444 = vadd.f32 %v3395, %v3443
        %3445 = vmatmul.bf16.gmra.mxu0 %v375
        %v3446 = vpop.f32.mrf.mxu0
        %v3447 = vadd.f32 %v3398, %v3446
        %v3448 = vpop.f32.mrf.mxu0
        %v3449 = vadd.f32 %v3400, %v3448
        %3450 = vmatmul.bf16.gmra.mxu0 %v378
        %v3451 = vpop.f32.mrf.mxu0
        %v3452 = vadd.f32 %v3403, %v3451
        %v3453 = vpop.f32.mrf.mxu0
        %v3454 = vadd.f32 %v3405, %v3453
        %3455 = vmatmul.bf16.gmra.mxu0 %v381
        %v3456 = vpop.f32.mrf.mxu0
        %v3457 = vadd.f32 %v3408, %v3456
        %v3458 = vpop.f32.mrf.mxu0
        %v3459 = vadd.f32 %v3410, %v3458
        %3460 = vdwg.mxu0
        %3461 = vmatpush.bf16.msra.mxu0 %v1655
        %3462 = vmatpush.bf16.msra.mxu0 %v1643
        %3463 = vmatpush.bf16.msra.mxu0 %v1631
        %3464 = vmatpush.bf16.msra.mxu0 %v1619
        %3465 = vmatpush.bf16.msra.mxu0 %v1607
        %3466 = vmatpush.bf16.msra.mxu0 %v1595
        %3467 = vmatpush.bf16.msra.mxu0 %v1583
        %3468 = vmatpush.bf16.msra.mxu0 %v1571
        %3469 = vmatmul.bf16.gmra.mxu0 %v358
        %v3470 = vpop.f32.mrf.mxu0
        %v3471 = vadd.f32 %v683, %v3470
        %v3472 = vpop.f32.mrf.mxu0
        %v3473 = vadd.f32 %v683, %v3472
        %3474 = vmatmul.bf16.gmra.mxu0 %v361
        %v3475 = vpop.f32.mrf.mxu0
        %v3476 = vadd.f32 %v683, %v3475
        %v3477 = vpop.f32.mrf.mxu0
        %v3478 = vadd.f32 %v683, %v3477
        %3479 = vmatmul.bf16.gmra.mxu0 %v364
        %v3480 = vpop.f32.mrf.mxu0
        %v3481 = vadd.f32 %v683, %v3480
        %v3482 = vpop.f32.mrf.mxu0
        %v3483 = vadd.f32 %v683, %v3482
        %3484 = vmatmul.bf16.gmra.mxu0 %v367
        %v3485 = vpop.f32.mrf.mxu0
        %v3486 = vadd.f32 %v683, %v3485
        %v3487 = vpop.f32.mrf.mxu0
        %v3488 = vadd.f32 %v683, %v3487
        %3489 = vmatmul.bf16.gmra.mxu0 %v370
        %v3490 = vpop.f32.mrf.mxu0
        %v3491 = vadd.f32 %v683, %v3490
        %v3492 = vpop.f32.mrf.mxu0
        %v3493 = vadd.f32 %v683, %v3492
        %3494 = vmatmul.bf16.gmra.mxu0 %v373
        %v3495 = vpop.f32.mrf.mxu0
        %v3496 = vadd.f32 %v683, %v3495
        %v3497 = vpop.f32.mrf.mxu0
        %v3498 = vadd.f32 %v683, %v3497
        %3499 = vmatmul.bf16.gmra.mxu0 %v376
        %v3500 = vpop.f32.mrf.mxu0
        %v3501 = vadd.f32 %v683, %v3500
        %v3502 = vpop.f32.mrf.mxu0
        %v3503 = vadd.f32 %v683, %v3502
        %3504 = vmatmul.bf16.gmra.mxu0 %v379
        %v3505 = vpop.f32.mrf.mxu0
        %v3506 = vadd.f32 %v683, %v3505
        %v3507 = vpop.f32.mrf.mxu0
        %v3508 = vadd.f32 %v683, %v3507
        %3509 = vdwg.mxu0
        %3510 = vmatpush.bf16.msra.mxu0 %v1751
        %3511 = vmatpush.bf16.msra.mxu0 %v1739
        %3512 = vmatpush.bf16.msra.mxu0 %v1727
        %3513 = vmatpush.bf16.msra.mxu0 %v1715
        %3514 = vmatpush.bf16.msra.mxu0 %v1703
        %3515 = vmatpush.bf16.msra.mxu0 %v1691
        %3516 = vmatpush.bf16.msra.mxu0 %v1679
        %3517 = vmatpush.bf16.msra.mxu0 %v1667
        %3518 = vmatmul.bf16.gmra.mxu0 %v359
        %v3519 = vpop.f32.mrf.mxu0
        %v3520 = vadd.f32 %v3471, %v3519
        %v3521 = vpop.f32.mrf.mxu0
        %v3522 = vadd.f32 %v3473, %v3521
        %3523 = vmatmul.bf16.gmra.mxu0 %v362
        %v3524 = vpop.f32.mrf.mxu0
        %v3525 = vadd.f32 %v3476, %v3524
        %v3526 = vpop.f32.mrf.mxu0
        %v3527 = vadd.f32 %v3478, %v3526
        %3528 = vmatmul.bf16.gmra.mxu0 %v365
        %v3529 = vpop.f32.mrf.mxu0
        %v3530 = vadd.f32 %v3481, %v3529
        %v3531 = vpop.f32.mrf.mxu0
        %v3532 = vadd.f32 %v3483, %v3531
        %3533 = vmatmul.bf16.gmra.mxu0 %v368
        %v3534 = vpop.f32.mrf.mxu0
        %v3535 = vadd.f32 %v3486, %v3534
        %v3536 = vpop.f32.mrf.mxu0
        %v3537 = vadd.f32 %v3488, %v3536
        %3538 = vmatmul.bf16.gmra.mxu0 %v371
        %v3539 = vpop.f32.mrf.mxu0
        %v3540 = vadd.f32 %v3491, %v3539
        %v3541 = vpop.f32.mrf.mxu0
        %v3542 = vadd.f32 %v3493, %v3541
        %3543 = vmatmul.bf16.gmra.mxu0 %v374
        %v3544 = vpop.f32.mrf.mxu0
        %v3545 = vadd.f32 %v3496, %v3544
        %v3546 = vpop.f32.mrf.mxu0
        %v3547 = vadd.f32 %v3498, %v3546
        %3548 = vmatmul.bf16.gmra.mxu0 %v377
        %v3549 = vpop.f32.mrf.mxu0
        %v3550 = vadd.f32 %v3501, %v3549
        %v3551 = vpop.f32.mrf.mxu0
        %v3552 = vadd.f32 %v3503, %v3551
        %3553 = vmatmul.bf16.gmra.mxu0 %v380
        %v3554 = vpop.f32.mrf.mxu0
        %v3555 = vadd.f32 %v3506, %v3554
        %v3556 = vpop.f32.mrf.mxu0
        %v3557 = vadd.f32 %v3508, %v3556
        %3558 = vdwg.mxu0
        %3559 = vmatpush.bf16.msra.mxu0 %v1847
        %3560 = vmatpush.bf16.msra.mxu0 %v1835
        %3561 = vmatpush.bf16.msra.mxu0 %v1823
        %3562 = vmatpush.bf16.msra.mxu0 %v1811
        %3563 = vmatpush.bf16.msra.mxu0 %v1799
        %3564 = vmatpush.bf16.msra.mxu0 %v1787
        %3565 = vmatpush.bf16.msra.mxu0 %v1775
        %3566 = vmatpush.bf16.msra.mxu0 %v1763
        %3567 = vmatmul.bf16.gmra.mxu0 %v360
        %v3568 = vpop.f32.mrf.mxu0
        %v3569 = vadd.f32 %v3520, %v3568
        %v3570 = vpop.f32.mrf.mxu0
        %v3571 = vadd.f32 %v3522, %v3570
        %3572 = vmatmul.bf16.gmra.mxu0 %v363
        %v3573 = vpop.f32.mrf.mxu0
        %v3574 = vadd.f32 %v3525, %v3573
        %v3575 = vpop.f32.mrf.mxu0
        %v3576 = vadd.f32 %v3527, %v3575
        %3577 = vmatmul.bf16.gmra.mxu0 %v366
        %v3578 = vpop.f32.mrf.mxu0
        %v3579 = vadd.f32 %v3530, %v3578
        %v3580 = vpop.f32.mrf.mxu0
        %v3581 = vadd.f32 %v3532, %v3580
        %3582 = vmatmul.bf16.gmra.mxu0 %v369
        %v3583 = vpop.f32.mrf.mxu0
        %v3584 = vadd.f32 %v3535, %v3583
        %v3585 = vpop.f32.mrf.mxu0
        %v3586 = vadd.f32 %v3537, %v3585
        %3587 = vmatmul.bf16.gmra.mxu0 %v372
        %v3588 = vpop.f32.mrf.mxu0
        %v3589 = vadd.f32 %v3540, %v3588
        %v3590 = vpop.f32.mrf.mxu0
        %v3591 = vadd.f32 %v3542, %v3590
        %3592 = vmatmul.bf16.gmra.mxu0 %v375
        %v3593 = vpop.f32.mrf.mxu0
        %v3594 = vadd.f32 %v3545, %v3593
        %v3595 = vpop.f32.mrf.mxu0
        %v3596 = vadd.f32 %v3547, %v3595
        %3597 = vmatmul.bf16.gmra.mxu0 %v378
        %v3598 = vpop.f32.mrf.mxu0
        %v3599 = vadd.f32 %v3550, %v3598
        %v3600 = vpop.f32.mrf.mxu0
        %v3601 = vadd.f32 %v3552, %v3600
        %3602 = vmatmul.bf16.gmra.mxu0 %v381
        %v3603 = vpop.f32.mrf.mxu0
        %v3604 = vadd.f32 %v3555, %v3603
        %v3605 = vpop.f32.mrf.mxu0
        %v3606 = vadd.f32 %v3557, %v3605
        %3607 = vdwg.mxu0
        %3608 = vmatpush.bf16.msra.mxu0 %v1656
        %3609 = vmatpush.bf16.msra.mxu0 %v1644
        %3610 = vmatpush.bf16.msra.mxu0 %v1632
        %3611 = vmatpush.bf16.msra.mxu0 %v1620
        %3612 = vmatpush.bf16.msra.mxu0 %v1608
        %3613 = vmatpush.bf16.msra.mxu0 %v1596
        %3614 = vmatpush.bf16.msra.mxu0 %v1584
        %3615 = vmatpush.bf16.msra.mxu0 %v1572
        %3616 = vmatmul.bf16.gmra.mxu0 %v358
        %v3617 = vpop.f32.mrf.mxu0
        %v3618 = vadd.f32 %v684, %v3617
        %v3619 = vpop.f32.mrf.mxu0
        %v3620 = vadd.f32 %v684, %v3619
        %3621 = vmatmul.bf16.gmra.mxu0 %v361
        %v3622 = vpop.f32.mrf.mxu0
        %v3623 = vadd.f32 %v684, %v3622
        %v3624 = vpop.f32.mrf.mxu0
        %v3625 = vadd.f32 %v684, %v3624
        %3626 = vmatmul.bf16.gmra.mxu0 %v364
        %v3627 = vpop.f32.mrf.mxu0
        %v3628 = vadd.f32 %v684, %v3627
        %v3629 = vpop.f32.mrf.mxu0
        %v3630 = vadd.f32 %v684, %v3629
        %3631 = vmatmul.bf16.gmra.mxu0 %v367
        %v3632 = vpop.f32.mrf.mxu0
        %v3633 = vadd.f32 %v684, %v3632
        %v3634 = vpop.f32.mrf.mxu0
        %v3635 = vadd.f32 %v684, %v3634
        %3636 = vmatmul.bf16.gmra.mxu0 %v370
        %v3637 = vpop.f32.mrf.mxu0
        %v3638 = vadd.f32 %v684, %v3637
        %v3639 = vpop.f32.mrf.mxu0
        %v3640 = vadd.f32 %v684, %v3639
        %3641 = vmatmul.bf16.gmra.mxu0 %v373
        %v3642 = vpop.f32.mrf.mxu0
        %v3643 = vadd.f32 %v684, %v3642
        %v3644 = vpop.f32.mrf.mxu0
        %v3645 = vadd.f32 %v684, %v3644
        %3646 = vmatmul.bf16.gmra.mxu0 %v376
        %v3647 = vpop.f32.mrf.mxu0
        %v3648 = vadd.f32 %v684, %v3647
        %v3649 = vpop.f32.mrf.mxu0
        %v3650 = vadd.f32 %v684, %v3649
        %3651 = vmatmul.bf16.gmra.mxu0 %v379
        %v3652 = vpop.f32.mrf.mxu0
        %v3653 = vadd.f32 %v684, %v3652
        %v3654 = vpop.f32.mrf.mxu0
        %v3655 = vadd.f32 %v684, %v3654
        %3656 = vdwg.mxu0
        %3657 = vmatpush.bf16.msra.mxu0 %v1752
        %3658 = vmatpush.bf16.msra.mxu0 %v1740
        %3659 = vmatpush.bf16.msra.mxu0 %v1728
        %3660 = vmatpush.bf16.msra.mxu0 %v1716
        %3661 = vmatpush.bf16.msra.mxu0 %v1704
        %3662 = vmatpush.bf16.msra.mxu0 %v1692
        %3663 = vmatpush.bf16.msra.mxu0 %v1680
        %3664 = vmatpush.bf16.msra.mxu0 %v1668
        %3665 = vmatmul.bf16.gmra.mxu0 %v359
        %v3666 = vpop.f32.mrf.mxu0
        %v3667 = vadd.f32 %v3618, %v3666
        %v3668 = vpop.f32.mrf.mxu0
        %v3669 = vadd.f32 %v3620, %v3668
        %3670 = vmatmul.bf16.gmra.mxu0 %v362
        %v3671 = vpop.f32.mrf.mxu0
        %v3672 = vadd.f32 %v3623, %v3671
        %v3673 = vpop.f32.mrf.mxu0
        %v3674 = vadd.f32 %v3625, %v3673
        %3675 = vmatmul.bf16.gmra.mxu0 %v365
        %v3676 = vpop.f32.mrf.mxu0
        %v3677 = vadd.f32 %v3628, %v3676
        %v3678 = vpop.f32.mrf.mxu0
        %v3679 = vadd.f32 %v3630, %v3678
        %3680 = vmatmul.bf16.gmra.mxu0 %v368
        %v3681 = vpop.f32.mrf.mxu0
        %v3682 = vadd.f32 %v3633, %v3681
        %v3683 = vpop.f32.mrf.mxu0
        %v3684 = vadd.f32 %v3635, %v3683
        %3685 = vmatmul.bf16.gmra.mxu0 %v371
        %v3686 = vpop.f32.mrf.mxu0
        %v3687 = vadd.f32 %v3638, %v3686
        %v3688 = vpop.f32.mrf.mxu0
        %v3689 = vadd.f32 %v3640, %v3688
        %3690 = vmatmul.bf16.gmra.mxu0 %v374
        %v3691 = vpop.f32.mrf.mxu0
        %v3692 = vadd.f32 %v3643, %v3691
        %v3693 = vpop.f32.mrf.mxu0
        %v3694 = vadd.f32 %v3645, %v3693
        %3695 = vmatmul.bf16.gmra.mxu0 %v377
        %v3696 = vpop.f32.mrf.mxu0
        %v3697 = vadd.f32 %v3648, %v3696
        %v3698 = vpop.f32.mrf.mxu0
        %v3699 = vadd.f32 %v3650, %v3698
        %3700 = vmatmul.bf16.gmra.mxu0 %v380
        %v3701 = vpop.f32.mrf.mxu0
        %v3702 = vadd.f32 %v3653, %v3701
        %v3703 = vpop.f32.mrf.mxu0
        %v3704 = vadd.f32 %v3655, %v3703
        %3705 = vdwg.mxu0
        %3706 = vmatpush.bf16.msra.mxu0 %v1848
        %3707 = vmatpush.bf16.msra.mxu0 %v1836
        %3708 = vmatpush.bf16.msra.mxu0 %v1824
        %3709 = vmatpush.bf16.msra.mxu0 %v1812
        %3710 = vmatpush.bf16.msra.mxu0 %v1800
        %3711 = vmatpush.bf16.msra.mxu0 %v1788
        %3712 = vmatpush.bf16.msra.mxu0 %v1776
        %3713 = vmatpush.bf16.msra.mxu0 %v1764
        %3714 = vmatmul.bf16.gmra.mxu0 %v360
        %v3715 = vpop.f32.mrf.mxu0
        %v3716 = vadd.f32 %v3667, %v3715
        %v3717 = vpop.f32.mrf.mxu0
        %v3718 = vadd.f32 %v3669, %v3717
        %3719 = vmatmul.bf16.gmra.mxu0 %v363
        %v3720 = vpop.f32.mrf.mxu0
        %v3721 = vadd.f32 %v3672, %v3720
        %v3722 = vpop.f32.mrf.mxu0
        %v3723 = vadd.f32 %v3674, %v3722
        %3724 = vmatmul.bf16.gmra.mxu0 %v366
        %v3725 = vpop.f32.mrf.mxu0
        %v3726 = vadd.f32 %v3677, %v3725
        %v3727 = vpop.f32.mrf.mxu0
        %v3728 = vadd.f32 %v3679, %v3727
        %3729 = vmatmul.bf16.gmra.mxu0 %v369
        %v3730 = vpop.f32.mrf.mxu0
        %v3731 = vadd.f32 %v3682, %v3730
        %v3732 = vpop.f32.mrf.mxu0
        %v3733 = vadd.f32 %v3684, %v3732
        %3734 = vmatmul.bf16.gmra.mxu0 %v372
        %v3735 = vpop.f32.mrf.mxu0
        %v3736 = vadd.f32 %v3687, %v3735
        %v3737 = vpop.f32.mrf.mxu0
        %v3738 = vadd.f32 %v3689, %v3737
        %3739 = vmatmul.bf16.gmra.mxu0 %v375
        %v3740 = vpop.f32.mrf.mxu0
        %v3741 = vadd.f32 %v3692, %v3740
        %v3742 = vpop.f32.mrf.mxu0
        %v3743 = vadd.f32 %v3694, %v3742
        %3744 = vmatmul.bf16.gmra.mxu0 %v378
        %v3745 = vpop.f32.mrf.mxu0
        %v3746 = vadd.f32 %v3697, %v3745
        %v3747 = vpop.f32.mrf.mxu0
        %v3748 = vadd.f32 %v3699, %v3747
        %3749 = vmatmul.bf16.gmra.mxu0 %v381
        %v3750 = vpop.f32.mrf.mxu0
        %v3751 = vadd.f32 %v3702, %v3750
        %v3752 = vpop.f32.mrf.mxu0
        %v3753 = vadd.f32 %v3704, %v3752
        %3754 = vdwg.mxu0
        %3755 = vmatpush.bf16.msra.mxu0 %v1657
        %3756 = vmatpush.bf16.msra.mxu0 %v1645
        %3757 = vmatpush.bf16.msra.mxu0 %v1633
        %3758 = vmatpush.bf16.msra.mxu0 %v1621
        %3759 = vmatpush.bf16.msra.mxu0 %v1609
        %3760 = vmatpush.bf16.msra.mxu0 %v1597
        %3761 = vmatpush.bf16.msra.mxu0 %v1585
        %3762 = vmatpush.bf16.msra.mxu0 %v1573
        %3763 = vmatmul.bf16.gmra.mxu0 %v358
        %v3764 = vpop.f32.mrf.mxu0
        %v3765 = vadd.f32 %v685, %v3764
        %v3766 = vpop.f32.mrf.mxu0
        %v3767 = vadd.f32 %v685, %v3766
        %3768 = vmatmul.bf16.gmra.mxu0 %v361
        %v3769 = vpop.f32.mrf.mxu0
        %v3770 = vadd.f32 %v685, %v3769
        %v3771 = vpop.f32.mrf.mxu0
        %v3772 = vadd.f32 %v685, %v3771
        %3773 = vmatmul.bf16.gmra.mxu0 %v364
        %v3774 = vpop.f32.mrf.mxu0
        %v3775 = vadd.f32 %v685, %v3774
        %v3776 = vpop.f32.mrf.mxu0
        %v3777 = vadd.f32 %v685, %v3776
        %3778 = vmatmul.bf16.gmra.mxu0 %v367
        %v3779 = vpop.f32.mrf.mxu0
        %v3780 = vadd.f32 %v685, %v3779
        %v3781 = vpop.f32.mrf.mxu0
        %v3782 = vadd.f32 %v685, %v3781
        %3783 = vmatmul.bf16.gmra.mxu0 %v370
        %v3784 = vpop.f32.mrf.mxu0
        %v3785 = vadd.f32 %v685, %v3784
        %v3786 = vpop.f32.mrf.mxu0
        %v3787 = vadd.f32 %v685, %v3786
        %3788 = vmatmul.bf16.gmra.mxu0 %v373
        %v3789 = vpop.f32.mrf.mxu0
        %v3790 = vadd.f32 %v685, %v3789
        %v3791 = vpop.f32.mrf.mxu0
        %v3792 = vadd.f32 %v685, %v3791
        %3793 = vmatmul.bf16.gmra.mxu0 %v376
        %v3794 = vpop.f32.mrf.mxu0
        %v3795 = vadd.f32 %v685, %v3794
        %v3796 = vpop.f32.mrf.mxu0
        %v3797 = vadd.f32 %v685, %v3796
        %3798 = vmatmul.bf16.gmra.mxu0 %v379
        %v3799 = vpop.f32.mrf.mxu0
        %v3800 = vadd.f32 %v685, %v3799
        %v3801 = vpop.f32.mrf.mxu0
        %v3802 = vadd.f32 %v685, %v3801
        %3803 = vdwg.mxu0
        %3804 = vmatpush.bf16.msra.mxu0 %v1753
        %3805 = vmatpush.bf16.msra.mxu0 %v1741
        %3806 = vmatpush.bf16.msra.mxu0 %v1729
        %3807 = vmatpush.bf16.msra.mxu0 %v1717
        %3808 = vmatpush.bf16.msra.mxu0 %v1705
        %3809 = vmatpush.bf16.msra.mxu0 %v1693
        %3810 = vmatpush.bf16.msra.mxu0 %v1681
        %3811 = vmatpush.bf16.msra.mxu0 %v1669
        %3812 = vmatmul.bf16.gmra.mxu0 %v359
        %v3813 = vpop.f32.mrf.mxu0
        %v3814 = vadd.f32 %v3765, %v3813
        %v3815 = vpop.f32.mrf.mxu0
        %v3816 = vadd.f32 %v3767, %v3815
        %3817 = vmatmul.bf16.gmra.mxu0 %v362
        %v3818 = vpop.f32.mrf.mxu0
        %v3819 = vadd.f32 %v3770, %v3818
        %v3820 = vpop.f32.mrf.mxu0
        %v3821 = vadd.f32 %v3772, %v3820
        %3822 = vmatmul.bf16.gmra.mxu0 %v365
        %v3823 = vpop.f32.mrf.mxu0
        %v3824 = vadd.f32 %v3775, %v3823
        %v3825 = vpop.f32.mrf.mxu0
        %v3826 = vadd.f32 %v3777, %v3825
        %3827 = vmatmul.bf16.gmra.mxu0 %v368
        %v3828 = vpop.f32.mrf.mxu0
        %v3829 = vadd.f32 %v3780, %v3828
        %v3830 = vpop.f32.mrf.mxu0
        %v3831 = vadd.f32 %v3782, %v3830
        %3832 = vmatmul.bf16.gmra.mxu0 %v371
        %v3833 = vpop.f32.mrf.mxu0
        %v3834 = vadd.f32 %v3785, %v3833
        %v3835 = vpop.f32.mrf.mxu0
        %v3836 = vadd.f32 %v3787, %v3835
        %3837 = vmatmul.bf16.gmra.mxu0 %v374
        %v3838 = vpop.f32.mrf.mxu0
        %v3839 = vadd.f32 %v3790, %v3838
        %v3840 = vpop.f32.mrf.mxu0
        %v3841 = vadd.f32 %v3792, %v3840
        %3842 = vmatmul.bf16.gmra.mxu0 %v377
        %v3843 = vpop.f32.mrf.mxu0
        %v3844 = vadd.f32 %v3795, %v3843
        %v3845 = vpop.f32.mrf.mxu0
        %v3846 = vadd.f32 %v3797, %v3845
        %3847 = vmatmul.bf16.gmra.mxu0 %v380
        %v3848 = vpop.f32.mrf.mxu0
        %v3849 = vadd.f32 %v3800, %v3848
        %v3850 = vpop.f32.mrf.mxu0
        %v3851 = vadd.f32 %v3802, %v3850
        %3852 = vdwg.mxu0
        %3853 = vmatpush.bf16.msra.mxu0 %v1849
        %3854 = vmatpush.bf16.msra.mxu0 %v1837
        %3855 = vmatpush.bf16.msra.mxu0 %v1825
        %3856 = vmatpush.bf16.msra.mxu0 %v1813
        %3857 = vmatpush.bf16.msra.mxu0 %v1801
        %3858 = vmatpush.bf16.msra.mxu0 %v1789
        %3859 = vmatpush.bf16.msra.mxu0 %v1777
        %3860 = vmatpush.bf16.msra.mxu0 %v1765
        %3861 = vmatmul.bf16.gmra.mxu0 %v360
        %v3862 = vpop.f32.mrf.mxu0
        %v3863 = vadd.f32 %v3814, %v3862
        %v3864 = vpop.f32.mrf.mxu0
        %v3865 = vadd.f32 %v3816, %v3864
        %3866 = vmatmul.bf16.gmra.mxu0 %v363
        %v3867 = vpop.f32.mrf.mxu0
        %v3868 = vadd.f32 %v3819, %v3867
        %v3869 = vpop.f32.mrf.mxu0
        %v3870 = vadd.f32 %v3821, %v3869
        %3871 = vmatmul.bf16.gmra.mxu0 %v366
        %v3872 = vpop.f32.mrf.mxu0
        %v3873 = vadd.f32 %v3824, %v3872
        %v3874 = vpop.f32.mrf.mxu0
        %v3875 = vadd.f32 %v3826, %v3874
        %3876 = vmatmul.bf16.gmra.mxu0 %v369
        %v3877 = vpop.f32.mrf.mxu0
        %v3878 = vadd.f32 %v3829, %v3877
        %v3879 = vpop.f32.mrf.mxu0
        %v3880 = vadd.f32 %v3831, %v3879
        %3881 = vmatmul.bf16.gmra.mxu0 %v372
        %v3882 = vpop.f32.mrf.mxu0
        %v3883 = vadd.f32 %v3834, %v3882
        %v3884 = vpop.f32.mrf.mxu0
        %v3885 = vadd.f32 %v3836, %v3884
        %3886 = vmatmul.bf16.gmra.mxu0 %v375
        %v3887 = vpop.f32.mrf.mxu0
        %v3888 = vadd.f32 %v3839, %v3887
        %v3889 = vpop.f32.mrf.mxu0
        %v3890 = vadd.f32 %v3841, %v3889
        %3891 = vmatmul.bf16.gmra.mxu0 %v378
        %v3892 = vpop.f32.mrf.mxu0
        %v3893 = vadd.f32 %v3844, %v3892
        %v3894 = vpop.f32.mrf.mxu0
        %v3895 = vadd.f32 %v3846, %v3894
        %3896 = vmatmul.bf16.gmra.mxu0 %v381
        %v3897 = vpop.f32.mrf.mxu0
        %v3898 = vadd.f32 %v3849, %v3897
        %v3899 = vpop.f32.mrf.mxu0
        %v3900 = vadd.f32 %v3851, %v3899
        %3901 = vdwg.mxu0
        %v3902 = vmax.f32 %v2246, 0.0
        %v3903 = vmax.f32 %v2393, 0.0
        %v3904 = vmax.f32 %v2540, 0.0
        %v3905 = vmax.f32 %v2687, 0.0
        %v3906 = vmax.f32 %v2834, 0.0
        %v3907 = vmax.f32 %v2981, 0.0
        %v3908 = vmax.f32 %v3128, 0.0
        %v3909 = vmax.f32 %v3275, 0.0
        %v3910 = vmax.f32 %v3422, 0.0
        %v3911 = vmax.f32 %v3569, 0.0
        %v3912 = vmax.f32 %v3716, 0.0
        %v3913 = vmax.f32 %v3863, 0.0
        %v3914 = vmax.f32 %v2248, 0.0
        %v3915 = vmax.f32 %v2395, 0.0
        %v3916 = vmax.f32 %v2542, 0.0
        %v3917 = vmax.f32 %v2689, 0.0
        %v3918 = vmax.f32 %v2836, 0.0
        %v3919 = vmax.f32 %v2983, 0.0
        %v3920 = vmax.f32 %v3130, 0.0
        %v3921 = vmax.f32 %v3277, 0.0
        %v3922 = vmax.f32 %v3424, 0.0
        %v3923 = vmax.f32 %v3571, 0.0
        %v3924 = vmax.f32 %v3718, 0.0
        %v3925 = vmax.f32 %v3865, 0.0
        %v3926 = vmax.f32 %v2251, 0.0
        %v3927 = vmax.f32 %v2398, 0.0
        %v3928 = vmax.f32 %v2545, 0.0
        %v3929 = vmax.f32 %v2692, 0.0
        %v3930 = vmax.f32 %v2839, 0.0
        %v3931 = vmax.f32 %v2986, 0.0
        %v3932 = vmax.f32 %v3133, 0.0
        %v3933 = vmax.f32 %v3280, 0.0
        %v3934 = vmax.f32 %v3427, 0.0
        %v3935 = vmax.f32 %v3574, 0.0
        %v3936 = vmax.f32 %v3721, 0.0
        %v3937 = vmax.f32 %v3868, 0.0
        %v3938 = vmax.f32 %v2253, 0.0
        %v3939 = vmax.f32 %v2400, 0.0
        %v3940 = vmax.f32 %v2547, 0.0
        %v3941 = vmax.f32 %v2694, 0.0
        %v3942 = vmax.f32 %v2841, 0.0
        %v3943 = vmax.f32 %v2988, 0.0
        %v3944 = vmax.f32 %v3135, 0.0
        %v3945 = vmax.f32 %v3282, 0.0
        %v3946 = vmax.f32 %v3429, 0.0
        %v3947 = vmax.f32 %v3576, 0.0
        %v3948 = vmax.f32 %v3723, 0.0
        %v3949 = vmax.f32 %v3870, 0.0
        %v3950 = vmax.f32 %v2256, 0.0
        %v3951 = vmax.f32 %v2403, 0.0
        %v3952 = vmax.f32 %v2550, 0.0
        %v3953 = vmax.f32 %v2697, 0.0
        %v3954 = vmax.f32 %v2844, 0.0
        %v3955 = vmax.f32 %v2991, 0.0
        %v3956 = vmax.f32 %v3138, 0.0
        %v3957 = vmax.f32 %v3285, 0.0
        %v3958 = vmax.f32 %v3432, 0.0
        %v3959 = vmax.f32 %v3579, 0.0
        %v3960 = vmax.f32 %v3726, 0.0
        %v3961 = vmax.f32 %v3873, 0.0
        %v3962 = vmax.f32 %v2258, 0.0
        %v3963 = vmax.f32 %v2405, 0.0
        %v3964 = vmax.f32 %v2552, 0.0
        %v3965 = vmax.f32 %v2699, 0.0
        %v3966 = vmax.f32 %v2846, 0.0
        %v3967 = vmax.f32 %v2993, 0.0
        %v3968 = vmax.f32 %v3140, 0.0
        %v3969 = vmax.f32 %v3287, 0.0
        %v3970 = vmax.f32 %v3434, 0.0
        %v3971 = vmax.f32 %v3581, 0.0
        %v3972 = vmax.f32 %v3728, 0.0
        %v3973 = vmax.f32 %v3875, 0.0
        %v3974 = vmax.f32 %v2261, 0.0
        %v3975 = vmax.f32 %v2408, 0.0
        %v3976 = vmax.f32 %v2555, 0.0
        %v3977 = vmax.f32 %v2702, 0.0
        %v3978 = vmax.f32 %v2849, 0.0
        %v3979 = vmax.f32 %v2996, 0.0
        %v3980 = vmax.f32 %v3143, 0.0
        %v3981 = vmax.f32 %v3290, 0.0
        %v3982 = vmax.f32 %v3437, 0.0
        %v3983 = vmax.f32 %v3584, 0.0
        %v3984 = vmax.f32 %v3731, 0.0
        %v3985 = vmax.f32 %v3878, 0.0
        %v3986 = vmax.f32 %v2263, 0.0
        %v3987 = vmax.f32 %v2410, 0.0
        %v3988 = vmax.f32 %v2557, 0.0
        %v3989 = vmax.f32 %v2704, 0.0
        %v3990 = vmax.f32 %v2851, 0.0
        %v3991 = vmax.f32 %v2998, 0.0
        %v3992 = vmax.f32 %v3145, 0.0
        %v3993 = vmax.f32 %v3292, 0.0
        %v3994 = vmax.f32 %v3439, 0.0
        %v3995 = vmax.f32 %v3586, 0.0
        %v3996 = vmax.f32 %v3733, 0.0
        %v3997 = vmax.f32 %v3880, 0.0
        %v3998 = vmax.f32 %v2266, 0.0
        %v3999 = vmax.f32 %v2413, 0.0
        %v4000 = vmax.f32 %v2560, 0.0
        %v4001 = vmax.f32 %v2707, 0.0
        %v4002 = vmax.f32 %v2854, 0.0
        %v4003 = vmax.f32 %v3001, 0.0
        %v4004 = vmax.f32 %v3148, 0.0
        %v4005 = vmax.f32 %v3295, 0.0
        %v4006 = vmax.f32 %v3442, 0.0
        %v4007 = vmax.f32 %v3589, 0.0
        %v4008 = vmax.f32 %v3736, 0.0
        %v4009 = vmax.f32 %v3883, 0.0
        %v4010 = vmax.f32 %v2268, 0.0
        %v4011 = vmax.f32 %v2415, 0.0
        %v4012 = vmax.f32 %v2562, 0.0
        %v4013 = vmax.f32 %v2709, 0.0
        %v4014 = vmax.f32 %v2856, 0.0
        %v4015 = vmax.f32 %v3003, 0.0
        %v4016 = vmax.f32 %v3150, 0.0
        %v4017 = vmax.f32 %v3297, 0.0
        %v4018 = vmax.f32 %v3444, 0.0
        %v4019 = vmax.f32 %v3591, 0.0
        %v4020 = vmax.f32 %v3738, 0.0
        %v4021 = vmax.f32 %v3885, 0.0
        %v4022 = vmax.f32 %v2271, 0.0
        %v4023 = vmax.f32 %v2418, 0.0
        %v4024 = vmax.f32 %v2565, 0.0
        %v4025 = vmax.f32 %v2712, 0.0
        %v4026 = vmax.f32 %v2859, 0.0
        %v4027 = vmax.f32 %v3006, 0.0
        %v4028 = vmax.f32 %v3153, 0.0
        %v4029 = vmax.f32 %v3300, 0.0
        %v4030 = vmax.f32 %v3447, 0.0
        %v4031 = vmax.f32 %v3594, 0.0
        %v4032 = vmax.f32 %v3741, 0.0
        %v4033 = vmax.f32 %v3888, 0.0
        %v4034 = vmax.f32 %v2273, 0.0
        %v4035 = vmax.f32 %v2420, 0.0
        %v4036 = vmax.f32 %v2567, 0.0
        %v4037 = vmax.f32 %v2714, 0.0
        %v4038 = vmax.f32 %v2861, 0.0
        %v4039 = vmax.f32 %v3008, 0.0
        %v4040 = vmax.f32 %v3155, 0.0
        %v4041 = vmax.f32 %v3302, 0.0
        %v4042 = vmax.f32 %v3449, 0.0
        %v4043 = vmax.f32 %v3596, 0.0
        %v4044 = vmax.f32 %v3743, 0.0
        %v4045 = vmax.f32 %v3890, 0.0
        %v4046 = vmax.f32 %v2276, 0.0
        %v4047 = vmax.f32 %v2423, 0.0
        %v4048 = vmax.f32 %v2570, 0.0
        %v4049 = vmax.f32 %v2717, 0.0
        %v4050 = vmax.f32 %v2864, 0.0
        %v4051 = vmax.f32 %v3011, 0.0
        %v4052 = vmax.f32 %v3158, 0.0
        %v4053 = vmax.f32 %v3305, 0.0
        %v4054 = vmax.f32 %v3452, 0.0
        %v4055 = vmax.f32 %v3599, 0.0
        %v4056 = vmax.f32 %v3746, 0.0
        %v4057 = vmax.f32 %v3893, 0.0
        %v4058 = vmax.f32 %v2278, 0.0
        %v4059 = vmax.f32 %v2425, 0.0
        %v4060 = vmax.f32 %v2572, 0.0
        %v4061 = vmax.f32 %v2719, 0.0
        %v4062 = vmax.f32 %v2866, 0.0
        %v4063 = vmax.f32 %v3013, 0.0
        %v4064 = vmax.f32 %v3160, 0.0
        %v4065 = vmax.f32 %v3307, 0.0
        %v4066 = vmax.f32 %v3454, 0.0
        %v4067 = vmax.f32 %v3601, 0.0
        %v4068 = vmax.f32 %v3748, 0.0
        %v4069 = vmax.f32 %v3895, 0.0
        %v4070 = vmax.f32 %v2281, 0.0
        %v4071 = vmax.f32 %v2428, 0.0
        %v4072 = vmax.f32 %v2575, 0.0
        %v4073 = vmax.f32 %v2722, 0.0
        %v4074 = vmax.f32 %v2869, 0.0
        %v4075 = vmax.f32 %v3016, 0.0
        %v4076 = vmax.f32 %v3163, 0.0
        %v4077 = vmax.f32 %v3310, 0.0
        %v4078 = vmax.f32 %v3457, 0.0
        %v4079 = vmax.f32 %v3604, 0.0
        %v4080 = vmax.f32 %v3751, 0.0
        %v4081 = vmax.f32 %v3898, 0.0
        %v4082 = vmax.f32 %v2283, 0.0
        %v4083 = vmax.f32 %v2430, 0.0
        %v4084 = vmax.f32 %v2577, 0.0
        %v4085 = vmax.f32 %v2724, 0.0
        %v4086 = vmax.f32 %v2871, 0.0
        %v4087 = vmax.f32 %v3018, 0.0
        %v4088 = vmax.f32 %v3165, 0.0
        %v4089 = vmax.f32 %v3312, 0.0
        %v4090 = vmax.f32 %v3459, 0.0
        %v4091 = vmax.f32 %v3606, 0.0
        %v4092 = vmax.f32 %v3753, 0.0
        %v4093 = vmax.f32 %v3900, 0.0
        %v4094 = vpack.c.bf16 %v3914, %v3902
        %v4095 = vpack.c.bf16 %v3915, %v3903
        %v4096 = vpack.c.bf16 %v3916, %v3904
        %v4097 = vpack.c.bf16 %v3917, %v3905
        %v4098 = vpack.c.bf16 %v3918, %v3906
        %v4099 = vpack.c.bf16 %v3919, %v3907
        %v4100 = vpack.c.bf16 %v3920, %v3908
        %v4101 = vpack.c.bf16 %v3921, %v3909
        %v4102 = vpack.c.bf16 %v3922, %v3910
        %v4103 = vpack.c.bf16 %v3923, %v3911
        %v4104 = vpack.c.bf16 %v3924, %v3912
        %v4105 = vpack.c.bf16 %v3925, %v3913
        %v4106 = vpack.c.bf16 %v3938, %v3926
        %v4107 = vpack.c.bf16 %v3939, %v3927
        %v4108 = vpack.c.bf16 %v3940, %v3928
        %v4109 = vpack.c.bf16 %v3941, %v3929
        %v4110 = vpack.c.bf16 %v3942, %v3930
        %v4111 = vpack.c.bf16 %v3943, %v3931
        %v4112 = vpack.c.bf16 %v3944, %v3932
        %v4113 = vpack.c.bf16 %v3945, %v3933
        %v4114 = vpack.c.bf16 %v3946, %v3934
        %v4115 = vpack.c.bf16 %v3947, %v3935
        %v4116 = vpack.c.bf16 %v3948, %v3936
        %v4117 = vpack.c.bf16 %v3949, %v3937
        %v4118 = vpack.c.bf16 %v3962, %v3950
        %v4119 = vpack.c.bf16 %v3963, %v3951
        %v4120 = vpack.c.bf16 %v3964, %v3952
        %v4121 = vpack.c.bf16 %v3965, %v3953
        %v4122 = vpack.c.bf16 %v3966, %v3954
        %v4123 = vpack.c.bf16 %v3967, %v3955
        %v4124 = vpack.c.bf16 %v3968, %v3956
        %v4125 = vpack.c.bf16 %v3969, %v3957
        %v4126 = vpack.c.bf16 %v3970, %v3958
        %v4127 = vpack.c.bf16 %v3971, %v3959
        %v4128 = vpack.c.bf16 %v3972, %v3960
        %v4129 = vpack.c.bf16 %v3973, %v3961
        %v4130 = vpack.c.bf16 %v3986, %v3974
        %v4131 = vpack.c.bf16 %v3987, %v3975
        %v4132 = vpack.c.bf16 %v3988, %v3976
        %v4133 = vpack.c.bf16 %v3989, %v3977
        %v4134 = vpack.c.bf16 %v3990, %v3978
        %v4135 = vpack.c.bf16 %v3991, %v3979
        %v4136 = vpack.c.bf16 %v3992, %v3980
        %v4137 = vpack.c.bf16 %v3993, %v3981
        %v4138 = vpack.c.bf16 %v3994, %v3982
        %v4139 = vpack.c.bf16 %v3995, %v3983
        %v4140 = vpack.c.bf16 %v3996, %v3984
        %v4141 = vpack.c.bf16 %v3997, %v3985
        %v4142 = vpack.c.bf16 %v4010, %v3998
        %v4143 = vpack.c.bf16 %v4011, %v3999
        %v4144 = vpack.c.bf16 %v4012, %v4000
        %v4145 = vpack.c.bf16 %v4013, %v4001
        %v4146 = vpack.c.bf16 %v4014, %v4002
        %v4147 = vpack.c.bf16 %v4015, %v4003
        %v4148 = vpack.c.bf16 %v4016, %v4004
        %v4149 = vpack.c.bf16 %v4017, %v4005
        %v4150 = vpack.c.bf16 %v4018, %v4006
        %v4151 = vpack.c.bf16 %v4019, %v4007
        %v4152 = vpack.c.bf16 %v4020, %v4008
        %v4153 = vpack.c.bf16 %v4021, %v4009
        %v4154 = vpack.c.bf16 %v4034, %v4022
        %v4155 = vpack.c.bf16 %v4035, %v4023
        %v4156 = vpack.c.bf16 %v4036, %v4024
        %v4157 = vpack.c.bf16 %v4037, %v4025
        %v4158 = vpack.c.bf16 %v4038, %v4026
        %v4159 = vpack.c.bf16 %v4039, %v4027
        %v4160 = vpack.c.bf16 %v4040, %v4028
        %v4161 = vpack.c.bf16 %v4041, %v4029
        %v4162 = vpack.c.bf16 %v4042, %v4030
        %v4163 = vpack.c.bf16 %v4043, %v4031
        %v4164 = vpack.c.bf16 %v4044, %v4032
        %v4165 = vpack.c.bf16 %v4045, %v4033
        %v4166 = vpack.c.bf16 %v4058, %v4046
        %v4167 = vpack.c.bf16 %v4059, %v4047
        %v4168 = vpack.c.bf16 %v4060, %v4048
        %v4169 = vpack.c.bf16 %v4061, %v4049
        %v4170 = vpack.c.bf16 %v4062, %v4050
        %v4171 = vpack.c.bf16 %v4063, %v4051
        %v4172 = vpack.c.bf16 %v4064, %v4052
        %v4173 = vpack.c.bf16 %v4065, %v4053
        %v4174 = vpack.c.bf16 %v4066, %v4054
        %v4175 = vpack.c.bf16 %v4067, %v4055
        %v4176 = vpack.c.bf16 %v4068, %v4056
        %v4177 = vpack.c.bf16 %v4069, %v4057
        %v4178 = vpack.c.bf16 %v4082, %v4070
        %v4179 = vpack.c.bf16 %v4083, %v4071
        %v4180 = vpack.c.bf16 %v4084, %v4072
        %v4181 = vpack.c.bf16 %v4085, %v4073
        %v4182 = vpack.c.bf16 %v4086, %v4074
        %v4183 = vpack.c.bf16 %v4087, %v4075
        %v4184 = vpack.c.bf16 %v4088, %v4076
        %v4185 = vpack.c.bf16 %v4089, %v4077
        %v4186 = vpack.c.bf16 %v4090, %v4078
        %v4187 = vpack.c.bf16 %v4091, %v4079
        %v4188 = vpack.c.bf16 %v4092, %v4080
        %v4189 = vpack.c.bf16 %v4093, %v4081
        %v4190 = vld [vmem:[#allocation8] sm:$0xff]
        %v4191 = vld [vmem:[#allocation8 + $0x8] sm:$0xf]
        %v4192 = vld [vmem:[#allocation8 + $0xc] sm:$0xff]
        %v4193 = vld [vmem:[#allocation8 + $0x14] sm:$0xf]
        %v4194 = vld [vmem:[#allocation8 + $0x18] sm:$0xff]
        %v4195 = vld [vmem:[#allocation8 + $0x20] sm:$0xf]
        %v4196 = vld [vmem:[#allocation8 + $0x24] sm:$0xff]
        %v4197 = vld [vmem:[#allocation8 + $0x2c] sm:$0xf]
        %v4198 = vld [vmem:[#allocation8 + $0x30] sm:$0xff]
        %v4199 = vld [vmem:[#allocation8 + $0x38] sm:$0xf]
        %v4200 = vld [vmem:[#allocation8 + $0x3c] sm:$0xff]
        %v4201 = vld [vmem:[#allocation8 + $0x44] sm:$0xf]
        %v4202 = vld [vmem:[#allocation8 + $0x48] sm:$0xff]
        %v4203 = vld [vmem:[#allocation8 + $0x50] sm:$0xf]
        %v4204 = vld [vmem:[#allocation8 + $0x54] sm:$0xff]
        %v4205 = vld [vmem:[#allocation8 + $0x5c] sm:$0xf]
        %v4206 = vld [vmem:[#allocation8 + $0x60] sm:$0xff]
        %v4207 = vld [vmem:[#allocation8 + $0x68] sm:$0xf]
        %v4208 = vld [vmem:[#allocation8 + $0x6c] sm:$0xff]
        %v4209 = vld [vmem:[#allocation8 + $0x74] sm:$0xf]
        %v4210 = vld [vmem:[#allocation8 + $0x78] sm:$0xff]
        %v4211 = vld [vmem:[#allocation8 + $0x80] sm:$0xf]
        %v4212 = vld [vmem:[#allocation8 + $0x84] sm:$0xff]
        %v4213 = vld [vmem:[#allocation8 + $0x8c] sm:$0xf]
        %v4214 = vld [vmem:[#allocation8 + $0x90] sm:$0xff]
        %v4215 = vld [vmem:[#allocation8 + $0x98] sm:$0xf]
        %v4216 = vld [vmem:[#allocation8 + $0x9c] sm:$0xff]
        %v4217 = vld [vmem:[#allocation8 + $0xa4] sm:$0xf]
        %v4218 = vld [vmem:[#allocation8 + $0xa8] sm:$0xff]
        %v4219 = vld [vmem:[#allocation8 + $0xb0] sm:$0xf]
        %v4220 = vld [vmem:[#allocation8 + $0xb4] sm:$0xff]
        %v4221 = vld [vmem:[#allocation8 + $0xbc] sm:$0xf]
        %v4222 = vld [vmem:[#allocation8 + $0xc0] sm:$0xff]
        %v4223 = vld [vmem:[#allocation8 + $0xc8] sm:$0xf]
        %v4224 = vld [vmem:[#allocation8 + $0xcc] sm:$0xff]
        %v4225 = vld [vmem:[#allocation8 + $0xd4] sm:$0xf]
        %v4226 = vld [vmem:[#allocation8 + $0xd8] sm:$0xff]
        %v4227 = vld [vmem:[#allocation8 + $0xe0] sm:$0xf]
        %v4228 = vld [vmem:[#allocation8 + $0xe4] sm:$0xff]
        %v4229 = vld [vmem:[#allocation8 + $0xec] sm:$0xf]
        %v4230 = vld [vmem:[#allocation8 + $0xf0] sm:$0xff]
        %v4231 = vld [vmem:[#allocation8 + $0xf8] sm:$0xf]
        %v4232 = vld [vmem:[#allocation8 + $0xfc] sm:$0xff]
        %v4233 = vld [vmem:[#allocation8 + $0x104] sm:$0xf]
        %v4234 = vld [vmem:[#allocation8 + $0x108] sm:$0xff]
        %v4235 = vld [vmem:[#allocation8 + $0x110] sm:$0xf]
        %v4236 = vld [vmem:[#allocation8 + $0x114] sm:$0xff]
        %v4237 = vld [vmem:[#allocation8 + $0x11c] sm:$0xf]
        %v4238 = vld [vmem:[#allocation8 + $0x120] sm:$0xff]
        %v4239 = vld [vmem:[#allocation8 + $0x128] sm:$0xf]
        %v4240 = vld [vmem:[#allocation8 + $0x12c] sm:$0xff]
        %v4241 = vld [vmem:[#allocation8 + $0x134] sm:$0xf]
        %v4242 = vld [vmem:[#allocation8 + $0x138] sm:$0xff]
        %v4243 = vld [vmem:[#allocation8 + $0x140] sm:$0xf]
        %v4244 = vld [vmem:[#allocation8 + $0x144] sm:$0xff]
        %v4245 = vld [vmem:[#allocation8 + $0x14c] sm:$0xf]
        %v4246 = vld [vmem:[#allocation8 + $0x150] sm:$0xff]
        %v4247 = vld [vmem:[#allocation8 + $0x158] sm:$0xf]
        %v4248 = vld [vmem:[#allocation8 + $0x15c] sm:$0xff]
        %v4249 = vld [vmem:[#allocation8 + $0x164] sm:$0xf]
        %v4250 = vld [vmem:[#allocation8 + $0x168] sm:$0xff]
        %v4251 = vld [vmem:[#allocation8 + $0x170] sm:$0xf]
        %v4252 = vld [vmem:[#allocation8 + $0x174] sm:$0xff]
        %v4253 = vld [vmem:[#allocation8 + $0x17c] sm:$0xf]
        %v4254 = vld [vmem:[#allocation8 + $0x180] sm:$0xff]
        %v4255 = vld [vmem:[#allocation8 + $0x188] sm:$0xf]
        %v4256 = vld [vmem:[#allocation8 + $0x18c] sm:$0xff]
        %v4257 = vld [vmem:[#allocation8 + $0x194] sm:$0xf]
        %v4258 = vld [vmem:[#allocation8 + $0x198] sm:$0xff]
        %v4259 = vld [vmem:[#allocation8 + $0x1a0] sm:$0xf]
        %v4260 = vld [vmem:[#allocation8 + $0x1a4] sm:$0xff]
        %v4261 = vld [vmem:[#allocation8 + $0x1ac] sm:$0xf]
        %v4262 = vld [vmem:[#allocation8 + $0x1b0] sm:$0xff]
        %v4263 = vld [vmem:[#allocation8 + $0x1b8] sm:$0xf]
        %v4264 = vld [vmem:[#allocation8 + $0x1bc] sm:$0xff]
        %v4265 = vld [vmem:[#allocation8 + $0x1c4] sm:$0xf]
        %v4266 = vld [vmem:[#allocation8 + $0x1c8] sm:$0xff]
        %v4267 = vld [vmem:[#allocation8 + $0x1d0] sm:$0xf]
        %v4268 = vld [vmem:[#allocation8 + $0x1d4] sm:$0xff]
        %v4269 = vld [vmem:[#allocation8 + $0x1dc] sm:$0xf]
        %v4270 = vld [vmem:[#allocation8 + $0x1e0] sm:$0xff]
        %v4271 = vld [vmem:[#allocation8 + $0x1e8] sm:$0xf]
        %v4272 = vld [vmem:[#allocation8 + $0x1ec] sm:$0xff]
        %v4273 = vld [vmem:[#allocation8 + $0x1f4] sm:$0xf]
        %v4274 = vld [vmem:[#allocation8 + $0x1f8] sm:$0xff]
        %v4275 = vld [vmem:[#allocation8 + $0x200] sm:$0xf]
        %v4276 = vld [vmem:[#allocation8 + $0x204] sm:$0xff]
        %v4277 = vld [vmem:[#allocation8 + $0x20c] sm:$0xf]
        %v4278 = vld [vmem:[#allocation8 + $0x210] sm:$0xff]
        %v4279 = vld [vmem:[#allocation8 + $0x218] sm:$0xf]
        %v4280 = vld [vmem:[#allocation8 + $0x21c] sm:$0xff]
        %v4281 = vld [vmem:[#allocation8 + $0x224] sm:$0xf]
        %v4282 = vld [vmem:[#allocation8 + $0x228] sm:$0xff]
        %v4283 = vld [vmem:[#allocation8 + $0x230] sm:$0xf]
        %v4284 = vld [vmem:[#allocation8 + $0x234] sm:$0xff]
        %v4285 = vld [vmem:[#allocation8 + $0x23c] sm:$0xf]
        %v4286 = vld [vmem:[#allocation8 + $0x240] sm:$0xff]
        %v4287 = vld [vmem:[#allocation8 + $0x248] sm:$0xf]
        %v4288 = vld [vmem:[#allocation8 + $0x24c] sm:$0xff]
        %v4289 = vld [vmem:[#allocation8 + $0x254] sm:$0xf]
        %v4290 = vld [vmem:[#allocation8 + $0x258] sm:$0xff]
        %v4291 = vld [vmem:[#allocation8 + $0x260] sm:$0xf]
        %v4292 = vld [vmem:[#allocation8 + $0x264] sm:$0xff]
        %v4293 = vld [vmem:[#allocation8 + $0x26c] sm:$0xf]
        %v4294 = vld [vmem:[#allocation8 + $0x270] sm:$0xff]
        %v4295 = vld [vmem:[#allocation8 + $0x278] sm:$0xf]
        %v4296 = vld [vmem:[#allocation8 + $0x27c] sm:$0xff]
        %v4297 = vld [vmem:[#allocation8 + $0x284] sm:$0xf]
        %v4298 = vld [vmem:[#allocation8 + $0x288] sm:$0xff]
        %v4299 = vld [vmem:[#allocation8 + $0x290] sm:$0xf]
        %v4300 = vld [vmem:[#allocation8 + $0x294] sm:$0xff]
        %v4301 = vld [vmem:[#allocation8 + $0x29c] sm:$0xf]
        %v4302 = vld [vmem:[#allocation8 + $0x2a0] sm:$0xff]
        %v4303 = vld [vmem:[#allocation8 + $0x2a8] sm:$0xf]
        %v4304 = vld [vmem:[#allocation8 + $0x2ac] sm:$0xff]
        %v4305 = vld [vmem:[#allocation8 + $0x2b4] sm:$0xf]
        %v4306 = vld [vmem:[#allocation8 + $0x2b8] sm:$0xff]
        %v4307 = vld [vmem:[#allocation8 + $0x2c0] sm:$0xf]
        %v4308 = vld [vmem:[#allocation8 + $0x2c4] sm:$0xff]
        %v4309 = vld [vmem:[#allocation8 + $0x2cc] sm:$0xf]
        %v4310 = vld [vmem:[#allocation8 + $0x2d0] sm:$0xff]
        %v4311 = vld [vmem:[#allocation8 + $0x2d8] sm:$0xf]
        %v4312 = vld [vmem:[#allocation8 + $0x2dc] sm:$0xff]
        %v4313 = vld [vmem:[#allocation8 + $0x2e4] sm:$0xf]
        %v4314 = vld [vmem:[#allocation8 + $0x2e8] sm:$0xff]
        %v4315 = vld [vmem:[#allocation8 + $0x2f0] sm:$0xf]
        %v4316 = vld [vmem:[#allocation8 + $0x2f4] sm:$0xff]
        %v4317 = vld [vmem:[#allocation8 + $0x2fc] sm:$0xf]
        %v4318 = vld [vmem:[#allocation8 + $0x300] sm:$0xff]
        %v4319 = vld [vmem:[#allocation8 + $0x308] sm:$0xf]
        %v4320 = vld [vmem:[#allocation8 + $0x30c] sm:$0xff]
        %v4321 = vld [vmem:[#allocation8 + $0x314] sm:$0xf]
        %v4322 = vld [vmem:[#allocation8 + $0x318] sm:$0xff]
        %v4323 = vld [vmem:[#allocation8 + $0x320] sm:$0xf]
        %v4324 = vld [vmem:[#allocation8 + $0x324] sm:$0xff]
        %v4325 = vld [vmem:[#allocation8 + $0x32c] sm:$0xf]
        %v4326 = vld [vmem:[#allocation8 + $0x330] sm:$0xff]
        %v4327 = vld [vmem:[#allocation8 + $0x338] sm:$0xf]
        %v4328 = vld [vmem:[#allocation8 + $0x33c] sm:$0xff]
        %v4329 = vld [vmem:[#allocation8 + $0x344] sm:$0xf]
        %v4330 = vld [vmem:[#allocation8 + $0x348] sm:$0xff]
        %v4331 = vld [vmem:[#allocation8 + $0x350] sm:$0xf]
        %v4332 = vld [vmem:[#allocation8 + $0x354] sm:$0xff]
        %v4333 = vld [vmem:[#allocation8 + $0x35c] sm:$0xf]
        %v4334 = vld [vmem:[#allocation8 + $0x360] sm:$0xff]
        %v4335 = vld [vmem:[#allocation8 + $0x368] sm:$0xf]
        %v4336 = vld [vmem:[#allocation8 + $0x36c] sm:$0xff]
        %v4337 = vld [vmem:[#allocation8 + $0x374] sm:$0xf]
        %v4338 = vld [vmem:[#allocation8 + $0x378] sm:$0xff]
        %v4339 = vld [vmem:[#allocation8 + $0x380] sm:$0xf]
        %v4340 = vld [vmem:[#allocation8 + $0x384] sm:$0xff]
        %v4341 = vld [vmem:[#allocation8 + $0x38c] sm:$0xf]
        %v4342 = vld [vmem:[#allocation8 + $0x390] sm:$0xff]
        %v4343 = vld [vmem:[#allocation8 + $0x398] sm:$0xf]
        %v4344 = vld [vmem:[#allocation8 + $0x39c] sm:$0xff]
        %v4345 = vld [vmem:[#allocation8 + $0x3a4] sm:$0xf]
        %v4346 = vld [vmem:[#allocation8 + $0x3a8] sm:$0xff]
        %v4347 = vld [vmem:[#allocation8 + $0x3b0] sm:$0xf]
        %v4348 = vld [vmem:[#allocation8 + $0x3b4] sm:$0xff]
        %v4349 = vld [vmem:[#allocation8 + $0x3bc] sm:$0xf]
        %v4350 = vld [vmem:[#allocation8 + $0x3c0] sm:$0xff]
        %v4351 = vld [vmem:[#allocation8 + $0x3c8] sm:$0xf]
        %v4352 = vld [vmem:[#allocation8 + $0x3cc] sm:$0xff]
        %v4353 = vld [vmem:[#allocation8 + $0x3d4] sm:$0xf]
        %v4354 = vld [vmem:[#allocation8 + $0x3d8] sm:$0xff]
        %v4355 = vld [vmem:[#allocation8 + $0x3e0] sm:$0xf]
        %v4356 = vld [vmem:[#allocation8 + $0x3e4] sm:$0xff]
        %v4357 = vld [vmem:[#allocation8 + $0x3ec] sm:$0xf]
        %v4358 = vld [vmem:[#allocation8 + $0x3f0] sm:$0xff]
        %v4359 = vld [vmem:[#allocation8 + $0x3f8] sm:$0xf]
        %v4360 = vld [vmem:[#allocation8 + $0x3fc] sm:$0xff]
        %v4361 = vld [vmem:[#allocation8 + $0x404] sm:$0xf]
        %v4362 = vld [vmem:[#allocation8 + $0x408] sm:$0xff]
        %v4363 = vld [vmem:[#allocation8 + $0x410] sm:$0xf]
        %v4364 = vld [vmem:[#allocation8 + $0x414] sm:$0xff]
        %v4365 = vld [vmem:[#allocation8 + $0x41c] sm:$0xf]
        %v4366 = vld [vmem:[#allocation8 + $0x420] sm:$0xff]
        %v4367 = vld [vmem:[#allocation8 + $0x428] sm:$0xf]
        %v4368 = vld [vmem:[#allocation8 + $0x42c] sm:$0xff]
        %v4369 = vld [vmem:[#allocation8 + $0x434] sm:$0xf]
        %v4370 = vld [vmem:[#allocation8 + $0x438] sm:$0xff]
        %v4371 = vld [vmem:[#allocation8 + $0x440] sm:$0xf]
        %v4372 = vld [vmem:[#allocation8 + $0x444] sm:$0xff]
        %v4373 = vld [vmem:[#allocation8 + $0x44c] sm:$0xf]
        %v4374 = vld [vmem:[#allocation8 + $0x450] sm:$0xff]
        %v4375 = vld [vmem:[#allocation8 + $0x458] sm:$0xf]
        %v4376 = vld [vmem:[#allocation8 + $0x45c] sm:$0xff]
        %v4377 = vld [vmem:[#allocation8 + $0x464] sm:$0xf]
        %v4378 = vld [vmem:[#allocation8 + $0x468] sm:$0xff]
        %v4379 = vld [vmem:[#allocation8 + $0x470] sm:$0xf]
        %v4380 = vld [vmem:[#allocation8 + $0x474] sm:$0xff]
        %v4381 = vld [vmem:[#allocation8 + $0x47c] sm:$0xf]
        %v4382 = vld [vmem:[#allocation8 + $0x480] sm:$0xff]
        %v4383 = vld [vmem:[#allocation8 + $0x488] sm:$0xf]
        %v4384 = vld [vmem:[#allocation8 + $0x48c] sm:$0xff]
        %v4385 = vld [vmem:[#allocation8 + $0x494] sm:$0xf]
        %v4386 = vld [vmem:[#allocation8 + $0x498] sm:$0xff]
        %v4387 = vld [vmem:[#allocation8 + $0x4a0] sm:$0xf]
        %v4388 = vld [vmem:[#allocation8 + $0x4a4] sm:$0xff]
        %v4389 = vld [vmem:[#allocation8 + $0x4ac] sm:$0xf]
        %v4390 = vld [vmem:[#allocation8 + $0x4b0] sm:$0xff]
        %v4391 = vld [vmem:[#allocation8 + $0x4b8] sm:$0xf]
        %v4392 = vld [vmem:[#allocation8 + $0x4bc] sm:$0xff]
        %v4393 = vld [vmem:[#allocation8 + $0x4c4] sm:$0xf]
        %v4394 = vld [vmem:[#allocation8 + $0x4c8] sm:$0xff]
        %v4395 = vld [vmem:[#allocation8 + $0x4d0] sm:$0xf]
        %v4396 = vld [vmem:[#allocation8 + $0x4d4] sm:$0xff]
        %v4397 = vld [vmem:[#allocation8 + $0x4dc] sm:$0xf]
        %v4398 = vld [vmem:[#allocation8 + $0x4e0] sm:$0xff]
        %v4399 = vld [vmem:[#allocation8 + $0x4e8] sm:$0xf]
        %v4400 = vld [vmem:[#allocation8 + $0x4ec] sm:$0xff]
        %v4401 = vld [vmem:[#allocation8 + $0x4f4] sm:$0xf]
        %v4402 = vld [vmem:[#allocation8 + $0x4f8] sm:$0xff]
        %v4403 = vld [vmem:[#allocation8 + $0x500] sm:$0xf]
        %v4404 = vld [vmem:[#allocation8 + $0x504] sm:$0xff]
        %v4405 = vld [vmem:[#allocation8 + $0x50c] sm:$0xf]
        %v4406 = vld [vmem:[#allocation8 + $0x510] sm:$0xff]
        %v4407 = vld [vmem:[#allocation8 + $0x518] sm:$0xf]
        %v4408 = vld [vmem:[#allocation8 + $0x51c] sm:$0xff]
        %v4409 = vld [vmem:[#allocation8 + $0x524] sm:$0xf]
        %v4410 = vld [vmem:[#allocation8 + $0x528] sm:$0xff]
        %v4411 = vld [vmem:[#allocation8 + $0x530] sm:$0xf]
        %v4412 = vld [vmem:[#allocation8 + $0x534] sm:$0xff]
        %v4413 = vld [vmem:[#allocation8 + $0x53c] sm:$0xf]
        %v4414 = vld [vmem:[#allocation8 + $0x540] sm:$0xff]
        %v4415 = vld [vmem:[#allocation8 + $0x548] sm:$0xf]
        %v4416 = vld [vmem:[#allocation8 + $0x54c] sm:$0xff]
        %v4417 = vld [vmem:[#allocation8 + $0x554] sm:$0xf]
        %v4418 = vld [vmem:[#allocation8 + $0x558] sm:$0xff]
        %v4419 = vld [vmem:[#allocation8 + $0x560] sm:$0xf]
        %v4420 = vld [vmem:[#allocation8 + $0x564] sm:$0xff]
        %v4421 = vld [vmem:[#allocation8 + $0x56c] sm:$0xf]
        %v4422 = vld [vmem:[#allocation8 + $0x570] sm:$0xff]
        %v4423 = vld [vmem:[#allocation8 + $0x578] sm:$0xf]
        %v4424 = vld [vmem:[#allocation8 + $0x57c] sm:$0xff]
        %v4425 = vld [vmem:[#allocation8 + $0x584] sm:$0xf]
        %v4426 = vld [vmem:[#allocation8 + $0x588] sm:$0xff]
        %v4427 = vld [vmem:[#allocation8 + $0x590] sm:$0xf]
        %v4428 = vld [vmem:[#allocation8 + $0x594] sm:$0xff]
        %v4429 = vld [vmem:[#allocation8 + $0x59c] sm:$0xf]
        %v4430 = vld [vmem:[#allocation8 + $0x5a0] sm:$0xff]
        %v4431 = vld [vmem:[#allocation8 + $0x5a8] sm:$0xf]
        %v4432 = vld [vmem:[#allocation8 + $0x5ac] sm:$0xff]
        %v4433 = vld [vmem:[#allocation8 + $0x5b4] sm:$0xf]
        %v4434 = vld [vmem:[#allocation8 + $0x5b8] sm:$0xff]
        %v4435 = vld [vmem:[#allocation8 + $0x5c0] sm:$0xf]
        %v4436 = vld [vmem:[#allocation8 + $0x5c4] sm:$0xff]
        %v4437 = vld [vmem:[#allocation8 + $0x5cc] sm:$0xf]
        %v4438 = vld [vmem:[#allocation8 + $0x5d0] sm:$0xff]
        %v4439 = vld [vmem:[#allocation8 + $0x5d8] sm:$0xf]
        %v4440 = vld [vmem:[#allocation8 + $0x5dc] sm:$0xff]
        %v4441 = vld [vmem:[#allocation8 + $0x5e4] sm:$0xf]
        %v4442 = vld [vmem:[#allocation8 + $0x5e8] sm:$0xff]
        %v4443 = vld [vmem:[#allocation8 + $0x5f0] sm:$0xf]
        %v4444 = vld [vmem:[#allocation8 + $0x5f4] sm:$0xff]
        %v4445 = vld [vmem:[#allocation8 + $0x5fc] sm:$0xf]
        %v4446 = vld [vmem:[#allocation8 + $0x600] sm:$0xff]
        %v4447 = vld [vmem:[#allocation8 + $0x608] sm:$0xf]
        %v4448 = vld [vmem:[#allocation8 + $0x60c] sm:$0xff]
        %v4449 = vld [vmem:[#allocation8 + $0x614] sm:$0xf]
        %v4450 = vld [vmem:[#allocation8 + $0x618] sm:$0xff]
        %v4451 = vld [vmem:[#allocation8 + $0x620] sm:$0xf]
        %v4452 = vld [vmem:[#allocation8 + $0x624] sm:$0xff]
        %v4453 = vld [vmem:[#allocation8 + $0x62c] sm:$0xf]
        %v4454 = vld [vmem:[#allocation8 + $0x630] sm:$0xff]
        %v4455 = vld [vmem:[#allocation8 + $0x638] sm:$0xf]
        %v4456 = vld [vmem:[#allocation8 + $0x63c] sm:$0xff]
        %v4457 = vld [vmem:[#allocation8 + $0x644] sm:$0xf]
        %v4458 = vld [vmem:[#allocation8 + $0x648] sm:$0xff]
        %v4459 = vld [vmem:[#allocation8 + $0x650] sm:$0xf]
        %v4460 = vld [vmem:[#allocation8 + $0x654] sm:$0xff]
        %v4461 = vld [vmem:[#allocation8 + $0x65c] sm:$0xf]
        %v4462 = vld [vmem:[#allocation8 + $0x660] sm:$0xff]
        %v4463 = vld [vmem:[#allocation8 + $0x668] sm:$0xf]
        %v4464 = vld [vmem:[#allocation8 + $0x66c] sm:$0xff]
        %v4465 = vld [vmem:[#allocation8 + $0x674] sm:$0xf]
        %v4466 = vld [vmem:[#allocation8 + $0x678] sm:$0xff]
        %v4467 = vld [vmem:[#allocation8 + $0x680] sm:$0xf]
        %v4468 = vld [vmem:[#allocation8 + $0x684] sm:$0xff]
        %v4469 = vld [vmem:[#allocation8 + $0x68c] sm:$0xf]
        %v4470 = vld [vmem:[#allocation8 + $0x690] sm:$0xff]
        %v4471 = vld [vmem:[#allocation8 + $0x698] sm:$0xf]
        %v4472 = vld [vmem:[#allocation8 + $0x69c] sm:$0xff]
        %v4473 = vld [vmem:[#allocation8 + $0x6a4] sm:$0xf]
        %v4474 = vld [vmem:[#allocation8 + $0x6a8] sm:$0xff]
        %v4475 = vld [vmem:[#allocation8 + $0x6b0] sm:$0xf]
        %v4476 = vld [vmem:[#allocation8 + $0x6b4] sm:$0xff]
        %v4477 = vld [vmem:[#allocation8 + $0x6bc] sm:$0xf]
        %v4478 = vld [vmem:[#allocation8 + $0x6c0] sm:$0xff]
        %v4479 = vld [vmem:[#allocation8 + $0x6c8] sm:$0xf]
        %v4480 = vld [vmem:[#allocation8 + $0x6cc] sm:$0xff]
        %v4481 = vld [vmem:[#allocation8 + $0x6d4] sm:$0xf]
        %v4482 = vld [vmem:[#allocation8 + $0x6d8] sm:$0xff]
        %v4483 = vld [vmem:[#allocation8 + $0x6e0] sm:$0xf]
        %v4484 = vld [vmem:[#allocation8 + $0x6e4] sm:$0xff]
        %v4485 = vld [vmem:[#allocation8 + $0x6ec] sm:$0xf]
        %v4486 = vld [vmem:[#allocation8 + $0x6f0] sm:$0xff]
        %v4487 = vld [vmem:[#allocation8 + $0x6f8] sm:$0xf]
        %v4488 = vld [vmem:[#allocation8 + $0x6fc] sm:$0xff]
        %v4489 = vld [vmem:[#allocation8 + $0x704] sm:$0xf]
        %v4490 = vld [vmem:[#allocation8 + $0x708] sm:$0xff]
        %v4491 = vld [vmem:[#allocation8 + $0x710] sm:$0xf]
        %v4492 = vld [vmem:[#allocation8 + $0x714] sm:$0xff]
        %v4493 = vld [vmem:[#allocation8 + $0x71c] sm:$0xf]
        %v4494 = vld [vmem:[#allocation8 + $0x720] sm:$0xff]
        %v4495 = vld [vmem:[#allocation8 + $0x728] sm:$0xf]
        %v4496 = vld [vmem:[#allocation8 + $0x72c] sm:$0xff]
        %v4497 = vld [vmem:[#allocation8 + $0x734] sm:$0xf]
        %v4498 = vld [vmem:[#allocation8 + $0x738] sm:$0xff]
        %v4499 = vld [vmem:[#allocation8 + $0x740] sm:$0xf]
        %v4500 = vld [vmem:[#allocation8 + $0x744] sm:$0xff]
        %v4501 = vld [vmem:[#allocation8 + $0x74c] sm:$0xf]
        %v4502 = vld [vmem:[#allocation8 + $0x750] sm:$0xff]
        %v4503 = vld [vmem:[#allocation8 + $0x758] sm:$0xf]
        %v4504 = vld [vmem:[#allocation8 + $0x75c] sm:$0xff]
        %v4505 = vld [vmem:[#allocation8 + $0x764] sm:$0xf]
        %v4506 = vld [vmem:[#allocation8 + $0x768] sm:$0xff]
        %v4507 = vld [vmem:[#allocation8 + $0x770] sm:$0xf]
        %v4508 = vld [vmem:[#allocation8 + $0x774] sm:$0xff]
        %v4509 = vld [vmem:[#allocation8 + $0x77c] sm:$0xf]
        %v4510 = vld [vmem:[#allocation8 + $0x780] sm:$0xff]
        %v4511 = vld [vmem:[#allocation8 + $0x788] sm:$0xf]
        %v4512 = vld [vmem:[#allocation8 + $0x78c] sm:$0xff]
        %v4513 = vld [vmem:[#allocation8 + $0x794] sm:$0xf]
        %v4514 = vld [vmem:[#allocation8 + $0x798] sm:$0xff]
        %v4515 = vld [vmem:[#allocation8 + $0x7a0] sm:$0xf]
        %v4516 = vld [vmem:[#allocation8 + $0x7a4] sm:$0xff]
        %v4517 = vld [vmem:[#allocation8 + $0x7ac] sm:$0xf]
        %v4518 = vld [vmem:[#allocation8 + $0x7b0] sm:$0xff]
        %v4519 = vld [vmem:[#allocation8 + $0x7b8] sm:$0xf]
        %v4520 = vld [vmem:[#allocation8 + $0x7bc] sm:$0xff]
        %v4521 = vld [vmem:[#allocation8 + $0x7c4] sm:$0xf]
        %v4522 = vld [vmem:[#allocation8 + $0x7c8] sm:$0xff]
        %v4523 = vld [vmem:[#allocation8 + $0x7d0] sm:$0xf]
        %v4524 = vld [vmem:[#allocation8 + $0x7d4] sm:$0xff]
        %v4525 = vld [vmem:[#allocation8 + $0x7dc] sm:$0xf]
        %v4526 = vld [vmem:[#allocation8 + $0x7e0] sm:$0xff]
        %v4527 = vld [vmem:[#allocation8 + $0x7e8] sm:$0xf]
        %v4528 = vld [vmem:[#allocation8 + $0x7ec] sm:$0xff]
        %v4529 = vld [vmem:[#allocation8 + $0x7f4] sm:$0xf]
        %v4530 = vld [vmem:[#allocation8 + $0x7f8] sm:$0xff]
        %v4531 = vld [vmem:[#allocation8 + $0x800] sm:$0xf]
        %v4532 = vld [vmem:[#allocation8 + $0x804] sm:$0xff]
        %v4533 = vld [vmem:[#allocation8 + $0x80c] sm:$0xf]
        %v4534 = vld [vmem:[#allocation8 + $0x810] sm:$0xff]
        %v4535 = vld [vmem:[#allocation8 + $0x818] sm:$0xf]
        %v4536 = vld [vmem:[#allocation8 + $0x81c] sm:$0xff]
        %v4537 = vld [vmem:[#allocation8 + $0x824] sm:$0xf]
        %v4538 = vld [vmem:[#allocation8 + $0x828] sm:$0xff]
        %v4539 = vld [vmem:[#allocation8 + $0x830] sm:$0xf]
        %v4540 = vld [vmem:[#allocation8 + $0x834] sm:$0xff]
        %v4541 = vld [vmem:[#allocation8 + $0x83c] sm:$0xf]
        %v4542 = vld [vmem:[#allocation8 + $0x840] sm:$0xff]
        %v4543 = vld [vmem:[#allocation8 + $0x848] sm:$0xf]
        %v4544 = vld [vmem:[#allocation8 + $0x84c] sm:$0xff]
        %v4545 = vld [vmem:[#allocation8 + $0x854] sm:$0xf]
        %v4546 = vld [vmem:[#allocation8 + $0x858] sm:$0xff]
        %v4547 = vld [vmem:[#allocation8 + $0x860] sm:$0xf]
        %v4548 = vld [vmem:[#allocation8 + $0x864] sm:$0xff]
        %v4549 = vld [vmem:[#allocation8 + $0x86c] sm:$0xf]
        %v4550 = vld [vmem:[#allocation8 + $0x870] sm:$0xff]
        %v4551 = vld [vmem:[#allocation8 + $0x878] sm:$0xf]
        %v4552 = vld [vmem:[#allocation8 + $0x87c] sm:$0xff]
        %v4553 = vld [vmem:[#allocation8 + $0x884] sm:$0xf]
        %v4554 = vld [vmem:[#allocation8 + $0x888] sm:$0xff]
        %v4555 = vld [vmem:[#allocation8 + $0x890] sm:$0xf]
        %v4556 = vld [vmem:[#allocation8 + $0x894] sm:$0xff]
        %v4557 = vld [vmem:[#allocation8 + $0x89c] sm:$0xf]
        %v4558 = vld [vmem:[#allocation8 + $0x8a0] sm:$0xff]
        %v4559 = vld [vmem:[#allocation8 + $0x8a8] sm:$0xf]
        %v4560 = vld [vmem:[#allocation8 + $0x8ac] sm:$0xff]
        %v4561 = vld [vmem:[#allocation8 + $0x8b4] sm:$0xf]
        %v4562 = vld [vmem:[#allocation8 + $0x8b8] sm:$0xff]
        %v4563 = vld [vmem:[#allocation8 + $0x8c0] sm:$0xf]
        %v4564 = vld [vmem:[#allocation8 + $0x8c4] sm:$0xff]
        %v4565 = vld [vmem:[#allocation8 + $0x8cc] sm:$0xf]
        %v4566 = vld [vmem:[#allocation8 + $0x8d0] sm:$0xff]
        %v4567 = vld [vmem:[#allocation8 + $0x8d8] sm:$0xf]
        %v4568 = vld [vmem:[#allocation8 + $0x8dc] sm:$0xff]
        %v4569 = vld [vmem:[#allocation8 + $0x8e4] sm:$0xf]
        %v4570 = vld [vmem:[#allocation8 + $0x8e8] sm:$0xff]
        %v4571 = vld [vmem:[#allocation8 + $0x8f0] sm:$0xf]
        %v4572 = vld [vmem:[#allocation8 + $0x8f4] sm:$0xff]
        %v4573 = vld [vmem:[#allocation8 + $0x8fc] sm:$0xf]
        %v4574 = vld [vmem:[#allocation10] sm:$0x7]
        %v4576 = vperm.slane %v4574, 0
        %v4577 = vperm.slane %v4574, 1
        %v4578 = vperm.slane %v4574, 2
        %v4966 = vunpack.c.l.b16 %v4190
        %v4967 = vunpack.c.h.b16 %v4190
        %v4968 = vunpack.c.l.b16 %v4191
        %v4969 = vunpack.c.l.b16 %v4192
        %v4970 = vunpack.c.h.b16 %v4192
        %v4971 = vunpack.c.l.b16 %v4193
        %v4972 = vunpack.c.l.b16 %v4194
        %v4973 = vunpack.c.h.b16 %v4194
        %v4974 = vunpack.c.l.b16 %v4195
        %v4975 = vunpack.c.l.b16 %v4196
        %v4976 = vunpack.c.h.b16 %v4196
        %v4977 = vunpack.c.l.b16 %v4197
        %v4978 = vunpack.c.l.b16 %v4198
        %v4979 = vunpack.c.h.b16 %v4198
        %v4980 = vunpack.c.l.b16 %v4199
        %v4981 = vunpack.c.l.b16 %v4200
        %v4982 = vunpack.c.h.b16 %v4200
        %v4983 = vunpack.c.l.b16 %v4201
        %v4984 = vunpack.c.l.b16 %v4202
        %v4985 = vunpack.c.h.b16 %v4202
        %v4986 = vunpack.c.l.b16 %v4203
        %v4987 = vunpack.c.l.b16 %v4204
        %v4988 = vunpack.c.h.b16 %v4204
        %v4989 = vunpack.c.l.b16 %v4205
        %v4990 = vunpack.c.l.b16 %v4206
        %v4991 = vunpack.c.h.b16 %v4206
        %v4992 = vunpack.c.l.b16 %v4207
        %v4993 = vunpack.c.l.b16 %v4208
        %v4994 = vunpack.c.h.b16 %v4208
        %v4995 = vunpack.c.l.b16 %v4209
        %v4996 = vunpack.c.l.b16 %v4210
        %v4997 = vunpack.c.h.b16 %v4210
        %v4998 = vunpack.c.l.b16 %v4211
        %v4999 = vunpack.c.l.b16 %v4212
        %v5000 = vunpack.c.h.b16 %v4212
        %v5001 = vunpack.c.l.b16 %v4213
        %v5002 = vunpack.c.l.b16 %v4214
        %v5003 = vunpack.c.h.b16 %v4214
        %v5004 = vunpack.c.l.b16 %v4215
        %v5005 = vunpack.c.l.b16 %v4216
        %v5006 = vunpack.c.h.b16 %v4216
        %v5007 = vunpack.c.l.b16 %v4217
        %v5008 = vunpack.c.l.b16 %v4218
        %v5009 = vunpack.c.h.b16 %v4218
        %v5010 = vunpack.c.l.b16 %v4219
        %v5011 = vunpack.c.l.b16 %v4220
        %v5012 = vunpack.c.h.b16 %v4220
        %v5013 = vunpack.c.l.b16 %v4221
        %v5014 = vunpack.c.l.b16 %v4222
        %v5015 = vunpack.c.h.b16 %v4222
        %v5016 = vunpack.c.l.b16 %v4223
        %v5017 = vunpack.c.l.b16 %v4224
        %v5018 = vunpack.c.h.b16 %v4224
        %v5019 = vunpack.c.l.b16 %v4225
        %v5020 = vunpack.c.l.b16 %v4226
        %v5021 = vunpack.c.h.b16 %v4226
        %v5022 = vunpack.c.l.b16 %v4227
        %v5023 = vunpack.c.l.b16 %v4228
        %v5024 = vunpack.c.h.b16 %v4228
        %v5025 = vunpack.c.l.b16 %v4229
        %v5026 = vunpack.c.l.b16 %v4230
        %v5027 = vunpack.c.h.b16 %v4230
        %v5028 = vunpack.c.l.b16 %v4231
        %v5029 = vunpack.c.l.b16 %v4232
        %v5030 = vunpack.c.h.b16 %v4232
        %v5031 = vunpack.c.l.b16 %v4233
        %v5032 = vunpack.c.l.b16 %v4234
        %v5033 = vunpack.c.h.b16 %v4234
        %v5034 = vunpack.c.l.b16 %v4235
        %v5035 = vunpack.c.l.b16 %v4236
        %v5036 = vunpack.c.h.b16 %v4236
        %v5037 = vunpack.c.l.b16 %v4237
        %v5038 = vunpack.c.l.b16 %v4238
        %v5039 = vunpack.c.h.b16 %v4238
        %v5040 = vunpack.c.l.b16 %v4239
        %v5041 = vunpack.c.l.b16 %v4240
        %v5042 = vunpack.c.h.b16 %v4240
        %v5043 = vunpack.c.l.b16 %v4241
        %v5044 = vunpack.c.l.b16 %v4242
        %v5045 = vunpack.c.h.b16 %v4242
        %v5046 = vunpack.c.l.b16 %v4243
        %v5047 = vunpack.c.l.b16 %v4244
        %v5048 = vunpack.c.h.b16 %v4244
        %v5049 = vunpack.c.l.b16 %v4245
        %v5050 = vunpack.c.l.b16 %v4246
        %v5051 = vunpack.c.h.b16 %v4246
        %v5052 = vunpack.c.l.b16 %v4247
        %v5053 = vunpack.c.l.b16 %v4248
        %v5054 = vunpack.c.h.b16 %v4248
        %v5055 = vunpack.c.l.b16 %v4249
        %v5056 = vunpack.c.l.b16 %v4250
        %v5057 = vunpack.c.h.b16 %v4250
        %v5058 = vunpack.c.l.b16 %v4251
        %v5059 = vunpack.c.l.b16 %v4252
        %v5060 = vunpack.c.h.b16 %v4252
        %v5061 = vunpack.c.l.b16 %v4253
        %v5062 = vunpack.c.l.b16 %v4254
        %v5063 = vunpack.c.h.b16 %v4254
        %v5064 = vunpack.c.l.b16 %v4255
        %v5065 = vunpack.c.l.b16 %v4256
        %v5066 = vunpack.c.h.b16 %v4256
        %v5067 = vunpack.c.l.b16 %v4257
        %v5068 = vunpack.c.l.b16 %v4258
        %v5069 = vunpack.c.h.b16 %v4258
        %v5070 = vunpack.c.l.b16 %v4259
        %v5071 = vunpack.c.l.b16 %v4260
        %v5072 = vunpack.c.h.b16 %v4260
        %v5073 = vunpack.c.l.b16 %v4261
        %v5074 = vunpack.c.l.b16 %v4262
        %v5075 = vunpack.c.h.b16 %v4262
        %v5076 = vunpack.c.l.b16 %v4263
        %v5077 = vunpack.c.l.b16 %v4264
        %v5078 = vunpack.c.h.b16 %v4264
        %v5079 = vunpack.c.l.b16 %v4265
        %v5080 = vunpack.c.l.b16 %v4266
        %v5081 = vunpack.c.h.b16 %v4266
        %v5082 = vunpack.c.l.b16 %v4267
        %v5083 = vunpack.c.l.b16 %v4268
        %v5084 = vunpack.c.h.b16 %v4268
        %v5085 = vunpack.c.l.b16 %v4269
        %v5086 = vunpack.c.l.b16 %v4270
        %v5087 = vunpack.c.h.b16 %v4270
        %v5088 = vunpack.c.l.b16 %v4271
        %v5089 = vunpack.c.l.b16 %v4272
        %v5090 = vunpack.c.h.b16 %v4272
        %v5091 = vunpack.c.l.b16 %v4273
        %v5092 = vunpack.c.l.b16 %v4274
        %v5093 = vunpack.c.h.b16 %v4274
        %v5094 = vunpack.c.l.b16 %v4275
        %v5095 = vunpack.c.l.b16 %v4276
        %v5096 = vunpack.c.h.b16 %v4276
        %v5097 = vunpack.c.l.b16 %v4277
        %v5098 = vunpack.c.l.b16 %v4278
        %v5099 = vunpack.c.h.b16 %v4278
        %v5100 = vunpack.c.l.b16 %v4279
        %v5101 = vunpack.c.l.b16 %v4280
        %v5102 = vunpack.c.h.b16 %v4280
        %v5103 = vunpack.c.l.b16 %v4281
        %v5104 = vunpack.c.l.b16 %v4282
        %v5105 = vunpack.c.h.b16 %v4282
        %v5106 = vunpack.c.l.b16 %v4283
        %v5107 = vunpack.c.l.b16 %v4284
        %v5108 = vunpack.c.h.b16 %v4284
        %v5109 = vunpack.c.l.b16 %v4285
        %v5110 = vunpack.c.l.b16 %v4286
        %v5111 = vunpack.c.h.b16 %v4286
        %v5112 = vunpack.c.l.b16 %v4287
        %v5113 = vunpack.c.l.b16 %v4288
        %v5114 = vunpack.c.h.b16 %v4288
        %v5115 = vunpack.c.l.b16 %v4289
        %v5116 = vunpack.c.l.b16 %v4290
        %v5117 = vunpack.c.h.b16 %v4290
        %v5118 = vunpack.c.l.b16 %v4291
        %v5119 = vunpack.c.l.b16 %v4292
        %v5120 = vunpack.c.h.b16 %v4292
        %v5121 = vunpack.c.l.b16 %v4293
        %v5122 = vunpack.c.l.b16 %v4294
        %v5123 = vunpack.c.h.b16 %v4294
        %v5124 = vunpack.c.l.b16 %v4295
        %v5125 = vunpack.c.l.b16 %v4296
        %v5126 = vunpack.c.h.b16 %v4296
        %v5127 = vunpack.c.l.b16 %v4297
        %v5128 = vunpack.c.l.b16 %v4298
        %v5129 = vunpack.c.h.b16 %v4298
        %v5130 = vunpack.c.l.b16 %v4299
        %v5131 = vunpack.c.l.b16 %v4300
        %v5132 = vunpack.c.h.b16 %v4300
        %v5133 = vunpack.c.l.b16 %v4301
        %v5134 = vunpack.c.l.b16 %v4302
        %v5135 = vunpack.c.h.b16 %v4302
        %v5136 = vunpack.c.l.b16 %v4303
        %v5137 = vunpack.c.l.b16 %v4304
        %v5138 = vunpack.c.h.b16 %v4304
        %v5139 = vunpack.c.l.b16 %v4305
        %v5140 = vunpack.c.l.b16 %v4306
        %v5141 = vunpack.c.h.b16 %v4306
        %v5142 = vunpack.c.l.b16 %v4307
        %v5143 = vunpack.c.l.b16 %v4308
        %v5144 = vunpack.c.h.b16 %v4308
        %v5145 = vunpack.c.l.b16 %v4309
        %v5146 = vunpack.c.l.b16 %v4310
        %v5147 = vunpack.c.h.b16 %v4310
        %v5148 = vunpack.c.l.b16 %v4311
        %v5149 = vunpack.c.l.b16 %v4312
        %v5150 = vunpack.c.h.b16 %v4312
        %v5151 = vunpack.c.l.b16 %v4313
        %v5152 = vunpack.c.l.b16 %v4314
        %v5153 = vunpack.c.h.b16 %v4314
        %v5154 = vunpack.c.l.b16 %v4315
        %v5155 = vunpack.c.l.b16 %v4316
        %v5156 = vunpack.c.h.b16 %v4316
        %v5157 = vunpack.c.l.b16 %v4317
        %v5158 = vunpack.c.l.b16 %v4318
        %v5159 = vunpack.c.h.b16 %v4318
        %v5160 = vunpack.c.l.b16 %v4319
        %v5161 = vunpack.c.l.b16 %v4320
        %v5162 = vunpack.c.h.b16 %v4320
        %v5163 = vunpack.c.l.b16 %v4321
        %v5164 = vunpack.c.l.b16 %v4322
        %v5165 = vunpack.c.h.b16 %v4322
        %v5166 = vunpack.c.l.b16 %v4323
        %v5167 = vunpack.c.l.b16 %v4324
        %v5168 = vunpack.c.h.b16 %v4324
        %v5169 = vunpack.c.l.b16 %v4325
        %v5170 = vunpack.c.l.b16 %v4326
        %v5171 = vunpack.c.h.b16 %v4326
        %v5172 = vunpack.c.l.b16 %v4327
        %v5173 = vunpack.c.l.b16 %v4328
        %v5174 = vunpack.c.h.b16 %v4328
        %v5175 = vunpack.c.l.b16 %v4329
        %v5176 = vunpack.c.l.b16 %v4330
        %v5177 = vunpack.c.h.b16 %v4330
        %v5178 = vunpack.c.l.b16 %v4331
        %v5179 = vunpack.c.l.b16 %v4332
        %v5180 = vunpack.c.h.b16 %v4332
        %v5181 = vunpack.c.l.b16 %v4333
        %v5182 = vunpack.c.l.b16 %v4334
        %v5183 = vunpack.c.h.b16 %v4334
        %v5184 = vunpack.c.l.b16 %v4335
        %v5185 = vunpack.c.l.b16 %v4336
        %v5186 = vunpack.c.h.b16 %v4336
        %v5187 = vunpack.c.l.b16 %v4337
        %v5188 = vunpack.c.l.b16 %v4338
        %v5189 = vunpack.c.h.b16 %v4338
        %v5190 = vunpack.c.l.b16 %v4339
        %v5191 = vunpack.c.l.b16 %v4340
        %v5192 = vunpack.c.h.b16 %v4340
        %v5193 = vunpack.c.l.b16 %v4341
        %v5194 = vunpack.c.l.b16 %v4342
        %v5195 = vunpack.c.h.b16 %v4342
        %v5196 = vunpack.c.l.b16 %v4343
        %v5197 = vunpack.c.l.b16 %v4344
        %v5198 = vunpack.c.h.b16 %v4344
        %v5199 = vunpack.c.l.b16 %v4345
        %v5200 = vunpack.c.l.b16 %v4346
        %v5201 = vunpack.c.h.b16 %v4346
        %v5202 = vunpack.c.l.b16 %v4347
        %v5203 = vunpack.c.l.b16 %v4348
        %v5204 = vunpack.c.h.b16 %v4348
        %v5205 = vunpack.c.l.b16 %v4349
        %v5206 = vunpack.c.l.b16 %v4350
        %v5207 = vunpack.c.h.b16 %v4350
        %v5208 = vunpack.c.l.b16 %v4351
        %v5209 = vunpack.c.l.b16 %v4352
        %v5210 = vunpack.c.h.b16 %v4352
        %v5211 = vunpack.c.l.b16 %v4353
        %v5212 = vunpack.c.l.b16 %v4354
        %v5213 = vunpack.c.h.b16 %v4354
        %v5214 = vunpack.c.l.b16 %v4355
        %v5215 = vunpack.c.l.b16 %v4356
        %v5216 = vunpack.c.h.b16 %v4356
        %v5217 = vunpack.c.l.b16 %v4357
        %v5218 = vunpack.c.l.b16 %v4358
        %v5219 = vunpack.c.h.b16 %v4358
        %v5220 = vunpack.c.l.b16 %v4359
        %v5221 = vunpack.c.l.b16 %v4360
        %v5222 = vunpack.c.h.b16 %v4360
        %v5223 = vunpack.c.l.b16 %v4361
        %v5224 = vunpack.c.l.b16 %v4362
        %v5225 = vunpack.c.h.b16 %v4362
        %v5226 = vunpack.c.l.b16 %v4363
        %v5227 = vunpack.c.l.b16 %v4364
        %v5228 = vunpack.c.h.b16 %v4364
        %v5229 = vunpack.c.l.b16 %v4365
        %v5230 = vunpack.c.l.b16 %v4366
        %v5231 = vunpack.c.h.b16 %v4366
        %v5232 = vunpack.c.l.b16 %v4367
        %v5233 = vunpack.c.l.b16 %v4368
        %v5234 = vunpack.c.h.b16 %v4368
        %v5235 = vunpack.c.l.b16 %v4369
        %v5236 = vunpack.c.l.b16 %v4370
        %v5237 = vunpack.c.h.b16 %v4370
        %v5238 = vunpack.c.l.b16 %v4371
        %v5239 = vunpack.c.l.b16 %v4372
        %v5240 = vunpack.c.h.b16 %v4372
        %v5241 = vunpack.c.l.b16 %v4373
        %v5242 = vunpack.c.l.b16 %v4374
        %v5243 = vunpack.c.h.b16 %v4374
        %v5244 = vunpack.c.l.b16 %v4375
        %v5245 = vunpack.c.l.b16 %v4376
        %v5246 = vunpack.c.h.b16 %v4376
        %v5247 = vunpack.c.l.b16 %v4377
        %v5248 = vunpack.c.l.b16 %v4378
        %v5249 = vunpack.c.h.b16 %v4378
        %v5250 = vunpack.c.l.b16 %v4379
        %v5251 = vunpack.c.l.b16 %v4380
        %v5252 = vunpack.c.h.b16 %v4380
        %v5253 = vunpack.c.l.b16 %v4381
        %v5254 = vunpack.c.l.b16 %v4382
        %v5255 = vunpack.c.h.b16 %v4382
        %v5256 = vunpack.c.l.b16 %v4383
        %v5257 = vunpack.c.l.b16 %v4384
        %v5258 = vunpack.c.h.b16 %v4384
        %v5259 = vunpack.c.l.b16 %v4385
        %v5260 = vunpack.c.l.b16 %v4386
        %v5261 = vunpack.c.h.b16 %v4386
        %v5262 = vunpack.c.l.b16 %v4387
        %v5263 = vunpack.c.l.b16 %v4388
        %v5264 = vunpack.c.h.b16 %v4388
        %v5265 = vunpack.c.l.b16 %v4389
        %v5266 = vunpack.c.l.b16 %v4390
        %v5267 = vunpack.c.h.b16 %v4390
        %v5268 = vunpack.c.l.b16 %v4391
        %v5269 = vunpack.c.l.b16 %v4392
        %v5270 = vunpack.c.h.b16 %v4392
        %v5271 = vunpack.c.l.b16 %v4393
        %v5272 = vunpack.c.l.b16 %v4394
        %v5273 = vunpack.c.h.b16 %v4394
        %v5274 = vunpack.c.l.b16 %v4395
        %v5275 = vunpack.c.l.b16 %v4396
        %v5276 = vunpack.c.h.b16 %v4396
        %v5277 = vunpack.c.l.b16 %v4397
        %v5278 = vunpack.c.l.b16 %v4398
        %v5279 = vunpack.c.h.b16 %v4398
        %v5280 = vunpack.c.l.b16 %v4399
        %v5281 = vunpack.c.l.b16 %v4400
        %v5282 = vunpack.c.h.b16 %v4400
        %v5283 = vunpack.c.l.b16 %v4401
        %v5284 = vunpack.c.l.b16 %v4402
        %v5285 = vunpack.c.h.b16 %v4402
        %v5286 = vunpack.c.l.b16 %v4403
        %v5287 = vunpack.c.l.b16 %v4404
        %v5288 = vunpack.c.h.b16 %v4404
        %v5289 = vunpack.c.l.b16 %v4405
        %v5290 = vunpack.c.l.b16 %v4406
        %v5291 = vunpack.c.h.b16 %v4406
        %v5292 = vunpack.c.l.b16 %v4407
        %v5293 = vunpack.c.l.b16 %v4408
        %v5294 = vunpack.c.h.b16 %v4408
        %v5295 = vunpack.c.l.b16 %v4409
        %v5296 = vunpack.c.l.b16 %v4410
        %v5297 = vunpack.c.h.b16 %v4410
        %v5298 = vunpack.c.l.b16 %v4411
        %v5299 = vunpack.c.l.b16 %v4412
        %v5300 = vunpack.c.h.b16 %v4412
        %v5301 = vunpack.c.l.b16 %v4413
        %v5302 = vunpack.c.l.b16 %v4414
        %v5303 = vunpack.c.h.b16 %v4414
        %v5304 = vunpack.c.l.b16 %v4415
        %v5305 = vunpack.c.l.b16 %v4416
        %v5306 = vunpack.c.h.b16 %v4416
        %v5307 = vunpack.c.l.b16 %v4417
        %v5308 = vunpack.c.l.b16 %v4418
        %v5309 = vunpack.c.h.b16 %v4418
        %v5310 = vunpack.c.l.b16 %v4419
        %v5311 = vunpack.c.l.b16 %v4420
        %v5312 = vunpack.c.h.b16 %v4420
        %v5313 = vunpack.c.l.b16 %v4421
        %v5314 = vunpack.c.l.b16 %v4422
        %v5315 = vunpack.c.h.b16 %v4422
        %v5316 = vunpack.c.l.b16 %v4423
        %v5317 = vunpack.c.l.b16 %v4424
        %v5318 = vunpack.c.h.b16 %v4424
        %v5319 = vunpack.c.l.b16 %v4425
        %v5320 = vunpack.c.l.b16 %v4426
        %v5321 = vunpack.c.h.b16 %v4426
        %v5322 = vunpack.c.l.b16 %v4427
        %v5323 = vunpack.c.l.b16 %v4428
        %v5324 = vunpack.c.h.b16 %v4428
        %v5325 = vunpack.c.l.b16 %v4429
        %v5326 = vunpack.c.l.b16 %v4430
        %v5327 = vunpack.c.h.b16 %v4430
        %v5328 = vunpack.c.l.b16 %v4431
        %v5329 = vunpack.c.l.b16 %v4432
        %v5330 = vunpack.c.h.b16 %v4432
        %v5331 = vunpack.c.l.b16 %v4433
        %v5332 = vunpack.c.l.b16 %v4434
        %v5333 = vunpack.c.h.b16 %v4434
        %v5334 = vunpack.c.l.b16 %v4435
        %v5335 = vunpack.c.l.b16 %v4436
        %v5336 = vunpack.c.h.b16 %v4436
        %v5337 = vunpack.c.l.b16 %v4437
        %v5338 = vunpack.c.l.b16 %v4438
        %v5339 = vunpack.c.h.b16 %v4438
        %v5340 = vunpack.c.l.b16 %v4439
        %v5341 = vunpack.c.l.b16 %v4440
        %v5342 = vunpack.c.h.b16 %v4440
        %v5343 = vunpack.c.l.b16 %v4441
        %v5344 = vunpack.c.l.b16 %v4442
        %v5345 = vunpack.c.h.b16 %v4442
        %v5346 = vunpack.c.l.b16 %v4443
        %v5347 = vunpack.c.l.b16 %v4444
        %v5348 = vunpack.c.h.b16 %v4444
        %v5349 = vunpack.c.l.b16 %v4445
        %v5350 = vunpack.c.l.b16 %v4446
        %v5351 = vunpack.c.h.b16 %v4446
        %v5352 = vunpack.c.l.b16 %v4447
        %v5353 = vunpack.c.l.b16 %v4448
        %v5354 = vunpack.c.h.b16 %v4448
        %v5355 = vunpack.c.l.b16 %v4449
        %v5356 = vunpack.c.l.b16 %v4450
        %v5357 = vunpack.c.h.b16 %v4450
        %v5358 = vunpack.c.l.b16 %v4451
        %v5359 = vunpack.c.l.b16 %v4452
        %v5360 = vunpack.c.h.b16 %v4452
        %v5361 = vunpack.c.l.b16 %v4453
        %v5362 = vunpack.c.l.b16 %v4454
        %v5363 = vunpack.c.h.b16 %v4454
        %v5364 = vunpack.c.l.b16 %v4455
        %v5365 = vunpack.c.l.b16 %v4456
        %v5366 = vunpack.c.h.b16 %v4456
        %v5367 = vunpack.c.l.b16 %v4457
        %v5368 = vunpack.c.l.b16 %v4458
        %v5369 = vunpack.c.h.b16 %v4458
        %v5370 = vunpack.c.l.b16 %v4459
        %v5371 = vunpack.c.l.b16 %v4460
        %v5372 = vunpack.c.h.b16 %v4460
        %v5373 = vunpack.c.l.b16 %v4461
        %v5374 = vunpack.c.l.b16 %v4462
        %v5375 = vunpack.c.h.b16 %v4462
        %v5376 = vunpack.c.l.b16 %v4463
        %v5377 = vunpack.c.l.b16 %v4464
        %v5378 = vunpack.c.h.b16 %v4464
        %v5379 = vunpack.c.l.b16 %v4465
        %v5380 = vunpack.c.l.b16 %v4466
        %v5381 = vunpack.c.h.b16 %v4466
        %v5382 = vunpack.c.l.b16 %v4467
        %v5383 = vunpack.c.l.b16 %v4468
        %v5384 = vunpack.c.h.b16 %v4468
        %v5385 = vunpack.c.l.b16 %v4469
        %v5386 = vunpack.c.l.b16 %v4470
        %v5387 = vunpack.c.h.b16 %v4470
        %v5388 = vunpack.c.l.b16 %v4471
        %v5389 = vunpack.c.l.b16 %v4472
        %v5390 = vunpack.c.h.b16 %v4472
        %v5391 = vunpack.c.l.b16 %v4473
        %v5392 = vunpack.c.l.b16 %v4474
        %v5393 = vunpack.c.h.b16 %v4474
        %v5394 = vunpack.c.l.b16 %v4475
        %v5395 = vunpack.c.l.b16 %v4476
        %v5396 = vunpack.c.h.b16 %v4476
        %v5397 = vunpack.c.l.b16 %v4477
        %v5398 = vunpack.c.l.b16 %v4478
        %v5399 = vunpack.c.h.b16 %v4478
        %v5400 = vunpack.c.l.b16 %v4479
        %v5401 = vunpack.c.l.b16 %v4480
        %v5402 = vunpack.c.h.b16 %v4480
        %v5403 = vunpack.c.l.b16 %v4481
        %v5404 = vunpack.c.l.b16 %v4482
        %v5405 = vunpack.c.h.b16 %v4482
        %v5406 = vunpack.c.l.b16 %v4483
        %v5407 = vunpack.c.l.b16 %v4484
        %v5408 = vunpack.c.h.b16 %v4484
        %v5409 = vunpack.c.l.b16 %v4485
        %v5410 = vunpack.c.l.b16 %v4486
        %v5411 = vunpack.c.h.b16 %v4486
        %v5412 = vunpack.c.l.b16 %v4487
        %v5413 = vunpack.c.l.b16 %v4488
        %v5414 = vunpack.c.h.b16 %v4488
        %v5415 = vunpack.c.l.b16 %v4489
        %v5416 = vunpack.c.l.b16 %v4490
        %v5417 = vunpack.c.h.b16 %v4490
        %v5418 = vunpack.c.l.b16 %v4491
        %v5419 = vunpack.c.l.b16 %v4492
        %v5420 = vunpack.c.h.b16 %v4492
        %v5421 = vunpack.c.l.b16 %v4493
        %v5422 = vunpack.c.l.b16 %v4494
        %v5423 = vunpack.c.h.b16 %v4494
        %v5424 = vunpack.c.l.b16 %v4495
        %v5425 = vunpack.c.l.b16 %v4496
        %v5426 = vunpack.c.h.b16 %v4496
        %v5427 = vunpack.c.l.b16 %v4497
        %v5428 = vunpack.c.l.b16 %v4498
        %v5429 = vunpack.c.h.b16 %v4498
        %v5430 = vunpack.c.l.b16 %v4499
        %v5431 = vunpack.c.l.b16 %v4500
        %v5432 = vunpack.c.h.b16 %v4500
        %v5433 = vunpack.c.l.b16 %v4501
        %v5434 = vunpack.c.l.b16 %v4502
        %v5435 = vunpack.c.h.b16 %v4502
        %v5436 = vunpack.c.l.b16 %v4503
        %v5437 = vunpack.c.l.b16 %v4504
        %v5438 = vunpack.c.h.b16 %v4504
        %v5439 = vunpack.c.l.b16 %v4505
        %v5440 = vunpack.c.l.b16 %v4506
        %v5441 = vunpack.c.h.b16 %v4506
        %v5442 = vunpack.c.l.b16 %v4507
        %v5443 = vunpack.c.l.b16 %v4508
        %v5444 = vunpack.c.h.b16 %v4508
        %v5445 = vunpack.c.l.b16 %v4509
        %v5446 = vunpack.c.l.b16 %v4510
        %v5447 = vunpack.c.h.b16 %v4510
        %v5448 = vunpack.c.l.b16 %v4511
        %v5449 = vunpack.c.l.b16 %v4512
        %v5450 = vunpack.c.h.b16 %v4512
        %v5451 = vunpack.c.l.b16 %v4513
        %v5452 = vunpack.c.l.b16 %v4514
        %v5453 = vunpack.c.h.b16 %v4514
        %v5454 = vunpack.c.l.b16 %v4515
        %v5455 = vunpack.c.l.b16 %v4516
        %v5456 = vunpack.c.h.b16 %v4516
        %v5457 = vunpack.c.l.b16 %v4517
        %v5458 = vunpack.c.l.b16 %v4518
        %v5459 = vunpack.c.h.b16 %v4518
        %v5460 = vunpack.c.l.b16 %v4519
        %v5461 = vunpack.c.l.b16 %v4520
        %v5462 = vunpack.c.h.b16 %v4520
        %v5463 = vunpack.c.l.b16 %v4521
        %v5464 = vunpack.c.l.b16 %v4522
        %v5465 = vunpack.c.h.b16 %v4522
        %v5466 = vunpack.c.l.b16 %v4523
        %v5467 = vunpack.c.l.b16 %v4524
        %v5468 = vunpack.c.h.b16 %v4524
        %v5469 = vunpack.c.l.b16 %v4525
        %v5470 = vunpack.c.l.b16 %v4526
        %v5471 = vunpack.c.h.b16 %v4526
        %v5472 = vunpack.c.l.b16 %v4527
        %v5473 = vunpack.c.l.b16 %v4528
        %v5474 = vunpack.c.h.b16 %v4528
        %v5475 = vunpack.c.l.b16 %v4529
        %v5476 = vunpack.c.l.b16 %v4530
        %v5477 = vunpack.c.h.b16 %v4530
        %v5478 = vunpack.c.l.b16 %v4531
        %v5479 = vunpack.c.l.b16 %v4532
        %v5480 = vunpack.c.h.b16 %v4532
        %v5481 = vunpack.c.l.b16 %v4533
        %v5482 = vunpack.c.l.b16 %v4534
        %v5483 = vunpack.c.h.b16 %v4534
        %v5484 = vunpack.c.l.b16 %v4535
        %v5485 = vunpack.c.l.b16 %v4536
        %v5486 = vunpack.c.h.b16 %v4536
        %v5487 = vunpack.c.l.b16 %v4537
        %v5488 = vunpack.c.l.b16 %v4538
        %v5489 = vunpack.c.h.b16 %v4538
        %v5490 = vunpack.c.l.b16 %v4539
        %v5491 = vunpack.c.l.b16 %v4540
        %v5492 = vunpack.c.h.b16 %v4540
        %v5493 = vunpack.c.l.b16 %v4541
        %v5494 = vunpack.c.l.b16 %v4542
        %v5495 = vunpack.c.h.b16 %v4542
        %v5496 = vunpack.c.l.b16 %v4543
        %v5497 = vunpack.c.l.b16 %v4544
        %v5498 = vunpack.c.h.b16 %v4544
        %v5499 = vunpack.c.l.b16 %v4545
        %v5500 = vunpack.c.l.b16 %v4546
        %v5501 = vunpack.c.h.b16 %v4546
        %v5502 = vunpack.c.l.b16 %v4547
        %v5503 = vunpack.c.l.b16 %v4548
        %v5504 = vunpack.c.h.b16 %v4548
        %v5505 = vunpack.c.l.b16 %v4549
        %v5506 = vunpack.c.l.b16 %v4550
        %v5507 = vunpack.c.h.b16 %v4550
        %v5508 = vunpack.c.l.b16 %v4551
        %v5509 = vunpack.c.l.b16 %v4552
        %v5510 = vunpack.c.h.b16 %v4552
        %v5511 = vunpack.c.l.b16 %v4553
        %v5512 = vunpack.c.l.b16 %v4554
        %v5513 = vunpack.c.h.b16 %v4554
        %v5514 = vunpack.c.l.b16 %v4555
        %v5515 = vunpack.c.l.b16 %v4556
        %v5516 = vunpack.c.h.b16 %v4556
        %v5517 = vunpack.c.l.b16 %v4557
        %v5518 = vunpack.c.l.b16 %v4558
        %v5519 = vunpack.c.h.b16 %v4558
        %v5520 = vunpack.c.l.b16 %v4559
        %v5521 = vunpack.c.l.b16 %v4560
        %v5522 = vunpack.c.h.b16 %v4560
        %v5523 = vunpack.c.l.b16 %v4561
        %v5524 = vunpack.c.l.b16 %v4562
        %v5525 = vunpack.c.h.b16 %v4562
        %v5526 = vunpack.c.l.b16 %v4563
        %v5527 = vunpack.c.l.b16 %v4564
        %v5528 = vunpack.c.h.b16 %v4564
        %v5529 = vunpack.c.l.b16 %v4565
        %v5530 = vunpack.c.l.b16 %v4566
        %v5531 = vunpack.c.h.b16 %v4566
        %v5532 = vunpack.c.l.b16 %v4567
        %v5533 = vunpack.c.l.b16 %v4568
        %v5534 = vunpack.c.h.b16 %v4568
        %v5535 = vunpack.c.l.b16 %v4569
        %v5536 = vunpack.c.l.b16 %v4570
        %v5537 = vunpack.c.h.b16 %v4570
        %v5538 = vunpack.c.l.b16 %v4571
        %v5539 = vunpack.c.l.b16 %v4572
        %v5540 = vunpack.c.h.b16 %v4572
        %v5541 = vunpack.c.l.b16 %v4573
        %v5542 = vpack.c.b16 %v4969, %v4966
        %v5543 = vpack.c.b16 %v4970, %v4967
        %v5544 = vpack.c.b16 %v4971, %v4968
        %v5545 = vpack.c.b16 %v4975, %v4972
        %v5546 = vpack.c.b16 %v4976, %v4973
        %v5547 = vpack.c.b16 %v4977, %v4974
        %v5548 = vpack.c.b16 %v4981, %v4978
        %v5549 = vpack.c.b16 %v4982, %v4979
        %v5550 = vpack.c.b16 %v4983, %v4980
        %v5551 = vpack.c.b16 %v4987, %v4984
        %v5552 = vpack.c.b16 %v4988, %v4985
        %v5553 = vpack.c.b16 %v4989, %v4986
        %v5554 = vpack.c.b16 %v4993, %v4990
        %v5555 = vpack.c.b16 %v4994, %v4991
        %v5556 = vpack.c.b16 %v4995, %v4992
        %v5557 = vpack.c.b16 %v4999, %v4996
        %v5558 = vpack.c.b16 %v5000, %v4997
        %v5559 = vpack.c.b16 %v5001, %v4998
        %v5560 = vpack.c.b16 %v5005, %v5002
        %v5561 = vpack.c.b16 %v5006, %v5003
        %v5562 = vpack.c.b16 %v5007, %v5004
        %v5563 = vpack.c.b16 %v5011, %v5008
        %v5564 = vpack.c.b16 %v5012, %v5009
        %v5565 = vpack.c.b16 %v5013, %v5010
        %v5566 = vpack.c.b16 %v5017, %v5014
        %v5567 = vpack.c.b16 %v5018, %v5015
        %v5568 = vpack.c.b16 %v5019, %v5016
        %v5569 = vpack.c.b16 %v5023, %v5020
        %v5570 = vpack.c.b16 %v5024, %v5021
        %v5571 = vpack.c.b16 %v5025, %v5022
        %v5572 = vpack.c.b16 %v5029, %v5026
        %v5573 = vpack.c.b16 %v5030, %v5027
        %v5574 = vpack.c.b16 %v5031, %v5028
        %v5575 = vpack.c.b16 %v5035, %v5032
        %v5576 = vpack.c.b16 %v5036, %v5033
        %v5577 = vpack.c.b16 %v5037, %v5034
        %v5578 = vpack.c.b16 %v5041, %v5038
        %v5579 = vpack.c.b16 %v5042, %v5039
        %v5580 = vpack.c.b16 %v5043, %v5040
        %v5581 = vpack.c.b16 %v5047, %v5044
        %v5582 = vpack.c.b16 %v5048, %v5045
        %v5583 = vpack.c.b16 %v5049, %v5046
        %v5584 = vpack.c.b16 %v5053, %v5050
        %v5585 = vpack.c.b16 %v5054, %v5051
        %v5586 = vpack.c.b16 %v5055, %v5052
        %v5587 = vpack.c.b16 %v5059, %v5056
        %v5588 = vpack.c.b16 %v5060, %v5057
        %v5589 = vpack.c.b16 %v5061, %v5058
        %v5590 = vpack.c.b16 %v5065, %v5062
        %v5591 = vpack.c.b16 %v5066, %v5063
        %v5592 = vpack.c.b16 %v5067, %v5064
        %v5593 = vpack.c.b16 %v5071, %v5068
        %v5594 = vpack.c.b16 %v5072, %v5069
        %v5595 = vpack.c.b16 %v5073, %v5070
        %v5596 = vpack.c.b16 %v5077, %v5074
        %v5597 = vpack.c.b16 %v5078, %v5075
        %v5598 = vpack.c.b16 %v5079, %v5076
        %v5599 = vpack.c.b16 %v5083, %v5080
        %v5600 = vpack.c.b16 %v5084, %v5081
        %v5601 = vpack.c.b16 %v5085, %v5082
        %v5602 = vpack.c.b16 %v5089, %v5086
        %v5603 = vpack.c.b16 %v5090, %v5087
        %v5604 = vpack.c.b16 %v5091, %v5088
        %v5605 = vpack.c.b16 %v5095, %v5092
        %v5606 = vpack.c.b16 %v5096, %v5093
        %v5607 = vpack.c.b16 %v5097, %v5094
        %v5608 = vpack.c.b16 %v5101, %v5098
        %v5609 = vpack.c.b16 %v5102, %v5099
        %v5610 = vpack.c.b16 %v5103, %v5100
        %v5611 = vpack.c.b16 %v5107, %v5104
        %v5612 = vpack.c.b16 %v5108, %v5105
        %v5613 = vpack.c.b16 %v5109, %v5106
        %v5614 = vpack.c.b16 %v5113, %v5110
        %v5615 = vpack.c.b16 %v5114, %v5111
        %v5616 = vpack.c.b16 %v5115, %v5112
        %v5617 = vpack.c.b16 %v5119, %v5116
        %v5618 = vpack.c.b16 %v5120, %v5117
        %v5619 = vpack.c.b16 %v5121, %v5118
        %v5620 = vpack.c.b16 %v5125, %v5122
        %v5621 = vpack.c.b16 %v5126, %v5123
        %v5622 = vpack.c.b16 %v5127, %v5124
        %v5623 = vpack.c.b16 %v5131, %v5128
        %v5624 = vpack.c.b16 %v5132, %v5129
        %v5625 = vpack.c.b16 %v5133, %v5130
        %v5626 = vpack.c.b16 %v5137, %v5134
        %v5627 = vpack.c.b16 %v5138, %v5135
        %v5628 = vpack.c.b16 %v5139, %v5136
        %v5629 = vpack.c.b16 %v5143, %v5140
        %v5630 = vpack.c.b16 %v5144, %v5141
        %v5631 = vpack.c.b16 %v5145, %v5142
        %v5632 = vpack.c.b16 %v5149, %v5146
        %v5633 = vpack.c.b16 %v5150, %v5147
        %v5634 = vpack.c.b16 %v5151, %v5148
        %v5635 = vpack.c.b16 %v5155, %v5152
        %v5636 = vpack.c.b16 %v5156, %v5153
        %v5637 = vpack.c.b16 %v5157, %v5154
        %v5638 = vpack.c.b16 %v5161, %v5158
        %v5639 = vpack.c.b16 %v5162, %v5159
        %v5640 = vpack.c.b16 %v5163, %v5160
        %v5641 = vpack.c.b16 %v5167, %v5164
        %v5642 = vpack.c.b16 %v5168, %v5165
        %v5643 = vpack.c.b16 %v5169, %v5166
        %v5644 = vpack.c.b16 %v5173, %v5170
        %v5645 = vpack.c.b16 %v5174, %v5171
        %v5646 = vpack.c.b16 %v5175, %v5172
        %v5647 = vpack.c.b16 %v5179, %v5176
        %v5648 = vpack.c.b16 %v5180, %v5177
        %v5649 = vpack.c.b16 %v5181, %v5178
        %v5650 = vpack.c.b16 %v5185, %v5182
        %v5651 = vpack.c.b16 %v5186, %v5183
        %v5652 = vpack.c.b16 %v5187, %v5184
        %v5653 = vpack.c.b16 %v5191, %v5188
        %v5654 = vpack.c.b16 %v5192, %v5189
        %v5655 = vpack.c.b16 %v5193, %v5190
        %v5656 = vpack.c.b16 %v5197, %v5194
        %v5657 = vpack.c.b16 %v5198, %v5195
        %v5658 = vpack.c.b16 %v5199, %v5196
        %v5659 = vpack.c.b16 %v5203, %v5200
        %v5660 = vpack.c.b16 %v5204, %v5201
        %v5661 = vpack.c.b16 %v5205, %v5202
        %v5662 = vpack.c.b16 %v5209, %v5206
        %v5663 = vpack.c.b16 %v5210, %v5207
        %v5664 = vpack.c.b16 %v5211, %v5208
        %v5665 = vpack.c.b16 %v5215, %v5212
        %v5666 = vpack.c.b16 %v5216, %v5213
        %v5667 = vpack.c.b16 %v5217, %v5214
        %v5668 = vpack.c.b16 %v5221, %v5218
        %v5669 = vpack.c.b16 %v5222, %v5219
        %v5670 = vpack.c.b16 %v5223, %v5220
        %v5671 = vpack.c.b16 %v5227, %v5224
        %v5672 = vpack.c.b16 %v5228, %v5225
        %v5673 = vpack.c.b16 %v5229, %v5226
        %v5674 = vpack.c.b16 %v5233, %v5230
        %v5675 = vpack.c.b16 %v5234, %v5231
        %v5676 = vpack.c.b16 %v5235, %v5232
        %v5677 = vpack.c.b16 %v5239, %v5236
        %v5678 = vpack.c.b16 %v5240, %v5237
        %v5679 = vpack.c.b16 %v5241, %v5238
        %v5680 = vpack.c.b16 %v5245, %v5242
        %v5681 = vpack.c.b16 %v5246, %v5243
        %v5682 = vpack.c.b16 %v5247, %v5244
        %v5683 = vpack.c.b16 %v5251, %v5248
        %v5684 = vpack.c.b16 %v5252, %v5249
        %v5685 = vpack.c.b16 %v5253, %v5250
        %v5686 = vpack.c.b16 %v5257, %v5254
        %v5687 = vpack.c.b16 %v5258, %v5255
        %v5688 = vpack.c.b16 %v5259, %v5256
        %v5689 = vpack.c.b16 %v5263, %v5260
        %v5690 = vpack.c.b16 %v5264, %v5261
        %v5691 = vpack.c.b16 %v5265, %v5262
        %v5692 = vpack.c.b16 %v5269, %v5266
        %v5693 = vpack.c.b16 %v5270, %v5267
        %v5694 = vpack.c.b16 %v5271, %v5268
        %v5695 = vpack.c.b16 %v5275, %v5272
        %v5696 = vpack.c.b16 %v5276, %v5273
        %v5697 = vpack.c.b16 %v5277, %v5274
        %v5698 = vpack.c.b16 %v5281, %v5278
        %v5699 = vpack.c.b16 %v5282, %v5279
        %v5700 = vpack.c.b16 %v5283, %v5280
        %v5701 = vpack.c.b16 %v5287, %v5284
        %v5702 = vpack.c.b16 %v5288, %v5285
        %v5703 = vpack.c.b16 %v5289, %v5286
        %v5704 = vpack.c.b16 %v5293, %v5290
        %v5705 = vpack.c.b16 %v5294, %v5291
        %v5706 = vpack.c.b16 %v5295, %v5292
        %v5707 = vpack.c.b16 %v5299, %v5296
        %v5708 = vpack.c.b16 %v5300, %v5297
        %v5709 = vpack.c.b16 %v5301, %v5298
        %v5710 = vpack.c.b16 %v5305, %v5302
        %v5711 = vpack.c.b16 %v5306, %v5303
        %v5712 = vpack.c.b16 %v5307, %v5304
        %v5713 = vpack.c.b16 %v5311, %v5308
        %v5714 = vpack.c.b16 %v5312, %v5309
        %v5715 = vpack.c.b16 %v5313, %v5310
        %v5716 = vpack.c.b16 %v5317, %v5314
        %v5717 = vpack.c.b16 %v5318, %v5315
        %v5718 = vpack.c.b16 %v5319, %v5316
        %v5719 = vpack.c.b16 %v5323, %v5320
        %v5720 = vpack.c.b16 %v5324, %v5321
        %v5721 = vpack.c.b16 %v5325, %v5322
        %v5722 = vpack.c.b16 %v5329, %v5326
        %v5723 = vpack.c.b16 %v5330, %v5327
        %v5724 = vpack.c.b16 %v5331, %v5328
        %v5725 = vpack.c.b16 %v5335, %v5332
        %v5726 = vpack.c.b16 %v5336, %v5333
        %v5727 = vpack.c.b16 %v5337, %v5334
        %v5728 = vpack.c.b16 %v5341, %v5338
        %v5729 = vpack.c.b16 %v5342, %v5339
        %v5730 = vpack.c.b16 %v5343, %v5340
        %v5731 = vpack.c.b16 %v5347, %v5344
        %v5732 = vpack.c.b16 %v5348, %v5345
        %v5733 = vpack.c.b16 %v5349, %v5346
        %v5734 = vpack.c.b16 %v5353, %v5350
        %v5735 = vpack.c.b16 %v5354, %v5351
        %v5736 = vpack.c.b16 %v5355, %v5352
        %v5737 = vpack.c.b16 %v5359, %v5356
        %v5738 = vpack.c.b16 %v5360, %v5357
        %v5739 = vpack.c.b16 %v5361, %v5358
        %v5740 = vpack.c.b16 %v5365, %v5362
        %v5741 = vpack.c.b16 %v5366, %v5363
        %v5742 = vpack.c.b16 %v5367, %v5364
        %v5743 = vpack.c.b16 %v5371, %v5368
        %v5744 = vpack.c.b16 %v5372, %v5369
        %v5745 = vpack.c.b16 %v5373, %v5370
        %v5746 = vpack.c.b16 %v5377, %v5374
        %v5747 = vpack.c.b16 %v5378, %v5375
        %v5748 = vpack.c.b16 %v5379, %v5376
        %v5749 = vpack.c.b16 %v5383, %v5380
        %v5750 = vpack.c.b16 %v5384, %v5381
        %v5751 = vpack.c.b16 %v5385, %v5382
        %v5752 = vpack.c.b16 %v5389, %v5386
        %v5753 = vpack.c.b16 %v5390, %v5387
        %v5754 = vpack.c.b16 %v5391, %v5388
        %v5755 = vpack.c.b16 %v5395, %v5392
        %v5756 = vpack.c.b16 %v5396, %v5393
        %v5757 = vpack.c.b16 %v5397, %v5394
        %v5758 = vpack.c.b16 %v5401, %v5398
        %v5759 = vpack.c.b16 %v5402, %v5399
        %v5760 = vpack.c.b16 %v5403, %v5400
        %v5761 = vpack.c.b16 %v5407, %v5404
        %v5762 = vpack.c.b16 %v5408, %v5405
        %v5763 = vpack.c.b16 %v5409, %v5406
        %v5764 = vpack.c.b16 %v5413, %v5410
        %v5765 = vpack.c.b16 %v5414, %v5411
        %v5766 = vpack.c.b16 %v5415, %v5412
        %v5767 = vpack.c.b16 %v5419, %v5416
        %v5768 = vpack.c.b16 %v5420, %v5417
        %v5769 = vpack.c.b16 %v5421, %v5418
        %v5770 = vpack.c.b16 %v5425, %v5422
        %v5771 = vpack.c.b16 %v5426, %v5423
        %v5772 = vpack.c.b16 %v5427, %v5424
        %v5773 = vpack.c.b16 %v5431, %v5428
        %v5774 = vpack.c.b16 %v5432, %v5429
        %v5775 = vpack.c.b16 %v5433, %v5430
        %v5776 = vpack.c.b16 %v5437, %v5434
        %v5777 = vpack.c.b16 %v5438, %v5435
        %v5778 = vpack.c.b16 %v5439, %v5436
        %v5779 = vpack.c.b16 %v5443, %v5440
        %v5780 = vpack.c.b16 %v5444, %v5441
        %v5781 = vpack.c.b16 %v5445, %v5442
        %v5782 = vpack.c.b16 %v5449, %v5446
        %v5783 = vpack.c.b16 %v5450, %v5447
        %v5784 = vpack.c.b16 %v5451, %v5448
        %v5785 = vpack.c.b16 %v5455, %v5452
        %v5786 = vpack.c.b16 %v5456, %v5453
        %v5787 = vpack.c.b16 %v5457, %v5454
        %v5788 = vpack.c.b16 %v5461, %v5458
        %v5789 = vpack.c.b16 %v5462, %v5459
        %v5790 = vpack.c.b16 %v5463, %v5460
        %v5791 = vpack.c.b16 %v5467, %v5464
        %v5792 = vpack.c.b16 %v5468, %v5465
        %v5793 = vpack.c.b16 %v5469, %v5466
        %v5794 = vpack.c.b16 %v5473, %v5470
        %v5795 = vpack.c.b16 %v5474, %v5471
        %v5796 = vpack.c.b16 %v5475, %v5472
        %v5797 = vpack.c.b16 %v5479, %v5476
        %v5798 = vpack.c.b16 %v5480, %v5477
        %v5799 = vpack.c.b16 %v5481, %v5478
        %v5800 = vpack.c.b16 %v5485, %v5482
        %v5801 = vpack.c.b16 %v5486, %v5483
        %v5802 = vpack.c.b16 %v5487, %v5484
        %v5803 = vpack.c.b16 %v5491, %v5488
        %v5804 = vpack.c.b16 %v5492, %v5489
        %v5805 = vpack.c.b16 %v5493, %v5490
        %v5806 = vpack.c.b16 %v5497, %v5494
        %v5807 = vpack.c.b16 %v5498, %v5495
        %v5808 = vpack.c.b16 %v5499, %v5496
        %v5809 = vpack.c.b16 %v5503, %v5500
        %v5810 = vpack.c.b16 %v5504, %v5501
        %v5811 = vpack.c.b16 %v5505, %v5502
        %v5812 = vpack.c.b16 %v5509, %v5506
        %v5813 = vpack.c.b16 %v5510, %v5507
        %v5814 = vpack.c.b16 %v5511, %v5508
        %v5815 = vpack.c.b16 %v5515, %v5512
        %v5816 = vpack.c.b16 %v5516, %v5513
        %v5817 = vpack.c.b16 %v5517, %v5514
        %v5818 = vpack.c.b16 %v5521, %v5518
        %v5819 = vpack.c.b16 %v5522, %v5519
        %v5820 = vpack.c.b16 %v5523, %v5520
        %v5821 = vpack.c.b16 %v5527, %v5524
        %v5822 = vpack.c.b16 %v5528, %v5525
        %v5823 = vpack.c.b16 %v5529, %v5526
        %v5824 = vpack.c.b16 %v5533, %v5530
        %v5825 = vpack.c.b16 %v5534, %v5531
        %v5826 = vpack.c.b16 %v5535, %v5532
        %v5827 = vpack.c.b16 %v5539, %v5536
        %v5828 = vpack.c.b16 %v5540, %v5537
        %v5829 = vpack.c.b16 %v5541, %v5538
        %6118 = vmatpush.bf16.msra.mxu0 %v5563
        %6119 = vmatpush.bf16.msra.mxu0 %v5560
        %6120 = vmatpush.bf16.msra.mxu0 %v5557
        %6121 = vmatpush.bf16.msra.mxu0 %v5554
        %6122 = vmatpush.bf16.msra.mxu0 %v5551
        %6123 = vmatpush.bf16.msra.mxu0 %v5548
        %6124 = vmatpush.bf16.msra.mxu0 %v5545
        %6125 = vmatpush.bf16.msra.mxu0 %v5542
        %6126 = vmatmul.bf16.gmra.mxu0 %v4094
        %v6127 = vpop.f32.mrf.mxu0
        %v6128 = vadd.f32 %v4576, %v6127
        %v6129 = vpop.f32.mrf.mxu0
        %v6130 = vadd.f32 %v4576, %v6129
        %6131 = vmatmul.bf16.gmra.mxu0 %v4106
        %v6132 = vpop.f32.mrf.mxu0
        %v6133 = vadd.f32 %v4576, %v6132
        %v6134 = vpop.f32.mrf.mxu0
        %v6135 = vadd.f32 %v4576, %v6134
        %6136 = vmatmul.bf16.gmra.mxu0 %v4118
        %v6137 = vpop.f32.mrf.mxu0
        %v6138 = vadd.f32 %v4576, %v6137
        %v6139 = vpop.f32.mrf.mxu0
        %v6140 = vadd.f32 %v4576, %v6139
        %6141 = vmatmul.bf16.gmra.mxu0 %v4130
        %v6142 = vpop.f32.mrf.mxu0
        %v6143 = vadd.f32 %v4576, %v6142
        %v6144 = vpop.f32.mrf.mxu0
        %v6145 = vadd.f32 %v4576, %v6144
        %6146 = vmatmul.bf16.gmra.mxu0 %v4142
        %v6147 = vpop.f32.mrf.mxu0
        %v6148 = vadd.f32 %v4576, %v6147
        %v6149 = vpop.f32.mrf.mxu0
        %v6150 = vadd.f32 %v4576, %v6149
        %6151 = vmatmul.bf16.gmra.mxu0 %v4154
        %v6152 = vpop.f32.mrf.mxu0
        %v6153 = vadd.f32 %v4576, %v6152
        %v6154 = vpop.f32.mrf.mxu0
        %v6155 = vadd.f32 %v4576, %v6154
        %6156 = vmatmul.bf16.gmra.mxu0 %v4166
        %v6157 = vpop.f32.mrf.mxu0
        %v6158 = vadd.f32 %v4576, %v6157
        %v6159 = vpop.f32.mrf.mxu0
        %v6160 = vadd.f32 %v4576, %v6159
        %6161 = vmatmul.bf16.gmra.mxu0 %v4178
        %v6162 = vpop.f32.mrf.mxu0
        %v6163 = vadd.f32 %v4576, %v6162
        %v6164 = vpop.f32.mrf.mxu0
        %v6165 = vadd.f32 %v4576, %v6164
        %6166 = vdwg.mxu0
        %6167 = vmatpush.bf16.msra.mxu0 %v5587
        %6168 = vmatpush.bf16.msra.mxu0 %v5584
        %6169 = vmatpush.bf16.msra.mxu0 %v5581
        %6170 = vmatpush.bf16.msra.mxu0 %v5578
        %6171 = vmatpush.bf16.msra.mxu0 %v5575
        %6172 = vmatpush.bf16.msra.mxu0 %v5572
        %6173 = vmatpush.bf16.msra.mxu0 %v5569
        %6174 = vmatpush.bf16.msra.mxu0 %v5566
        %6175 = vmatmul.bf16.gmra.mxu0 %v4095
        %v6176 = vpop.f32.mrf.mxu0
        %v6177 = vadd.f32 %v6128, %v6176
        %v6178 = vpop.f32.mrf.mxu0
        %v6179 = vadd.f32 %v6130, %v6178
        %6180 = vmatmul.bf16.gmra.mxu0 %v4107
        %v6181 = vpop.f32.mrf.mxu0
        %v6182 = vadd.f32 %v6133, %v6181
        %v6183 = vpop.f32.mrf.mxu0
        %v6184 = vadd.f32 %v6135, %v6183
        %6185 = vmatmul.bf16.gmra.mxu0 %v4119
        %v6186 = vpop.f32.mrf.mxu0
        %v6187 = vadd.f32 %v6138, %v6186
        %v6188 = vpop.f32.mrf.mxu0
        %v6189 = vadd.f32 %v6140, %v6188
        %6190 = vmatmul.bf16.gmra.mxu0 %v4131
        %v6191 = vpop.f32.mrf.mxu0
        %v6192 = vadd.f32 %v6143, %v6191
        %v6193 = vpop.f32.mrf.mxu0
        %v6194 = vadd.f32 %v6145, %v6193
        %6195 = vmatmul.bf16.gmra.mxu0 %v4143
        %v6196 = vpop.f32.mrf.mxu0
        %v6197 = vadd.f32 %v6148, %v6196
        %v6198 = vpop.f32.mrf.mxu0
        %v6199 = vadd.f32 %v6150, %v6198
        %6200 = vmatmul.bf16.gmra.mxu0 %v4155
        %v6201 = vpop.f32.mrf.mxu0
        %v6202 = vadd.f32 %v6153, %v6201
        %v6203 = vpop.f32.mrf.mxu0
        %v6204 = vadd.f32 %v6155, %v6203
        %6205 = vmatmul.bf16.gmra.mxu0 %v4167
        %v6206 = vpop.f32.mrf.mxu0
        %v6207 = vadd.f32 %v6158, %v6206
        %v6208 = vpop.f32.mrf.mxu0
        %v6209 = vadd.f32 %v6160, %v6208
        %6210 = vmatmul.bf16.gmra.mxu0 %v4179
        %v6211 = vpop.f32.mrf.mxu0
        %v6212 = vadd.f32 %v6163, %v6211
        %v6213 = vpop.f32.mrf.mxu0
        %v6214 = vadd.f32 %v6165, %v6213
        %6215 = vdwg.mxu0
        %6216 = vmatpush.bf16.msra.mxu0 %v5611
        %6217 = vmatpush.bf16.msra.mxu0 %v5608
        %6218 = vmatpush.bf16.msra.mxu0 %v5605
        %6219 = vmatpush.bf16.msra.mxu0 %v5602
        %6220 = vmatpush.bf16.msra.mxu0 %v5599
        %6221 = vmatpush.bf16.msra.mxu0 %v5596
        %6222 = vmatpush.bf16.msra.mxu0 %v5593
        %6223 = vmatpush.bf16.msra.mxu0 %v5590
        %6224 = vmatmul.bf16.gmra.mxu0 %v4096
        %v6225 = vpop.f32.mrf.mxu0
        %v6226 = vadd.f32 %v6177, %v6225
        %v6227 = vpop.f32.mrf.mxu0
        %v6228 = vadd.f32 %v6179, %v6227
        %6229 = vmatmul.bf16.gmra.mxu0 %v4108
        %v6230 = vpop.f32.mrf.mxu0
        %v6231 = vadd.f32 %v6182, %v6230
        %v6232 = vpop.f32.mrf.mxu0
        %v6233 = vadd.f32 %v6184, %v6232
        %6234 = vmatmul.bf16.gmra.mxu0 %v4120
        %v6235 = vpop.f32.mrf.mxu0
        %v6236 = vadd.f32 %v6187, %v6235
        %v6237 = vpop.f32.mrf.mxu0
        %v6238 = vadd.f32 %v6189, %v6237
        %6239 = vmatmul.bf16.gmra.mxu0 %v4132
        %v6240 = vpop.f32.mrf.mxu0
        %v6241 = vadd.f32 %v6192, %v6240
        %v6242 = vpop.f32.mrf.mxu0
        %v6243 = vadd.f32 %v6194, %v6242
        %6244 = vmatmul.bf16.gmra.mxu0 %v4144
        %v6245 = vpop.f32.mrf.mxu0
        %v6246 = vadd.f32 %v6197, %v6245
        %v6247 = vpop.f32.mrf.mxu0
        %v6248 = vadd.f32 %v6199, %v6247
        %6249 = vmatmul.bf16.gmra.mxu0 %v4156
        %v6250 = vpop.f32.mrf.mxu0
        %v6251 = vadd.f32 %v6202, %v6250
        %v6252 = vpop.f32.mrf.mxu0
        %v6253 = vadd.f32 %v6204, %v6252
        %6254 = vmatmul.bf16.gmra.mxu0 %v4168
        %v6255 = vpop.f32.mrf.mxu0
        %v6256 = vadd.f32 %v6207, %v6255
        %v6257 = vpop.f32.mrf.mxu0
        %v6258 = vadd.f32 %v6209, %v6257
        %6259 = vmatmul.bf16.gmra.mxu0 %v4180
        %v6260 = vpop.f32.mrf.mxu0
        %v6261 = vadd.f32 %v6212, %v6260
        %v6262 = vpop.f32.mrf.mxu0
        %v6263 = vadd.f32 %v6214, %v6262
        %6264 = vdwg.mxu0
        %6265 = vmatpush.bf16.msra.mxu0 %v5635
        %6266 = vmatpush.bf16.msra.mxu0 %v5632
        %6267 = vmatpush.bf16.msra.mxu0 %v5629
        %6268 = vmatpush.bf16.msra.mxu0 %v5626
        %6269 = vmatpush.bf16.msra.mxu0 %v5623
        %6270 = vmatpush.bf16.msra.mxu0 %v5620
        %6271 = vmatpush.bf16.msra.mxu0 %v5617
        %6272 = vmatpush.bf16.msra.mxu0 %v5614
        %6273 = vmatmul.bf16.gmra.mxu0 %v4097
        %v6274 = vpop.f32.mrf.mxu0
        %v6275 = vadd.f32 %v6226, %v6274
        %v6276 = vpop.f32.mrf.mxu0
        %v6277 = vadd.f32 %v6228, %v6276
        %6278 = vmatmul.bf16.gmra.mxu0 %v4109
        %v6279 = vpop.f32.mrf.mxu0
        %v6280 = vadd.f32 %v6231, %v6279
        %v6281 = vpop.f32.mrf.mxu0
        %v6282 = vadd.f32 %v6233, %v6281
        %6283 = vmatmul.bf16.gmra.mxu0 %v4121
        %v6284 = vpop.f32.mrf.mxu0
        %v6285 = vadd.f32 %v6236, %v6284
        %v6286 = vpop.f32.mrf.mxu0
        %v6287 = vadd.f32 %v6238, %v6286
        %6288 = vmatmul.bf16.gmra.mxu0 %v4133
        %v6289 = vpop.f32.mrf.mxu0
        %v6290 = vadd.f32 %v6241, %v6289
        %v6291 = vpop.f32.mrf.mxu0
        %v6292 = vadd.f32 %v6243, %v6291
        %6293 = vmatmul.bf16.gmra.mxu0 %v4145
        %v6294 = vpop.f32.mrf.mxu0
        %v6295 = vadd.f32 %v6246, %v6294
        %v6296 = vpop.f32.mrf.mxu0
        %v6297 = vadd.f32 %v6248, %v6296
        %6298 = vmatmul.bf16.gmra.mxu0 %v4157
        %v6299 = vpop.f32.mrf.mxu0
        %v6300 = vadd.f32 %v6251, %v6299
        %v6301 = vpop.f32.mrf.mxu0
        %v6302 = vadd.f32 %v6253, %v6301
        %6303 = vmatmul.bf16.gmra.mxu0 %v4169
        %v6304 = vpop.f32.mrf.mxu0
        %v6305 = vadd.f32 %v6256, %v6304
        %v6306 = vpop.f32.mrf.mxu0
        %v6307 = vadd.f32 %v6258, %v6306
        %6308 = vmatmul.bf16.gmra.mxu0 %v4181
        %v6309 = vpop.f32.mrf.mxu0
        %v6310 = vadd.f32 %v6261, %v6309
        %v6311 = vpop.f32.mrf.mxu0
        %v6312 = vadd.f32 %v6263, %v6311
        %6313 = vdwg.mxu0
        %6314 = vmatpush.bf16.msra.mxu0 %v5659
        %6315 = vmatpush.bf16.msra.mxu0 %v5656
        %6316 = vmatpush.bf16.msra.mxu0 %v5653
        %6317 = vmatpush.bf16.msra.mxu0 %v5650
        %6318 = vmatpush.bf16.msra.mxu0 %v5647
        %6319 = vmatpush.bf16.msra.mxu0 %v5644
        %6320 = vmatpush.bf16.msra.mxu0 %v5641
        %6321 = vmatpush.bf16.msra.mxu0 %v5638
        %6322 = vmatmul.bf16.gmra.mxu0 %v4098
        %v6323 = vpop.f32.mrf.mxu0
        %v6324 = vadd.f32 %v6275, %v6323
        %v6325 = vpop.f32.mrf.mxu0
        %v6326 = vadd.f32 %v6277, %v6325
        %6327 = vmatmul.bf16.gmra.mxu0 %v4110
        %v6328 = vpop.f32.mrf.mxu0
        %v6329 = vadd.f32 %v6280, %v6328
        %v6330 = vpop.f32.mrf.mxu0
        %v6331 = vadd.f32 %v6282, %v6330
        %6332 = vmatmul.bf16.gmra.mxu0 %v4122
        %v6333 = vpop.f32.mrf.mxu0
        %v6334 = vadd.f32 %v6285, %v6333
        %v6335 = vpop.f32.mrf.mxu0
        %v6336 = vadd.f32 %v6287, %v6335
        %6337 = vmatmul.bf16.gmra.mxu0 %v4134
        %v6338 = vpop.f32.mrf.mxu0
        %v6339 = vadd.f32 %v6290, %v6338
        %v6340 = vpop.f32.mrf.mxu0
        %v6341 = vadd.f32 %v6292, %v6340
        %6342 = vmatmul.bf16.gmra.mxu0 %v4146
        %v6343 = vpop.f32.mrf.mxu0
        %v6344 = vadd.f32 %v6295, %v6343
        %v6345 = vpop.f32.mrf.mxu0
        %v6346 = vadd.f32 %v6297, %v6345
        %6347 = vmatmul.bf16.gmra.mxu0 %v4158
        %v6348 = vpop.f32.mrf.mxu0
        %v6349 = vadd.f32 %v6300, %v6348
        %v6350 = vpop.f32.mrf.mxu0
        %v6351 = vadd.f32 %v6302, %v6350
        %6352 = vmatmul.bf16.gmra.mxu0 %v4170
        %v6353 = vpop.f32.mrf.mxu0
        %v6354 = vadd.f32 %v6305, %v6353
        %v6355 = vpop.f32.mrf.mxu0
        %v6356 = vadd.f32 %v6307, %v6355
        %6357 = vmatmul.bf16.gmra.mxu0 %v4182
        %v6358 = vpop.f32.mrf.mxu0
        %v6359 = vadd.f32 %v6310, %v6358
        %v6360 = vpop.f32.mrf.mxu0
        %v6361 = vadd.f32 %v6312, %v6360
        %6362 = vdwg.mxu0
        %6363 = vmatpush.bf16.msra.mxu0 %v5683
        %6364 = vmatpush.bf16.msra.mxu0 %v5680
        %6365 = vmatpush.bf16.msra.mxu0 %v5677
        %6366 = vmatpush.bf16.msra.mxu0 %v5674
        %6367 = vmatpush.bf16.msra.mxu0 %v5671
        %6368 = vmatpush.bf16.msra.mxu0 %v5668
        %6369 = vmatpush.bf16.msra.mxu0 %v5665
        %6370 = vmatpush.bf16.msra.mxu0 %v5662
        %6371 = vmatmul.bf16.gmra.mxu0 %v4099
        %v6372 = vpop.f32.mrf.mxu0
        %v6373 = vadd.f32 %v6324, %v6372
        %v6374 = vpop.f32.mrf.mxu0
        %v6375 = vadd.f32 %v6326, %v6374
        %6376 = vmatmul.bf16.gmra.mxu0 %v4111
        %v6377 = vpop.f32.mrf.mxu0
        %v6378 = vadd.f32 %v6329, %v6377
        %v6379 = vpop.f32.mrf.mxu0
        %v6380 = vadd.f32 %v6331, %v6379
        %6381 = vmatmul.bf16.gmra.mxu0 %v4123
        %v6382 = vpop.f32.mrf.mxu0
        %v6383 = vadd.f32 %v6334, %v6382
        %v6384 = vpop.f32.mrf.mxu0
        %v6385 = vadd.f32 %v6336, %v6384
        %6386 = vmatmul.bf16.gmra.mxu0 %v4135
        %v6387 = vpop.f32.mrf.mxu0
        %v6388 = vadd.f32 %v6339, %v6387
        %v6389 = vpop.f32.mrf.mxu0
        %v6390 = vadd.f32 %v6341, %v6389
        %6391 = vmatmul.bf16.gmra.mxu0 %v4147
        %v6392 = vpop.f32.mrf.mxu0
        %v6393 = vadd.f32 %v6344, %v6392
        %v6394 = vpop.f32.mrf.mxu0
        %v6395 = vadd.f32 %v6346, %v6394
        %6396 = vmatmul.bf16.gmra.mxu0 %v4159
        %v6397 = vpop.f32.mrf.mxu0
        %v6398 = vadd.f32 %v6349, %v6397
        %v6399 = vpop.f32.mrf.mxu0
        %v6400 = vadd.f32 %v6351, %v6399
        %6401 = vmatmul.bf16.gmra.mxu0 %v4171
        %v6402 = vpop.f32.mrf.mxu0
        %v6403 = vadd.f32 %v6354, %v6402
        %v6404 = vpop.f32.mrf.mxu0
        %v6405 = vadd.f32 %v6356, %v6404
        %6406 = vmatmul.bf16.gmra.mxu0 %v4183
        %v6407 = vpop.f32.mrf.mxu0
        %v6408 = vadd.f32 %v6359, %v6407
        %v6409 = vpop.f32.mrf.mxu0
        %v6410 = vadd.f32 %v6361, %v6409
        %6411 = vdwg.mxu0
        %6412 = vmatpush.bf16.msra.mxu0 %v5707
        %6413 = vmatpush.bf16.msra.mxu0 %v5704
        %6414 = vmatpush.bf16.msra.mxu0 %v5701
        %6415 = vmatpush.bf16.msra.mxu0 %v5698
        %6416 = vmatpush.bf16.msra.mxu0 %v5695
        %6417 = vmatpush.bf16.msra.mxu0 %v5692
        %6418 = vmatpush.bf16.msra.mxu0 %v5689
        %6419 = vmatpush.bf16.msra.mxu0 %v5686
        %6420 = vmatmul.bf16.gmra.mxu0 %v4100
        %v6421 = vpop.f32.mrf.mxu0
        %v6422 = vadd.f32 %v6373, %v6421
        %v6423 = vpop.f32.mrf.mxu0
        %v6424 = vadd.f32 %v6375, %v6423
        %6425 = vmatmul.bf16.gmra.mxu0 %v4112
        %v6426 = vpop.f32.mrf.mxu0
        %v6427 = vadd.f32 %v6378, %v6426
        %v6428 = vpop.f32.mrf.mxu0
        %v6429 = vadd.f32 %v6380, %v6428
        %6430 = vmatmul.bf16.gmra.mxu0 %v4124
        %v6431 = vpop.f32.mrf.mxu0
        %v6432 = vadd.f32 %v6383, %v6431
        %v6433 = vpop.f32.mrf.mxu0
        %v6434 = vadd.f32 %v6385, %v6433
        %6435 = vmatmul.bf16.gmra.mxu0 %v4136
        %v6436 = vpop.f32.mrf.mxu0
        %v6437 = vadd.f32 %v6388, %v6436
        %v6438 = vpop.f32.mrf.mxu0
        %v6439 = vadd.f32 %v6390, %v6438
        %6440 = vmatmul.bf16.gmra.mxu0 %v4148
        %v6441 = vpop.f32.mrf.mxu0
        %v6442 = vadd.f32 %v6393, %v6441
        %v6443 = vpop.f32.mrf.mxu0
        %v6444 = vadd.f32 %v6395, %v6443
        %6445 = vmatmul.bf16.gmra.mxu0 %v4160
        %v6446 = vpop.f32.mrf.mxu0
        %v6447 = vadd.f32 %v6398, %v6446
        %v6448 = vpop.f32.mrf.mxu0
        %v6449 = vadd.f32 %v6400, %v6448
        %6450 = vmatmul.bf16.gmra.mxu0 %v4172
        %v6451 = vpop.f32.mrf.mxu0
        %v6452 = vadd.f32 %v6403, %v6451
        %v6453 = vpop.f32.mrf.mxu0
        %v6454 = vadd.f32 %v6405, %v6453
        %6455 = vmatmul.bf16.gmra.mxu0 %v4184
        %v6456 = vpop.f32.mrf.mxu0
        %v6457 = vadd.f32 %v6408, %v6456
        %v6458 = vpop.f32.mrf.mxu0
        %v6459 = vadd.f32 %v6410, %v6458
        %6460 = vdwg.mxu0
        %6461 = vmatpush.bf16.msra.mxu0 %v5731
        %6462 = vmatpush.bf16.msra.mxu0 %v5728
        %6463 = vmatpush.bf16.msra.mxu0 %v5725
        %6464 = vmatpush.bf16.msra.mxu0 %v5722
        %6465 = vmatpush.bf16.msra.mxu0 %v5719
        %6466 = vmatpush.bf16.msra.mxu0 %v5716
        %6467 = vmatpush.bf16.msra.mxu0 %v5713
        %6468 = vmatpush.bf16.msra.mxu0 %v5710
        %6469 = vmatmul.bf16.gmra.mxu0 %v4101
        %v6470 = vpop.f32.mrf.mxu0
        %v6471 = vadd.f32 %v6422, %v6470
        %v6472 = vpop.f32.mrf.mxu0
        %v6473 = vadd.f32 %v6424, %v6472
        %6474 = vmatmul.bf16.gmra.mxu0 %v4113
        %v6475 = vpop.f32.mrf.mxu0
        %v6476 = vadd.f32 %v6427, %v6475
        %v6477 = vpop.f32.mrf.mxu0
        %v6478 = vadd.f32 %v6429, %v6477
        %6479 = vmatmul.bf16.gmra.mxu0 %v4125
        %v6480 = vpop.f32.mrf.mxu0
        %v6481 = vadd.f32 %v6432, %v6480
        %v6482 = vpop.f32.mrf.mxu0
        %v6483 = vadd.f32 %v6434, %v6482
        %6484 = vmatmul.bf16.gmra.mxu0 %v4137
        %v6485 = vpop.f32.mrf.mxu0
        %v6486 = vadd.f32 %v6437, %v6485
        %v6487 = vpop.f32.mrf.mxu0
        %v6488 = vadd.f32 %v6439, %v6487
        %6489 = vmatmul.bf16.gmra.mxu0 %v4149
        %v6490 = vpop.f32.mrf.mxu0
        %v6491 = vadd.f32 %v6442, %v6490
        %v6492 = vpop.f32.mrf.mxu0
        %v6493 = vadd.f32 %v6444, %v6492
        %6494 = vmatmul.bf16.gmra.mxu0 %v4161
        %v6495 = vpop.f32.mrf.mxu0
        %v6496 = vadd.f32 %v6447, %v6495
        %v6497 = vpop.f32.mrf.mxu0
        %v6498 = vadd.f32 %v6449, %v6497
        %6499 = vmatmul.bf16.gmra.mxu0 %v4173
        %v6500 = vpop.f32.mrf.mxu0
        %v6501 = vadd.f32 %v6452, %v6500
        %v6502 = vpop.f32.mrf.mxu0
        %v6503 = vadd.f32 %v6454, %v6502
        %6504 = vmatmul.bf16.gmra.mxu0 %v4185
        %v6505 = vpop.f32.mrf.mxu0
        %v6506 = vadd.f32 %v6457, %v6505
        %v6507 = vpop.f32.mrf.mxu0
        %v6508 = vadd.f32 %v6459, %v6507
        %6509 = vdwg.mxu0
        %6510 = vmatpush.bf16.msra.mxu0 %v5755
        %6511 = vmatpush.bf16.msra.mxu0 %v5752
        %6512 = vmatpush.bf16.msra.mxu0 %v5749
        %6513 = vmatpush.bf16.msra.mxu0 %v5746
        %6514 = vmatpush.bf16.msra.mxu0 %v5743
        %6515 = vmatpush.bf16.msra.mxu0 %v5740
        %6516 = vmatpush.bf16.msra.mxu0 %v5737
        %6517 = vmatpush.bf16.msra.mxu0 %v5734
        %6518 = vmatmul.bf16.gmra.mxu0 %v4102
        %v6519 = vpop.f32.mrf.mxu0
        %v6520 = vadd.f32 %v6471, %v6519
        %v6521 = vpop.f32.mrf.mxu0
        %v6522 = vadd.f32 %v6473, %v6521
        %6523 = vmatmul.bf16.gmra.mxu0 %v4114
        %v6524 = vpop.f32.mrf.mxu0
        %v6525 = vadd.f32 %v6476, %v6524
        %v6526 = vpop.f32.mrf.mxu0
        %v6527 = vadd.f32 %v6478, %v6526
        %6528 = vmatmul.bf16.gmra.mxu0 %v4126
        %v6529 = vpop.f32.mrf.mxu0
        %v6530 = vadd.f32 %v6481, %v6529
        %v6531 = vpop.f32.mrf.mxu0
        %v6532 = vadd.f32 %v6483, %v6531
        %6533 = vmatmul.bf16.gmra.mxu0 %v4138
        %v6534 = vpop.f32.mrf.mxu0
        %v6535 = vadd.f32 %v6486, %v6534
        %v6536 = vpop.f32.mrf.mxu0
        %v6537 = vadd.f32 %v6488, %v6536
        %6538 = vmatmul.bf16.gmra.mxu0 %v4150
        %v6539 = vpop.f32.mrf.mxu0
        %v6540 = vadd.f32 %v6491, %v6539
        %v6541 = vpop.f32.mrf.mxu0
        %v6542 = vadd.f32 %v6493, %v6541
        %6543 = vmatmul.bf16.gmra.mxu0 %v4162
        %v6544 = vpop.f32.mrf.mxu0
        %v6545 = vadd.f32 %v6496, %v6544
        %v6546 = vpop.f32.mrf.mxu0
        %v6547 = vadd.f32 %v6498, %v6546
        %6548 = vmatmul.bf16.gmra.mxu0 %v4174
        %v6549 = vpop.f32.mrf.mxu0
        %v6550 = vadd.f32 %v6501, %v6549
        %v6551 = vpop.f32.mrf.mxu0
        %v6552 = vadd.f32 %v6503, %v6551
        %6553 = vmatmul.bf16.gmra.mxu0 %v4186
        %v6554 = vpop.f32.mrf.mxu0
        %v6555 = vadd.f32 %v6506, %v6554
        %v6556 = vpop.f32.mrf.mxu0
        %v6557 = vadd.f32 %v6508, %v6556
        %6558 = vdwg.mxu0
        %6559 = vmatpush.bf16.msra.mxu0 %v5779
        %6560 = vmatpush.bf16.msra.mxu0 %v5776
        %6561 = vmatpush.bf16.msra.mxu0 %v5773
        %6562 = vmatpush.bf16.msra.mxu0 %v5770
        %6563 = vmatpush.bf16.msra.mxu0 %v5767
        %6564 = vmatpush.bf16.msra.mxu0 %v5764
        %6565 = vmatpush.bf16.msra.mxu0 %v5761
        %6566 = vmatpush.bf16.msra.mxu0 %v5758
        %6567 = vmatmul.bf16.gmra.mxu0 %v4103
        %v6568 = vpop.f32.mrf.mxu0
        %v6569 = vadd.f32 %v6520, %v6568
        %v6570 = vpop.f32.mrf.mxu0
        %v6571 = vadd.f32 %v6522, %v6570
        %6572 = vmatmul.bf16.gmra.mxu0 %v4115
        %v6573 = vpop.f32.mrf.mxu0
        %v6574 = vadd.f32 %v6525, %v6573
        %v6575 = vpop.f32.mrf.mxu0
        %v6576 = vadd.f32 %v6527, %v6575
        %6577 = vmatmul.bf16.gmra.mxu0 %v4127
        %v6578 = vpop.f32.mrf.mxu0
        %v6579 = vadd.f32 %v6530, %v6578
        %v6580 = vpop.f32.mrf.mxu0
        %v6581 = vadd.f32 %v6532, %v6580
        %6582 = vmatmul.bf16.gmra.mxu0 %v4139
        %v6583 = vpop.f32.mrf.mxu0
        %v6584 = vadd.f32 %v6535, %v6583
        %v6585 = vpop.f32.mrf.mxu0
        %v6586 = vadd.f32 %v6537, %v6585
        %6587 = vmatmul.bf16.gmra.mxu0 %v4151
        %v6588 = vpop.f32.mrf.mxu0
        %v6589 = vadd.f32 %v6540, %v6588
        %v6590 = vpop.f32.mrf.mxu0
        %v6591 = vadd.f32 %v6542, %v6590
        %6592 = vmatmul.bf16.gmra.mxu0 %v4163
        %v6593 = vpop.f32.mrf.mxu0
        %v6594 = vadd.f32 %v6545, %v6593
        %v6595 = vpop.f32.mrf.mxu0
        %v6596 = vadd.f32 %v6547, %v6595
        %6597 = vmatmul.bf16.gmra.mxu0 %v4175
        %v6598 = vpop.f32.mrf.mxu0
        %v6599 = vadd.f32 %v6550, %v6598
        %v6600 = vpop.f32.mrf.mxu0
        %v6601 = vadd.f32 %v6552, %v6600
        %6602 = vmatmul.bf16.gmra.mxu0 %v4187
        %v6603 = vpop.f32.mrf.mxu0
        %v6604 = vadd.f32 %v6555, %v6603
        %v6605 = vpop.f32.mrf.mxu0
        %v6606 = vadd.f32 %v6557, %v6605
        %6607 = vdwg.mxu0
        %6608 = vmatpush.bf16.msra.mxu0 %v5803
        %6609 = vmatpush.bf16.msra.mxu0 %v5800
        %6610 = vmatpush.bf16.msra.mxu0 %v5797
        %6611 = vmatpush.bf16.msra.mxu0 %v5794
        %6612 = vmatpush.bf16.msra.mxu0 %v5791
        %6613 = vmatpush.bf16.msra.mxu0 %v5788
        %6614 = vmatpush.bf16.msra.mxu0 %v5785
        %6615 = vmatpush.bf16.msra.mxu0 %v5782
        %6616 = vmatmul.bf16.gmra.mxu0 %v4104
        %v6617 = vpop.f32.mrf.mxu0
        %v6618 = vadd.f32 %v6569, %v6617
        %v6619 = vpop.f32.mrf.mxu0
        %v6620 = vadd.f32 %v6571, %v6619
        %6621 = vmatmul.bf16.gmra.mxu0 %v4116
        %v6622 = vpop.f32.mrf.mxu0
        %v6623 = vadd.f32 %v6574, %v6622
        %v6624 = vpop.f32.mrf.mxu0
        %v6625 = vadd.f32 %v6576, %v6624
        %6626 = vmatmul.bf16.gmra.mxu0 %v4128
        %v6627 = vpop.f32.mrf.mxu0
        %v6628 = vadd.f32 %v6579, %v6627
        %v6629 = vpop.f32.mrf.mxu0
        %v6630 = vadd.f32 %v6581, %v6629
        %6631 = vmatmul.bf16.gmra.mxu0 %v4140
        %v6632 = vpop.f32.mrf.mxu0
        %v6633 = vadd.f32 %v6584, %v6632
        %v6634 = vpop.f32.mrf.mxu0
        %v6635 = vadd.f32 %v6586, %v6634
        %6636 = vmatmul.bf16.gmra.mxu0 %v4152
        %v6637 = vpop.f32.mrf.mxu0
        %v6638 = vadd.f32 %v6589, %v6637
        %v6639 = vpop.f32.mrf.mxu0
        %v6640 = vadd.f32 %v6591, %v6639
        %6641 = vmatmul.bf16.gmra.mxu0 %v4164
        %v6642 = vpop.f32.mrf.mxu0
        %v6643 = vadd.f32 %v6594, %v6642
        %v6644 = vpop.f32.mrf.mxu0
        %v6645 = vadd.f32 %v6596, %v6644
        %6646 = vmatmul.bf16.gmra.mxu0 %v4176
        %v6647 = vpop.f32.mrf.mxu0
        %v6648 = vadd.f32 %v6599, %v6647
        %v6649 = vpop.f32.mrf.mxu0
        %v6650 = vadd.f32 %v6601, %v6649
        %6651 = vmatmul.bf16.gmra.mxu0 %v4188
        %v6652 = vpop.f32.mrf.mxu0
        %v6653 = vadd.f32 %v6604, %v6652
        %v6654 = vpop.f32.mrf.mxu0
        %v6655 = vadd.f32 %v6606, %v6654
        %6656 = vdwg.mxu0
        %6657 = vmatpush.bf16.msra.mxu0 %v5827
        %6658 = vmatpush.bf16.msra.mxu0 %v5824
        %6659 = vmatpush.bf16.msra.mxu0 %v5821
        %6660 = vmatpush.bf16.msra.mxu0 %v5818
        %6661 = vmatpush.bf16.msra.mxu0 %v5815
        %6662 = vmatpush.bf16.msra.mxu0 %v5812
        %6663 = vmatpush.bf16.msra.mxu0 %v5809
        %6664 = vmatpush.bf16.msra.mxu0 %v5806
        %6665 = vmatmul.bf16.gmra.mxu0 %v4105
        %v6666 = vpop.f32.mrf.mxu0
        %v6667 = vadd.f32 %v6618, %v6666
        %v6668 = vpop.f32.mrf.mxu0
        %v6669 = vadd.f32 %v6620, %v6668
        %6670 = vmatmul.bf16.gmra.mxu0 %v4117
        %v6671 = vpop.f32.mrf.mxu0
        %v6672 = vadd.f32 %v6623, %v6671
        %v6673 = vpop.f32.mrf.mxu0
        %v6674 = vadd.f32 %v6625, %v6673
        %6675 = vmatmul.bf16.gmra.mxu0 %v4129
        %v6676 = vpop.f32.mrf.mxu0
        %v6677 = vadd.f32 %v6628, %v6676
        %v6678 = vpop.f32.mrf.mxu0
        %v6679 = vadd.f32 %v6630, %v6678
        %6680 = vmatmul.bf16.gmra.mxu0 %v4141
        %v6681 = vpop.f32.mrf.mxu0
        %v6682 = vadd.f32 %v6633, %v6681
        %v6683 = vpop.f32.mrf.mxu0
        %v6684 = vadd.f32 %v6635, %v6683
        %6685 = vmatmul.bf16.gmra.mxu0 %v4153
        %v6686 = vpop.f32.mrf.mxu0
        %v6687 = vadd.f32 %v6638, %v6686
        %v6688 = vpop.f32.mrf.mxu0
        %v6689 = vadd.f32 %v6640, %v6688
        %6690 = vmatmul.bf16.gmra.mxu0 %v4165
        %v6691 = vpop.f32.mrf.mxu0
        %v6692 = vadd.f32 %v6643, %v6691
        %v6693 = vpop.f32.mrf.mxu0
        %v6694 = vadd.f32 %v6645, %v6693
        %6695 = vmatmul.bf16.gmra.mxu0 %v4177
        %v6696 = vpop.f32.mrf.mxu0
        %v6697 = vadd.f32 %v6648, %v6696
        %v6698 = vpop.f32.mrf.mxu0
        %v6699 = vadd.f32 %v6650, %v6698
        %6700 = vmatmul.bf16.gmra.mxu0 %v4189
        %v6701 = vpop.f32.mrf.mxu0
        %v6702 = vadd.f32 %v6653, %v6701
        %v6703 = vpop.f32.mrf.mxu0
        %v6704 = vadd.f32 %v6655, %v6703
        %6705 = vdwg.mxu0
        %6706 = vmatpush.bf16.msra.mxu0 %v5564
        %6707 = vmatpush.bf16.msra.mxu0 %v5561
        %6708 = vmatpush.bf16.msra.mxu0 %v5558
        %6709 = vmatpush.bf16.msra.mxu0 %v5555
        %6710 = vmatpush.bf16.msra.mxu0 %v5552
        %6711 = vmatpush.bf16.msra.mxu0 %v5549
        %6712 = vmatpush.bf16.msra.mxu0 %v5546
        %6713 = vmatpush.bf16.msra.mxu0 %v5543
        %6714 = vmatmul.bf16.gmra.mxu0 %v4094
        %v6715 = vpop.f32.mrf.mxu0
        %v6716 = vadd.f32 %v4577, %v6715
        %v6717 = vpop.f32.mrf.mxu0
        %v6718 = vadd.f32 %v4577, %v6717
        %6719 = vmatmul.bf16.gmra.mxu0 %v4106
        %v6720 = vpop.f32.mrf.mxu0
        %v6721 = vadd.f32 %v4577, %v6720
        %v6722 = vpop.f32.mrf.mxu0
        %v6723 = vadd.f32 %v4577, %v6722
        %6724 = vmatmul.bf16.gmra.mxu0 %v4118
        %v6725 = vpop.f32.mrf.mxu0
        %v6726 = vadd.f32 %v4577, %v6725
        %v6727 = vpop.f32.mrf.mxu0
        %v6728 = vadd.f32 %v4577, %v6727
        %6729 = vmatmul.bf16.gmra.mxu0 %v4130
        %v6730 = vpop.f32.mrf.mxu0
        %v6731 = vadd.f32 %v4577, %v6730
        %v6732 = vpop.f32.mrf.mxu0
        %v6733 = vadd.f32 %v4577, %v6732
        %6734 = vmatmul.bf16.gmra.mxu0 %v4142
        %v6735 = vpop.f32.mrf.mxu0
        %v6736 = vadd.f32 %v4577, %v6735
        %v6737 = vpop.f32.mrf.mxu0
        %v6738 = vadd.f32 %v4577, %v6737
        %6739 = vmatmul.bf16.gmra.mxu0 %v4154
        %v6740 = vpop.f32.mrf.mxu0
        %v6741 = vadd.f32 %v4577, %v6740
        %v6742 = vpop.f32.mrf.mxu0
        %v6743 = vadd.f32 %v4577, %v6742
        %6744 = vmatmul.bf16.gmra.mxu0 %v4166
        %v6745 = vpop.f32.mrf.mxu0
        %v6746 = vadd.f32 %v4577, %v6745
        %v6747 = vpop.f32.mrf.mxu0
        %v6748 = vadd.f32 %v4577, %v6747
        %6749 = vmatmul.bf16.gmra.mxu0 %v4178
        %v6750 = vpop.f32.mrf.mxu0
        %v6751 = vadd.f32 %v4577, %v6750
        %v6752 = vpop.f32.mrf.mxu0
        %v6753 = vadd.f32 %v4577, %v6752
        %6754 = vdwg.mxu0
        %6755 = vmatpush.bf16.msra.mxu0 %v5588
        %6756 = vmatpush.bf16.msra.mxu0 %v5585
        %6757 = vmatpush.bf16.msra.mxu0 %v5582
        %6758 = vmatpush.bf16.msra.mxu0 %v5579
        %6759 = vmatpush.bf16.msra.mxu0 %v5576
        %6760 = vmatpush.bf16.msra.mxu0 %v5573
        %6761 = vmatpush.bf16.msra.mxu0 %v5570
        %6762 = vmatpush.bf16.msra.mxu0 %v5567
        %6763 = vmatmul.bf16.gmra.mxu0 %v4095
        %v6764 = vpop.f32.mrf.mxu0
        %v6765 = vadd.f32 %v6716, %v6764
        %v6766 = vpop.f32.mrf.mxu0
        %v6767 = vadd.f32 %v6718, %v6766
        %6768 = vmatmul.bf16.gmra.mxu0 %v4107
        %v6769 = vpop.f32.mrf.mxu0
        %v6770 = vadd.f32 %v6721, %v6769
        %v6771 = vpop.f32.mrf.mxu0
        %v6772 = vadd.f32 %v6723, %v6771
        %6773 = vmatmul.bf16.gmra.mxu0 %v4119
        %v6774 = vpop.f32.mrf.mxu0
        %v6775 = vadd.f32 %v6726, %v6774
        %v6776 = vpop.f32.mrf.mxu0
        %v6777 = vadd.f32 %v6728, %v6776
        %6778 = vmatmul.bf16.gmra.mxu0 %v4131
        %v6779 = vpop.f32.mrf.mxu0
        %v6780 = vadd.f32 %v6731, %v6779
        %v6781 = vpop.f32.mrf.mxu0
        %v6782 = vadd.f32 %v6733, %v6781
        %6783 = vmatmul.bf16.gmra.mxu0 %v4143
        %v6784 = vpop.f32.mrf.mxu0
        %v6785 = vadd.f32 %v6736, %v6784
        %v6786 = vpop.f32.mrf.mxu0
        %v6787 = vadd.f32 %v6738, %v6786
        %6788 = vmatmul.bf16.gmra.mxu0 %v4155
        %v6789 = vpop.f32.mrf.mxu0
        %v6790 = vadd.f32 %v6741, %v6789
        %v6791 = vpop.f32.mrf.mxu0
        %v6792 = vadd.f32 %v6743, %v6791
        %6793 = vmatmul.bf16.gmra.mxu0 %v4167
        %v6794 = vpop.f32.mrf.mxu0
        %v6795 = vadd.f32 %v6746, %v6794
        %v6796 = vpop.f32.mrf.mxu0
        %v6797 = vadd.f32 %v6748, %v6796
        %6798 = vmatmul.bf16.gmra.mxu0 %v4179
        %v6799 = vpop.f32.mrf.mxu0
        %v6800 = vadd.f32 %v6751, %v6799
        %v6801 = vpop.f32.mrf.mxu0
        %v6802 = vadd.f32 %v6753, %v6801
        %6803 = vdwg.mxu0
        %6804 = vmatpush.bf16.msra.mxu0 %v5612
        %6805 = vmatpush.bf16.msra.mxu0 %v5609
        %6806 = vmatpush.bf16.msra.mxu0 %v5606
        %6807 = vmatpush.bf16.msra.mxu0 %v5603
        %6808 = vmatpush.bf16.msra.mxu0 %v5600
        %6809 = vmatpush.bf16.msra.mxu0 %v5597
        %6810 = vmatpush.bf16.msra.mxu0 %v5594
        %6811 = vmatpush.bf16.msra.mxu0 %v5591
        %6812 = vmatmul.bf16.gmra.mxu0 %v4096
        %v6813 = vpop.f32.mrf.mxu0
        %v6814 = vadd.f32 %v6765, %v6813
        %v6815 = vpop.f32.mrf.mxu0
        %v6816 = vadd.f32 %v6767, %v6815
        %6817 = vmatmul.bf16.gmra.mxu0 %v4108
        %v6818 = vpop.f32.mrf.mxu0
        %v6819 = vadd.f32 %v6770, %v6818
        %v6820 = vpop.f32.mrf.mxu0
        %v6821 = vadd.f32 %v6772, %v6820
        %6822 = vmatmul.bf16.gmra.mxu0 %v4120
        %v6823 = vpop.f32.mrf.mxu0
        %v6824 = vadd.f32 %v6775, %v6823
        %v6825 = vpop.f32.mrf.mxu0
        %v6826 = vadd.f32 %v6777, %v6825
        %6827 = vmatmul.bf16.gmra.mxu0 %v4132
        %v6828 = vpop.f32.mrf.mxu0
        %v6829 = vadd.f32 %v6780, %v6828
        %v6830 = vpop.f32.mrf.mxu0
        %v6831 = vadd.f32 %v6782, %v6830
        %6832 = vmatmul.bf16.gmra.mxu0 %v4144
        %v6833 = vpop.f32.mrf.mxu0
        %v6834 = vadd.f32 %v6785, %v6833
        %v6835 = vpop.f32.mrf.mxu0
        %v6836 = vadd.f32 %v6787, %v6835
        %6837 = vmatmul.bf16.gmra.mxu0 %v4156
        %v6838 = vpop.f32.mrf.mxu0
        %v6839 = vadd.f32 %v6790, %v6838
        %v6840 = vpop.f32.mrf.mxu0
        %v6841 = vadd.f32 %v6792, %v6840
        %6842 = vmatmul.bf16.gmra.mxu0 %v4168
        %v6843 = vpop.f32.mrf.mxu0
        %v6844 = vadd.f32 %v6795, %v6843
        %v6845 = vpop.f32.mrf.mxu0
        %v6846 = vadd.f32 %v6797, %v6845
        %6847 = vmatmul.bf16.gmra.mxu0 %v4180
        %v6848 = vpop.f32.mrf.mxu0
        %v6849 = vadd.f32 %v6800, %v6848
        %v6850 = vpop.f32.mrf.mxu0
        %v6851 = vadd.f32 %v6802, %v6850
        %6852 = vdwg.mxu0
        %6853 = vmatpush.bf16.msra.mxu0 %v5636
        %6854 = vmatpush.bf16.msra.mxu0 %v5633
        %6855 = vmatpush.bf16.msra.mxu0 %v5630
        %6856 = vmatpush.bf16.msra.mxu0 %v5627
        %6857 = vmatpush.bf16.msra.mxu0 %v5624
        %6858 = vmatpush.bf16.msra.mxu0 %v5621
        %6859 = vmatpush.bf16.msra.mxu0 %v5618
        %6860 = vmatpush.bf16.msra.mxu0 %v5615
        %6861 = vmatmul.bf16.gmra.mxu0 %v4097
        %v6862 = vpop.f32.mrf.mxu0
        %v6863 = vadd.f32 %v6814, %v6862
        %v6864 = vpop.f32.mrf.mxu0
        %v6865 = vadd.f32 %v6816, %v6864
        %6866 = vmatmul.bf16.gmra.mxu0 %v4109
        %v6867 = vpop.f32.mrf.mxu0
        %v6868 = vadd.f32 %v6819, %v6867
        %v6869 = vpop.f32.mrf.mxu0
        %v6870 = vadd.f32 %v6821, %v6869
        %6871 = vmatmul.bf16.gmra.mxu0 %v4121
        %v6872 = vpop.f32.mrf.mxu0
        %v6873 = vadd.f32 %v6824, %v6872
        %v6874 = vpop.f32.mrf.mxu0
        %v6875 = vadd.f32 %v6826, %v6874
        %6876 = vmatmul.bf16.gmra.mxu0 %v4133
        %v6877 = vpop.f32.mrf.mxu0
        %v6878 = vadd.f32 %v6829, %v6877
        %v6879 = vpop.f32.mrf.mxu0
        %v6880 = vadd.f32 %v6831, %v6879
        %6881 = vmatmul.bf16.gmra.mxu0 %v4145
        %v6882 = vpop.f32.mrf.mxu0
        %v6883 = vadd.f32 %v6834, %v6882
        %v6884 = vpop.f32.mrf.mxu0
        %v6885 = vadd.f32 %v6836, %v6884
        %6886 = vmatmul.bf16.gmra.mxu0 %v4157
        %v6887 = vpop.f32.mrf.mxu0
        %v6888 = vadd.f32 %v6839, %v6887
        %v6889 = vpop.f32.mrf.mxu0
        %v6890 = vadd.f32 %v6841, %v6889
        %6891 = vmatmul.bf16.gmra.mxu0 %v4169
        %v6892 = vpop.f32.mrf.mxu0
        %v6893 = vadd.f32 %v6844, %v6892
        %v6894 = vpop.f32.mrf.mxu0
        %v6895 = vadd.f32 %v6846, %v6894
        %6896 = vmatmul.bf16.gmra.mxu0 %v4181
        %v6897 = vpop.f32.mrf.mxu0
        %v6898 = vadd.f32 %v6849, %v6897
        %v6899 = vpop.f32.mrf.mxu0
        %v6900 = vadd.f32 %v6851, %v6899
        %6901 = vdwg.mxu0
        %6902 = vmatpush.bf16.msra.mxu0 %v5660
        %6903 = vmatpush.bf16.msra.mxu0 %v5657
        %6904 = vmatpush.bf16.msra.mxu0 %v5654
        %6905 = vmatpush.bf16.msra.mxu0 %v5651
        %6906 = vmatpush.bf16.msra.mxu0 %v5648
        %6907 = vmatpush.bf16.msra.mxu0 %v5645
        %6908 = vmatpush.bf16.msra.mxu0 %v5642
        %6909 = vmatpush.bf16.msra.mxu0 %v5639
        %6910 = vmatmul.bf16.gmra.mxu0 %v4098
        %v6911 = vpop.f32.mrf.mxu0
        %v6912 = vadd.f32 %v6863, %v6911
        %v6913 = vpop.f32.mrf.mxu0
        %v6914 = vadd.f32 %v6865, %v6913
        %6915 = vmatmul.bf16.gmra.mxu0 %v4110
        %v6916 = vpop.f32.mrf.mxu0
        %v6917 = vadd.f32 %v6868, %v6916
        %v6918 = vpop.f32.mrf.mxu0
        %v6919 = vadd.f32 %v6870, %v6918
        %6920 = vmatmul.bf16.gmra.mxu0 %v4122
        %v6921 = vpop.f32.mrf.mxu0
        %v6922 = vadd.f32 %v6873, %v6921
        %v6923 = vpop.f32.mrf.mxu0
        %v6924 = vadd.f32 %v6875, %v6923
        %6925 = vmatmul.bf16.gmra.mxu0 %v4134
        %v6926 = vpop.f32.mrf.mxu0
        %v6927 = vadd.f32 %v6878, %v6926
        %v6928 = vpop.f32.mrf.mxu0
        %v6929 = vadd.f32 %v6880, %v6928
        %6930 = vmatmul.bf16.gmra.mxu0 %v4146
        %v6931 = vpop.f32.mrf.mxu0
        %v6932 = vadd.f32 %v6883, %v6931
        %v6933 = vpop.f32.mrf.mxu0
        %v6934 = vadd.f32 %v6885, %v6933
        %6935 = vmatmul.bf16.gmra.mxu0 %v4158
        %v6936 = vpop.f32.mrf.mxu0
        %v6937 = vadd.f32 %v6888, %v6936
        %v6938 = vpop.f32.mrf.mxu0
        %v6939 = vadd.f32 %v6890, %v6938
        %6940 = vmatmul.bf16.gmra.mxu0 %v4170
        %v6941 = vpop.f32.mrf.mxu0
        %v6942 = vadd.f32 %v6893, %v6941
        %v6943 = vpop.f32.mrf.mxu0
        %v6944 = vadd.f32 %v6895, %v6943
        %6945 = vmatmul.bf16.gmra.mxu0 %v4182
        %v6946 = vpop.f32.mrf.mxu0
        %v6947 = vadd.f32 %v6898, %v6946
        %v6948 = vpop.f32.mrf.mxu0
        %v6949 = vadd.f32 %v6900, %v6948
        %6950 = vdwg.mxu0
        %6951 = vmatpush.bf16.msra.mxu0 %v5684
        %6952 = vmatpush.bf16.msra.mxu0 %v5681
        %6953 = vmatpush.bf16.msra.mxu0 %v5678
        %6954 = vmatpush.bf16.msra.mxu0 %v5675
        %6955 = vmatpush.bf16.msra.mxu0 %v5672
        %6956 = vmatpush.bf16.msra.mxu0 %v5669
        %6957 = vmatpush.bf16.msra.mxu0 %v5666
        %6958 = vmatpush.bf16.msra.mxu0 %v5663
        %6959 = vmatmul.bf16.gmra.mxu0 %v4099
        %v6960 = vpop.f32.mrf.mxu0
        %v6961 = vadd.f32 %v6912, %v6960
        %v6962 = vpop.f32.mrf.mxu0
        %v6963 = vadd.f32 %v6914, %v6962
        %6964 = vmatmul.bf16.gmra.mxu0 %v4111
        %v6965 = vpop.f32.mrf.mxu0
        %v6966 = vadd.f32 %v6917, %v6965
        %v6967 = vpop.f32.mrf.mxu0
        %v6968 = vadd.f32 %v6919, %v6967
        %6969 = vmatmul.bf16.gmra.mxu0 %v4123
        %v6970 = vpop.f32.mrf.mxu0
        %v6971 = vadd.f32 %v6922, %v6970
        %v6972 = vpop.f32.mrf.mxu0
        %v6973 = vadd.f32 %v6924, %v6972
        %6974 = vmatmul.bf16.gmra.mxu0 %v4135
        %v6975 = vpop.f32.mrf.mxu0
        %v6976 = vadd.f32 %v6927, %v6975
        %v6977 = vpop.f32.mrf.mxu0
        %v6978 = vadd.f32 %v6929, %v6977
        %6979 = vmatmul.bf16.gmra.mxu0 %v4147
        %v6980 = vpop.f32.mrf.mxu0
        %v6981 = vadd.f32 %v6932, %v6980
        %v6982 = vpop.f32.mrf.mxu0
        %v6983 = vadd.f32 %v6934, %v6982
        %6984 = vmatmul.bf16.gmra.mxu0 %v4159
        %v6985 = vpop.f32.mrf.mxu0
        %v6986 = vadd.f32 %v6937, %v6985
        %v6987 = vpop.f32.mrf.mxu0
        %v6988 = vadd.f32 %v6939, %v6987
        %6989 = vmatmul.bf16.gmra.mxu0 %v4171
        %v6990 = vpop.f32.mrf.mxu0
        %v6991 = vadd.f32 %v6942, %v6990
        %v6992 = vpop.f32.mrf.mxu0
        %v6993 = vadd.f32 %v6944, %v6992
        %6994 = vmatmul.bf16.gmra.mxu0 %v4183
        %v6995 = vpop.f32.mrf.mxu0
        %v6996 = vadd.f32 %v6947, %v6995
        %v6997 = vpop.f32.mrf.mxu0
        %v6998 = vadd.f32 %v6949, %v6997
        %6999 = vdwg.mxu0
        %7000 = vmatpush.bf16.msra.mxu0 %v5708
        %7001 = vmatpush.bf16.msra.mxu0 %v5705
        %7002 = vmatpush.bf16.msra.mxu0 %v5702
        %7003 = vmatpush.bf16.msra.mxu0 %v5699
        %7004 = vmatpush.bf16.msra.mxu0 %v5696
        %7005 = vmatpush.bf16.msra.mxu0 %v5693
        %7006 = vmatpush.bf16.msra.mxu0 %v5690
        %7007 = vmatpush.bf16.msra.mxu0 %v5687
        %7008 = vmatmul.bf16.gmra.mxu0 %v4100
        %v7009 = vpop.f32.mrf.mxu0
        %v7010 = vadd.f32 %v6961, %v7009
        %v7011 = vpop.f32.mrf.mxu0
        %v7012 = vadd.f32 %v6963, %v7011
        %7013 = vmatmul.bf16.gmra.mxu0 %v4112
        %v7014 = vpop.f32.mrf.mxu0
        %v7015 = vadd.f32 %v6966, %v7014
        %v7016 = vpop.f32.mrf.mxu0
        %v7017 = vadd.f32 %v6968, %v7016
        %7018 = vmatmul.bf16.gmra.mxu0 %v4124
        %v7019 = vpop.f32.mrf.mxu0
        %v7020 = vadd.f32 %v6971, %v7019
        %v7021 = vpop.f32.mrf.mxu0
        %v7022 = vadd.f32 %v6973, %v7021
        %7023 = vmatmul.bf16.gmra.mxu0 %v4136
        %v7024 = vpop.f32.mrf.mxu0
        %v7025 = vadd.f32 %v6976, %v7024
        %v7026 = vpop.f32.mrf.mxu0
        %v7027 = vadd.f32 %v6978, %v7026
        %7028 = vmatmul.bf16.gmra.mxu0 %v4148
        %v7029 = vpop.f32.mrf.mxu0
        %v7030 = vadd.f32 %v6981, %v7029
        %v7031 = vpop.f32.mrf.mxu0
        %v7032 = vadd.f32 %v6983, %v7031
        %7033 = vmatmul.bf16.gmra.mxu0 %v4160
        %v7034 = vpop.f32.mrf.mxu0
        %v7035 = vadd.f32 %v6986, %v7034
        %v7036 = vpop.f32.mrf.mxu0
        %v7037 = vadd.f32 %v6988, %v7036
        %7038 = vmatmul.bf16.gmra.mxu0 %v4172
        %v7039 = vpop.f32.mrf.mxu0
        %v7040 = vadd.f32 %v6991, %v7039
        %v7041 = vpop.f32.mrf.mxu0
        %v7042 = vadd.f32 %v6993, %v7041
        %7043 = vmatmul.bf16.gmra.mxu0 %v4184
        %v7044 = vpop.f32.mrf.mxu0
        %v7045 = vadd.f32 %v6996, %v7044
        %v7046 = vpop.f32.mrf.mxu0
        %v7047 = vadd.f32 %v6998, %v7046
        %7048 = vdwg.mxu0
        %7049 = vmatpush.bf16.msra.mxu0 %v5732
        %7050 = vmatpush.bf16.msra.mxu0 %v5729
        %7051 = vmatpush.bf16.msra.mxu0 %v5726
        %7052 = vmatpush.bf16.msra.mxu0 %v5723
        %7053 = vmatpush.bf16.msra.mxu0 %v5720
        %7054 = vmatpush.bf16.msra.mxu0 %v5717
        %7055 = vmatpush.bf16.msra.mxu0 %v5714
        %7056 = vmatpush.bf16.msra.mxu0 %v5711
        %7057 = vmatmul.bf16.gmra.mxu0 %v4101
        %v7058 = vpop.f32.mrf.mxu0
        %v7059 = vadd.f32 %v7010, %v7058
        %v7060 = vpop.f32.mrf.mxu0
        %v7061 = vadd.f32 %v7012, %v7060
        %7062 = vmatmul.bf16.gmra.mxu0 %v4113
        %v7063 = vpop.f32.mrf.mxu0
        %v7064 = vadd.f32 %v7015, %v7063
        %v7065 = vpop.f32.mrf.mxu0
        %v7066 = vadd.f32 %v7017, %v7065
        %7067 = vmatmul.bf16.gmra.mxu0 %v4125
        %v7068 = vpop.f32.mrf.mxu0
        %v7069 = vadd.f32 %v7020, %v7068
        %v7070 = vpop.f32.mrf.mxu0
        %v7071 = vadd.f32 %v7022, %v7070
        %7072 = vmatmul.bf16.gmra.mxu0 %v4137
        %v7073 = vpop.f32.mrf.mxu0
        %v7074 = vadd.f32 %v7025, %v7073
        %v7075 = vpop.f32.mrf.mxu0
        %v7076 = vadd.f32 %v7027, %v7075
        %7077 = vmatmul.bf16.gmra.mxu0 %v4149
        %v7078 = vpop.f32.mrf.mxu0
        %v7079 = vadd.f32 %v7030, %v7078
        %v7080 = vpop.f32.mrf.mxu0
        %v7081 = vadd.f32 %v7032, %v7080
        %7082 = vmatmul.bf16.gmra.mxu0 %v4161
        %v7083 = vpop.f32.mrf.mxu0
        %v7084 = vadd.f32 %v7035, %v7083
        %v7085 = vpop.f32.mrf.mxu0
        %v7086 = vadd.f32 %v7037, %v7085
        %7087 = vmatmul.bf16.gmra.mxu0 %v4173
        %v7088 = vpop.f32.mrf.mxu0
        %v7089 = vadd.f32 %v7040, %v7088
        %v7090 = vpop.f32.mrf.mxu0
        %v7091 = vadd.f32 %v7042, %v7090
        %7092 = vmatmul.bf16.gmra.mxu0 %v4185
        %v7093 = vpop.f32.mrf.mxu0
        %v7094 = vadd.f32 %v7045, %v7093
        %v7095 = vpop.f32.mrf.mxu0
        %v7096 = vadd.f32 %v7047, %v7095
        %7097 = vdwg.mxu0
        %7098 = vmatpush.bf16.msra.mxu0 %v5756
        %7099 = vmatpush.bf16.msra.mxu0 %v5753
        %7100 = vmatpush.bf16.msra.mxu0 %v5750
        %7101 = vmatpush.bf16.msra.mxu0 %v5747
        %7102 = vmatpush.bf16.msra.mxu0 %v5744
        %7103 = vmatpush.bf16.msra.mxu0 %v5741
        %7104 = vmatpush.bf16.msra.mxu0 %v5738
        %7105 = vmatpush.bf16.msra.mxu0 %v5735
        %7106 = vmatmul.bf16.gmra.mxu0 %v4102
        %v7107 = vpop.f32.mrf.mxu0
        %v7108 = vadd.f32 %v7059, %v7107
        %v7109 = vpop.f32.mrf.mxu0
        %v7110 = vadd.f32 %v7061, %v7109
        %7111 = vmatmul.bf16.gmra.mxu0 %v4114
        %v7112 = vpop.f32.mrf.mxu0
        %v7113 = vadd.f32 %v7064, %v7112
        %v7114 = vpop.f32.mrf.mxu0
        %v7115 = vadd.f32 %v7066, %v7114
        %7116 = vmatmul.bf16.gmra.mxu0 %v4126
        %v7117 = vpop.f32.mrf.mxu0
        %v7118 = vadd.f32 %v7069, %v7117
        %v7119 = vpop.f32.mrf.mxu0
        %v7120 = vadd.f32 %v7071, %v7119
        %7121 = vmatmul.bf16.gmra.mxu0 %v4138
        %v7122 = vpop.f32.mrf.mxu0
        %v7123 = vadd.f32 %v7074, %v7122
        %v7124 = vpop.f32.mrf.mxu0
        %v7125 = vadd.f32 %v7076, %v7124
        %7126 = vmatmul.bf16.gmra.mxu0 %v4150
        %v7127 = vpop.f32.mrf.mxu0
        %v7128 = vadd.f32 %v7079, %v7127
        %v7129 = vpop.f32.mrf.mxu0
        %v7130 = vadd.f32 %v7081, %v7129
        %7131 = vmatmul.bf16.gmra.mxu0 %v4162
        %v7132 = vpop.f32.mrf.mxu0
        %v7133 = vadd.f32 %v7084, %v7132
        %v7134 = vpop.f32.mrf.mxu0
        %v7135 = vadd.f32 %v7086, %v7134
        %7136 = vmatmul.bf16.gmra.mxu0 %v4174
        %v7137 = vpop.f32.mrf.mxu0
        %v7138 = vadd.f32 %v7089, %v7137
        %v7139 = vpop.f32.mrf.mxu0
        %v7140 = vadd.f32 %v7091, %v7139
        %7141 = vmatmul.bf16.gmra.mxu0 %v4186
        %v7142 = vpop.f32.mrf.mxu0
        %v7143 = vadd.f32 %v7094, %v7142
        %v7144 = vpop.f32.mrf.mxu0
        %v7145 = vadd.f32 %v7096, %v7144
        %7146 = vdwg.mxu0
        %7147 = vmatpush.bf16.msra.mxu0 %v5780
        %7148 = vmatpush.bf16.msra.mxu0 %v5777
        %7149 = vmatpush.bf16.msra.mxu0 %v5774
        %7150 = vmatpush.bf16.msra.mxu0 %v5771
        %7151 = vmatpush.bf16.msra.mxu0 %v5768
        %7152 = vmatpush.bf16.msra.mxu0 %v5765
        %7153 = vmatpush.bf16.msra.mxu0 %v5762
        %7154 = vmatpush.bf16.msra.mxu0 %v5759
        %7155 = vmatmul.bf16.gmra.mxu0 %v4103
        %v7156 = vpop.f32.mrf.mxu0
        %v7157 = vadd.f32 %v7108, %v7156
        %v7158 = vpop.f32.mrf.mxu0
        %v7159 = vadd.f32 %v7110, %v7158
        %7160 = vmatmul.bf16.gmra.mxu0 %v4115
        %v7161 = vpop.f32.mrf.mxu0
        %v7162 = vadd.f32 %v7113, %v7161
        %v7163 = vpop.f32.mrf.mxu0
        %v7164 = vadd.f32 %v7115, %v7163
        %7165 = vmatmul.bf16.gmra.mxu0 %v4127
        %v7166 = vpop.f32.mrf.mxu0
        %v7167 = vadd.f32 %v7118, %v7166
        %v7168 = vpop.f32.mrf.mxu0
        %v7169 = vadd.f32 %v7120, %v7168
        %7170 = vmatmul.bf16.gmra.mxu0 %v4139
        %v7171 = vpop.f32.mrf.mxu0
        %v7172 = vadd.f32 %v7123, %v7171
        %v7173 = vpop.f32.mrf.mxu0
        %v7174 = vadd.f32 %v7125, %v7173
        %7175 = vmatmul.bf16.gmra.mxu0 %v4151
        %v7176 = vpop.f32.mrf.mxu0
        %v7177 = vadd.f32 %v7128, %v7176
        %v7178 = vpop.f32.mrf.mxu0
        %v7179 = vadd.f32 %v7130, %v7178
        %7180 = vmatmul.bf16.gmra.mxu0 %v4163
        %v7181 = vpop.f32.mrf.mxu0
        %v7182 = vadd.f32 %v7133, %v7181
        %v7183 = vpop.f32.mrf.mxu0
        %v7184 = vadd.f32 %v7135, %v7183
        %7185 = vmatmul.bf16.gmra.mxu0 %v4175
        %v7186 = vpop.f32.mrf.mxu0
        %v7187 = vadd.f32 %v7138, %v7186
        %v7188 = vpop.f32.mrf.mxu0
        %v7189 = vadd.f32 %v7140, %v7188
        %7190 = vmatmul.bf16.gmra.mxu0 %v4187
        %v7191 = vpop.f32.mrf.mxu0
        %v7192 = vadd.f32 %v7143, %v7191
        %v7193 = vpop.f32.mrf.mxu0
        %v7194 = vadd.f32 %v7145, %v7193
        %7195 = vdwg.mxu0
        %7196 = vmatpush.bf16.msra.mxu0 %v5804
        %7197 = vmatpush.bf16.msra.mxu0 %v5801
        %7198 = vmatpush.bf16.msra.mxu0 %v5798
        %7199 = vmatpush.bf16.msra.mxu0 %v5795
        %7200 = vmatpush.bf16.msra.mxu0 %v5792
        %7201 = vmatpush.bf16.msra.mxu0 %v5789
        %7202 = vmatpush.bf16.msra.mxu0 %v5786
        %7203 = vmatpush.bf16.msra.mxu0 %v5783
        %7204 = vmatmul.bf16.gmra.mxu0 %v4104
        %v7205 = vpop.f32.mrf.mxu0
        %v7206 = vadd.f32 %v7157, %v7205
        %v7207 = vpop.f32.mrf.mxu0
        %v7208 = vadd.f32 %v7159, %v7207
        %7209 = vmatmul.bf16.gmra.mxu0 %v4116
        %v7210 = vpop.f32.mrf.mxu0
        %v7211 = vadd.f32 %v7162, %v7210
        %v7212 = vpop.f32.mrf.mxu0
        %v7213 = vadd.f32 %v7164, %v7212
        %7214 = vmatmul.bf16.gmra.mxu0 %v4128
        %v7215 = vpop.f32.mrf.mxu0
        %v7216 = vadd.f32 %v7167, %v7215
        %v7217 = vpop.f32.mrf.mxu0
        %v7218 = vadd.f32 %v7169, %v7217
        %7219 = vmatmul.bf16.gmra.mxu0 %v4140
        %v7220 = vpop.f32.mrf.mxu0
        %v7221 = vadd.f32 %v7172, %v7220
        %v7222 = vpop.f32.mrf.mxu0
        %v7223 = vadd.f32 %v7174, %v7222
        %7224 = vmatmul.bf16.gmra.mxu0 %v4152
        %v7225 = vpop.f32.mrf.mxu0
        %v7226 = vadd.f32 %v7177, %v7225
        %v7227 = vpop.f32.mrf.mxu0
        %v7228 = vadd.f32 %v7179, %v7227
        %7229 = vmatmul.bf16.gmra.mxu0 %v4164
        %v7230 = vpop.f32.mrf.mxu0
        %v7231 = vadd.f32 %v7182, %v7230
        %v7232 = vpop.f32.mrf.mxu0
        %v7233 = vadd.f32 %v7184, %v7232
        %7234 = vmatmul.bf16.gmra.mxu0 %v4176
        %v7235 = vpop.f32.mrf.mxu0
        %v7236 = vadd.f32 %v7187, %v7235
        %v7237 = vpop.f32.mrf.mxu0
        %v7238 = vadd.f32 %v7189, %v7237
        %7239 = vmatmul.bf16.gmra.mxu0 %v4188
        %v7240 = vpop.f32.mrf.mxu0
        %v7241 = vadd.f32 %v7192, %v7240
        %v7242 = vpop.f32.mrf.mxu0
        %v7243 = vadd.f32 %v7194, %v7242
        %7244 = vdwg.mxu0
        %7245 = vmatpush.bf16.msra.mxu0 %v5828
        %7246 = vmatpush.bf16.msra.mxu0 %v5825
        %7247 = vmatpush.bf16.msra.mxu0 %v5822
        %7248 = vmatpush.bf16.msra.mxu0 %v5819
        %7249 = vmatpush.bf16.msra.mxu0 %v5816
        %7250 = vmatpush.bf16.msra.mxu0 %v5813
        %7251 = vmatpush.bf16.msra.mxu0 %v5810
        %7252 = vmatpush.bf16.msra.mxu0 %v5807
        %7253 = vmatmul.bf16.gmra.mxu0 %v4105
        %v7254 = vpop.f32.mrf.mxu0
        %v7255 = vadd.f32 %v7206, %v7254
        %v7256 = vpop.f32.mrf.mxu0
        %v7257 = vadd.f32 %v7208, %v7256
        %7258 = vmatmul.bf16.gmra.mxu0 %v4117
        %v7259 = vpop.f32.mrf.mxu0
        %v7260 = vadd.f32 %v7211, %v7259
        %v7261 = vpop.f32.mrf.mxu0
        %v7262 = vadd.f32 %v7213, %v7261
        %7263 = vmatmul.bf16.gmra.mxu0 %v4129
        %v7264 = vpop.f32.mrf.mxu0
        %v7265 = vadd.f32 %v7216, %v7264
        %v7266 = vpop.f32.mrf.mxu0
        %v7267 = vadd.f32 %v7218, %v7266
        %7268 = vmatmul.bf16.gmra.mxu0 %v4141
        %v7269 = vpop.f32.mrf.mxu0
        %v7270 = vadd.f32 %v7221, %v7269
        %v7271 = vpop.f32.mrf.mxu0
        %v7272 = vadd.f32 %v7223, %v7271
        %7273 = vmatmul.bf16.gmra.mxu0 %v4153
        %v7274 = vpop.f32.mrf.mxu0
        %v7275 = vadd.f32 %v7226, %v7274
        %v7276 = vpop.f32.mrf.mxu0
        %v7277 = vadd.f32 %v7228, %v7276
        %7278 = vmatmul.bf16.gmra.mxu0 %v4165
        %v7279 = vpop.f32.mrf.mxu0
        %v7280 = vadd.f32 %v7231, %v7279
        %v7281 = vpop.f32.mrf.mxu0
        %v7282 = vadd.f32 %v7233, %v7281
        %7283 = vmatmul.bf16.gmra.mxu0 %v4177
        %v7284 = vpop.f32.mrf.mxu0
        %v7285 = vadd.f32 %v7236, %v7284
        %v7286 = vpop.f32.mrf.mxu0
        %v7287 = vadd.f32 %v7238, %v7286
        %7288 = vmatmul.bf16.gmra.mxu0 %v4189
        %v7289 = vpop.f32.mrf.mxu0
        %v7290 = vadd.f32 %v7241, %v7289
        %v7291 = vpop.f32.mrf.mxu0
        %v7292 = vadd.f32 %v7243, %v7291
        %7293 = vdwg.mxu0
        %7294 = vmatpush.bf16.msra.mxu0 %v5565
        %7295 = vmatpush.bf16.msra.mxu0 %v5562
        %7296 = vmatpush.bf16.msra.mxu0 %v5559
        %7297 = vmatpush.bf16.msra.mxu0 %v5556
        %7298 = vmatpush.bf16.msra.mxu0 %v5553
        %7299 = vmatpush.bf16.msra.mxu0 %v5550
        %7300 = vmatpush.bf16.msra.mxu0 %v5547
        %7301 = vmatpush.bf16.msra.mxu0 %v5544
        %7302 = vmatmul.bf16.gmra.mxu0 %v4094
        %v7303 = vpop.f32.mrf.mxu0
        %v7304 = vadd.f32 %v4578, %v7303
        %v7305 = vpop.f32.mrf.mxu0
        %v7306 = vadd.f32 %v4578, %v7305
        %7307 = vmatmul.bf16.gmra.mxu0 %v4106
        %v7308 = vpop.f32.mrf.mxu0
        %v7309 = vadd.f32 %v4578, %v7308
        %v7310 = vpop.f32.mrf.mxu0
        %v7311 = vadd.f32 %v4578, %v7310
        %7312 = vmatmul.bf16.gmra.mxu0 %v4118
        %v7313 = vpop.f32.mrf.mxu0
        %v7314 = vadd.f32 %v4578, %v7313
        %v7315 = vpop.f32.mrf.mxu0
        %v7316 = vadd.f32 %v4578, %v7315
        %7317 = vmatmul.bf16.gmra.mxu0 %v4130
        %v7318 = vpop.f32.mrf.mxu0
        %v7319 = vadd.f32 %v4578, %v7318
        %v7320 = vpop.f32.mrf.mxu0
        %v7321 = vadd.f32 %v4578, %v7320
        %7322 = vmatmul.bf16.gmra.mxu0 %v4142
        %v7323 = vpop.f32.mrf.mxu0
        %v7324 = vadd.f32 %v4578, %v7323
        %v7325 = vpop.f32.mrf.mxu0
        %v7326 = vadd.f32 %v4578, %v7325
        %7327 = vmatmul.bf16.gmra.mxu0 %v4154
        %v7328 = vpop.f32.mrf.mxu0
        %v7329 = vadd.f32 %v4578, %v7328
        %v7330 = vpop.f32.mrf.mxu0
        %v7331 = vadd.f32 %v4578, %v7330
        %7332 = vmatmul.bf16.gmra.mxu0 %v4166
        %v7333 = vpop.f32.mrf.mxu0
        %v7334 = vadd.f32 %v4578, %v7333
        %v7335 = vpop.f32.mrf.mxu0
        %v7336 = vadd.f32 %v4578, %v7335
        %7337 = vmatmul.bf16.gmra.mxu0 %v4178
        %v7338 = vpop.f32.mrf.mxu0
        %v7339 = vadd.f32 %v4578, %v7338
        %v7340 = vpop.f32.mrf.mxu0
        %v7341 = vadd.f32 %v4578, %v7340
        %7342 = vdwg.mxu0
        %7343 = vmatpush.bf16.msra.mxu0 %v5589
        %7344 = vmatpush.bf16.msra.mxu0 %v5586
        %7345 = vmatpush.bf16.msra.mxu0 %v5583
        %7346 = vmatpush.bf16.msra.mxu0 %v5580
        %7347 = vmatpush.bf16.msra.mxu0 %v5577
        %7348 = vmatpush.bf16.msra.mxu0 %v5574
        %7349 = vmatpush.bf16.msra.mxu0 %v5571
        %7350 = vmatpush.bf16.msra.mxu0 %v5568
        %7351 = vmatmul.bf16.gmra.mxu0 %v4095
        %v7352 = vpop.f32.mrf.mxu0
        %v7353 = vadd.f32 %v7304, %v7352
        %v7354 = vpop.f32.mrf.mxu0
        %v7355 = vadd.f32 %v7306, %v7354
        %7356 = vmatmul.bf16.gmra.mxu0 %v4107
        %v7357 = vpop.f32.mrf.mxu0
        %v7358 = vadd.f32 %v7309, %v7357
        %v7359 = vpop.f32.mrf.mxu0
        %v7360 = vadd.f32 %v7311, %v7359
        %7361 = vmatmul.bf16.gmra.mxu0 %v4119
        %v7362 = vpop.f32.mrf.mxu0
        %v7363 = vadd.f32 %v7314, %v7362
        %v7364 = vpop.f32.mrf.mxu0
        %v7365 = vadd.f32 %v7316, %v7364
        %7366 = vmatmul.bf16.gmra.mxu0 %v4131
        %v7367 = vpop.f32.mrf.mxu0
        %v7368 = vadd.f32 %v7319, %v7367
        %v7369 = vpop.f32.mrf.mxu0
        %v7370 = vadd.f32 %v7321, %v7369
        %7371 = vmatmul.bf16.gmra.mxu0 %v4143
        %v7372 = vpop.f32.mrf.mxu0
        %v7373 = vadd.f32 %v7324, %v7372
        %v7374 = vpop.f32.mrf.mxu0
        %v7375 = vadd.f32 %v7326, %v7374
        %7376 = vmatmul.bf16.gmra.mxu0 %v4155
        %v7377 = vpop.f32.mrf.mxu0
        %v7378 = vadd.f32 %v7329, %v7377
        %v7379 = vpop.f32.mrf.mxu0
        %v7380 = vadd.f32 %v7331, %v7379
        %7381 = vmatmul.bf16.gmra.mxu0 %v4167
        %v7382 = vpop.f32.mrf.mxu0
        %v7383 = vadd.f32 %v7334, %v7382
        %v7384 = vpop.f32.mrf.mxu0
        %v7385 = vadd.f32 %v7336, %v7384
        %7386 = vmatmul.bf16.gmra.mxu0 %v4179
        %v7387 = vpop.f32.mrf.mxu0
        %v7388 = vadd.f32 %v7339, %v7387
        %v7389 = vpop.f32.mrf.mxu0
        %v7390 = vadd.f32 %v7341, %v7389
        %7391 = vdwg.mxu0
        %7392 = vmatpush.bf16.msra.mxu0 %v5613
        %7393 = vmatpush.bf16.msra.mxu0 %v5610
        %7394 = vmatpush.bf16.msra.mxu0 %v5607
        %7395 = vmatpush.bf16.msra.mxu0 %v5604
        %7396 = vmatpush.bf16.msra.mxu0 %v5601
        %7397 = vmatpush.bf16.msra.mxu0 %v5598
        %7398 = vmatpush.bf16.msra.mxu0 %v5595
        %7399 = vmatpush.bf16.msra.mxu0 %v5592
        %7400 = vmatmul.bf16.gmra.mxu0 %v4096
        %v7401 = vpop.f32.mrf.mxu0
        %v7402 = vadd.f32 %v7353, %v7401
        %v7403 = vpop.f32.mrf.mxu0
        %v7404 = vadd.f32 %v7355, %v7403
        %7405 = vmatmul.bf16.gmra.mxu0 %v4108
        %v7406 = vpop.f32.mrf.mxu0
        %v7407 = vadd.f32 %v7358, %v7406
        %v7408 = vpop.f32.mrf.mxu0
        %v7409 = vadd.f32 %v7360, %v7408
        %7410 = vmatmul.bf16.gmra.mxu0 %v4120
        %v7411 = vpop.f32.mrf.mxu0
        %v7412 = vadd.f32 %v7363, %v7411
        %v7413 = vpop.f32.mrf.mxu0
        %v7414 = vadd.f32 %v7365, %v7413
        %7415 = vmatmul.bf16.gmra.mxu0 %v4132
        %v7416 = vpop.f32.mrf.mxu0
        %v7417 = vadd.f32 %v7368, %v7416
        %v7418 = vpop.f32.mrf.mxu0
        %v7419 = vadd.f32 %v7370, %v7418
        %7420 = vmatmul.bf16.gmra.mxu0 %v4144
        %v7421 = vpop.f32.mrf.mxu0
        %v7422 = vadd.f32 %v7373, %v7421
        %v7423 = vpop.f32.mrf.mxu0
        %v7424 = vadd.f32 %v7375, %v7423
        %7425 = vmatmul.bf16.gmra.mxu0 %v4156
        %v7426 = vpop.f32.mrf.mxu0
        %v7427 = vadd.f32 %v7378, %v7426
        %v7428 = vpop.f32.mrf.mxu0
        %v7429 = vadd.f32 %v7380, %v7428
        %7430 = vmatmul.bf16.gmra.mxu0 %v4168
        %v7431 = vpop.f32.mrf.mxu0
        %v7432 = vadd.f32 %v7383, %v7431
        %v7433 = vpop.f32.mrf.mxu0
        %v7434 = vadd.f32 %v7385, %v7433
        %7435 = vmatmul.bf16.gmra.mxu0 %v4180
        %v7436 = vpop.f32.mrf.mxu0
        %v7437 = vadd.f32 %v7388, %v7436
        %v7438 = vpop.f32.mrf.mxu0
        %v7439 = vadd.f32 %v7390, %v7438
        %7440 = vdwg.mxu0
        %7441 = vmatpush.bf16.msra.mxu0 %v5637
        %7442 = vmatpush.bf16.msra.mxu0 %v5634
        %7443 = vmatpush.bf16.msra.mxu0 %v5631
        %7444 = vmatpush.bf16.msra.mxu0 %v5628
        %7445 = vmatpush.bf16.msra.mxu0 %v5625
        %7446 = vmatpush.bf16.msra.mxu0 %v5622
        %7447 = vmatpush.bf16.msra.mxu0 %v5619
        %7448 = vmatpush.bf16.msra.mxu0 %v5616
        %7449 = vmatmul.bf16.gmra.mxu0 %v4097
        %v7450 = vpop.f32.mrf.mxu0
        %v7451 = vadd.f32 %v7402, %v7450
        %v7452 = vpop.f32.mrf.mxu0
        %v7453 = vadd.f32 %v7404, %v7452
        %7454 = vmatmul.bf16.gmra.mxu0 %v4109
        %v7455 = vpop.f32.mrf.mxu0
        %v7456 = vadd.f32 %v7407, %v7455
        %v7457 = vpop.f32.mrf.mxu0
        %v7458 = vadd.f32 %v7409, %v7457
        %7459 = vmatmul.bf16.gmra.mxu0 %v4121
        %v7460 = vpop.f32.mrf.mxu0
        %v7461 = vadd.f32 %v7412, %v7460
        %v7462 = vpop.f32.mrf.mxu0
        %v7463 = vadd.f32 %v7414, %v7462
        %7464 = vmatmul.bf16.gmra.mxu0 %v4133
        %v7465 = vpop.f32.mrf.mxu0
        %v7466 = vadd.f32 %v7417, %v7465
        %v7467 = vpop.f32.mrf.mxu0
        %v7468 = vadd.f32 %v7419, %v7467
        %7469 = vmatmul.bf16.gmra.mxu0 %v4145
        %v7470 = vpop.f32.mrf.mxu0
        %v7471 = vadd.f32 %v7422, %v7470
        %v7472 = vpop.f32.mrf.mxu0
        %v7473 = vadd.f32 %v7424, %v7472
        %7474 = vmatmul.bf16.gmra.mxu0 %v4157
        %v7475 = vpop.f32.mrf.mxu0
        %v7476 = vadd.f32 %v7427, %v7475
        %v7477 = vpop.f32.mrf.mxu0
        %v7478 = vadd.f32 %v7429, %v7477
        %7479 = vmatmul.bf16.gmra.mxu0 %v4169
        %v7480 = vpop.f32.mrf.mxu0
        %v7481 = vadd.f32 %v7432, %v7480
        %v7482 = vpop.f32.mrf.mxu0
        %v7483 = vadd.f32 %v7434, %v7482
        %7484 = vmatmul.bf16.gmra.mxu0 %v4181
        %v7485 = vpop.f32.mrf.mxu0
        %v7486 = vadd.f32 %v7437, %v7485
        %v7487 = vpop.f32.mrf.mxu0
        %v7488 = vadd.f32 %v7439, %v7487
        %7489 = vdwg.mxu0
        %7490 = vmatpush.bf16.msra.mxu0 %v5661
        %7491 = vmatpush.bf16.msra.mxu0 %v5658
        %7492 = vmatpush.bf16.msra.mxu0 %v5655
        %7493 = vmatpush.bf16.msra.mxu0 %v5652
        %7494 = vmatpush.bf16.msra.mxu0 %v5649
        %7495 = vmatpush.bf16.msra.mxu0 %v5646
        %7496 = vmatpush.bf16.msra.mxu0 %v5643
        %7497 = vmatpush.bf16.msra.mxu0 %v5640
        %7498 = vmatmul.bf16.gmra.mxu0 %v4098
        %v7499 = vpop.f32.mrf.mxu0
        %v7500 = vadd.f32 %v7451, %v7499
        %v7501 = vpop.f32.mrf.mxu0
        %v7502 = vadd.f32 %v7453, %v7501
        %7503 = vmatmul.bf16.gmra.mxu0 %v4110
        %v7504 = vpop.f32.mrf.mxu0
        %v7505 = vadd.f32 %v7456, %v7504
        %v7506 = vpop.f32.mrf.mxu0
        %v7507 = vadd.f32 %v7458, %v7506
        %7508 = vmatmul.bf16.gmra.mxu0 %v4122
        %v7509 = vpop.f32.mrf.mxu0
        %v7510 = vadd.f32 %v7461, %v7509
        %v7511 = vpop.f32.mrf.mxu0
        %v7512 = vadd.f32 %v7463, %v7511
        %7513 = vmatmul.bf16.gmra.mxu0 %v4134
        %v7514 = vpop.f32.mrf.mxu0
        %v7515 = vadd.f32 %v7466, %v7514
        %v7516 = vpop.f32.mrf.mxu0
        %v7517 = vadd.f32 %v7468, %v7516
        %7518 = vmatmul.bf16.gmra.mxu0 %v4146
        %v7519 = vpop.f32.mrf.mxu0
        %v7520 = vadd.f32 %v7471, %v7519
        %v7521 = vpop.f32.mrf.mxu0
        %v7522 = vadd.f32 %v7473, %v7521
        %7523 = vmatmul.bf16.gmra.mxu0 %v4158
        %v7524 = vpop.f32.mrf.mxu0
        %v7525 = vadd.f32 %v7476, %v7524
        %v7526 = vpop.f32.mrf.mxu0
        %v7527 = vadd.f32 %v7478, %v7526
        %7528 = vmatmul.bf16.gmra.mxu0 %v4170
        %v7529 = vpop.f32.mrf.mxu0
        %v7530 = vadd.f32 %v7481, %v7529
        %v7531 = vpop.f32.mrf.mxu0
        %v7532 = vadd.f32 %v7483, %v7531
        %7533 = vmatmul.bf16.gmra.mxu0 %v4182
        %v7534 = vpop.f32.mrf.mxu0
        %v7535 = vadd.f32 %v7486, %v7534
        %v7536 = vpop.f32.mrf.mxu0
        %v7537 = vadd.f32 %v7488, %v7536
        %7538 = vdwg.mxu0
        %7539 = vmatpush.bf16.msra.mxu0 %v5685
        %7540 = vmatpush.bf16.msra.mxu0 %v5682
        %7541 = vmatpush.bf16.msra.mxu0 %v5679
        %7542 = vmatpush.bf16.msra.mxu0 %v5676
        %7543 = vmatpush.bf16.msra.mxu0 %v5673
        %7544 = vmatpush.bf16.msra.mxu0 %v5670
        %7545 = vmatpush.bf16.msra.mxu0 %v5667
        %7546 = vmatpush.bf16.msra.mxu0 %v5664
        %7547 = vmatmul.bf16.gmra.mxu0 %v4099
        %v7548 = vpop.f32.mrf.mxu0
        %v7549 = vadd.f32 %v7500, %v7548
        %v7550 = vpop.f32.mrf.mxu0
        %v7551 = vadd.f32 %v7502, %v7550
        %7552 = vmatmul.bf16.gmra.mxu0 %v4111
        %v7553 = vpop.f32.mrf.mxu0
        %v7554 = vadd.f32 %v7505, %v7553
        %v7555 = vpop.f32.mrf.mxu0
        %v7556 = vadd.f32 %v7507, %v7555
        %7557 = vmatmul.bf16.gmra.mxu0 %v4123
        %v7558 = vpop.f32.mrf.mxu0
        %v7559 = vadd.f32 %v7510, %v7558
        %v7560 = vpop.f32.mrf.mxu0
        %v7561 = vadd.f32 %v7512, %v7560
        %7562 = vmatmul.bf16.gmra.mxu0 %v4135
        %v7563 = vpop.f32.mrf.mxu0
        %v7564 = vadd.f32 %v7515, %v7563
        %v7565 = vpop.f32.mrf.mxu0
        %v7566 = vadd.f32 %v7517, %v7565
        %7567 = vmatmul.bf16.gmra.mxu0 %v4147
        %v7568 = vpop.f32.mrf.mxu0
        %v7569 = vadd.f32 %v7520, %v7568
        %v7570 = vpop.f32.mrf.mxu0
        %v7571 = vadd.f32 %v7522, %v7570
        %7572 = vmatmul.bf16.gmra.mxu0 %v4159
        %v7573 = vpop.f32.mrf.mxu0
        %v7574 = vadd.f32 %v7525, %v7573
        %v7575 = vpop.f32.mrf.mxu0
        %v7576 = vadd.f32 %v7527, %v7575
        %7577 = vmatmul.bf16.gmra.mxu0 %v4171
        %v7578 = vpop.f32.mrf.mxu0
        %v7579 = vadd.f32 %v7530, %v7578
        %v7580 = vpop.f32.mrf.mxu0
        %v7581 = vadd.f32 %v7532, %v7580
        %7582 = vmatmul.bf16.gmra.mxu0 %v4183
        %v7583 = vpop.f32.mrf.mxu0
        %v7584 = vadd.f32 %v7535, %v7583
        %v7585 = vpop.f32.mrf.mxu0
        %v7586 = vadd.f32 %v7537, %v7585
        %7587 = vdwg.mxu0
        %7588 = vmatpush.bf16.msra.mxu0 %v5709
        %7589 = vmatpush.bf16.msra.mxu0 %v5706
        %7590 = vmatpush.bf16.msra.mxu0 %v5703
        %7591 = vmatpush.bf16.msra.mxu0 %v5700
        %7592 = vmatpush.bf16.msra.mxu0 %v5697
        %7593 = vmatpush.bf16.msra.mxu0 %v5694
        %7594 = vmatpush.bf16.msra.mxu0 %v5691
        %7595 = vmatpush.bf16.msra.mxu0 %v5688
        %7596 = vmatmul.bf16.gmra.mxu0 %v4100
        %v7597 = vpop.f32.mrf.mxu0
        %v7598 = vadd.f32 %v7549, %v7597
        %v7599 = vpop.f32.mrf.mxu0
        %v7600 = vadd.f32 %v7551, %v7599
        %7601 = vmatmul.bf16.gmra.mxu0 %v4112
        %v7602 = vpop.f32.mrf.mxu0
        %v7603 = vadd.f32 %v7554, %v7602
        %v7604 = vpop.f32.mrf.mxu0
        %v7605 = vadd.f32 %v7556, %v7604
        %7606 = vmatmul.bf16.gmra.mxu0 %v4124
        %v7607 = vpop.f32.mrf.mxu0
        %v7608 = vadd.f32 %v7559, %v7607
        %v7609 = vpop.f32.mrf.mxu0
        %v7610 = vadd.f32 %v7561, %v7609
        %7611 = vmatmul.bf16.gmra.mxu0 %v4136
        %v7612 = vpop.f32.mrf.mxu0
        %v7613 = vadd.f32 %v7564, %v7612
        %v7614 = vpop.f32.mrf.mxu0
        %v7615 = vadd.f32 %v7566, %v7614
        %7616 = vmatmul.bf16.gmra.mxu0 %v4148
        %v7617 = vpop.f32.mrf.mxu0
        %v7618 = vadd.f32 %v7569, %v7617
        %v7619 = vpop.f32.mrf.mxu0
        %v7620 = vadd.f32 %v7571, %v7619
        %7621 = vmatmul.bf16.gmra.mxu0 %v4160
        %v7622 = vpop.f32.mrf.mxu0
        %v7623 = vadd.f32 %v7574, %v7622
        %v7624 = vpop.f32.mrf.mxu0
        %v7625 = vadd.f32 %v7576, %v7624
        %7626 = vmatmul.bf16.gmra.mxu0 %v4172
        %v7627 = vpop.f32.mrf.mxu0
        %v7628 = vadd.f32 %v7579, %v7627
        %v7629 = vpop.f32.mrf.mxu0
        %v7630 = vadd.f32 %v7581, %v7629
        %7631 = vmatmul.bf16.gmra.mxu0 %v4184
        %v7632 = vpop.f32.mrf.mxu0
        %v7633 = vadd.f32 %v7584, %v7632
        %v7634 = vpop.f32.mrf.mxu0
        %v7635 = vadd.f32 %v7586, %v7634
        %7636 = vdwg.mxu0
        %7637 = vmatpush.bf16.msra.mxu0 %v5733
        %7638 = vmatpush.bf16.msra.mxu0 %v5730
        %7639 = vmatpush.bf16.msra.mxu0 %v5727
        %7640 = vmatpush.bf16.msra.mxu0 %v5724
        %7641 = vmatpush.bf16.msra.mxu0 %v5721
        %7642 = vmatpush.bf16.msra.mxu0 %v5718
        %7643 = vmatpush.bf16.msra.mxu0 %v5715
        %7644 = vmatpush.bf16.msra.mxu0 %v5712
        %7645 = vmatmul.bf16.gmra.mxu0 %v4101
        %v7646 = vpop.f32.mrf.mxu0
        %v7647 = vadd.f32 %v7598, %v7646
        %v7648 = vpop.f32.mrf.mxu0
        %v7649 = vadd.f32 %v7600, %v7648
        %7650 = vmatmul.bf16.gmra.mxu0 %v4113
        %v7651 = vpop.f32.mrf.mxu0
        %v7652 = vadd.f32 %v7603, %v7651
        %v7653 = vpop.f32.mrf.mxu0
        %v7654 = vadd.f32 %v7605, %v7653
        %7655 = vmatmul.bf16.gmra.mxu0 %v4125
        %v7656 = vpop.f32.mrf.mxu0
        %v7657 = vadd.f32 %v7608, %v7656
        %v7658 = vpop.f32.mrf.mxu0
        %v7659 = vadd.f32 %v7610, %v7658
        %7660 = vmatmul.bf16.gmra.mxu0 %v4137
        %v7661 = vpop.f32.mrf.mxu0
        %v7662 = vadd.f32 %v7613, %v7661
        %v7663 = vpop.f32.mrf.mxu0
        %v7664 = vadd.f32 %v7615, %v7663
        %7665 = vmatmul.bf16.gmra.mxu0 %v4149
        %v7666 = vpop.f32.mrf.mxu0
        %v7667 = vadd.f32 %v7618, %v7666
        %v7668 = vpop.f32.mrf.mxu0
        %v7669 = vadd.f32 %v7620, %v7668
        %7670 = vmatmul.bf16.gmra.mxu0 %v4161
        %v7671 = vpop.f32.mrf.mxu0
        %v7672 = vadd.f32 %v7623, %v7671
        %v7673 = vpop.f32.mrf.mxu0
        %v7674 = vadd.f32 %v7625, %v7673
        %7675 = vmatmul.bf16.gmra.mxu0 %v4173
        %v7676 = vpop.f32.mrf.mxu0
        %v7677 = vadd.f32 %v7628, %v7676
        %v7678 = vpop.f32.mrf.mxu0
        %v7679 = vadd.f32 %v7630, %v7678
        %7680 = vmatmul.bf16.gmra.mxu0 %v4185
        %v7681 = vpop.f32.mrf.mxu0
        %v7682 = vadd.f32 %v7633, %v7681
        %v7683 = vpop.f32.mrf.mxu0
        %v7684 = vadd.f32 %v7635, %v7683
        %7685 = vdwg.mxu0
        %7686 = vmatpush.bf16.msra.mxu0 %v5757
        %7687 = vmatpush.bf16.msra.mxu0 %v5754
        %7688 = vmatpush.bf16.msra.mxu0 %v5751
        %7689 = vmatpush.bf16.msra.mxu0 %v5748
        %7690 = vmatpush.bf16.msra.mxu0 %v5745
        %7691 = vmatpush.bf16.msra.mxu0 %v5742
        %7692 = vmatpush.bf16.msra.mxu0 %v5739
        %7693 = vmatpush.bf16.msra.mxu0 %v5736
        %7694 = vmatmul.bf16.gmra.mxu0 %v4102
        %v7695 = vpop.f32.mrf.mxu0
        %v7696 = vadd.f32 %v7647, %v7695
        %v7697 = vpop.f32.mrf.mxu0
        %v7698 = vadd.f32 %v7649, %v7697
        %7699 = vmatmul.bf16.gmra.mxu0 %v4114
        %v7700 = vpop.f32.mrf.mxu0
        %v7701 = vadd.f32 %v7652, %v7700
        %v7702 = vpop.f32.mrf.mxu0
        %v7703 = vadd.f32 %v7654, %v7702
        %7704 = vmatmul.bf16.gmra.mxu0 %v4126
        %v7705 = vpop.f32.mrf.mxu0
        %v7706 = vadd.f32 %v7657, %v7705
        %v7707 = vpop.f32.mrf.mxu0
        %v7708 = vadd.f32 %v7659, %v7707
        %7709 = vmatmul.bf16.gmra.mxu0 %v4138
        %v7710 = vpop.f32.mrf.mxu0
        %v7711 = vadd.f32 %v7662, %v7710
        %v7712 = vpop.f32.mrf.mxu0
        %v7713 = vadd.f32 %v7664, %v7712
        %7714 = vmatmul.bf16.gmra.mxu0 %v4150
        %v7715 = vpop.f32.mrf.mxu0
        %v7716 = vadd.f32 %v7667, %v7715
        %v7717 = vpop.f32.mrf.mxu0
        %v7718 = vadd.f32 %v7669, %v7717
        %7719 = vmatmul.bf16.gmra.mxu0 %v4162
        %v7720 = vpop.f32.mrf.mxu0
        %v7721 = vadd.f32 %v7672, %v7720
        %v7722 = vpop.f32.mrf.mxu0
        %v7723 = vadd.f32 %v7674, %v7722
        %7724 = vmatmul.bf16.gmra.mxu0 %v4174
        %v7725 = vpop.f32.mrf.mxu0
        %v7726 = vadd.f32 %v7677, %v7725
        %v7727 = vpop.f32.mrf.mxu0
        %v7728 = vadd.f32 %v7679, %v7727
        %7729 = vmatmul.bf16.gmra.mxu0 %v4186
        %v7730 = vpop.f32.mrf.mxu0
        %v7731 = vadd.f32 %v7682, %v7730
        %v7732 = vpop.f32.mrf.mxu0
        %v7733 = vadd.f32 %v7684, %v7732
        %7734 = vdwg.mxu0
        %7735 = vmatpush.bf16.msra.mxu0 %v5781
        %7736 = vmatpush.bf16.msra.mxu0 %v5778
        %7737 = vmatpush.bf16.msra.mxu0 %v5775
        %7738 = vmatpush.bf16.msra.mxu0 %v5772
        %7739 = vmatpush.bf16.msra.mxu0 %v5769
        %7740 = vmatpush.bf16.msra.mxu0 %v5766
        %7741 = vmatpush.bf16.msra.mxu0 %v5763
        %7742 = vmatpush.bf16.msra.mxu0 %v5760
        %7743 = vmatmul.bf16.gmra.mxu0 %v4103
        %v7744 = vpop.f32.mrf.mxu0
        %v7745 = vadd.f32 %v7696, %v7744
        %v7746 = vpop.f32.mrf.mxu0
        %v7747 = vadd.f32 %v7698, %v7746
        %7748 = vmatmul.bf16.gmra.mxu0 %v4115
        %v7749 = vpop.f32.mrf.mxu0
        %v7750 = vadd.f32 %v7701, %v7749
        %v7751 = vpop.f32.mrf.mxu0
        %v7752 = vadd.f32 %v7703, %v7751
        %7753 = vmatmul.bf16.gmra.mxu0 %v4127
        %v7754 = vpop.f32.mrf.mxu0
        %v7755 = vadd.f32 %v7706, %v7754
        %v7756 = vpop.f32.mrf.mxu0
        %v7757 = vadd.f32 %v7708, %v7756
        %7758 = vmatmul.bf16.gmra.mxu0 %v4139
        %v7759 = vpop.f32.mrf.mxu0
        %v7760 = vadd.f32 %v7711, %v7759
        %v7761 = vpop.f32.mrf.mxu0
        %v7762 = vadd.f32 %v7713, %v7761
        %7763 = vmatmul.bf16.gmra.mxu0 %v4151
        %v7764 = vpop.f32.mrf.mxu0
        %v7765 = vadd.f32 %v7716, %v7764
        %v7766 = vpop.f32.mrf.mxu0
        %v7767 = vadd.f32 %v7718, %v7766
        %7768 = vmatmul.bf16.gmra.mxu0 %v4163
        %v7769 = vpop.f32.mrf.mxu0
        %v7770 = vadd.f32 %v7721, %v7769
        %v7771 = vpop.f32.mrf.mxu0
        %v7772 = vadd.f32 %v7723, %v7771
        %7773 = vmatmul.bf16.gmra.mxu0 %v4175
        %v7774 = vpop.f32.mrf.mxu0
        %v7775 = vadd.f32 %v7726, %v7774
        %v7776 = vpop.f32.mrf.mxu0
        %v7777 = vadd.f32 %v7728, %v7776
        %7778 = vmatmul.bf16.gmra.mxu0 %v4187
        %v7779 = vpop.f32.mrf.mxu0
        %v7780 = vadd.f32 %v7731, %v7779
        %v7781 = vpop.f32.mrf.mxu0
        %v7782 = vadd.f32 %v7733, %v7781
        %7783 = vdwg.mxu0
        %7784 = vmatpush.bf16.msra.mxu0 %v5805
        %7785 = vmatpush.bf16.msra.mxu0 %v5802
        %7786 = vmatpush.bf16.msra.mxu0 %v5799
        %7787 = vmatpush.bf16.msra.mxu0 %v5796
        %7788 = vmatpush.bf16.msra.mxu0 %v5793
        %7789 = vmatpush.bf16.msra.mxu0 %v5790
        %7790 = vmatpush.bf16.msra.mxu0 %v5787
        %7791 = vmatpush.bf16.msra.mxu0 %v5784
        %7792 = vmatmul.bf16.gmra.mxu0 %v4104
        %v7793 = vpop.f32.mrf.mxu0
        %v7794 = vadd.f32 %v7745, %v7793
        %v7795 = vpop.f32.mrf.mxu0
        %v7796 = vadd.f32 %v7747, %v7795
        %7797 = vmatmul.bf16.gmra.mxu0 %v4116
        %v7798 = vpop.f32.mrf.mxu0
        %v7799 = vadd.f32 %v7750, %v7798
        %v7800 = vpop.f32.mrf.mxu0
        %v7801 = vadd.f32 %v7752, %v7800
        %7802 = vmatmul.bf16.gmra.mxu0 %v4128
        %v7803 = vpop.f32.mrf.mxu0
        %v7804 = vadd.f32 %v7755, %v7803
        %v7805 = vpop.f32.mrf.mxu0
        %v7806 = vadd.f32 %v7757, %v7805
        %7807 = vmatmul.bf16.gmra.mxu0 %v4140
        %v7808 = vpop.f32.mrf.mxu0
        %v7809 = vadd.f32 %v7760, %v7808
        %v7810 = vpop.f32.mrf.mxu0
        %v7811 = vadd.f32 %v7762, %v7810
        %7812 = vmatmul.bf16.gmra.mxu0 %v4152
        %v7813 = vpop.f32.mrf.mxu0
        %v7814 = vadd.f32 %v7765, %v7813
        %v7815 = vpop.f32.mrf.mxu0
        %v7816 = vadd.f32 %v7767, %v7815
        %7817 = vmatmul.bf16.gmra.mxu0 %v4164
        %v7818 = vpop.f32.mrf.mxu0
        %v7819 = vadd.f32 %v7770, %v7818
        %v7820 = vpop.f32.mrf.mxu0
        %v7821 = vadd.f32 %v7772, %v7820
        %7822 = vmatmul.bf16.gmra.mxu0 %v4176
        %v7823 = vpop.f32.mrf.mxu0
        %v7824 = vadd.f32 %v7775, %v7823
        %v7825 = vpop.f32.mrf.mxu0
        %v7826 = vadd.f32 %v7777, %v7825
        %7827 = vmatmul.bf16.gmra.mxu0 %v4188
        %v7828 = vpop.f32.mrf.mxu0
        %v7829 = vadd.f32 %v7780, %v7828
        %v7830 = vpop.f32.mrf.mxu0
        %v7831 = vadd.f32 %v7782, %v7830
        %7832 = vdwg.mxu0
        %7833 = vmatpush.bf16.msra.mxu0 %v5829
        %7834 = vmatpush.bf16.msra.mxu0 %v5826
        %7835 = vmatpush.bf16.msra.mxu0 %v5823
        %7836 = vmatpush.bf16.msra.mxu0 %v5820
        %7837 = vmatpush.bf16.msra.mxu0 %v5817
        %7838 = vmatpush.bf16.msra.mxu0 %v5814
        %7839 = vmatpush.bf16.msra.mxu0 %v5811
        %7840 = vmatpush.bf16.msra.mxu0 %v5808
        %7841 = vmatmul.bf16.gmra.mxu0 %v4105
        %v7842 = vpop.f32.mrf.mxu0
        %v7843 = vadd.f32 %v7794, %v7842
        %v7844 = vpop.f32.mrf.mxu0
        %v7845 = vadd.f32 %v7796, %v7844
        %7846 = vmatmul.bf16.gmra.mxu0 %v4117
        %v7847 = vpop.f32.mrf.mxu0
        %v7848 = vadd.f32 %v7799, %v7847
        %v7849 = vpop.f32.mrf.mxu0
        %v7850 = vadd.f32 %v7801, %v7849
        %7851 = vmatmul.bf16.gmra.mxu0 %v4129
        %v7852 = vpop.f32.mrf.mxu0
        %v7853 = vadd.f32 %v7804, %v7852
        %v7854 = vpop.f32.mrf.mxu0
        %v7855 = vadd.f32 %v7806, %v7854
        %7856 = vmatmul.bf16.gmra.mxu0 %v4141
        %v7857 = vpop.f32.mrf.mxu0
        %v7858 = vadd.f32 %v7809, %v7857
        %v7859 = vpop.f32.mrf.mxu0
        %v7860 = vadd.f32 %v7811, %v7859
        %7861 = vmatmul.bf16.gmra.mxu0 %v4153
        %v7862 = vpop.f32.mrf.mxu0
        %v7863 = vadd.f32 %v7814, %v7862
        %v7864 = vpop.f32.mrf.mxu0
        %v7865 = vadd.f32 %v7816, %v7864
        %7866 = vmatmul.bf16.gmra.mxu0 %v4165
        %v7867 = vpop.f32.mrf.mxu0
        %v7868 = vadd.f32 %v7819, %v7867
        %v7869 = vpop.f32.mrf.mxu0
        %v7870 = vadd.f32 %v7821, %v7869
        %7871 = vmatmul.bf16.gmra.mxu0 %v4177
        %v7872 = vpop.f32.mrf.mxu0
        %v7873 = vadd.f32 %v7824, %v7872
        %v7874 = vpop.f32.mrf.mxu0
        %v7875 = vadd.f32 %v7826, %v7874
        %7876 = vmatmul.bf16.gmra.mxu0 %v4189
        %v7877 = vpop.f32.mrf.mxu0
        %v7878 = vadd.f32 %v7829, %v7877
        %v7879 = vpop.f32.mrf.mxu0
        %v7880 = vadd.f32 %v7831, %v7879
        %7881 = vdwg.mxu0
        %7882 = vst [vmem:[%s307] sm:$0xff] %v6667
        %7883 = vst [vmem:[%s307 + $0x8] sm:$0xff] %v7255
        %7884 = vst [vmem:[%s307 + $0x10] sm:$0xff] %v7843
        %7885 = vst [vmem:[%s307 + $0x18] sm:$0xff] %v6669
        %7886 = vst [vmem:[%s307 + $0x20] sm:$0xff] %v7257
        %7887 = vst [vmem:[%s307 + $0x28] sm:$0xff] %v7845
        %7888 = vst [vmem:[%s307 + $0x30] sm:$0xff] %v6672
        %7889 = vst [vmem:[%s307 + $0x38] sm:$0xff] %v7260
        %7890 = vst [vmem:[%s307 + $0x40] sm:$0xff] %v7848
        %7891 = vst [vmem:[%s307 + $0x48] sm:$0xff] %v6674
        %7892 = vst [vmem:[%s307 + $0x50] sm:$0xff] %v7262
        %7893 = vst [vmem:[%s307 + $0x58] sm:$0xff] %v7850
        %7894 = vst [vmem:[%s307 + $0x60] sm:$0xff] %v6677
        %7895 = vst [vmem:[%s307 + $0x68] sm:$0xff] %v7265
        %7896 = vst [vmem:[%s307 + $0x70] sm:$0xff] %v7853
        %7897 = vst [vmem:[%s307 + $0x78] sm:$0xff] %v6679
        %7898 = vst [vmem:[%s307 + $0x80] sm:$0xff] %v7267
        %7899 = vst [vmem:[%s307 + $0x88] sm:$0xff] %v7855
        %7900 = vst [vmem:[%s307 + $0x90] sm:$0xff] %v6682
        %7901 = vst [vmem:[%s307 + $0x98] sm:$0xff] %v7270
        %7902 = vst [vmem:[%s307 + $0xa0] sm:$0xff] %v7858
        %7903 = vst [vmem:[%s307 + $0xa8] sm:$0xff] %v6684
        %7904 = vst [vmem:[%s307 + $0xb0] sm:$0xff] %v7272
        %7905 = vst [vmem:[%s307 + $0xb8] sm:$0xff] %v7860
        %7906 = vst [vmem:[%s307 + $0xc0] sm:$0xff] %v6687
        %7907 = vst [vmem:[%s307 + $0xc8] sm:$0xff] %v7275
        %7908 = vst [vmem:[%s307 + $0xd0] sm:$0xff] %v7863
        %7909 = vst [vmem:[%s307 + $0xd8] sm:$0xff] %v6689
        %7910 = vst [vmem:[%s307 + $0xe0] sm:$0xff] %v7277
        %7911 = vst [vmem:[%s307 + $0xe8] sm:$0xff] %v7865
        %7912 = vst [vmem:[%s307 + $0xf0] sm:$0xff] %v6692
        %7913 = vst [vmem:[%s307 + $0xf8] sm:$0xff] %v7280
        %7914 = vst [vmem:[%s307 + $0x100] sm:$0xff] %v7868
        %7915 = vst [vmem:[%s307 + $0x108] sm:$0xff] %v6694
        %7916 = vst [vmem:[%s307 + $0x110] sm:$0xff] %v7282
        %7917 = vst [vmem:[%s307 + $0x118] sm:$0xff] %v7870
        %7918 = vst [vmem:[%s307 + $0x120] sm:$0xff] %v6697
        %7919 = vst [vmem:[%s307 + $0x128] sm:$0xff] %v7285
        %7920 = vst [vmem:[%s307 + $0x130] sm:$0xff] %v7873
        %7921 = vst [vmem:[%s307 + $0x138] sm:$0xff] %v6699
        %7922 = vst [vmem:[%s307 + $0x140] sm:$0xff] %v7287
        %7923 = vst [vmem:[%s307 + $0x148] sm:$0xff] %v7875
        %7924 = vst [vmem:[%s307 + $0x150] sm:$0xff] %v6702
        %7925 = vst [vmem:[%s307 + $0x158] sm:$0xff] %v7290
        %7926 = vst [vmem:[%s307 + $0x160] sm:$0xff] %v7878
        %7927 = vst [vmem:[%s307 + $0x168] sm:$0xff] %v6704
        %7928 = vst [vmem:[%s307 + $0x170] sm:$0xff] %v7292
        %7929 = vst [vmem:[%s307 + $0x178] sm:$0xff] %v7880
        %s7930 = sand.u32 %s142, 1
        %s7931 = scalar_lea.sflag [#allocation4], %s7930
        %s7932 = sand.u32 %s142, 1
        %s7933 = smul.addr %s7932, 384
        %s7934 = scalar_lea.vmem [#allocation11], %s7933
        // Predicated region
        $region61: #{tpu_custom_call.1} parent=39 // pred_check
          %p7935 = pneg %p152
        $region62: #{tpu_custom_call.1} parent=39 // pred_check_branch
          %7937 = sbr.rel (%p7935) target = $region64
        $region63: #{tpu_custom_call.1} parent=39 // pred_region
          %s7938 = smul.u32 16, %s24
          %7940 = vsyncadd %s7931, 0
          %s7941 = smul.addr %s7938, 3
          %s7942 = smul.addr %s7941, 8
          %s7943 = scalar_lea.hbm %s5, %s7942
          %s7944 = sshll.u32 %s7934, 4
          %s7945 = int_to_ptr.vmem [resolvable:$true] %s7944
          %s7946 = sshll.u32 %s7943, 4
          %s7947 = int_to_ptr.hbm [resolvable:$true] %s7946
          %7952 = dma.vmem_to_hbm [thread:$0]  %s7945, 6144, %s7947, %s7931, 384, 384, 24
        $region64: #{tpu_custom_call.1} parent=39 // pred_fallthru
          _
      $region40: #{tpu_custom_call.1} parent=5 // pred_fallthru
        _
      %p7953 = scmp.le.s32.totalorder 2, %s19
      // Predicated region
      $region65: #{tpu_custom_call.1} parent=5 // pred_check
        %p7954 = pneg %p7953
      $region66: #{tpu_custom_call.1} parent=5 // pred_check_branch
        %7956 = sbr.rel (%p7954) target = $region68
      $region67: #{tpu_custom_call.1} parent=5 // pred_region
        %s7957 = ssub.s32 %s19, 2
        // Predicated region
        $region69: #{tpu_custom_call.1} parent=67 // pred_check
          %p7958 = pneg %p158
        $region70: #{tpu_custom_call.1} parent=67 // pred_check_branch
          %7960 = sbr.rel (%p7958) target = $region72
        $region71: #{tpu_custom_call.1} parent=67 // pred_region
          %s7961 = sand.u32 %s143, 1
          %s7962 = scalar_lea.sflag [#allocation4], %s7961
          %s7963 = sand.u32 %s143, 1
          %s7964 = smul.addr %s7963, 384
          %s7965 = scalar_lea.vmem [#allocation11], %s7964
          %7967 = dma.done %s7962, 6144
        $region72: #{tpu_custom_call.1} parent=67 // pred_fallthru
          _
      $region68: #{tpu_custom_call.1} parent=5 // pred_fallthru
        _
    $region6: #{tpu_custom_call.1} parent=1 // loop_footer
      %s23 = sadd.s32 1, %s19
    $region7: #{tpu_custom_call.1} parent=1 // loop_footer_branch
      %18 = sbr.rel target = $region3
    $region8: #{tpu_custom_call.1} parent=1 // loop_exit
      _
    %7968 = vsyncpa [#allocation3], 1
    %s7969 = scalar_lea.sflag [#allocation3], 1
    %7970 = vsyncpa %s7969, 1
    %7971 = vsyncpa [#allocation6], 1
    %7972 = vsyncpa [#allocation9], 1
    %7973 = vsyncpa [#allocation4], 1
    %s7974 = scalar_lea.sflag [#allocation4], 1
    %7975 = vsyncpa %s7974, 1

</llo_original>
